<compile_context>
chip_gen: v7x
topology: tpu7x:2x2x1
jax: 0.10.0
libtpu: 0.0.40
codegen_flags: <defaults>
</compile_context>

<pallas_src>
import jax
import jax.numpy as jnp
from jax.experimental import pallas as pl
from jax.experimental.pallas import tpu as pltpu

EPS = 1e-5
LANE = 128      # TPU lane width: channel axes are padded to a multiple of this
SUBLANE = 16    # bf16 sublane-tile granularity for the flattened spatial axis


def _round_up(x, m):
    return (x + m - 1) // m * m


def _elu(x):
    # ELU(alpha=1): x if x > 0 else exp(x) - 1  (clamp exp arg; f32 math)
    return jnp.where(x > 0, x, jnp.exp(jnp.minimum(x, 0.0)) - 1.0)


# --------------------------------------------------------------------------
# Kernels
# --------------------------------------------------------------------------
def _conv_elu_store(x_f32, w_ref, b_ref, mask, y_ref, stats_ref, tap_offsets):
    """3x3 conv as ONE deep-K MXU matmul + bias + ELU + halo mask.

    `x_f32` is one image in flattened zero-padded (M, Cin_pad) layout, f32.
    Each 3x3 tap is a spatial shift of the input realized with pltpu.roll
    (XLU slot); the 9 shifted copies are cast to bf16 and concatenated along
    the lane axis into an (M, 9*Cin_pad) operand, so the conv is a single
    K = 9*Cin_pad matmul that accumulates inside the MXU (no f32 partial
    products through the VPU-add / VMEM vld-vst path).  Wrap-around rows from
    the rolls land only in the halo ring / tail padding, which `mask`
    re-zeroes (invariant asserted in the wrapper).

    The activation is stored as bf16 (halves inter-stage HBM traffic); the BN
    partial sums are computed from the stored (quantized) value.
    """
    m = x_f32.shape[0]
    # TODO(synk): roll the bf16 operand directly (half the XLU bytes) once
    # packed-sublane rotates are verified in the bundle dump; f32 rolls are
    # the conservatively supported path and the XLU is not the binding slot.
    cols = []
    for off in tap_offsets:
        xt = x_f32 if off == 0 else pltpu.roll(x_f32, shift=(-off) % m, axis=0)
        cols.append(xt.astype(jnp.bfloat16))
    xs = jnp.concatenate(cols, axis=1)                    # (M, 9*Cin_pad) bf16
    acc = jnp.dot(xs, w_ref[...], preferred_element_type=jnp.float32)
    y = _elu(acc + b_ref[...]) * mask                     # f32 VPU/EUP; zero halo
    yq = y.astype(y_ref.dtype)                            # bf16 store
    y_ref[0] = yq
    yf = yq.astype(jnp.float32)
    # One-pass BN partials: [sum; sum of squares] over this image's pixels.
    stats_ref[0] = jnp.concatenate(
        [jnp.sum(yf, axis=0, keepdims=True),
         jnp.sum(yf * yf, axis=0, keepdims=True)], axis=0)


def _make_conv1_kernel(tap_offsets):
    def kernel(x_ref, w_ref, b_ref, mask_ref, y_ref, stats_ref):
        _conv_elu_store(x_ref[0].astype(jnp.float32), w_ref, b_ref,
                        mask_ref[...], y_ref, stats_ref, tap_offsets)
    return kernel


def _make_bn_conv2_kernel(tap_offsets):
    def kernel(y1_ref, scale_ref, shift_ref, w_ref, b_ref, mask_ref,
               y_ref, stats_ref):
        mask = mask_ref[...]
        # BN1 apply with hoisted per-channel scale/shift in f32 on the bf16
        # activation, re-zeroing the halo ring (shift would leak into it).
        z = (y1_ref[0].astype(jnp.float32) * scale_ref[...]
             + shift_ref[...]) * mask
        _conv_elu_store(z, w_ref, b_ref, mask, y_ref, stats_ref, tap_offsets)
    return kernel


# --------------------------------------------------------------------------
# Wrapper
# --------------------------------------------------------------------------
def _finalize_bn(stats, gamma, beta, count):
    """Global train-mode BN stats from per-image [sum; sumsq] partials."""
    s = jnp.sum(stats[:, 0, :], axis=0, keepdims=True)         # (1, C)
    ss = jnp.sum(stats[:, 1, :], axis=0, keepdims=True)
    mean = s / count
    var = jnp.maximum(ss / count - mean * mean, 0.0)            # biased variance
    scale = gamma * jax.lax.rsqrt(var + EPS)                    # hoisted g*rsqrt
    shift = beta - mean * scale
    return scale, shift


def _pick_vmem_limit_bytes():
    cap = 64 * 1024 * 1024
    try:
        cap = int(getattr(pltpu.get_tpu_info(), "vmem_capacity_bytes", cap))
    except Exception:
        pass
    # ~48 MiB on v7x (64 MiB physical VMEM), ~96 MiB on v5e/v6e (128 MiB).
    return max(32 * 1024 * 1024, min(cap * 3 // 4, 100 * 1024 * 1024))


def conv_block_forward(x_nchw, params):
    """x_nchw: (N, Cin, H, W) float32. Returns (N, Cout, H, W) like PyTorch."""
    w1, b1, g1, bt1, w2, b2, g2, bt2 = params      # torch layouts (OIHW, (C,))
    N, Cin, H, W = x_nchw.shape
    Cout = w1.shape[0]
    Hp, Wp = H + 2, W + 2
    C1 = _round_up(Cin, LANE)                      # lane-dense input channels
    C2 = _round_up(Cout, LANE)                     # lane-dense output channels
    M = _round_up(Hp * Wp, SUBLANE)                # flattened padded spatial
    count = N * H * W                              # BN population size
    f32, bf16 = jnp.float32, jnp.bfloat16

    # Flattened 3x3 tap offsets (dy-major; center is index 4, offset 0).
    tap_offsets = tuple((dy - 1) * Wp + (dx - 1)
                        for dy in range(3) for dx in range(3))
    # Roll wrap-around invariant: for interior (unmasked) rows m, m + off
    # never leaves [0, M), so wrapped rows only land in the halo / tail
    # padding that the mask re-zeroes.  Holds for 3x3 / pad=1 only.
    assert (H + 1) * Wp + (W + 1) < Hp * Wp <= M and tap_offsets[4] == 0

    # ---- layout glue (wrapper side, fused by XLA) ----
    x = jnp.transpose(x_nchw.astype(f32), (0, 2, 3, 1))            # NHWC
    x = jnp.pad(x, ((0, 0), (1, 1), (1, 1), (0, C1 - Cin)))        # halo + lanes
    x = x.reshape(N, Hp * Wp, C1)
    x = jnp.pad(x, ((0, 0), (0, M - Hp * Wp), (0, 0))).astype(bf16)

    def prep_w(w, cin, cin_pad):
        # (O,I,3,3) -> (3,3,I,O) -> pad -> K-stacked (9*cin_pad, C2), tap-major.
        wt = jnp.transpose(w.astype(f32), (2, 3, 1, 0))
        wt = jnp.pad(wt, ((0, 0), (0, 0), (0, cin_pad - cin), (0, C2 - Cout)))
        return wt.reshape(9 * cin_pad, C2).astype(bf16)

    w1p, w2p = prep_w(w1, Cin, C1), prep_w(w2, Cout, C2)
    pad_c = lambda v, cv=0.0: jnp.pad(v.astype(f32), (0, C2 - Cout),
                                      constant_values=cv).reshape(1, C2)
    b1p, b2p = pad_c(b1), pad_c(b2)
    g1p, g2p = pad_c(g1, 1.0), pad_c(g2, 1.0)
    bt1p, bt2p = pad_c(bt1), pad_c(bt2)

    # Interior mask over the flattened padded layout (1 = real pixel).
    idx = jnp.arange(M)
    row, col = idx // Wp, idx % Wp
    mask = ((row >= 1) & (row <= H) & (col >= 1) & (col <= W)
            ).astype(f32).reshape(M, 1)

    # One grid step per image; batch axis is parallel (shards across the two
    # TensorCores on v7x).
    # TODO(synk): for large images add a second grid axis over row tiles with
    # a 1-row halo (pl.ANY input + pltpu.make_async_copy) so a full image does
    # not have to fit VMEM (v7x has only 64 MiB); for many small images fold
    # several images per step to amortize the ~0.35 us per-step overhead.
    # TODO(synk): for narrow layers (Cin/Cout << 128) the lane padding inflates
    # FLOPs/bytes ~16-32x; a spatial-in-lanes layout would be needed there.
    cparams = pltpu.CompilerParams(
        dimension_semantics=("parallel",),
        vmem_limit_bytes=_pick_vmem_limit_bytes())

    img_block = lambda c: pl.BlockSpec((1, M, c), lambda n: (n, 0, 0))
    stat_block = pl.BlockSpec((1, 2, C2), lambda n: (n, 0, 0))
    full2 = lambda shape: pl.BlockSpec(shape, lambda n: (0, 0))

    def conv_cost(cin_pad):
        return pl.CostEstimate(
            flops=2 * N * M * 9 * cin_pad * C2,
            transcendentals=N * M * C2,
            bytes_accessed=(N * M * cin_pad * 2 + 9 * cin_pad * C2 * 2
                            + N * M * C2 * 2 + N * 2 * C2 * 4))

    # ---- stage 1: conv1 + bias + ELU (bf16 store), per-image BN1 partials ----
    y1, stats1 = pl.pallas_call(
        _make_conv1_kernel(tap_offsets),
        grid=(N,),
        in_specs=[img_block(C1), full2((9 * C1, C2)), full2((1, C2)),
                  full2((M, 1))],
        out_specs=(img_block(C2), stat_block),
        out_shape=(jax.ShapeDtypeStruct((N, M, C2), bf16),
                   jax.ShapeDtypeStruct((N, 2, C2), f32)),
        compiler_params=cparams,
        cost_estimate=conv_cost(C1),
    )(x, w1p, b1p, mask)

    scale1, shift1 = _finalize_bn(stats1, g1p, bt1p, count)

    # ---- stage 2: BN1-apply + conv2 + bias + ELU (bf16 store), BN2 partials --
    y2, stats2 = pl.pallas_call(
        _make_bn_conv2_kernel(tap_offsets),
        grid=(N,),
        in_specs=[img_block(C2), full2((1, C2)), full2((1, C2)),
                  full2((9 * C2, C2)), full2((1, C2)), full2((M, 1))],
        out_specs=(img_block(C2), stat_block),
        out_shape=(jax.ShapeDtypeStruct((N, M, C2), bf16),
                   jax.ShapeDtypeStruct((N, 2, C2), f32)),
        compiler_params=cparams,
        cost_estimate=conv_cost(C2),
    )(y1, scale1, shift1, w2p, b2p, mask)

    scale2, shift2 = _finalize_bn(stats2, g2p, bt2p, count)

    # ---- BN2 apply fused into the wrapper-side crop / transpose (no 3rd pass)
    out = y2[:, :Hp * Wp, :].reshape(N, Hp, Wp, C2)[:, 1:H + 1, 1:W + 1, :Cout]
    out = out.astype(f32) * scale2[0, :Cout] + shift2[0, :Cout]
    return jnp.transpose(out, (0, 3, 1, 2))


# --------------------------------------------------------------------------
# Pure-JAX reference
# --------------------------------------------------------------------------
def conv_block_reference(x_nchw, params, matmul_dtype=jnp.float32,
                         act_dtype=jnp.float32):
    """f32 reference. `matmul_dtype` quantizes the conv inputs/weights (MXU
    input precision); `act_dtype` quantizes the stored post-ELU activations
    (the kernel stores them as bf16).  Accumulation and BN math stay f32."""
    w1, b1, g1, bt1, w2, b2, g2, bt2 = params

    def conv(x, w, b):
        xq = x.astype(matmul_dtype).astype(jnp.float32)
        wq = w.astype(matmul_dtype).astype(jnp.float32)
        y = jax.lax.conv_general_dilated(
            xq, wq, window_strides=(1, 1), padding="SAME",
            dimension_numbers=("NCHW", "OIHW", "NCHW"))
        return y + b[None, :, None, None]

    def bn(x, g, bt):
        mean = x.mean(axis=(0, 2, 3), keepdims=True)
        var = ((x - mean) ** 2).mean(axis=(0, 2, 3), keepdims=True)
        return (g[None, :, None, None] * (x - mean) / jnp.sqrt(var + EPS)
                + bt[None, :, None, None])

    q = lambda t: t.astype(act_dtype).astype(jnp.float32)
    h = bn(q(_elu(conv(x_nchw, w1, b1))), g1, bt1)
    h = bn(q(_elu(conv(h, w2, b2))), g2, bt2)
    return h


if __name__ == "__main__":
    key = jax.random.PRNGKey(0)
    N, Cin, Cout, H, W = 2, 4, 8, 16, 16

    ks = jax.random.split(key, 9)
    x = jax.random.normal(ks[0], (N, Cin, H, W), jnp.float32)

    # Deterministic parameter init (shapes match nn.Conv2d / nn.BatchNorm2d).
    w1 = jax.random.normal(ks[1], (Cout, Cin, 3, 3), jnp.float32) * 0.1
    b1 = jax.random.normal(ks[2], (Cout,), jnp.float32) * 0.1
    g1 = 1.0 + 0.1 * jax.random.normal(ks[3], (Cout,), jnp.float32)
    bt1 = 0.1 * jax.random.normal(ks[4], (Cout,), jnp.float32)
    w2 = jax.random.normal(ks[5], (Cout, Cout, 3, 3), jnp.float32) * 0.1
    b2 = jax.random.normal(ks[6], (Cout,), jnp.float32) * 0.1
    g2 = 1.0 + 0.1 * jax.random.normal(ks[7], (Cout,), jnp.float32)
    bt2 = 0.1 * jax.random.normal(ks[8], (Cout,), jnp.float32)
    params = (w1, b1, g1, bt1, w2, b2, g2, bt2)

    out = jax.block_until_ready(jax.jit(conv_block_forward)(x, params))

    # Reference matched to the kernel's native precisions: bf16 MXU inputs and
    # bf16-stored intermediate activations, f32 accumulation / BN math.
    ref_matched = conv_block_reference(x, params, matmul_dtype=jnp.bfloat16,
                                       act_dtype=jnp.bfloat16)
    ref_f32 = conv_block_reference(x, params)

    assert out.shape == (N, Cout, H, W), out.shape
    assert bool(jnp.all(jnp.isfinite(out)))
    # Tight check vs the precision-matched reference.
    assert jnp.allclose(out, ref_matched, rtol=2e-3, atol=2e-3), (
        float(jnp.max(jnp.abs(out - ref_matched))))
    # Loose sanity check vs the pure-f32 reference (bounds bf16 quantization).
    assert jnp.allclose(out, ref_f32, rtol=1e-1, atol=1e-1), (
        float(jnp.max(jnp.abs(out - ref_f32))))

    print("KERNEL_OK")
</pallas_src>

<mosaic_0001>
module attributes {stable_mosaic.version = 11 : i64} {
  func.func @kernel(%arg0: i32, %arg1: memref<1x336x128xbf16, #tpu.memory_space<vmem>>, %arg2: memref<1152x128xbf16, #tpu.memory_space<vmem>>, %arg3: memref<1x128xf32, #tpu.memory_space<vmem>>, %arg4: memref<336x1xf32, #tpu.memory_space<vmem>>, %arg5: memref<1x336x128xbf16, #tpu.memory_space<vmem>>, %arg6: memref<1x2x128xf32, #tpu.memory_space<vmem>>) attributes {dimension_semantics = [#tpu.dimension_semantics<parallel>], iteration_bounds = array<i64: 2>, scalar_prefetch = 0 : i64, scratch_operands = 0 : i64, tpu.core_type = #tpu.core_type<tc>, window_params = [{transform_indices = @transform_0, window_bounds = array<i64: 1, 336, 128>}, {pipeline_mode = #tpu.pipeline_mode<synchronous>, transform_indices = @transform_1, window_bounds = array<i64: 1152, 128>}, {pipeline_mode = #tpu.pipeline_mode<synchronous>, transform_indices = @transform_2, window_bounds = array<i64: 1, 128>}, {pipeline_mode = #tpu.pipeline_mode<synchronous>, transform_indices = @transform_3, window_bounds = array<i64: 336, 1>}, {transform_indices = @transform_4, window_bounds = array<i64: 1, 336, 128>}, {transform_indices = @transform_5, window_bounds = array<i64: 1, 2, 128>}]} {
    %c0 = arith.constant 0 : index
    %c0_0 = arith.constant 0 : index
    %c0_1 = arith.constant 0 : index
    %0 = vector.load %arg1[%c0, %c0_0, %c0_1] : memref<1x336x128xbf16, #tpu.memory_space<vmem>>, vector<1x336x128xbf16>
    %1 = vector.shape_cast %0 : vector<1x336x128xbf16> to vector<336x128xbf16>
    %2 = arith.extf %1 : vector<336x128xbf16> to vector<336x128xf32>
    %c0_2 = arith.constant 0 : index
    %c0_3 = arith.constant 0 : index
    %3 = vector.load %arg4[%c0_2, %c0_3] : memref<336x1xf32, #tpu.memory_space<vmem>>, vector<336x1xf32>
    %c19_i32 = arith.constant 19 : i32
    %4 = tpu.dynamic_rotate %2 by %c19_i32 dim 0 : vector<336x128xf32>, i32 -> vector<336x128xf32>
    %5 = arith.truncf %4 : vector<336x128xf32> to vector<336x128xbf16>
    %c18_i32 = arith.constant 18 : i32
    %6 = tpu.dynamic_rotate %2 by %c18_i32 dim 0 : vector<336x128xf32>, i32 -> vector<336x128xf32>
    %7 = arith.truncf %6 : vector<336x128xf32> to vector<336x128xbf16>
    %c17_i32 = arith.constant 17 : i32
    %8 = tpu.dynamic_rotate %2 by %c17_i32 dim 0 : vector<336x128xf32>, i32 -> vector<336x128xf32>
    %9 = arith.truncf %8 : vector<336x128xf32> to vector<336x128xbf16>
    %c1_i32 = arith.constant 1 : i32
    %10 = tpu.dynamic_rotate %2 by %c1_i32 dim 0 : vector<336x128xf32>, i32 -> vector<336x128xf32>
    %11 = arith.truncf %10 : vector<336x128xf32> to vector<336x128xbf16>
    %12 = arith.truncf %2 : vector<336x128xf32> to vector<336x128xbf16>
    %c335_i32 = arith.constant 335 : i32
    %13 = tpu.dynamic_rotate %2 by %c335_i32 dim 0 : vector<336x128xf32>, i32 -> vector<336x128xf32>
    %14 = arith.truncf %13 : vector<336x128xf32> to vector<336x128xbf16>
    %c319_i32 = arith.constant 319 : i32
    %15 = tpu.dynamic_rotate %2 by %c319_i32 dim 0 : vector<336x128xf32>, i32 -> vector<336x128xf32>
    %16 = arith.truncf %15 : vector<336x128xf32> to vector<336x128xbf16>
    %c318_i32 = arith.constant 318 : i32
    %17 = tpu.dynamic_rotate %2 by %c318_i32 dim 0 : vector<336x128xf32>, i32 -> vector<336x128xf32>
    %18 = arith.truncf %17 : vector<336x128xf32> to vector<336x128xbf16>
    %c317_i32 = arith.constant 317 : i32
    %19 = tpu.dynamic_rotate %2 by %c317_i32 dim 0 : vector<336x128xf32>, i32 -> vector<336x128xf32>
    %20 = arith.truncf %19 : vector<336x128xf32> to vector<336x128xbf16>
    %21 = tpu.concatenate %5, %7, %9, %11, %12, %14, %16, %18, %20 in 1 : vector<336x128xbf16>, vector<336x128xbf16>, vector<336x128xbf16>, vector<336x128xbf16>, vector<336x128xbf16>, vector<336x128xbf16>, vector<336x128xbf16>, vector<336x128xbf16>, vector<336x128xbf16> -> vector<336x1152xbf16>
    %c0_4 = arith.constant 0 : index
    %c0_5 = arith.constant 0 : index
    %22 = vector.load %arg2[%c0_4, %c0_5] : memref<1152x128xbf16, #tpu.memory_space<vmem>>, vector<1152x128xbf16>
    %cst = arith.constant dense<0.000000e+00> : vector<336x128xf32>
    %23 = tpu.matmul %21, %22, %cst {dimension_numbers = #tpu.dot_dimension_numbers<[1], [0], [0], [1], [0, 0, 1, 1], [], []>} : vector<336x1152xbf16>, vector<1152x128xbf16>, vector<336x128xf32> -> vector<336x128xf32>
    %c0_6 = arith.constant 0 : index
    %c0_7 = arith.constant 0 : index
    %24 = vector.load %arg3[%c0_6, %c0_7] : memref<1x128xf32, #tpu.memory_space<vmem>>, vector<1x128xf32>
    %25 = vector.broadcast %24 : vector<1x128xf32> to vector<336x128xf32>
    %26 = arith.addf %23, %25 : vector<336x128xf32>
    %cst_8 = arith.constant 0.000000e+00 : f32
    %27 = vector.broadcast %cst_8 : f32 to vector<336x128xf32>
    %28 = arith.cmpf ogt, %26, %27 : vector<336x128xf32>
    %cst_9 = arith.constant 0.000000e+00 : f32
    %29 = vector.broadcast %cst_9 : f32 to vector<336x128xf32>
    %30 = arith.minimumf %26, %29 : vector<336x128xf32>
    %31 = math.exp %30 : vector<336x128xf32>
    %cst_10 = arith.constant 1.000000e+00 : f32
    %32 = vector.broadcast %cst_10 : f32 to vector<336x128xf32>
    %33 = arith.subf %31, %32 : vector<336x128xf32>
    %34 = arith.select %28, %26, %33 : vector<336x128xi1>, vector<336x128xf32>
    %35 = vector.broadcast %3 : vector<336x1xf32> to vector<336x128xf32>
    %36 = arith.mulf %34, %35 : vector<336x128xf32>
    %37 = arith.truncf %36 : vector<336x128xf32> to vector<336x128xbf16>
    %c0_11 = arith.constant 0 : index
    %c0_12 = arith.constant 0 : index
    %c0_13 = arith.constant 0 : index
    %38 = vector.load %arg5[%c0_11, %c0_12, %c0_13] : memref<1x336x128xbf16, #tpu.memory_space<vmem>>, vector<1x336x128xbf16>
    %39 = vector.shape_cast %38 : vector<1x336x128xbf16> to vector<336x128xbf16>
    %40 = vector.shape_cast %37 : vector<336x128xbf16> to vector<1x336x128xbf16>
    tpu.vector_store %arg5[%c0_11, %c0_12, %c0_13], %40 {strides = array<i32>} : memref<1x336x128xbf16, #tpu.memory_space<vmem>>, vector<1x336x128xbf16>,
    %41 = arith.extf %37 : vector<336x128xbf16> to vector<336x128xf32>
    %cst_14 = arith.constant dense<0.000000e+00> : vector<128xf32>
    %42 = vector.multi_reduction <add>, %41, %cst_14 [0] : vector<336x128xf32> to vector<128xf32>
    %43 = vector.shape_cast %42 : vector<128xf32> to vector<1x128xf32>
    %44 = arith.mulf %41, %41 : vector<336x128xf32>
    %cst_15 = arith.constant dense<0.000000e+00> : vector<128xf32>
    %45 = vector.multi_reduction <add>, %44, %cst_15 [0] : vector<336x128xf32> to vector<128xf32>
    %46 = vector.shape_cast %45 : vector<128xf32> to vector<1x128xf32>
    %47 = tpu.concatenate %43, %46 in 0 : vector<1x128xf32>, vector<1x128xf32> -> vector<2x128xf32>
    %c0_16 = arith.constant 0 : index
    %c0_17 = arith.constant 0 : index
    %c0_18 = arith.constant 0 : index
    %48 = vector.load %arg6[%c0_16, %c0_17, %c0_18] : memref<1x2x128xf32, #tpu.memory_space<vmem>>, vector<1x2x128xf32>
    %49 = vector.shape_cast %48 : vector<1x2x128xf32> to vector<2x128xf32>
    %50 = vector.shape_cast %47 : vector<2x128xf32> to vector<1x2x128xf32>
    tpu.vector_store %arg6[%c0_16, %c0_17, %c0_18], %50 {strides = array<i32>} : memref<1x2x128xf32, #tpu.memory_space<vmem>>, vector<1x2x128xf32>,
    return
  }
  func.func @transform_0(%arg0: i32) -> (i32, i32, i32) {
    %c0_i32 = arith.constant 0 : i32
    %c0_i32_0 = arith.constant 0 : i32
    %c0_i32_1 = arith.constant 0 : i32
    return %arg0, %c0_i32, %c0_i32_0 : i32, i32, i32
  }
  func.func @transform_1(%arg0: i32) -> (i32, i32) {
    %c0_i32 = arith.constant 0 : i32
    %c0_i32_0 = arith.constant 0 : i32
    %c0_i32_1 = arith.constant 0 : i32
    return %c0_i32, %c0_i32_0 : i32, i32
  }
  func.func @transform_2(%arg0: i32) -> (i32, i32) {
    %c0_i32 = arith.constant 0 : i32
    %c0_i32_0 = arith.constant 0 : i32
    %c0_i32_1 = arith.constant 0 : i32
    return %c0_i32, %c0_i32_0 : i32, i32
  }
  func.func @transform_3(%arg0: i32) -> (i32, i32) {
    %c0_i32 = arith.constant 0 : i32
    %c0_i32_0 = arith.constant 0 : i32
    %c0_i32_1 = arith.constant 0 : i32
    return %c0_i32, %c0_i32_0 : i32, i32
  }
  func.func @transform_4(%arg0: i32) -> (i32, i32, i32) {
    %c0_i32 = arith.constant 0 : i32
    %c0_i32_0 = arith.constant 0 : i32
    %c0_i32_1 = arith.constant 0 : i32
    return %arg0, %c0_i32, %c0_i32_0 : i32, i32, i32
  }
  func.func @transform_5(%arg0: i32) -> (i32, i32, i32) {
    %c0_i32 = arith.constant 0 : i32
    %c0_i32_0 = arith.constant 0 : i32
    %c0_i32_1 = arith.constant 0 : i32
    return %arg0, %c0_i32, %c0_i32_0 : i32, i32, i32
  }
}

module attributes {stable_mosaic.version = 11 : i64} {
  func.func @kernel(%arg0: i32, %arg1: memref<1x336x128xbf16, #tpu.memory_space<vmem>>, %arg2: memref<1x128xf32, #tpu.memory_space<vmem>>, %arg3: memref<1x128xf32, #tpu.memory_space<vmem>>, %arg4: memref<1152x128xbf16, #tpu.memory_space<vmem>>, %arg5: memref<1x128xf32, #tpu.memory_space<vmem>>, %arg6: memref<336x1xf32, #tpu.memory_space<vmem>>, %arg7: memref<1x336x128xbf16, #tpu.memory_space<vmem>>, %arg8: memref<1x2x128xf32, #tpu.memory_space<vmem>>) attributes {dimension_semantics = [#tpu.dimension_semantics<parallel>], iteration_bounds = array<i64: 2>, scalar_prefetch = 0 : i64, scratch_operands = 0 : i64, tpu.core_type = #tpu.core_type<tc>, window_params = [{transform_indices = @transform_0, window_bounds = array<i64: 1, 336, 128>}, {pipeline_mode = #tpu.pipeline_mode<synchronous>, transform_indices = @transform_1, window_bounds = array<i64: 1, 128>}, {pipeline_mode = #tpu.pipeline_mode<synchronous>, transform_indices = @transform_2, window_bounds = array<i64: 1, 128>}, {pipeline_mode = #tpu.pipeline_mode<synchronous>, transform_indices = @transform_3, window_bounds = array<i64: 1152, 128>}, {pipeline_mode = #tpu.pipeline_mode<synchronous>, transform_indices = @transform_4, window_bounds = array<i64: 1, 128>}, {pipeline_mode = #tpu.pipeline_mode<synchronous>, transform_indices = @transform_5, window_bounds = array<i64: 336, 1>}, {transform_indices = @transform_6, window_bounds = array<i64: 1, 336, 128>}, {transform_indices = @transform_7, window_bounds = array<i64: 1, 2, 128>}]} {
    %c0 = arith.constant 0 : index
    %c0_0 = arith.constant 0 : index
    %0 = vector.load %arg6[%c0, %c0_0] : memref<336x1xf32, #tpu.memory_space<vmem>>, vector<336x1xf32>
    %c0_1 = arith.constant 0 : index
    %c0_2 = arith.constant 0 : index
    %c0_3 = arith.constant 0 : index
    %1 = vector.load %arg1[%c0_1, %c0_2, %c0_3] : memref<1x336x128xbf16, #tpu.memory_space<vmem>>, vector<1x336x128xbf16>
    %2 = vector.shape_cast %1 : vector<1x336x128xbf16> to vector<336x128xbf16>
    %3 = arith.extf %2 : vector<336x128xbf16> to vector<336x128xf32>
    %c0_4 = arith.constant 0 : index
    %c0_5 = arith.constant 0 : index
    %4 = vector.load %arg2[%c0_4, %c0_5] : memref<1x128xf32, #tpu.memory_space<vmem>>, vector<1x128xf32>
    %5 = vector.broadcast %4 : vector<1x128xf32> to vector<336x128xf32>
    %6 = arith.mulf %3, %5 : vector<336x128xf32>
    %c0_6 = arith.constant 0 : index
    %c0_7 = arith.constant 0 : index
    %7 = vector.load %arg3[%c0_6, %c0_7] : memref<1x128xf32, #tpu.memory_space<vmem>>, vector<1x128xf32>
    %8 = vector.broadcast %7 : vector<1x128xf32> to vector<336x128xf32>
    %9 = arith.addf %6, %8 : vector<336x128xf32>
    %10 = vector.broadcast %0 : vector<336x1xf32> to vector<336x128xf32>
    %11 = arith.mulf %9, %10 : vector<336x128xf32>
    %c19_i32 = arith.constant 19 : i32
    %12 = tpu.dynamic_rotate %11 by %c19_i32 dim 0 : vector<336x128xf32>, i32 -> vector<336x128xf32>
    %13 = arith.truncf %12 : vector<336x128xf32> to vector<336x128xbf16>
    %c18_i32 = arith.constant 18 : i32
    %14 = tpu.dynamic_rotate %11 by %c18_i32 dim 0 : vector<336x128xf32>, i32 -> vector<336x128xf32>
    %15 = arith.truncf %14 : vector<336x128xf32> to vector<336x128xbf16>
    %c17_i32 = arith.constant 17 : i32
    %16 = tpu.dynamic_rotate %11 by %c17_i32 dim 0 : vector<336x128xf32>, i32 -> vector<336x128xf32>
    %17 = arith.truncf %16 : vector<336x128xf32> to vector<336x128xbf16>
    %c1_i32 = arith.constant 1 : i32
    %18 = tpu.dynamic_rotate %11 by %c1_i32 dim 0 : vector<336x128xf32>, i32 -> vector<336x128xf32>
    %19 = arith.truncf %18 : vector<336x128xf32> to vector<336x128xbf16>
    %20 = arith.truncf %11 : vector<336x128xf32> to vector<336x128xbf16>
    %c335_i32 = arith.constant 335 : i32
    %21 = tpu.dynamic_rotate %11 by %c335_i32 dim 0 : vector<336x128xf32>, i32 -> vector<336x128xf32>
    %22 = arith.truncf %21 : vector<336x128xf32> to vector<336x128xbf16>
    %c319_i32 = arith.constant 319 : i32
    %23 = tpu.dynamic_rotate %11 by %c319_i32 dim 0 : vector<336x128xf32>, i32 -> vector<336x128xf32>
    %24 = arith.truncf %23 : vector<336x128xf32> to vector<336x128xbf16>
    %c318_i32 = arith.constant 318 : i32
    %25 = tpu.dynamic_rotate %11 by %c318_i32 dim 0 : vector<336x128xf32>, i32 -> vector<336x128xf32>
    %26 = arith.truncf %25 : vector<336x128xf32> to vector<336x128xbf16>
    %c317_i32 = arith.constant 317 : i32
    %27 = tpu.dynamic_rotate %11 by %c317_i32 dim 0 : vector<336x128xf32>, i32 -> vector<336x128xf32>
    %28 = arith.truncf %27 : vector<336x128xf32> to vector<336x128xbf16>
    %29 = tpu.concatenate %13, %15, %17, %19, %20, %22, %24, %26, %28 in 1 : vector<336x128xbf16>, vector<336x128xbf16>, vector<336x128xbf16>, vector<336x128xbf16>, vector<336x128xbf16>, vector<336x128xbf16>, vector<336x128xbf16>, vector<336x128xbf16>, vector<336x128xbf16> -> vector<336x1152xbf16>
    %c0_8 = arith.constant 0 : index
    %c0_9 = arith.constant 0 : index
    %30 = vector.load %arg4[%c0_8, %c0_9] : memref<1152x128xbf16, #tpu.memory_space<vmem>>, vector<1152x128xbf16>
    %cst = arith.constant dense<0.000000e+00> : vector<336x128xf32>
    %31 = tpu.matmul %29, %30, %cst {dimension_numbers = #tpu.dot_dimension_numbers<[1], [0], [0], [1], [0, 0, 1, 1], [], []>} : vector<336x1152xbf16>, vector<1152x128xbf16>, vector<336x128xf32> -> vector<336x128xf32>
    %c0_10 = arith.constant 0 : index
    %c0_11 = arith.constant 0 : index
    %32 = vector.load %arg5[%c0_10, %c0_11] : memref<1x128xf32, #tpu.memory_space<vmem>>, vector<1x128xf32>
    %33 = vector.broadcast %32 : vector<1x128xf32> to vector<336x128xf32>
    %34 = arith.addf %31, %33 : vector<336x128xf32>
    %cst_12 = arith.constant 0.000000e+00 : f32
    %35 = vector.broadcast %cst_12 : f32 to vector<336x128xf32>
    %36 = arith.cmpf ogt, %34, %35 : vector<336x128xf32>
    %cst_13 = arith.constant 0.000000e+00 : f32
    %37 = vector.broadcast %cst_13 : f32 to vector<336x128xf32>
    %38 = arith.minimumf %34, %37 : vector<336x128xf32>
    %39 = math.exp %38 : vector<336x128xf32>
    %cst_14 = arith.constant 1.000000e+00 : f32
    %40 = vector.broadcast %cst_14 : f32 to vector<336x128xf32>
    %41 = arith.subf %39, %40 : vector<336x128xf32>
    %42 = arith.select %36, %34, %41 : vector<336x128xi1>, vector<336x128xf32>
    %43 = vector.broadcast %0 : vector<336x1xf32> to vector<336x128xf32>
    %44 = arith.mulf %42, %43 : vector<336x128xf32>
    %45 = arith.truncf %44 : vector<336x128xf32> to vector<336x128xbf16>
    %c0_15 = arith.constant 0 : index
    %c0_16 = arith.constant 0 : index
    %c0_17 = arith.constant 0 : index
    %46 = vector.load %arg7[%c0_15, %c0_16, %c0_17] : memref<1x336x128xbf16, #tpu.memory_space<vmem>>, vector<1x336x128xbf16>
    %47 = vector.shape_cast %46 : vector<1x336x128xbf16> to vector<336x128xbf16>
    %48 = vector.shape_cast %45 : vector<336x128xbf16> to vector<1x336x128xbf16>
    tpu.vector_store %arg7[%c0_15, %c0_16, %c0_17], %48 {strides = array<i32>} : memref<1x336x128xbf16, #tpu.memory_space<vmem>>, vector<1x336x128xbf16>,
    %49 = arith.extf %45 : vector<336x128xbf16> to vector<336x128xf32>
    %cst_18 = arith.constant dense<0.000000e+00> : vector<128xf32>
    %50 = vector.multi_reduction <add>, %49, %cst_18 [0] : vector<336x128xf32> to vector<128xf32>
    %51 = vector.shape_cast %50 : vector<128xf32> to vector<1x128xf32>
    %52 = arith.mulf %49, %49 : vector<336x128xf32>
    %cst_19 = arith.constant dense<0.000000e+00> : vector<128xf32>
    %53 = vector.multi_reduction <add>, %52, %cst_19 [0] : vector<336x128xf32> to vector<128xf32>
    %54 = vector.shape_cast %53 : vector<128xf32> to vector<1x128xf32>
    %55 = tpu.concatenate %51, %54 in 0 : vector<1x128xf32>, vector<1x128xf32> -> vector<2x128xf32>
    %c0_20 = arith.constant 0 : index
    %c0_21 = arith.constant 0 : index
    %c0_22 = arith.constant 0 : index
    %56 = vector.load %arg8[%c0_20, %c0_21, %c0_22] : memref<1x2x128xf32, #tpu.memory_space<vmem>>, vector<1x2x128xf32>
    %57 = vector.shape_cast %56 : vector<1x2x128xf32> to vector<2x128xf32>
    %58 = vector.shape_cast %55 : vector<2x128xf32> to vector<1x2x128xf32>
    tpu.vector_store %arg8[%c0_20, %c0_21, %c0_22], %58 {strides = array<i32>} : memref<1x2x128xf32, #tpu.memory_space<vmem>>, vector<1x2x128xf32>,
    return
  }
  func.func @transform_0(%arg0: i32) -> (i32, i32, i32) {
    %c0_i32 = arith.constant 0 : i32
    %c0_i32_0 = arith.constant 0 : i32
    %c0_i32_1 = arith.constant 0 : i32
    return %arg0, %c0_i32, %c0_i32_0 : i32, i32, i32
  }
  func.func @transform_1(%arg0: i32) -> (i32, i32) {
    %c0_i32 = arith.constant 0 : i32
    %c0_i32_0 = arith.constant 0 : i32
    %c0_i32_1 = arith.constant 0 : i32
    return %c0_i32, %c0_i32_0 : i32, i32
  }
  func.func @transform_2(%arg0: i32) -> (i32, i32) {
    %c0_i32 = arith.constant 0 : i32
    %c0_i32_0 = arith.constant 0 : i32
    %c0_i32_1 = arith.constant 0 : i32
    return %c0_i32, %c0_i32_0 : i32, i32
  }
  func.func @transform_3(%arg0: i32) -> (i32, i32) {
    %c0_i32 = arith.constant 0 : i32
    %c0_i32_0 = arith.constant 0 : i32
    %c0_i32_1 = arith.constant 0 : i32
    return %c0_i32, %c0_i32_0 : i32, i32
  }
  func.func @transform_4(%arg0: i32) -> (i32, i32) {
    %c0_i32 = arith.constant 0 : i32
    %c0_i32_0 = arith.constant 0 : i32
    %c0_i32_1 = arith.constant 0 : i32
    return %c0_i32, %c0_i32_0 : i32, i32
  }
  func.func @transform_5(%arg0: i32) -> (i32, i32) {
    %c0_i32 = arith.constant 0 : i32
    %c0_i32_0 = arith.constant 0 : i32
    %c0_i32_1 = arith.constant 0 : i32
    return %c0_i32, %c0_i32_0 : i32, i32
  }
  func.func @transform_6(%arg0: i32) -> (i32, i32, i32) {
    %c0_i32 = arith.constant 0 : i32
    %c0_i32_0 = arith.constant 0 : i32
    %c0_i32_1 = arith.constant 0 : i32
    return %arg0, %c0_i32, %c0_i32_0 : i32, i32, i32
  }
  func.func @transform_7(%arg0: i32) -> (i32, i32, i32) {
    %c0_i32 = arith.constant 0 : i32
    %c0_i32_0 = arith.constant 0 : i32
    %c0_i32_1 = arith.constant 0 : i32
    return %arg0, %c0_i32, %c0_i32_0 : i32, i32, i32
  }
}

</mosaic_0001>

<llo_original>
// kernel: conv_block_forward.2
$region0: #{conv_block_forward.2}
  #allocation0 [shape = 'u32[]', space=smem, size = 0x4, offset = 0x4, fixed_abs, tag = 'smem constant byte address 0x4 - core index']
  #allocation1 [shape = 'u32[144,128]{1,0:T(1,128)}', space=vmem, size = 0x12000, scoped, tag = 'internal scratch']
  %s0 = inlined_call_operand.vmem [shape: bf16[2,336,128], index: 0, kind: input, shape index: {}]
  %s1 = inlined_call_operand.vmem [shape: bf16[1152,128], index: 1, kind: input, shape index: {}]
  %s2 = inlined_call_operand.vmem [shape: f32[1,128], index: 2, kind: input, shape index: {}]
  %s3 = inlined_call_operand.vmem [shape: f32[336,1], index: 3, kind: input, shape index: {}]
  %s4 = inlined_call_operand.vmem [shape: bf16[2,336,128], index: 4, kind: output, shape index: {0}]
  %s5 = inlined_call_operand.vmem [shape: f32[2,2,128], index: 5, kind: output, shape index: {1}]
  %6 = xla_tuple %s4, %s5
  %s7 = sld [smem:[#allocation0]]
  $region57: #{conv_block_forward.2} parent=0
    _
  %s9 = ssub.s32 1, %s7
  %s10 = scalar_select 0, %s9, %s7
  loop: start=0, step=1, limit=4
  $region2: #{conv_block_forward.2} parent=0 // loop_pre_header
    _
  $region3: #{conv_block_forward.2} parent=0 // loop_header
    %s12 = sphi 0, %s16
    %p13 = scmp.ge.s32.totalorder %s12, 4
    %s22 = sphi 0, %s24
    %s25 = sphi 0, %s22
    %s26 = sphi 0, %s25
    %s42 = sphi 0, %s26
    %s46 = sphi 0, %s46
    %s48 = sphi 0, %s46
    %s49 = sphi 0, %s48
    %s63 = sphi 0, %s49
    %s67 = sphi 0, %s67
    %s69 = sphi 0, %s67
    %s70 = sphi 0, %s69
    %s84 = sphi 0, %s70
    %s88 = sphi 0, %s88
    %s90 = sphi 0, %s88
    %s91 = sphi 0, %s90
    %s105 = sphi 0, %s91
    %s111 = sphi 0, %s113
    %s114 = sphi 0, %s111
    %s115 = sphi 0, %s114
    %s131 = sphi 0, %s115
    %s137 = sphi 0, %s139
    %s140 = sphi 0, %s137
    %s141 = sphi 0, %s140
    %s157 = sphi 0, %s141
  $region4: #{conv_block_forward.2} parent=0 // loop_header_branch
    %15 = sbr.rel (%p13) target = $region8
  $region5: #{conv_block_forward.2} parent=0 // loop_body
    %s17 = ssub.s32 %s12, 1
    %s18 = ssub.s32 %s12, 2
    %s19 = sadd.s32 %s12, 1
    %s20 = ssub.s32 %s12, %s19
    %p21 = scmp.eq.s32.totalorder %s20, 0
    %s23 = sadd.s32 %s22, 1
    %s24 = scalar_select %p21, %s22, %s23
    %p27 = pneg %p21
    %p28 = scmp.eq.s32.totalorder %s12, 1
    %p29 = por %p27, %p28
    %p30 = scmp.ne.s32.totalorder %s22, %s25
    %p31 = scmp.eq.s32.totalorder %s12, 0
    %p32 = por %p30, %p31
    %p33 = scmp.ne.s32.totalorder %s22, %s25
    %p34 = scmp.eq.s32.totalorder %s17, 1
    %p35 = por %p33, %p34
    %p36 = scmp.ne.s32.totalorder %s25, %s26
    %p37 = scmp.eq.s32.totalorder %s17, 0
    %p38 = por %p36, %p37
    %p39 = scmp.ne.s32.totalorder %s25, %s26
    %p40 = scmp.eq.s32.totalorder %s18, 1
    %p41 = por %p39, %p40
    %p43 = scmp.ne.s32.totalorder %s26, %s42
    %p44 = scmp.eq.s32.totalorder %s18, 0
    %p45 = por %p43, %p44
    %s47 = sadd.s32 %s46, 1
    %p50 = scmp.eq.s32.totalorder %s12, 1
    %p51 = scmp.ne.s32.totalorder %s46, %s48
    %p52 = scmp.eq.s32.totalorder %s12, 0
    %p53 = por %p51, %p52
    %p54 = scmp.ne.s32.totalorder %s46, %s48
    %p55 = scmp.eq.s32.totalorder %s17, 1
    %p56 = por %p54, %p55
    %p57 = scmp.ne.s32.totalorder %s48, %s49
    %p58 = scmp.eq.s32.totalorder %s17, 0
    %p59 = por %p57, %p58
    %p60 = scmp.ne.s32.totalorder %s48, %s49
    %p61 = scmp.eq.s32.totalorder %s18, 1
    %p62 = por %p60, %p61
    %p64 = scmp.ne.s32.totalorder %s49, %s63
    %p65 = scmp.eq.s32.totalorder %s18, 0
    %p66 = por %p64, %p65
    %s68 = sadd.s32 %s67, 1
    %p71 = scmp.eq.s32.totalorder %s12, 1
    %p72 = scmp.ne.s32.totalorder %s67, %s69
    %p73 = scmp.eq.s32.totalorder %s12, 0
    %p74 = por %p72, %p73
    %p75 = scmp.ne.s32.totalorder %s67, %s69
    %p76 = scmp.eq.s32.totalorder %s17, 1
    %p77 = por %p75, %p76
    %p78 = scmp.ne.s32.totalorder %s69, %s70
    %p79 = scmp.eq.s32.totalorder %s17, 0
    %p80 = por %p78, %p79
    %p81 = scmp.ne.s32.totalorder %s69, %s70
    %p82 = scmp.eq.s32.totalorder %s18, 1
    %p83 = por %p81, %p82
    %p85 = scmp.ne.s32.totalorder %s70, %s84
    %p86 = scmp.eq.s32.totalorder %s18, 0
    %p87 = por %p85, %p86
    %s89 = sadd.s32 %s88, 1
    %p92 = scmp.eq.s32.totalorder %s12, 1
    %p93 = scmp.ne.s32.totalorder %s88, %s90
    %p94 = scmp.eq.s32.totalorder %s12, 0
    %p95 = por %p93, %p94
    %p96 = scmp.ne.s32.totalorder %s88, %s90
    %p97 = scmp.eq.s32.totalorder %s17, 1
    %p98 = por %p96, %p97
    %p99 = scmp.ne.s32.totalorder %s90, %s91
    %p100 = scmp.eq.s32.totalorder %s17, 0
    %p101 = por %p99, %p100
    %p102 = scmp.ne.s32.totalorder %s90, %s91
    %p103 = scmp.eq.s32.totalorder %s18, 1
    %p104 = por %p102, %p103
    %p106 = scmp.ne.s32.totalorder %s91, %s105
    %p107 = scmp.eq.s32.totalorder %s18, 0
    %p108 = por %p106, %p107
    %s109 = ssub.s32 %s12, %s19
    %p110 = scmp.eq.s32.totalorder %s109, 0
    %s112 = sadd.s32 %s111, 1
    %s113 = scalar_select %p110, %s111, %s112
    %p116 = pneg %p110
    %p117 = scmp.eq.s32.totalorder %s12, 1
    %p118 = por %p116, %p117
    %p119 = scmp.ne.s32.totalorder %s111, %s114
    %p120 = scmp.eq.s32.totalorder %s12, 0
    %p121 = por %p119, %p120
    %p122 = scmp.ne.s32.totalorder %s111, %s114
    %p123 = scmp.eq.s32.totalorder %s17, 1
    %p124 = por %p122, %p123
    %p125 = scmp.ne.s32.totalorder %s114, %s115
    %p126 = scmp.eq.s32.totalorder %s17, 0
    %p127 = por %p125, %p126
    %p128 = scmp.ne.s32.totalorder %s114, %s115
    %p129 = scmp.eq.s32.totalorder %s18, 1
    %p130 = por %p128, %p129
    %p132 = scmp.ne.s32.totalorder %s115, %s131
    %p133 = scmp.eq.s32.totalorder %s18, 0
    %p134 = por %p132, %p133
    %s135 = ssub.s32 %s12, %s19
    %p136 = scmp.eq.s32.totalorder %s135, 0
    %s138 = sadd.s32 %s137, 1
    %s139 = scalar_select %p136, %s137, %s138
    %p142 = pneg %p136
    %p143 = scmp.eq.s32.totalorder %s12, 1
    %p144 = por %p142, %p143
    %p145 = scmp.ne.s32.totalorder %s137, %s140
    %p146 = scmp.eq.s32.totalorder %s12, 0
    %p147 = por %p145, %p146
    %p148 = scmp.ne.s32.totalorder %s137, %s140
    %p149 = scmp.eq.s32.totalorder %s17, 1
    %p150 = por %p148, %p149
    %p151 = scmp.ne.s32.totalorder %s140, %s141
    %p152 = scmp.eq.s32.totalorder %s17, 0
    %p153 = por %p151, %p152
    %p154 = scmp.ne.s32.totalorder %s140, %s141
    %p155 = scmp.eq.s32.totalorder %s18, 1
    %p156 = por %p154, %p155
    %p158 = scmp.ne.s32.totalorder %s141, %s157
    %p159 = scmp.eq.s32.totalorder %s18, 0
    %p160 = por %p158, %p159
    %p161 = scmp.le.s32.totalorder 1, %s12
    %p162 = scmp.lt.s32.totalorder %s12, 3
    %p163 = pnand %p161, %p162
    %p164 = pneg %p163
    // Predicated region
    $region9: #{conv_block_forward.2} parent=5 // pred_check
      _
    $region10: #{conv_block_forward.2} parent=5 // pred_check_branch
      %166 = sbr.rel (%p163) target = $region12
    $region11: #{conv_block_forward.2} parent=5 // pred_region
      %s167 = ssub.s32 %s12, 1
      // Predicated region
      $region13: #{conv_block_forward.2} parent=11 // pred_check
        %p168 = pneg %p59
      $region14: #{conv_block_forward.2} parent=11 // pred_check_branch
        %170 = sbr.rel (%p168) target = $region16
      $region15: #{conv_block_forward.2} parent=11 // pred_region
        _
      $region16: #{conv_block_forward.2} parent=11 // pred_fallthru
        _
      // Predicated region
      $region17: #{conv_block_forward.2} parent=11 // pred_check
        %p171 = pneg %p80
      $region18: #{conv_block_forward.2} parent=11 // pred_check_branch
        %173 = sbr.rel (%p171) target = $region20
      $region19: #{conv_block_forward.2} parent=11 // pred_region
        _
      $region20: #{conv_block_forward.2} parent=11 // pred_fallthru
        _
      // Predicated region
      $region21: #{conv_block_forward.2} parent=11 // pred_check
        %p174 = pneg %p101
      $region22: #{conv_block_forward.2} parent=11 // pred_check_branch
        %176 = sbr.rel (%p174) target = $region24
      $region23: #{conv_block_forward.2} parent=11 // pred_region
        _
      $region24: #{conv_block_forward.2} parent=11 // pred_fallthru
        _
    $region12: #{conv_block_forward.2} parent=5 // pred_fallthru
      _
    %p177 = scmp.lt.s32.totalorder %s12, 2
    // Predicated region
    $region25: #{conv_block_forward.2} parent=5 // pred_check
      %p178 = pneg %p177
    $region26: #{conv_block_forward.2} parent=5 // pred_check_branch
      %180 = sbr.rel (%p178) target = $region28
    $region27: #{conv_block_forward.2} parent=5 // pred_region
      // Predicated region
      $region29: #{conv_block_forward.2} parent=27 // pred_check
        %p181 = pneg %p32
      $region30: #{conv_block_forward.2} parent=27 // pred_check_branch
        %183 = sbr.rel (%p181) target = $region32
      $region31: #{conv_block_forward.2} parent=27 // pred_region
        %p184 = scmp.lt.s32.totalorder %s12, 1
        %s185 = scalar_select %p184, %s12, 1
        %s186 = smul.addr %s185, 42
        %s187 = smul.addr %s186, 4
        %s188 = scalar_lea.vmem %s0, %s187
      $region32: #{conv_block_forward.2} parent=27 // pred_fallthru
        _
    $region28: #{conv_block_forward.2} parent=5 // pred_fallthru
      _
    %p189 = scmp.le.s32.totalorder 1, %s12
    %p190 = scmp.lt.s32.totalorder %s12, 3
    %p191 = pnand %p189, %p190
    %p192 = pneg %p191
    // Predicated region
    $region33: #{conv_block_forward.2} parent=5 // pred_check
      _
    $region34: #{conv_block_forward.2} parent=5 // pred_check_branch
      %194 = sbr.rel (%p191) target = $region36
    $region35: #{conv_block_forward.2} parent=5 // pred_region
      %s195 = ssub.s32 %s12, 1
      %p196 = scmp.lt.s32.totalorder %s17, 1
      %s197 = scalar_select %p196, %s17, 1
      %s198 = smul.addr %s197, 42
      %s199 = smul.addr %s198, 4
      %s200 = scalar_lea.vmem %s0, %s199
      %p201 = pneg %p38
      %p202 = pneg %p35
      %p203 = pneg %p59
      %p204 = pneg %p56
      %p205 = pneg %p80
      %p206 = pneg %p77
      %p207 = pneg %p101
      %p208 = pneg %p98
      %p209 = pneg %p127
      %p210 = pneg %p124
      %p211 = scmp.lt.s32.totalorder %s17, 1
      %s212 = scalar_select %p211, %s17, 1
      %s213 = smul.addr %s212, 42
      %s214 = smul.addr %s213, 4
      %s215 = scalar_lea.vmem %s4, %s214
      %p216 = pneg %p153
      %p217 = pneg %p150
      %p218 = scmp.lt.s32.totalorder %s17, 1
      %s219 = scalar_select %p218, %s17, 1
      %s220 = smul.addr %s219, 2
      %s221 = scalar_lea.vmem %s5, %s220
      %p222 = scmp.lt.s32.totalorder %s17, 1
      %s223 = scalar_select %p222, %s17, 1
      %s224 = smul.addr %s223, 42
      %s225 = smul.addr %s224, 4
      %s226 = scalar_lea.vmem %s0, %s225
      %p227 = scmp.lt.s32.totalorder %s17, 1
      %s228 = scalar_select %p227, %s17, 1
      %s229 = smul.addr %s228, 42
      %s230 = smul.addr %s229, 4
      %s231 = scalar_lea.vmem %s4, %s230
      %p232 = scmp.lt.s32.totalorder %s17, 1
      %s233 = scalar_select %p232, %s17, 1
      %s234 = smul.addr %s233, 2
      %s235 = scalar_lea.vmem %s5, %s234
      %v237 = vld [vmem:[%s226] sm:$0xf]
      %v238 = vld [vmem:[%s226 + $0x4] sm:$0xf]
      %v239 = vld [vmem:[%s226 + $0x8] sm:$0xf]
      %v240 = vld [vmem:[%s226 + $0xc] sm:$0xf]
      %v241 = vld [vmem:[%s226 + $0x10] sm:$0xf]
      %v242 = vld [vmem:[%s226 + $0x14] sm:$0xf]
      %v243 = vld [vmem:[%s226 + $0x18] sm:$0xf]
      %v244 = vld [vmem:[%s226 + $0x1c] sm:$0xf]
      %v245 = vld [vmem:[%s226 + $0x20] sm:$0xf]
      %v246 = vld [vmem:[%s226 + $0x24] sm:$0xf]
      %v247 = vld [vmem:[%s226 + $0x28] sm:$0xf]
      %v248 = vld [vmem:[%s226 + $0x2c] sm:$0xf]
      %v249 = vld [vmem:[%s226 + $0x30] sm:$0xf]
      %v250 = vld [vmem:[%s226 + $0x34] sm:$0xf]
      %v251 = vld [vmem:[%s226 + $0x38] sm:$0xf]
      %v252 = vld [vmem:[%s226 + $0x3c] sm:$0xf]
      %v253 = vld [vmem:[%s226 + $0x40] sm:$0xf]
      %v254 = vld [vmem:[%s226 + $0x44] sm:$0xf]
      %v255 = vld [vmem:[%s226 + $0x48] sm:$0xf]
      %v256 = vld [vmem:[%s226 + $0x4c] sm:$0xf]
      %v257 = vld [vmem:[%s226 + $0x50] sm:$0xf]
      %v258 = vld [vmem:[%s226 + $0x54] sm:$0xf]
      %v259 = vld [vmem:[%s226 + $0x58] sm:$0xf]
      %v260 = vld [vmem:[%s226 + $0x5c] sm:$0xf]
      %v261 = vld [vmem:[%s226 + $0x60] sm:$0xf]
      %v262 = vld [vmem:[%s226 + $0x64] sm:$0xf]
      %v263 = vld [vmem:[%s226 + $0x68] sm:$0xf]
      %v264 = vld [vmem:[%s226 + $0x6c] sm:$0xf]
      %v265 = vld [vmem:[%s226 + $0x70] sm:$0xf]
      %v266 = vld [vmem:[%s226 + $0x74] sm:$0xf]
      %v267 = vld [vmem:[%s226 + $0x78] sm:$0xf]
      %v268 = vld [vmem:[%s226 + $0x7c] sm:$0xf]
      %v269 = vld [vmem:[%s226 + $0x80] sm:$0xf]
      %v270 = vld [vmem:[%s226 + $0x84] sm:$0xf]
      %v271 = vld [vmem:[%s226 + $0x88] sm:$0xf]
      %v272 = vld [vmem:[%s226 + $0x8c] sm:$0xf]
      %v273 = vld [vmem:[%s226 + $0x90] sm:$0xf]
      %v274 = vld [vmem:[%s226 + $0x94] sm:$0xf]
      %v275 = vld [vmem:[%s226 + $0x98] sm:$0xf]
      %v276 = vld [vmem:[%s226 + $0x9c] sm:$0xf]
      %v277 = vld [vmem:[%s226 + $0xa0] sm:$0xf]
      %v278 = vld [vmem:[%s226 + $0xa4] sm:$0xf]
      %v279 = vunpack.c.l.bf16 %v237
      %v280 = vunpack.c.l.bf16 %v238
      %v281 = vunpack.c.l.bf16 %v239
      %v282 = vunpack.c.l.bf16 %v240
      %v283 = vunpack.c.l.bf16 %v241
      %v284 = vunpack.c.l.bf16 %v242
      %v285 = vunpack.c.l.bf16 %v243
      %v286 = vunpack.c.l.bf16 %v244
      %v287 = vunpack.c.l.bf16 %v245
      %v288 = vunpack.c.l.bf16 %v246
      %v289 = vunpack.c.l.bf16 %v247
      %v290 = vunpack.c.l.bf16 %v248
      %v291 = vunpack.c.l.bf16 %v249
      %v292 = vunpack.c.l.bf16 %v250
      %v293 = vunpack.c.l.bf16 %v251
      %v294 = vunpack.c.l.bf16 %v252
      %v295 = vunpack.c.l.bf16 %v253
      %v296 = vunpack.c.l.bf16 %v254
      %v297 = vunpack.c.l.bf16 %v255
      %v298 = vunpack.c.l.bf16 %v256
      %v299 = vunpack.c.l.bf16 %v257
      %v300 = vunpack.c.l.bf16 %v258
      %v301 = vunpack.c.l.bf16 %v259
      %v302 = vunpack.c.l.bf16 %v260
      %v303 = vunpack.c.l.bf16 %v261
      %v304 = vunpack.c.l.bf16 %v262
      %v305 = vunpack.c.l.bf16 %v263
      %v306 = vunpack.c.l.bf16 %v264
      %v307 = vunpack.c.l.bf16 %v265
      %v308 = vunpack.c.l.bf16 %v266
      %v309 = vunpack.c.l.bf16 %v267
      %v310 = vunpack.c.l.bf16 %v268
      %v311 = vunpack.c.l.bf16 %v269
      %v312 = vunpack.c.l.bf16 %v270
      %v313 = vunpack.c.l.bf16 %v271
      %v314 = vunpack.c.l.bf16 %v272
      %v315 = vunpack.c.l.bf16 %v273
      %v316 = vunpack.c.l.bf16 %v274
      %v317 = vunpack.c.l.bf16 %v275
      %v318 = vunpack.c.l.bf16 %v276
      %v319 = vunpack.c.l.bf16 %v277
      %v320 = vunpack.c.l.bf16 %v278
      %v321 = vld [vmem:[%s3] sm:$0xff]
      %v322 = vld [vmem:[%s3 + $0x8] sm:$0xff]
      %v323 = vld [vmem:[%s3 + $0x10] sm:$0xff]
      %v324 = vld [vmem:[%s3 + $0x18] sm:$0xff]
      %v325 = vld [vmem:[%s3 + $0x20] sm:$0xff]
      %v326 = vld [vmem:[%s3 + $0x28] sm:$0xff]
      %v327 = vld [vmem:[%s3 + $0x30] sm:$0xff]
      %v328 = vld [vmem:[%s3 + $0x38] sm:$0xff]
      %v329 = vld [vmem:[%s3 + $0x40] sm:$0xff]
      %v330 = vld [vmem:[%s3 + $0x48] sm:$0xff]
      %v331 = vld [vmem:[%s3 + $0x50] sm:$0xff]
      %v332 = vld [vmem:[%s3 + $0x58] sm:$0xff]
      %v333 = vld [vmem:[%s3 + $0x60] sm:$0xff]
      %v334 = vld [vmem:[%s3 + $0x68] sm:$0xff]
      %v335 = vld [vmem:[%s3 + $0x70] sm:$0xff]
      %v336 = vld [vmem:[%s3 + $0x78] sm:$0xff]
      %v337 = vld [vmem:[%s3 + $0x80] sm:$0xff]
      %v338 = vld [vmem:[%s3 + $0x88] sm:$0xff]
      %v339 = vld [vmem:[%s3 + $0x90] sm:$0xff]
      %v340 = vld [vmem:[%s3 + $0x98] sm:$0xff]
      %v341 = vld [vmem:[%s3 + $0xa0] sm:$0xff]
      %v342 = vld [vmem:[%s3 + $0xa8] sm:$0xff]
      %v343 = vld [vmem:[%s3 + $0xb0] sm:$0xff]
      %v344 = vld [vmem:[%s3 + $0xb8] sm:$0xff]
      %v345 = vld [vmem:[%s3 + $0xc0] sm:$0xff]
      %v346 = vld [vmem:[%s3 + $0xc8] sm:$0xff]
      %v347 = vld [vmem:[%s3 + $0xd0] sm:$0xff]
      %v348 = vld [vmem:[%s3 + $0xd8] sm:$0xff]
      %v349 = vld [vmem:[%s3 + $0xe0] sm:$0xff]
      %v350 = vld [vmem:[%s3 + $0xe8] sm:$0xff]
      %v351 = vld [vmem:[%s3 + $0xf0] sm:$0xff]
      %v352 = vld [vmem:[%s3 + $0xf8] sm:$0xff]
      %v353 = vld [vmem:[%s3 + $0x100] sm:$0xff]
      %v354 = vld [vmem:[%s3 + $0x108] sm:$0xff]
      %v355 = vld [vmem:[%s3 + $0x110] sm:$0xff]
      %v356 = vld [vmem:[%s3 + $0x118] sm:$0xff]
      %v357 = vld [vmem:[%s3 + $0x120] sm:$0xff]
      %v358 = vld [vmem:[%s3 + $0x128] sm:$0xff]
      %v359 = vld [vmem:[%s3 + $0x130] sm:$0xff]
      %v360 = vld [vmem:[%s3 + $0x138] sm:$0xff]
      %v361 = vld [vmem:[%s3 + $0x140] sm:$0xff]
      %v362 = vld [vmem:[%s3 + $0x148] sm:$0xff]
      %v363 = vrot.slane %v279, 5
      %v364 = vrot.slane %v280, 5
      %v365 = vrot.slane %v281, 5
      %v366 = vrot.slane %v282, 5
      %v367 = vrot.slane %v283, 5
      %v368 = vrot.slane %v284, 5
      %v369 = vrot.slane %v285, 5
      %v370 = vrot.slane %v286, 5
      %v371 = vrot.slane %v287, 5
      %v372 = vrot.slane %v288, 5
      %v373 = vrot.slane %v289, 5
      %v374 = vrot.slane %v290, 5
      %v375 = vrot.slane %v291, 5
      %v376 = vrot.slane %v292, 5
      %v377 = vrot.slane %v293, 5
      %v378 = vrot.slane %v294, 5
      %v379 = vrot.slane %v295, 5
      %v380 = vrot.slane %v296, 5
      %v381 = vrot.slane %v297, 5
      %v382 = vrot.slane %v298, 5
      %v383 = vrot.slane %v299, 5
      %v384 = vrot.slane %v300, 5
      %v385 = vrot.slane %v301, 5
      %v386 = vrot.slane %v302, 5
      %v387 = vrot.slane %v303, 5
      %v388 = vrot.slane %v304, 5
      %v389 = vrot.slane %v305, 5
      %v390 = vrot.slane %v306, 5
      %v391 = vrot.slane %v307, 5
      %v392 = vrot.slane %v308, 5
      %v393 = vrot.slane %v309, 5
      %v394 = vrot.slane %v310, 5
      %v395 = vrot.slane %v311, 5
      %v396 = vrot.slane %v312, 5
      %v397 = vrot.slane %v313, 5
      %v398 = vrot.slane %v314, 5
      %v399 = vrot.slane %v315, 5
      %v400 = vrot.slane %v316, 5
      %v401 = vrot.slane %v317, 5
      %v402 = vrot.slane %v318, 5
      %v403 = vrot.slane %v319, 5
      %v404 = vrot.slane %v320, 5
      %v405 = vlaneseq
      %v406 = vshrl.u32 %v405, 7
      %vm407 = vcmp.lt.s32.totalorder %v406, 3
      %v408 = vsel %vm407, %v403, %v404
      %v409 = vsel %vm407, %v402, %v403
      %v410 = vsel %vm407, %v401, %v402
      %v411 = vsel %vm407, %v400, %v401
      %v412 = vsel %vm407, %v399, %v400
      %v413 = vsel %vm407, %v398, %v399
      %v414 = vsel %vm407, %v397, %v398
      %v415 = vsel %vm407, %v396, %v397
      %v416 = vsel %vm407, %v395, %v396
      %v417 = vsel %vm407, %v394, %v395
      %v418 = vsel %vm407, %v393, %v394
      %v419 = vsel %vm407, %v392, %v393
      %v420 = vsel %vm407, %v391, %v392
      %v421 = vsel %vm407, %v390, %v391
      %v422 = vsel %vm407, %v389, %v390
      %v423 = vsel %vm407, %v388, %v389
      %v424 = vsel %vm407, %v387, %v388
      %v425 = vsel %vm407, %v386, %v387
      %v426 = vsel %vm407, %v385, %v386
      %v427 = vsel %vm407, %v384, %v385
      %v428 = vsel %vm407, %v383, %v384
      %v429 = vsel %vm407, %v382, %v383
      %v430 = vsel %vm407, %v381, %v382
      %v431 = vsel %vm407, %v380, %v381
      %v432 = vsel %vm407, %v379, %v380
      %v433 = vsel %vm407, %v378, %v379
      %v434 = vsel %vm407, %v377, %v378
      %v435 = vsel %vm407, %v376, %v377
      %v436 = vsel %vm407, %v375, %v376
      %v437 = vsel %vm407, %v374, %v375
      %v438 = vsel %vm407, %v373, %v374
      %v439 = vsel %vm407, %v372, %v373
      %v440 = vsel %vm407, %v371, %v372
      %v441 = vsel %vm407, %v370, %v371
      %v442 = vsel %vm407, %v369, %v370
      %v443 = vsel %vm407, %v368, %v369
      %v444 = vsel %vm407, %v367, %v368
      %v445 = vsel %vm407, %v366, %v367
      %v446 = vsel %vm407, %v365, %v366
      %v447 = vsel %vm407, %v364, %v365
      %v448 = vsel %vm407, %v363, %v364
      %v449 = vsel %vm407, %v404, %v363
      %v450 = vpack.c.bf16 %v408, %v409
      %v451 = vpack.c.bf16 %v448, %v449
      %v452 = vpack.c.bf16 %v446, %v447
      %v453 = vpack.c.bf16 %v444, %v445
      %v454 = vpack.c.bf16 %v442, %v443
      %v455 = vpack.c.bf16 %v440, %v441
      %v456 = vpack.c.bf16 %v438, %v439
      %v457 = vpack.c.bf16 %v436, %v437
      %v458 = vpack.c.bf16 %v434, %v435
      %v459 = vpack.c.bf16 %v432, %v433
      %v460 = vpack.c.bf16 %v430, %v431
      %v461 = vpack.c.bf16 %v428, %v429
      %v462 = vpack.c.bf16 %v426, %v427
      %v463 = vpack.c.bf16 %v424, %v425
      %v464 = vpack.c.bf16 %v422, %v423
      %v465 = vpack.c.bf16 %v420, %v421
      %v466 = vpack.c.bf16 %v418, %v419
      %v467 = vpack.c.bf16 %v416, %v417
      %v468 = vpack.c.bf16 %v414, %v415
      %v469 = vpack.c.bf16 %v412, %v413
      %v470 = vpack.c.bf16 %v410, %v411
      %v471 = vrot.slane %v279, 6
      %v472 = vrot.slane %v280, 6
      %v473 = vrot.slane %v281, 6
      %v474 = vrot.slane %v282, 6
      %v475 = vrot.slane %v283, 6
      %v476 = vrot.slane %v284, 6
      %v477 = vrot.slane %v285, 6
      %v478 = vrot.slane %v286, 6
      %v479 = vrot.slane %v287, 6
      %v480 = vrot.slane %v288, 6
      %v481 = vrot.slane %v289, 6
      %v482 = vrot.slane %v290, 6
      %v483 = vrot.slane %v291, 6
      %v484 = vrot.slane %v292, 6
      %v485 = vrot.slane %v293, 6
      %v486 = vrot.slane %v294, 6
      %v487 = vrot.slane %v295, 6
      %v488 = vrot.slane %v296, 6
      %v489 = vrot.slane %v297, 6
      %v490 = vrot.slane %v298, 6
      %v491 = vrot.slane %v299, 6
      %v492 = vrot.slane %v300, 6
      %v493 = vrot.slane %v301, 6
      %v494 = vrot.slane %v302, 6
      %v495 = vrot.slane %v303, 6
      %v496 = vrot.slane %v304, 6
      %v497 = vrot.slane %v305, 6
      %v498 = vrot.slane %v306, 6
      %v499 = vrot.slane %v307, 6
      %v500 = vrot.slane %v308, 6
      %v501 = vrot.slane %v309, 6
      %v502 = vrot.slane %v310, 6
      %v503 = vrot.slane %v311, 6
      %v504 = vrot.slane %v312, 6
      %v505 = vrot.slane %v313, 6
      %v506 = vrot.slane %v314, 6
      %v507 = vrot.slane %v315, 6
      %v508 = vrot.slane %v316, 6
      %v509 = vrot.slane %v317, 6
      %v510 = vrot.slane %v318, 6
      %v511 = vrot.slane %v319, 6
      %v512 = vrot.slane %v320, 6
      %vm513 = vcmp.lt.s32.totalorder %v406, 2
      %v514 = vsel %vm513, %v511, %v512
      %v515 = vsel %vm513, %v510, %v511
      %v516 = vsel %vm513, %v509, %v510
      %v517 = vsel %vm513, %v508, %v509
      %v518 = vsel %vm513, %v507, %v508
      %v519 = vsel %vm513, %v506, %v507
      %v520 = vsel %vm513, %v505, %v506
      %v521 = vsel %vm513, %v504, %v505
      %v522 = vsel %vm513, %v503, %v504
      %v523 = vsel %vm513, %v502, %v503
      %v524 = vsel %vm513, %v501, %v502
      %v525 = vsel %vm513, %v500, %v501
      %v526 = vsel %vm513, %v499, %v500
      %v527 = vsel %vm513, %v498, %v499
      %v528 = vsel %vm513, %v497, %v498
      %v529 = vsel %vm513, %v496, %v497
      %v530 = vsel %vm513, %v495, %v496
      %v531 = vsel %vm513, %v494, %v495
      %v532 = vsel %vm513, %v493, %v494
      %v533 = vsel %vm513, %v492, %v493
      %v534 = vsel %vm513, %v491, %v492
      %v535 = vsel %vm513, %v490, %v491
      %v536 = vsel %vm513, %v489, %v490
      %v537 = vsel %vm513, %v488, %v489
      %v538 = vsel %vm513, %v487, %v488
      %v539 = vsel %vm513, %v486, %v487
      %v540 = vsel %vm513, %v485, %v486
      %v541 = vsel %vm513, %v484, %v485
      %v542 = vsel %vm513, %v483, %v484
      %v543 = vsel %vm513, %v482, %v483
      %v544 = vsel %vm513, %v481, %v482
      %v545 = vsel %vm513, %v480, %v481
      %v546 = vsel %vm513, %v479, %v480
      %v547 = vsel %vm513, %v478, %v479
      %v548 = vsel %vm513, %v477, %v478
      %v549 = vsel %vm513, %v476, %v477
      %v550 = vsel %vm513, %v475, %v476
      %v551 = vsel %vm513, %v474, %v475
      %v552 = vsel %vm513, %v473, %v474
      %v553 = vsel %vm513, %v472, %v473
      %v554 = vsel %vm513, %v471, %v472
      %v555 = vsel %vm513, %v512, %v471
      %v556 = vpack.c.bf16 %v514, %v515
      %v557 = vpack.c.bf16 %v554, %v555
      %v558 = vpack.c.bf16 %v552, %v553
      %v559 = vpack.c.bf16 %v550, %v551
      %v560 = vpack.c.bf16 %v548, %v549
      %v561 = vpack.c.bf16 %v546, %v547
      %v562 = vpack.c.bf16 %v544, %v545
      %v563 = vpack.c.bf16 %v542, %v543
      %v564 = vpack.c.bf16 %v540, %v541
      %v565 = vpack.c.bf16 %v538, %v539
      %v566 = vpack.c.bf16 %v536, %v537
      %v567 = vpack.c.bf16 %v534, %v535
      %v568 = vpack.c.bf16 %v532, %v533
      %v569 = vpack.c.bf16 %v530, %v531
      %v570 = vpack.c.bf16 %v528, %v529
      %v571 = vpack.c.bf16 %v526, %v527
      %v572 = vpack.c.bf16 %v524, %v525
      %v573 = vpack.c.bf16 %v522, %v523
      %v574 = vpack.c.bf16 %v520, %v521
      %v575 = vpack.c.bf16 %v518, %v519
      %v576 = vpack.c.bf16 %v516, %v517
      %v577 = vrot.slane %v279, 7
      %v578 = vrot.slane %v280, 7
      %v579 = vrot.slane %v281, 7
      %v580 = vrot.slane %v282, 7
      %v581 = vrot.slane %v283, 7
      %v582 = vrot.slane %v284, 7
      %v583 = vrot.slane %v285, 7
      %v584 = vrot.slane %v286, 7
      %v585 = vrot.slane %v287, 7
      %v586 = vrot.slane %v288, 7
      %v587 = vrot.slane %v289, 7
      %v588 = vrot.slane %v290, 7
      %v589 = vrot.slane %v291, 7
      %v590 = vrot.slane %v292, 7
      %v591 = vrot.slane %v293, 7
      %v592 = vrot.slane %v294, 7
      %v593 = vrot.slane %v295, 7
      %v594 = vrot.slane %v296, 7
      %v595 = vrot.slane %v297, 7
      %v596 = vrot.slane %v298, 7
      %v597 = vrot.slane %v299, 7
      %v598 = vrot.slane %v300, 7
      %v599 = vrot.slane %v301, 7
      %v600 = vrot.slane %v302, 7
      %v601 = vrot.slane %v303, 7
      %v602 = vrot.slane %v304, 7
      %v603 = vrot.slane %v305, 7
      %v604 = vrot.slane %v306, 7
      %v605 = vrot.slane %v307, 7
      %v606 = vrot.slane %v308, 7
      %v607 = vrot.slane %v309, 7
      %v608 = vrot.slane %v310, 7
      %v609 = vrot.slane %v311, 7
      %v610 = vrot.slane %v312, 7
      %v611 = vrot.slane %v313, 7
      %v612 = vrot.slane %v314, 7
      %v613 = vrot.slane %v315, 7
      %v614 = vrot.slane %v316, 7
      %v615 = vrot.slane %v317, 7
      %v616 = vrot.slane %v318, 7
      %v617 = vrot.slane %v319, 7
      %v618 = vrot.slane %v320, 7
      %vm619 = vcmp.lt.s32.totalorder %v406, 1
      %v620 = vsel %vm619, %v617, %v618
      %v621 = vsel %vm619, %v616, %v617
      %v622 = vsel %vm619, %v615, %v616
      %v623 = vsel %vm619, %v614, %v615
      %v624 = vsel %vm619, %v613, %v614
      %v625 = vsel %vm619, %v612, %v613
      %v626 = vsel %vm619, %v611, %v612
      %v627 = vsel %vm619, %v610, %v611
      %v628 = vsel %vm619, %v609, %v610
      %v629 = vsel %vm619, %v608, %v609
      %v630 = vsel %vm619, %v607, %v608
      %v631 = vsel %vm619, %v606, %v607
      %v632 = vsel %vm619, %v605, %v606
      %v633 = vsel %vm619, %v604, %v605
      %v634 = vsel %vm619, %v603, %v604
      %v635 = vsel %vm619, %v602, %v603
      %v636 = vsel %vm619, %v601, %v602
      %v637 = vsel %vm619, %v600, %v601
      %v638 = vsel %vm619, %v599, %v600
      %v639 = vsel %vm619, %v598, %v599
      %v640 = vsel %vm619, %v597, %v598
      %v641 = vsel %vm619, %v596, %v597
      %v642 = vsel %vm619, %v595, %v596
      %v643 = vsel %vm619, %v594, %v595
      %v644 = vsel %vm619, %v593, %v594
      %v645 = vsel %vm619, %v592, %v593
      %v646 = vsel %vm619, %v591, %v592
      %v647 = vsel %vm619, %v590, %v591
      %v648 = vsel %vm619, %v589, %v590
      %v649 = vsel %vm619, %v588, %v589
      %v650 = vsel %vm619, %v587, %v588
      %v651 = vsel %vm619, %v586, %v587
      %v652 = vsel %vm619, %v585, %v586
      %v653 = vsel %vm619, %v584, %v585
      %v654 = vsel %vm619, %v583, %v584
      %v655 = vsel %vm619, %v582, %v583
      %v656 = vsel %vm619, %v581, %v582
      %v657 = vsel %vm619, %v580, %v581
      %v658 = vsel %vm619, %v579, %v580
      %v659 = vsel %vm619, %v578, %v579
      %v660 = vsel %vm619, %v577, %v578
      %v661 = vsel %vm619, %v618, %v577
      %v662 = vpack.c.bf16 %v620, %v621
      %v663 = vpack.c.bf16 %v660, %v661
      %v664 = vpack.c.bf16 %v658, %v659
      %v665 = vpack.c.bf16 %v656, %v657
      %v666 = vpack.c.bf16 %v654, %v655
      %v667 = vpack.c.bf16 %v652, %v653
      %v668 = vpack.c.bf16 %v650, %v651
      %v669 = vpack.c.bf16 %v648, %v649
      %v670 = vpack.c.bf16 %v646, %v647
      %v671 = vpack.c.bf16 %v644, %v645
      %v672 = vpack.c.bf16 %v642, %v643
      %v673 = vpack.c.bf16 %v640, %v641
      %v674 = vpack.c.bf16 %v638, %v639
      %v675 = vpack.c.bf16 %v636, %v637
      %v676 = vpack.c.bf16 %v634, %v635
      %v677 = vpack.c.bf16 %v632, %v633
      %v678 = vpack.c.bf16 %v630, %v631
      %v679 = vpack.c.bf16 %v628, %v629
      %v680 = vpack.c.bf16 %v626, %v627
      %v681 = vpack.c.bf16 %v624, %v625
      %v682 = vpack.c.bf16 %v622, %v623
      %v683 = vrot.slane %v279, 1
      %v684 = vrot.slane %v280, 1
      %v685 = vrot.slane %v281, 1
      %v686 = vrot.slane %v282, 1
      %v687 = vrot.slane %v283, 1
      %v688 = vrot.slane %v284, 1
      %v689 = vrot.slane %v285, 1
      %v690 = vrot.slane %v286, 1
      %v691 = vrot.slane %v287, 1
      %v692 = vrot.slane %v288, 1
      %v693 = vrot.slane %v289, 1
      %v694 = vrot.slane %v290, 1
      %v695 = vrot.slane %v291, 1
      %v696 = vrot.slane %v292, 1
      %v697 = vrot.slane %v293, 1
      %v698 = vrot.slane %v294, 1
      %v699 = vrot.slane %v295, 1
      %v700 = vrot.slane %v296, 1
      %v701 = vrot.slane %v297, 1
      %v702 = vrot.slane %v298, 1
      %v703 = vrot.slane %v299, 1
      %v704 = vrot.slane %v300, 1
      %v705 = vrot.slane %v301, 1
      %v706 = vrot.slane %v302, 1
      %v707 = vrot.slane %v303, 1
      %v708 = vrot.slane %v304, 1
      %v709 = vrot.slane %v305, 1
      %v710 = vrot.slane %v306, 1
      %v711 = vrot.slane %v307, 1
      %v712 = vrot.slane %v308, 1
      %v713 = vrot.slane %v309, 1
      %v714 = vrot.slane %v310, 1
      %v715 = vrot.slane %v311, 1
      %v716 = vrot.slane %v312, 1
      %v717 = vrot.slane %v313, 1
      %v718 = vrot.slane %v314, 1
      %v719 = vrot.slane %v315, 1
      %v720 = vrot.slane %v316, 1
      %v721 = vrot.slane %v317, 1
      %v722 = vrot.slane %v318, 1
      %v723 = vrot.slane %v319, 1
      %v724 = vrot.slane %v320, 1
      %vm725 = vcmp.lt.s32.totalorder %v406, 7
      %v726 = vsel %vm725, %v723, %v724
      %v727 = vsel %vm725, %v722, %v723
      %v728 = vsel %vm725, %v721, %v722
      %v729 = vsel %vm725, %v720, %v721
      %v730 = vsel %vm725, %v719, %v720
      %v731 = vsel %vm725, %v718, %v719
      %v732 = vsel %vm725, %v717, %v718
      %v733 = vsel %vm725, %v716, %v717
      %v734 = vsel %vm725, %v715, %v716
      %v735 = vsel %vm725, %v714, %v715
      %v736 = vsel %vm725, %v713, %v714
      %v737 = vsel %vm725, %v712, %v713
      %v738 = vsel %vm725, %v711, %v712
      %v739 = vsel %vm725, %v710, %v711
      %v740 = vsel %vm725, %v709, %v710
      %v741 = vsel %vm725, %v708, %v709
      %v742 = vsel %vm725, %v707, %v708
      %v743 = vsel %vm725, %v706, %v707
      %v744 = vsel %vm725, %v705, %v706
      %v745 = vsel %vm725, %v704, %v705
      %v746 = vsel %vm725, %v703, %v704
      %v747 = vsel %vm725, %v702, %v703
      %v748 = vsel %vm725, %v701, %v702
      %v749 = vsel %vm725, %v700, %v701
      %v750 = vsel %vm725, %v699, %v700
      %v751 = vsel %vm725, %v698, %v699
      %v752 = vsel %vm725, %v697, %v698
      %v753 = vsel %vm725, %v696, %v697
      %v754 = vsel %vm725, %v695, %v696
      %v755 = vsel %vm725, %v694, %v695
      %v756 = vsel %vm725, %v693, %v694
      %v757 = vsel %vm725, %v692, %v693
      %v758 = vsel %vm725, %v691, %v692
      %v759 = vsel %vm725, %v690, %v691
      %v760 = vsel %vm725, %v689, %v690
      %v761 = vsel %vm725, %v688, %v689
      %v762 = vsel %vm725, %v687, %v688
      %v763 = vsel %vm725, %v686, %v687
      %v764 = vsel %vm725, %v685, %v686
      %v765 = vsel %vm725, %v684, %v685
      %v766 = vsel %vm725, %v683, %v684
      %v767 = vsel %vm725, %v724, %v683
      %v768 = vpack.c.bf16 %v765, %v766
      %v769 = vpack.c.bf16 %v763, %v764
      %v770 = vpack.c.bf16 %v761, %v762
      %v771 = vpack.c.bf16 %v759, %v760
      %v772 = vpack.c.bf16 %v757, %v758
      %v773 = vpack.c.bf16 %v755, %v756
      %v774 = vpack.c.bf16 %v753, %v754
      %v775 = vpack.c.bf16 %v751, %v752
      %v776 = vpack.c.bf16 %v749, %v750
      %v777 = vpack.c.bf16 %v747, %v748
      %v778 = vpack.c.bf16 %v745, %v746
      %v779 = vpack.c.bf16 %v743, %v744
      %v780 = vpack.c.bf16 %v741, %v742
      %v781 = vpack.c.bf16 %v739, %v740
      %v782 = vpack.c.bf16 %v737, %v738
      %v783 = vpack.c.bf16 %v735, %v736
      %v784 = vpack.c.bf16 %v733, %v734
      %v785 = vpack.c.bf16 %v731, %v732
      %v786 = vpack.c.bf16 %v729, %v730
      %v787 = vpack.c.bf16 %v727, %v728
      %v788 = vpack.c.bf16 %v767, %v726
      %v789 = vrot.slane %v279, 2
      %v790 = vrot.slane %v280, 2
      %v791 = vrot.slane %v281, 2
      %v792 = vrot.slane %v282, 2
      %v793 = vrot.slane %v283, 2
      %v794 = vrot.slane %v284, 2
      %v795 = vrot.slane %v285, 2
      %v796 = vrot.slane %v286, 2
      %v797 = vrot.slane %v287, 2
      %v798 = vrot.slane %v288, 2
      %v799 = vrot.slane %v289, 2
      %v800 = vrot.slane %v290, 2
      %v801 = vrot.slane %v291, 2
      %v802 = vrot.slane %v292, 2
      %v803 = vrot.slane %v293, 2
      %v804 = vrot.slane %v294, 2
      %v805 = vrot.slane %v295, 2
      %v806 = vrot.slane %v296, 2
      %v807 = vrot.slane %v297, 2
      %v808 = vrot.slane %v298, 2
      %v809 = vrot.slane %v299, 2
      %v810 = vrot.slane %v300, 2
      %v811 = vrot.slane %v301, 2
      %v812 = vrot.slane %v302, 2
      %v813 = vrot.slane %v303, 2
      %v814 = vrot.slane %v304, 2
      %v815 = vrot.slane %v305, 2
      %v816 = vrot.slane %v306, 2
      %v817 = vrot.slane %v307, 2
      %v818 = vrot.slane %v308, 2
      %v819 = vrot.slane %v309, 2
      %v820 = vrot.slane %v310, 2
      %v821 = vrot.slane %v311, 2
      %v822 = vrot.slane %v312, 2
      %v823 = vrot.slane %v313, 2
      %v824 = vrot.slane %v314, 2
      %v825 = vrot.slane %v315, 2
      %v826 = vrot.slane %v316, 2
      %v827 = vrot.slane %v317, 2
      %v828 = vrot.slane %v318, 2
      %v829 = vrot.slane %v319, 2
      %v830 = vrot.slane %v320, 2
      %vm831 = vcmp.lt.s32.totalorder %v406, 6
      %v832 = vsel %vm831, %v829, %v830
      %v833 = vsel %vm831, %v828, %v829
      %v834 = vsel %vm831, %v827, %v828
      %v835 = vsel %vm831, %v826, %v827
      %v836 = vsel %vm831, %v825, %v826
      %v837 = vsel %vm831, %v824, %v825
      %v838 = vsel %vm831, %v823, %v824
      %v839 = vsel %vm831, %v822, %v823
      %v840 = vsel %vm831, %v821, %v822
      %v841 = vsel %vm831, %v820, %v821
      %v842 = vsel %vm831, %v819, %v820
      %v843 = vsel %vm831, %v818, %v819
      %v844 = vsel %vm831, %v817, %v818
      %v845 = vsel %vm831, %v816, %v817
      %v846 = vsel %vm831, %v815, %v816
      %v847 = vsel %vm831, %v814, %v815
      %v848 = vsel %vm831, %v813, %v814
      %v849 = vsel %vm831, %v812, %v813
      %v850 = vsel %vm831, %v811, %v812
      %v851 = vsel %vm831, %v810, %v811
      %v852 = vsel %vm831, %v809, %v810
      %v853 = vsel %vm831, %v808, %v809
      %v854 = vsel %vm831, %v807, %v808
      %v855 = vsel %vm831, %v806, %v807
      %v856 = vsel %vm831, %v805, %v806
      %v857 = vsel %vm831, %v804, %v805
      %v858 = vsel %vm831, %v803, %v804
      %v859 = vsel %vm831, %v802, %v803
      %v860 = vsel %vm831, %v801, %v802
      %v861 = vsel %vm831, %v800, %v801
      %v862 = vsel %vm831, %v799, %v800
      %v863 = vsel %vm831, %v798, %v799
      %v864 = vsel %vm831, %v797, %v798
      %v865 = vsel %vm831, %v796, %v797
      %v866 = vsel %vm831, %v795, %v796
      %v867 = vsel %vm831, %v794, %v795
      %v868 = vsel %vm831, %v793, %v794
      %v869 = vsel %vm831, %v792, %v793
      %v870 = vsel %vm831, %v791, %v792
      %v871 = vsel %vm831, %v790, %v791
      %v872 = vsel %vm831, %v789, %v790
      %v873 = vsel %vm831, %v830, %v789
      %v874 = vpack.c.bf16 %v869, %v870
      %v875 = vpack.c.bf16 %v867, %v868
      %v876 = vpack.c.bf16 %v865, %v866
      %v877 = vpack.c.bf16 %v863, %v864
      %v878 = vpack.c.bf16 %v861, %v862
      %v879 = vpack.c.bf16 %v859, %v860
      %v880 = vpack.c.bf16 %v857, %v858
      %v881 = vpack.c.bf16 %v855, %v856
      %v882 = vpack.c.bf16 %v853, %v854
      %v883 = vpack.c.bf16 %v851, %v852
      %v884 = vpack.c.bf16 %v849, %v850
      %v885 = vpack.c.bf16 %v847, %v848
      %v886 = vpack.c.bf16 %v845, %v846
      %v887 = vpack.c.bf16 %v843, %v844
      %v888 = vpack.c.bf16 %v841, %v842
      %v889 = vpack.c.bf16 %v839, %v840
      %v890 = vpack.c.bf16 %v837, %v838
      %v891 = vpack.c.bf16 %v835, %v836
      %v892 = vpack.c.bf16 %v833, %v834
      %v893 = vpack.c.bf16 %v873, %v832
      %v894 = vpack.c.bf16 %v871, %v872
      %v895 = vrot.slane %v279, 3
      %v896 = vrot.slane %v280, 3
      %v897 = vrot.slane %v281, 3
      %v898 = vrot.slane %v282, 3
      %v899 = vrot.slane %v283, 3
      %v900 = vrot.slane %v284, 3
      %v901 = vrot.slane %v285, 3
      %v902 = vrot.slane %v286, 3
      %v903 = vrot.slane %v287, 3
      %v904 = vrot.slane %v288, 3
      %v905 = vrot.slane %v289, 3
      %v906 = vrot.slane %v290, 3
      %v907 = vrot.slane %v291, 3
      %v908 = vrot.slane %v292, 3
      %v909 = vrot.slane %v293, 3
      %v910 = vrot.slane %v294, 3
      %v911 = vrot.slane %v295, 3
      %v912 = vrot.slane %v296, 3
      %v913 = vrot.slane %v297, 3
      %v914 = vrot.slane %v298, 3
      %v915 = vrot.slane %v299, 3
      %v916 = vrot.slane %v300, 3
      %v917 = vrot.slane %v301, 3
      %v918 = vrot.slane %v302, 3
      %v919 = vrot.slane %v303, 3
      %v920 = vrot.slane %v304, 3
      %v921 = vrot.slane %v305, 3
      %v922 = vrot.slane %v306, 3
      %v923 = vrot.slane %v307, 3
      %v924 = vrot.slane %v308, 3
      %v925 = vrot.slane %v309, 3
      %v926 = vrot.slane %v310, 3
      %v927 = vrot.slane %v311, 3
      %v928 = vrot.slane %v312, 3
      %v929 = vrot.slane %v313, 3
      %v930 = vrot.slane %v314, 3
      %v931 = vrot.slane %v315, 3
      %v932 = vrot.slane %v316, 3
      %v933 = vrot.slane %v317, 3
      %v934 = vrot.slane %v318, 3
      %v935 = vrot.slane %v319, 3
      %v936 = vrot.slane %v320, 3
      %vm937 = vcmp.lt.s32.totalorder %v406, 5
      %v938 = vsel %vm937, %v935, %v936
      %v939 = vsel %vm937, %v934, %v935
      %v940 = vsel %vm937, %v933, %v934
      %v941 = vsel %vm937, %v932, %v933
      %v942 = vsel %vm937, %v931, %v932
      %v943 = vsel %vm937, %v930, %v931
      %v944 = vsel %vm937, %v929, %v930
      %v945 = vsel %vm937, %v928, %v929
      %v946 = vsel %vm937, %v927, %v928
      %v947 = vsel %vm937, %v926, %v927
      %v948 = vsel %vm937, %v925, %v926
      %v949 = vsel %vm937, %v924, %v925
      %v950 = vsel %vm937, %v923, %v924
      %v951 = vsel %vm937, %v922, %v923
      %v952 = vsel %vm937, %v921, %v922
      %v953 = vsel %vm937, %v920, %v921
      %v954 = vsel %vm937, %v919, %v920
      %v955 = vsel %vm937, %v918, %v919
      %v956 = vsel %vm937, %v917, %v918
      %v957 = vsel %vm937, %v916, %v917
      %v958 = vsel %vm937, %v915, %v916
      %v959 = vsel %vm937, %v914, %v915
      %v960 = vsel %vm937, %v913, %v914
      %v961 = vsel %vm937, %v912, %v913
      %v962 = vsel %vm937, %v911, %v912
      %v963 = vsel %vm937, %v910, %v911
      %v964 = vsel %vm937, %v909, %v910
      %v965 = vsel %vm937, %v908, %v909
      %v966 = vsel %vm937, %v907, %v908
      %v967 = vsel %vm937, %v906, %v907
      %v968 = vsel %vm937, %v905, %v906
      %v969 = vsel %vm937, %v904, %v905
      %v970 = vsel %vm937, %v903, %v904
      %v971 = vsel %vm937, %v902, %v903
      %v972 = vsel %vm937, %v901, %v902
      %v973 = vsel %vm937, %v900, %v901
      %v974 = vsel %vm937, %v899, %v900
      %v975 = vsel %vm937, %v898, %v899
      %v976 = vsel %vm937, %v897, %v898
      %v977 = vsel %vm937, %v896, %v897
      %v978 = vsel %vm937, %v895, %v896
      %v979 = vsel %vm937, %v936, %v895
      %v980 = vpack.c.bf16 %v975, %v976
      %v981 = vpack.c.bf16 %v973, %v974
      %v982 = vpack.c.bf16 %v971, %v972
      %v983 = vpack.c.bf16 %v969, %v970
      %v984 = vpack.c.bf16 %v967, %v968
      %v985 = vpack.c.bf16 %v965, %v966
      %v986 = vpack.c.bf16 %v963, %v964
      %v987 = vpack.c.bf16 %v961, %v962
      %v988 = vpack.c.bf16 %v959, %v960
      %v989 = vpack.c.bf16 %v957, %v958
      %v990 = vpack.c.bf16 %v955, %v956
      %v991 = vpack.c.bf16 %v953, %v954
      %v992 = vpack.c.bf16 %v951, %v952
      %v993 = vpack.c.bf16 %v949, %v950
      %v994 = vpack.c.bf16 %v947, %v948
      %v995 = vpack.c.bf16 %v945, %v946
      %v996 = vpack.c.bf16 %v943, %v944
      %v997 = vpack.c.bf16 %v941, %v942
      %v998 = vpack.c.bf16 %v939, %v940
      %v999 = vpack.c.bf16 %v979, %v938
      %v1000 = vpack.c.bf16 %v977, %v978
      %v1043 = vunpack.c.l.b16 %v237
      %v1044 = vunpack.c.l.b16 %v238
      %v1045 = vunpack.c.l.b16 %v239
      %v1046 = vunpack.c.l.b16 %v240
      %v1047 = vunpack.c.l.b16 %v241
      %v1048 = vunpack.c.l.b16 %v242
      %v1049 = vunpack.c.l.b16 %v243
      %v1050 = vunpack.c.l.b16 %v244
      %v1051 = vunpack.c.l.b16 %v245
      %v1052 = vunpack.c.l.b16 %v246
      %v1053 = vunpack.c.l.b16 %v247
      %v1054 = vunpack.c.l.b16 %v248
      %v1055 = vunpack.c.l.b16 %v249
      %v1056 = vunpack.c.l.b16 %v250
      %v1057 = vunpack.c.l.b16 %v251
      %v1058 = vunpack.c.l.b16 %v252
      %v1059 = vunpack.c.l.b16 %v253
      %v1060 = vunpack.c.l.b16 %v254
      %v1061 = vunpack.c.l.b16 %v255
      %v1062 = vunpack.c.l.b16 %v256
      %v1063 = vunpack.c.l.b16 %v257
      %v1064 = vunpack.c.l.b16 %v258
      %v1065 = vunpack.c.l.b16 %v259
      %v1066 = vunpack.c.l.b16 %v260
      %v1067 = vunpack.c.l.b16 %v261
      %v1068 = vunpack.c.l.b16 %v262
      %v1069 = vunpack.c.l.b16 %v263
      %v1070 = vunpack.c.l.b16 %v264
      %v1071 = vunpack.c.l.b16 %v265
      %v1072 = vunpack.c.l.b16 %v266
      %v1073 = vunpack.c.l.b16 %v267
      %v1074 = vunpack.c.l.b16 %v268
      %v1075 = vunpack.c.l.b16 %v269
      %v1076 = vunpack.c.l.b16 %v270
      %v1077 = vunpack.c.l.b16 %v271
      %v1078 = vunpack.c.l.b16 %v272
      %v1079 = vunpack.c.l.b16 %v273
      %v1080 = vunpack.c.l.b16 %v274
      %v1081 = vunpack.c.l.b16 %v275
      %v1082 = vunpack.c.l.b16 %v276
      %v1083 = vunpack.c.l.b16 %v277
      %v1084 = vunpack.c.l.b16 %v278
      %v1085 = vpack.c.b16 %v1044, %v1043
      %v1086 = vpack.c.b16 %v1046, %v1045
      %v1087 = vpack.c.b16 %v1048, %v1047
      %v1088 = vpack.c.b16 %v1050, %v1049
      %v1089 = vpack.c.b16 %v1052, %v1051
      %v1090 = vpack.c.b16 %v1054, %v1053
      %v1091 = vpack.c.b16 %v1056, %v1055
      %v1092 = vpack.c.b16 %v1058, %v1057
      %v1093 = vpack.c.b16 %v1060, %v1059
      %v1094 = vpack.c.b16 %v1062, %v1061
      %v1095 = vpack.c.b16 %v1064, %v1063
      %v1096 = vpack.c.b16 %v1066, %v1065
      %v1097 = vpack.c.b16 %v1068, %v1067
      %v1098 = vpack.c.b16 %v1070, %v1069
      %v1099 = vpack.c.b16 %v1072, %v1071
      %v1100 = vpack.c.b16 %v1074, %v1073
      %v1101 = vpack.c.b16 %v1076, %v1075
      %v1102 = vpack.c.b16 %v1078, %v1077
      %v1103 = vpack.c.b16 %v1080, %v1079
      %v1104 = vpack.c.b16 %v1082, %v1081
      %v1105 = vpack.c.b16 %v1084, %v1083
      %v1127 = vld [vmem:[%s1] sm:$0xf]
      %v1128 = vld [vmem:[%s1 + $0x4] sm:$0xf]
      %v1129 = vld [vmem:[%s1 + $0x8] sm:$0xf]
      %v1130 = vld [vmem:[%s1 + $0xc] sm:$0xf]
      %v1131 = vld [vmem:[%s1 + $0x10] sm:$0xf]
      %v1132 = vld [vmem:[%s1 + $0x14] sm:$0xf]
      %v1133 = vld [vmem:[%s1 + $0x18] sm:$0xf]
      %v1134 = vld [vmem:[%s1 + $0x1c] sm:$0xf]
      %v1135 = vld [vmem:[%s1 + $0x20] sm:$0xf]
      %v1136 = vld [vmem:[%s1 + $0x24] sm:$0xf]
      %v1137 = vld [vmem:[%s1 + $0x28] sm:$0xf]
      %v1138 = vld [vmem:[%s1 + $0x2c] sm:$0xf]
      %v1139 = vld [vmem:[%s1 + $0x30] sm:$0xf]
      %v1140 = vld [vmem:[%s1 + $0x34] sm:$0xf]
      %v1141 = vld [vmem:[%s1 + $0x38] sm:$0xf]
      %v1142 = vld [vmem:[%s1 + $0x3c] sm:$0xf]
      %v1143 = vld [vmem:[%s1 + $0x40] sm:$0xf]
      %v1144 = vld [vmem:[%s1 + $0x44] sm:$0xf]
      %v1145 = vld [vmem:[%s1 + $0x48] sm:$0xf]
      %v1146 = vld [vmem:[%s1 + $0x4c] sm:$0xf]
      %v1147 = vld [vmem:[%s1 + $0x50] sm:$0xf]
      %v1148 = vld [vmem:[%s1 + $0x54] sm:$0xf]
      %v1149 = vld [vmem:[%s1 + $0x58] sm:$0xf]
      %v1150 = vld [vmem:[%s1 + $0x5c] sm:$0xf]
      %v1151 = vld [vmem:[%s1 + $0x60] sm:$0xf]
      %v1152 = vld [vmem:[%s1 + $0x64] sm:$0xf]
      %v1153 = vld [vmem:[%s1 + $0x68] sm:$0xf]
      %v1154 = vld [vmem:[%s1 + $0x6c] sm:$0xf]
      %v1155 = vld [vmem:[%s1 + $0x70] sm:$0xf]
      %v1156 = vld [vmem:[%s1 + $0x74] sm:$0xf]
      %v1157 = vld [vmem:[%s1 + $0x78] sm:$0xf]
      %v1158 = vld [vmem:[%s1 + $0x7c] sm:$0xf]
      %v1159 = vld [vmem:[%s1 + $0x80] sm:$0xf]
      %v1160 = vld [vmem:[%s1 + $0x84] sm:$0xf]
      %v1161 = vld [vmem:[%s1 + $0x88] sm:$0xf]
      %v1162 = vld [vmem:[%s1 + $0x8c] sm:$0xf]
      %v1163 = vld [vmem:[%s1 + $0x90] sm:$0xf]
      %v1164 = vld [vmem:[%s1 + $0x94] sm:$0xf]
      %v1165 = vld [vmem:[%s1 + $0x98] sm:$0xf]
      %v1166 = vld [vmem:[%s1 + $0x9c] sm:$0xf]
      %v1167 = vld [vmem:[%s1 + $0xa0] sm:$0xf]
      %v1168 = vld [vmem:[%s1 + $0xa4] sm:$0xf]
      %v1169 = vld [vmem:[%s1 + $0xa8] sm:$0xf]
      %v1170 = vld [vmem:[%s1 + $0xac] sm:$0xf]
      %v1171 = vld [vmem:[%s1 + $0xb0] sm:$0xf]
      %v1172 = vld [vmem:[%s1 + $0xb4] sm:$0xf]
      %v1173 = vld [vmem:[%s1 + $0xb8] sm:$0xf]
      %v1174 = vld [vmem:[%s1 + $0xbc] sm:$0xf]
      %v1175 = vld [vmem:[%s1 + $0xc0] sm:$0xf]
      %v1176 = vld [vmem:[%s1 + $0xc4] sm:$0xf]
      %v1177 = vld [vmem:[%s1 + $0xc8] sm:$0xf]
      %v1178 = vld [vmem:[%s1 + $0xcc] sm:$0xf]
      %v1179 = vld [vmem:[%s1 + $0xd0] sm:$0xf]
      %v1180 = vld [vmem:[%s1 + $0xd4] sm:$0xf]
      %v1181 = vld [vmem:[%s1 + $0xd8] sm:$0xf]
      %v1182 = vld [vmem:[%s1 + $0xdc] sm:$0xf]
      %v1183 = vld [vmem:[%s1 + $0xe0] sm:$0xf]
      %v1184 = vld [vmem:[%s1 + $0xe4] sm:$0xf]
      %v1185 = vld [vmem:[%s1 + $0xe8] sm:$0xf]
      %v1186 = vld [vmem:[%s1 + $0xec] sm:$0xf]
      %v1187 = vld [vmem:[%s1 + $0xf0] sm:$0xf]
      %v1188 = vld [vmem:[%s1 + $0xf4] sm:$0xf]
      %v1189 = vld [vmem:[%s1 + $0xf8] sm:$0xf]
      %v1190 = vld [vmem:[%s1 + $0xfc] sm:$0xf]
      %v1191 = vld [vmem:[%s1 + $0x100] sm:$0xf]
      %v1192 = vld [vmem:[%s1 + $0x104] sm:$0xf]
      %v1193 = vld [vmem:[%s1 + $0x108] sm:$0xf]
      %v1194 = vld [vmem:[%s1 + $0x10c] sm:$0xf]
      %v1195 = vld [vmem:[%s1 + $0x110] sm:$0xf]
      %v1196 = vld [vmem:[%s1 + $0x114] sm:$0xf]
      %v1197 = vld [vmem:[%s1 + $0x118] sm:$0xf]
      %v1198 = vld [vmem:[%s1 + $0x11c] sm:$0xf]
      %v1199 = vld [vmem:[%s1 + $0x120] sm:$0xf]
      %v1200 = vld [vmem:[%s1 + $0x124] sm:$0xf]
      %v1201 = vld [vmem:[%s1 + $0x128] sm:$0xf]
      %v1202 = vld [vmem:[%s1 + $0x12c] sm:$0xf]
      %v1203 = vld [vmem:[%s1 + $0x130] sm:$0xf]
      %v1204 = vld [vmem:[%s1 + $0x134] sm:$0xf]
      %v1205 = vld [vmem:[%s1 + $0x138] sm:$0xf]
      %v1206 = vld [vmem:[%s1 + $0x13c] sm:$0xf]
      %v1207 = vld [vmem:[%s1 + $0x140] sm:$0xf]
      %v1208 = vld [vmem:[%s1 + $0x144] sm:$0xf]
      %v1209 = vld [vmem:[%s1 + $0x148] sm:$0xf]
      %v1210 = vld [vmem:[%s1 + $0x14c] sm:$0xf]
      %v1211 = vld [vmem:[%s1 + $0x150] sm:$0xf]
      %v1212 = vld [vmem:[%s1 + $0x154] sm:$0xf]
      %v1213 = vld [vmem:[%s1 + $0x158] sm:$0xf]
      %v1214 = vld [vmem:[%s1 + $0x15c] sm:$0xf]
      %v1215 = vld [vmem:[%s1 + $0x160] sm:$0xf]
      %v1216 = vld [vmem:[%s1 + $0x164] sm:$0xf]
      %v1217 = vld [vmem:[%s1 + $0x168] sm:$0xf]
      %v1218 = vld [vmem:[%s1 + $0x16c] sm:$0xf]
      %v1219 = vld [vmem:[%s1 + $0x170] sm:$0xf]
      %v1220 = vld [vmem:[%s1 + $0x174] sm:$0xf]
      %v1221 = vld [vmem:[%s1 + $0x178] sm:$0xf]
      %v1222 = vld [vmem:[%s1 + $0x17c] sm:$0xf]
      %v1223 = vld [vmem:[%s1 + $0x180] sm:$0xf]
      %v1224 = vld [vmem:[%s1 + $0x184] sm:$0xf]
      %v1225 = vld [vmem:[%s1 + $0x188] sm:$0xf]
      %v1226 = vld [vmem:[%s1 + $0x18c] sm:$0xf]
      %v1227 = vld [vmem:[%s1 + $0x190] sm:$0xf]
      %v1228 = vld [vmem:[%s1 + $0x194] sm:$0xf]
      %v1229 = vld [vmem:[%s1 + $0x198] sm:$0xf]
      %v1230 = vld [vmem:[%s1 + $0x19c] sm:$0xf]
      %v1231 = vld [vmem:[%s1 + $0x1a0] sm:$0xf]
      %v1232 = vld [vmem:[%s1 + $0x1a4] sm:$0xf]
      %v1233 = vld [vmem:[%s1 + $0x1a8] sm:$0xf]
      %v1234 = vld [vmem:[%s1 + $0x1ac] sm:$0xf]
      %v1235 = vld [vmem:[%s1 + $0x1b0] sm:$0xf]
      %v1236 = vld [vmem:[%s1 + $0x1b4] sm:$0xf]
      %v1237 = vld [vmem:[%s1 + $0x1b8] sm:$0xf]
      %v1238 = vld [vmem:[%s1 + $0x1bc] sm:$0xf]
      %v1239 = vld [vmem:[%s1 + $0x1c0] sm:$0xf]
      %v1240 = vld [vmem:[%s1 + $0x1c4] sm:$0xf]
      %v1241 = vld [vmem:[%s1 + $0x1c8] sm:$0xf]
      %v1242 = vld [vmem:[%s1 + $0x1cc] sm:$0xf]
      %v1243 = vld [vmem:[%s1 + $0x1d0] sm:$0xf]
      %v1244 = vld [vmem:[%s1 + $0x1d4] sm:$0xf]
      %v1245 = vld [vmem:[%s1 + $0x1d8] sm:$0xf]
      %v1246 = vld [vmem:[%s1 + $0x1dc] sm:$0xf]
      %v1247 = vld [vmem:[%s1 + $0x1e0] sm:$0xf]
      %v1248 = vld [vmem:[%s1 + $0x1e4] sm:$0xf]
      %v1249 = vld [vmem:[%s1 + $0x1e8] sm:$0xf]
      %v1250 = vld [vmem:[%s1 + $0x1ec] sm:$0xf]
      %v1251 = vld [vmem:[%s1 + $0x1f0] sm:$0xf]
      %v1252 = vld [vmem:[%s1 + $0x1f4] sm:$0xf]
      %v1253 = vld [vmem:[%s1 + $0x1f8] sm:$0xf]
      %v1254 = vld [vmem:[%s1 + $0x1fc] sm:$0xf]
      %v1255 = vld [vmem:[%s1 + $0x200] sm:$0xf]
      %v1256 = vld [vmem:[%s1 + $0x204] sm:$0xf]
      %v1257 = vld [vmem:[%s1 + $0x208] sm:$0xf]
      %v1258 = vld [vmem:[%s1 + $0x20c] sm:$0xf]
      %v1259 = vld [vmem:[%s1 + $0x210] sm:$0xf]
      %v1260 = vld [vmem:[%s1 + $0x214] sm:$0xf]
      %v1261 = vld [vmem:[%s1 + $0x218] sm:$0xf]
      %v1262 = vld [vmem:[%s1 + $0x21c] sm:$0xf]
      %v1263 = vld [vmem:[%s1 + $0x220] sm:$0xf]
      %v1264 = vld [vmem:[%s1 + $0x224] sm:$0xf]
      %v1265 = vld [vmem:[%s1 + $0x228] sm:$0xf]
      %v1266 = vld [vmem:[%s1 + $0x22c] sm:$0xf]
      %v1267 = vld [vmem:[%s1 + $0x230] sm:$0xf]
      %v1268 = vld [vmem:[%s1 + $0x234] sm:$0xf]
      %v1269 = vld [vmem:[%s1 + $0x238] sm:$0xf]
      %v1270 = vld [vmem:[%s1 + $0x23c] sm:$0xf]
      %v1271 = vld [vmem:[%s2] sm:$0x1]
      %v1273 = vlaneseq
      %v1274 = vshrl.u32 %v1273, 7
      %v1275 = vsub.s32 0, %v1274
      %v1276 = vrot.slane %v1271, %v1275
      %v1422 = vunpack.c.l.b16 %v1127
      %v1423 = vunpack.c.l.b16 %v1128
      %v1424 = vunpack.c.l.b16 %v1129
      %v1425 = vunpack.c.l.b16 %v1130
      %v1426 = vunpack.c.l.b16 %v1131
      %v1427 = vunpack.c.l.b16 %v1132
      %v1428 = vunpack.c.l.b16 %v1133
      %v1429 = vunpack.c.l.b16 %v1134
      %v1430 = vunpack.c.l.b16 %v1135
      %v1431 = vunpack.c.l.b16 %v1136
      %v1432 = vunpack.c.l.b16 %v1137
      %v1433 = vunpack.c.l.b16 %v1138
      %v1434 = vunpack.c.l.b16 %v1139
      %v1435 = vunpack.c.l.b16 %v1140
      %v1436 = vunpack.c.l.b16 %v1141
      %v1437 = vunpack.c.l.b16 %v1142
      %v1438 = vunpack.c.l.b16 %v1143
      %v1439 = vunpack.c.l.b16 %v1144
      %v1440 = vunpack.c.l.b16 %v1145
      %v1441 = vunpack.c.l.b16 %v1146
      %v1442 = vunpack.c.l.b16 %v1147
      %v1443 = vunpack.c.l.b16 %v1148
      %v1444 = vunpack.c.l.b16 %v1149
      %v1445 = vunpack.c.l.b16 %v1150
      %v1446 = vunpack.c.l.b16 %v1151
      %v1447 = vunpack.c.l.b16 %v1152
      %v1448 = vunpack.c.l.b16 %v1153
      %v1449 = vunpack.c.l.b16 %v1154
      %v1450 = vunpack.c.l.b16 %v1155
      %v1451 = vunpack.c.l.b16 %v1156
      %v1452 = vunpack.c.l.b16 %v1157
      %v1453 = vunpack.c.l.b16 %v1158
      %v1454 = vunpack.c.l.b16 %v1159
      %v1455 = vunpack.c.l.b16 %v1160
      %v1456 = vunpack.c.l.b16 %v1161
      %v1457 = vunpack.c.l.b16 %v1162
      %v1458 = vunpack.c.l.b16 %v1163
      %v1459 = vunpack.c.l.b16 %v1164
      %v1460 = vunpack.c.l.b16 %v1165
      %v1461 = vunpack.c.l.b16 %v1166
      %v1462 = vunpack.c.l.b16 %v1167
      %v1463 = vunpack.c.l.b16 %v1168
      %v1464 = vunpack.c.l.b16 %v1169
      %v1465 = vunpack.c.l.b16 %v1170
      %v1466 = vunpack.c.l.b16 %v1171
      %v1467 = vunpack.c.l.b16 %v1172
      %v1468 = vunpack.c.l.b16 %v1173
      %v1469 = vunpack.c.l.b16 %v1174
      %v1470 = vunpack.c.l.b16 %v1175
      %v1471 = vunpack.c.l.b16 %v1176
      %v1472 = vunpack.c.l.b16 %v1177
      %v1473 = vunpack.c.l.b16 %v1178
      %v1474 = vunpack.c.l.b16 %v1179
      %v1475 = vunpack.c.l.b16 %v1180
      %v1476 = vunpack.c.l.b16 %v1181
      %v1477 = vunpack.c.l.b16 %v1182
      %v1478 = vunpack.c.l.b16 %v1183
      %v1479 = vunpack.c.l.b16 %v1184
      %v1480 = vunpack.c.l.b16 %v1185
      %v1481 = vunpack.c.l.b16 %v1186
      %v1482 = vunpack.c.l.b16 %v1187
      %v1483 = vunpack.c.l.b16 %v1188
      %v1484 = vunpack.c.l.b16 %v1189
      %v1485 = vunpack.c.l.b16 %v1190
      %v1486 = vunpack.c.l.b16 %v1191
      %v1487 = vunpack.c.l.b16 %v1192
      %v1488 = vunpack.c.l.b16 %v1193
      %v1489 = vunpack.c.l.b16 %v1194
      %v1490 = vunpack.c.l.b16 %v1195
      %v1491 = vunpack.c.l.b16 %v1196
      %v1492 = vunpack.c.l.b16 %v1197
      %v1493 = vunpack.c.l.b16 %v1198
      %v1494 = vunpack.c.l.b16 %v1199
      %v1495 = vunpack.c.l.b16 %v1200
      %v1496 = vunpack.c.l.b16 %v1201
      %v1497 = vunpack.c.l.b16 %v1202
      %v1498 = vunpack.c.l.b16 %v1203
      %v1499 = vunpack.c.l.b16 %v1204
      %v1500 = vunpack.c.l.b16 %v1205
      %v1501 = vunpack.c.l.b16 %v1206
      %v1502 = vunpack.c.l.b16 %v1207
      %v1503 = vunpack.c.l.b16 %v1208
      %v1504 = vunpack.c.l.b16 %v1209
      %v1505 = vunpack.c.l.b16 %v1210
      %v1506 = vunpack.c.l.b16 %v1211
      %v1507 = vunpack.c.l.b16 %v1212
      %v1508 = vunpack.c.l.b16 %v1213
      %v1509 = vunpack.c.l.b16 %v1214
      %v1510 = vunpack.c.l.b16 %v1215
      %v1511 = vunpack.c.l.b16 %v1216
      %v1512 = vunpack.c.l.b16 %v1217
      %v1513 = vunpack.c.l.b16 %v1218
      %v1514 = vunpack.c.l.b16 %v1219
      %v1515 = vunpack.c.l.b16 %v1220
      %v1516 = vunpack.c.l.b16 %v1221
      %v1517 = vunpack.c.l.b16 %v1222
      %v1518 = vunpack.c.l.b16 %v1223
      %v1519 = vunpack.c.l.b16 %v1224
      %v1520 = vunpack.c.l.b16 %v1225
      %v1521 = vunpack.c.l.b16 %v1226
      %v1522 = vunpack.c.l.b16 %v1227
      %v1523 = vunpack.c.l.b16 %v1228
      %v1524 = vunpack.c.l.b16 %v1229
      %v1525 = vunpack.c.l.b16 %v1230
      %v1526 = vunpack.c.l.b16 %v1231
      %v1527 = vunpack.c.l.b16 %v1232
      %v1528 = vunpack.c.l.b16 %v1233
      %v1529 = vunpack.c.l.b16 %v1234
      %v1530 = vunpack.c.l.b16 %v1235
      %v1531 = vunpack.c.l.b16 %v1236
      %v1532 = vunpack.c.l.b16 %v1237
      %v1533 = vunpack.c.l.b16 %v1238
      %v1534 = vunpack.c.l.b16 %v1239
      %v1535 = vunpack.c.l.b16 %v1240
      %v1536 = vunpack.c.l.b16 %v1241
      %v1537 = vunpack.c.l.b16 %v1242
      %v1538 = vunpack.c.l.b16 %v1243
      %v1539 = vunpack.c.l.b16 %v1244
      %v1540 = vunpack.c.l.b16 %v1245
      %v1541 = vunpack.c.l.b16 %v1246
      %v1542 = vunpack.c.l.b16 %v1247
      %v1543 = vunpack.c.l.b16 %v1248
      %v1544 = vunpack.c.l.b16 %v1249
      %v1545 = vunpack.c.l.b16 %v1250
      %v1546 = vunpack.c.l.b16 %v1251
      %v1547 = vunpack.c.l.b16 %v1252
      %v1548 = vunpack.c.l.b16 %v1253
      %v1549 = vunpack.c.l.b16 %v1254
      %v1550 = vunpack.c.l.b16 %v1255
      %v1551 = vunpack.c.l.b16 %v1256
      %v1552 = vunpack.c.l.b16 %v1257
      %v1553 = vunpack.c.l.b16 %v1258
      %v1554 = vunpack.c.l.b16 %v1259
      %v1555 = vunpack.c.l.b16 %v1260
      %v1556 = vunpack.c.l.b16 %v1261
      %v1557 = vunpack.c.l.b16 %v1262
      %v1558 = vunpack.c.l.b16 %v1263
      %v1559 = vunpack.c.l.b16 %v1264
      %v1560 = vunpack.c.l.b16 %v1265
      %v1561 = vunpack.c.l.b16 %v1266
      %v1562 = vunpack.c.l.b16 %v1267
      %v1563 = vunpack.c.l.b16 %v1268
      %v1564 = vunpack.c.l.b16 %v1269
      %v1565 = vunpack.c.l.b16 %v1270
      %v1566 = vpack.c.b16 %v1423, %v1422
      %v1567 = vpack.c.b16 %v1425, %v1424
      %v1568 = vpack.c.b16 %v1427, %v1426
      %v1569 = vpack.c.b16 %v1429, %v1428
      %v1570 = vpack.c.b16 %v1431, %v1430
      %v1571 = vpack.c.b16 %v1433, %v1432
      %v1572 = vpack.c.b16 %v1435, %v1434
      %v1573 = vpack.c.b16 %v1437, %v1436
      %v1574 = vpack.c.b16 %v1439, %v1438
      %v1575 = vpack.c.b16 %v1441, %v1440
      %v1576 = vpack.c.b16 %v1443, %v1442
      %v1577 = vpack.c.b16 %v1445, %v1444
      %v1578 = vpack.c.b16 %v1447, %v1446
      %v1579 = vpack.c.b16 %v1449, %v1448
      %v1580 = vpack.c.b16 %v1451, %v1450
      %v1581 = vpack.c.b16 %v1453, %v1452
      %v1582 = vpack.c.b16 %v1455, %v1454
      %v1583 = vpack.c.b16 %v1457, %v1456
      %v1584 = vpack.c.b16 %v1459, %v1458
      %v1585 = vpack.c.b16 %v1461, %v1460
      %v1586 = vpack.c.b16 %v1463, %v1462
      %v1587 = vpack.c.b16 %v1465, %v1464
      %v1588 = vpack.c.b16 %v1467, %v1466
      %v1589 = vpack.c.b16 %v1469, %v1468
      %v1590 = vpack.c.b16 %v1471, %v1470
      %v1591 = vpack.c.b16 %v1473, %v1472
      %v1592 = vpack.c.b16 %v1475, %v1474
      %v1593 = vpack.c.b16 %v1477, %v1476
      %v1594 = vpack.c.b16 %v1479, %v1478
      %v1595 = vpack.c.b16 %v1481, %v1480
      %v1596 = vpack.c.b16 %v1483, %v1482
      %v1597 = vpack.c.b16 %v1485, %v1484
      %v1598 = vpack.c.b16 %v1487, %v1486
      %v1599 = vpack.c.b16 %v1489, %v1488
      %v1600 = vpack.c.b16 %v1491, %v1490
      %v1601 = vpack.c.b16 %v1493, %v1492
      %v1602 = vpack.c.b16 %v1495, %v1494
      %v1603 = vpack.c.b16 %v1497, %v1496
      %v1604 = vpack.c.b16 %v1499, %v1498
      %v1605 = vpack.c.b16 %v1501, %v1500
      %v1606 = vpack.c.b16 %v1503, %v1502
      %v1607 = vpack.c.b16 %v1505, %v1504
      %v1608 = vpack.c.b16 %v1507, %v1506
      %v1609 = vpack.c.b16 %v1509, %v1508
      %v1610 = vpack.c.b16 %v1511, %v1510
      %v1611 = vpack.c.b16 %v1513, %v1512
      %v1612 = vpack.c.b16 %v1515, %v1514
      %v1613 = vpack.c.b16 %v1517, %v1516
      %v1614 = vpack.c.b16 %v1519, %v1518
      %v1615 = vpack.c.b16 %v1521, %v1520
      %v1616 = vpack.c.b16 %v1523, %v1522
      %v1617 = vpack.c.b16 %v1525, %v1524
      %v1618 = vpack.c.b16 %v1527, %v1526
      %v1619 = vpack.c.b16 %v1529, %v1528
      %v1620 = vpack.c.b16 %v1531, %v1530
      %v1621 = vpack.c.b16 %v1533, %v1532
      %v1622 = vpack.c.b16 %v1535, %v1534
      %v1623 = vpack.c.b16 %v1537, %v1536
      %v1624 = vpack.c.b16 %v1539, %v1538
      %v1625 = vpack.c.b16 %v1541, %v1540
      %v1626 = vpack.c.b16 %v1543, %v1542
      %v1627 = vpack.c.b16 %v1545, %v1544
      %v1628 = vpack.c.b16 %v1547, %v1546
      %v1629 = vpack.c.b16 %v1549, %v1548
      %v1630 = vpack.c.b16 %v1551, %v1550
      %v1631 = vpack.c.b16 %v1553, %v1552
      %v1632 = vpack.c.b16 %v1555, %v1554
      %v1633 = vpack.c.b16 %v1557, %v1556
      %v1634 = vpack.c.b16 %v1559, %v1558
      %v1635 = vpack.c.b16 %v1561, %v1560
      %v1636 = vpack.c.b16 %v1563, %v1562
      %v1637 = vpack.c.b16 %v1565, %v1564
      %1710 = vmatprep.subr.bf16.mxu0 0
      %1711 = vmatpush1.bf16.msra.mxu0 %v1566
      %1712 = vmatprep.subr.bf16.mxu0 0
      %1713 = vmatpush1.bf16.msra.mxu0 %v1567
      %1714 = vmatprep.subr.bf16.mxu0 0
      %1715 = vmatpush1.bf16.msra.mxu0 %v1568
      %1716 = vmatprep.subr.bf16.mxu0 0
      %1717 = vmatpush1.bf16.msra.mxu0 %v1569
      %1718 = vmatprep.subr.bf16.mxu0 0
      %1719 = vmatpush1.bf16.msra.mxu0 %v1570
      %1720 = vmatprep.subr.bf16.mxu0 0
      %1721 = vmatpush1.bf16.msra.mxu0 %v1571
      %1722 = vmatprep.subr.bf16.mxu0 0
      %1723 = vmatpush1.bf16.msra.mxu0 %v1572
      %1724 = vmatprep.subr.bf16.mxu0 0
      %1725 = vmatpush1.bf16.msra.mxu0 %v1573
      %1726 = vmatprep.subr.bf16.mxu0 0
      %1727 = vmatpush1.bf16.msra.mxu0 %v1574
      %1728 = vmatprep.subr.bf16.mxu0 0
      %1729 = vmatpush1.bf16.msra.mxu0 %v1575
      %1730 = vmatprep.subr.bf16.mxu0 0
      %1731 = vmatpush1.bf16.msra.mxu0 %v1576
      %1732 = vmatprep.subr.bf16.mxu0 0
      %1733 = vmatpush1.bf16.msra.mxu0 %v1577
      %1734 = vmatprep.subr.bf16.mxu0 0
      %1735 = vmatpush1.bf16.msra.mxu0 %v1578
      %1736 = vmatprep.subr.bf16.mxu0 0
      %1737 = vmatpush1.bf16.msra.mxu0 %v1579
      %1738 = vmatprep.subr.bf16.mxu0 0
      %1739 = vmatpush1.bf16.msra.mxu0 %v1580
      %1740 = vmatprep.subr.bf16.mxu0 0
      %1741 = vmatpush1.bf16.msra.mxu0 %v1581
      %1742 = vmatprep.mubr.bf16.mxu0 %v556
      %1743 = vmatmul.mubr.bf16.gmra.mrb[0].mxu0 %v450
      %v1744 = vpop.f32.mrb[0].mxu0
      %v1745 = vadd.f32 %v1276, %v1744
      %v1746 = vpop.f32.mrb[0].mxu0
      %v1747 = vpop.f32.mrb[0].mxu0
      %v1748 = vadd.f32 %v1276, %v1747
      %v1749 = vpop.f32.mrb[0].mxu0
      %1750 = vmatprep.mubr.bf16.mxu0 %v557
      %1751 = vmatmul.mubr.bf16.gmra.mrb[0].mxu0 %v451
      %v1752 = vpop.f32.mrb[0].mxu0
      %v1753 = vadd.f32 %v1276, %v1752
      %v1754 = vpop.f32.mrb[0].mxu0
      %v1755 = vpop.f32.mrb[0].mxu0
      %v1756 = vadd.f32 %v1276, %v1755
      %v1757 = vpop.f32.mrb[0].mxu0
      %1758 = vmatprep.mubr.bf16.mxu0 %v558
      %1759 = vmatmul.mubr.bf16.gmra.mrb[0].mxu0 %v452
      %v1760 = vpop.f32.mrb[0].mxu0
      %v1761 = vadd.f32 %v1276, %v1760
      %v1762 = vpop.f32.mrb[0].mxu0
      %v1763 = vpop.f32.mrb[0].mxu0
      %v1764 = vadd.f32 %v1276, %v1763
      %v1765 = vpop.f32.mrb[0].mxu0
      %1766 = vmatprep.mubr.bf16.mxu0 %v559
      %1767 = vmatmul.mubr.bf16.gmra.mrb[0].mxu0 %v453
      %v1768 = vpop.f32.mrb[0].mxu0
      %v1769 = vadd.f32 %v1276, %v1768
      %v1770 = vpop.f32.mrb[0].mxu0
      %v1771 = vpop.f32.mrb[0].mxu0
      %v1772 = vadd.f32 %v1276, %v1771
      %v1773 = vpop.f32.mrb[0].mxu0
      %1774 = vmatprep.mubr.bf16.mxu0 %v560
      %1775 = vmatmul.mubr.bf16.gmra.mrb[0].mxu0 %v454
      %v1776 = vpop.f32.mrb[0].mxu0
      %v1777 = vadd.f32 %v1276, %v1776
      %v1778 = vpop.f32.mrb[0].mxu0
      %v1779 = vpop.f32.mrb[0].mxu0
      %v1780 = vadd.f32 %v1276, %v1779
      %v1781 = vpop.f32.mrb[0].mxu0
      %1782 = vmatprep.mubr.bf16.mxu0 %v561
      %1783 = vmatmul.mubr.bf16.gmra.mrb[0].mxu0 %v455
      %v1784 = vpop.f32.mrb[0].mxu0
      %v1785 = vadd.f32 %v1276, %v1784
      %v1786 = vpop.f32.mrb[0].mxu0
      %v1787 = vpop.f32.mrb[0].mxu0
      %v1788 = vadd.f32 %v1276, %v1787
      %v1789 = vpop.f32.mrb[0].mxu0
      %1790 = vmatprep.mubr.bf16.mxu0 %v562
      %1791 = vmatmul.mubr.bf16.gmra.mrb[0].mxu0 %v456
      %v1792 = vpop.f32.mrb[0].mxu0
      %v1793 = vadd.f32 %v1276, %v1792
      %v1794 = vpop.f32.mrb[0].mxu0
      %v1795 = vpop.f32.mrb[0].mxu0
      %v1796 = vadd.f32 %v1276, %v1795
      %v1797 = vpop.f32.mrb[0].mxu0
      %1798 = vmatprep.mubr.bf16.mxu0 %v563
      %1799 = vmatmul.mubr.bf16.gmra.mrb[0].mxu0 %v457
      %v1800 = vpop.f32.mrb[0].mxu0
      %v1801 = vadd.f32 %v1276, %v1800
      %v1802 = vpop.f32.mrb[0].mxu0
      %v1803 = vpop.f32.mrb[0].mxu0
      %v1804 = vadd.f32 %v1276, %v1803
      %v1805 = vpop.f32.mrb[0].mxu0
      %1806 = vmatprep.mubr.bf16.mxu0 %v564
      %1807 = vmatmul.mubr.bf16.gmra.mrb[0].mxu0 %v458
      %v1808 = vpop.f32.mrb[0].mxu0
      %v1809 = vadd.f32 %v1276, %v1808
      %v1810 = vpop.f32.mrb[0].mxu0
      %v1811 = vpop.f32.mrb[0].mxu0
      %v1812 = vadd.f32 %v1276, %v1811
      %v1813 = vpop.f32.mrb[0].mxu0
      %1814 = vmatprep.mubr.bf16.mxu0 %v565
      %1815 = vmatmul.mubr.bf16.gmra.mrb[0].mxu0 %v459
      %v1816 = vpop.f32.mrb[0].mxu0
      %v1817 = vadd.f32 %v1276, %v1816
      %v1818 = vpop.f32.mrb[0].mxu0
      %v1819 = vpop.f32.mrb[0].mxu0
      %v1820 = vadd.f32 %v1276, %v1819
      %v1821 = vpop.f32.mrb[0].mxu0
      %1822 = vmatprep.mubr.bf16.mxu0 %v566
      %1823 = vmatmul.mubr.bf16.gmra.mrb[0].mxu0 %v460
      %v1824 = vpop.f32.mrb[0].mxu0
      %v1825 = vadd.f32 %v1276, %v1824
      %v1826 = vpop.f32.mrb[0].mxu0
      %v1827 = vpop.f32.mrb[0].mxu0
      %v1828 = vadd.f32 %v1276, %v1827
      %v1829 = vpop.f32.mrb[0].mxu0
      %1830 = vmatprep.mubr.bf16.mxu0 %v567
      %1831 = vmatmul.mubr.bf16.gmra.mrb[0].mxu0 %v461
      %v1832 = vpop.f32.mrb[0].mxu0
      %v1833 = vadd.f32 %v1276, %v1832
      %v1834 = vpop.f32.mrb[0].mxu0
      %v1835 = vpop.f32.mrb[0].mxu0
      %v1836 = vadd.f32 %v1276, %v1835
      %v1837 = vpop.f32.mrb[0].mxu0
      %1838 = vmatprep.mubr.bf16.mxu0 %v568
      %1839 = vmatmul.mubr.bf16.gmra.mrb[0].mxu0 %v462
      %v1840 = vpop.f32.mrb[0].mxu0
      %v1841 = vadd.f32 %v1276, %v1840
      %v1842 = vpop.f32.mrb[0].mxu0
      %v1843 = vpop.f32.mrb[0].mxu0
      %v1844 = vadd.f32 %v1276, %v1843
      %v1845 = vpop.f32.mrb[0].mxu0
      %1846 = vmatprep.mubr.bf16.mxu0 %v569
      %1847 = vmatmul.mubr.bf16.gmra.mrb[0].mxu0 %v463
      %v1848 = vpop.f32.mrb[0].mxu0
      %v1849 = vadd.f32 %v1276, %v1848
      %v1850 = vpop.f32.mrb[0].mxu0
      %v1851 = vpop.f32.mrb[0].mxu0
      %v1852 = vadd.f32 %v1276, %v1851
      %v1853 = vpop.f32.mrb[0].mxu0
      %1854 = vmatprep.mubr.bf16.mxu0 %v570
      %1855 = vmatmul.mubr.bf16.gmra.mrb[0].mxu0 %v464
      %v1856 = vpop.f32.mrb[0].mxu0
      %v1857 = vadd.f32 %v1276, %v1856
      %v1858 = vpop.f32.mrb[0].mxu0
      %v1859 = vpop.f32.mrb[0].mxu0
      %v1860 = vadd.f32 %v1276, %v1859
      %v1861 = vpop.f32.mrb[0].mxu0
      %1862 = vmatprep.mubr.bf16.mxu0 %v571
      %1863 = vmatmul.mubr.bf16.gmra.mrb[0].mxu0 %v465
      %v1864 = vpop.f32.mrb[0].mxu0
      %v1865 = vadd.f32 %v1276, %v1864
      %v1866 = vpop.f32.mrb[0].mxu0
      %v1867 = vpop.f32.mrb[0].mxu0
      %v1868 = vadd.f32 %v1276, %v1867
      %v1869 = vpop.f32.mrb[0].mxu0
      %1870 = vmatprep.mubr.bf16.mxu0 %v572
      %1871 = vmatmul.mubr.bf16.gmra.mrb[0].mxu0 %v466
      %v1872 = vpop.f32.mrb[0].mxu0
      %v1873 = vadd.f32 %v1276, %v1872
      %v1874 = vpop.f32.mrb[0].mxu0
      %v1875 = vpop.f32.mrb[0].mxu0
      %v1876 = vadd.f32 %v1276, %v1875
      %v1877 = vpop.f32.mrb[0].mxu0
      %1878 = vmatprep.mubr.bf16.mxu0 %v573
      %1879 = vmatmul.mubr.bf16.gmra.mrb[0].mxu0 %v467
      %v1880 = vpop.f32.mrb[0].mxu0
      %v1881 = vadd.f32 %v1276, %v1880
      %v1882 = vpop.f32.mrb[0].mxu0
      %v1883 = vpop.f32.mrb[0].mxu0
      %v1884 = vadd.f32 %v1276, %v1883
      %v1885 = vpop.f32.mrb[0].mxu0
      %1886 = vmatprep.mubr.bf16.mxu0 %v574
      %1887 = vmatmul.mubr.bf16.gmra.mrb[0].mxu0 %v468
      %v1888 = vpop.f32.mrb[0].mxu0
      %v1889 = vadd.f32 %v1276, %v1888
      %v1890 = vpop.f32.mrb[0].mxu0
      %v1891 = vpop.f32.mrb[0].mxu0
      %v1892 = vadd.f32 %v1276, %v1891
      %v1893 = vpop.f32.mrb[0].mxu0
      %1894 = vmatprep.mubr.bf16.mxu0 %v575
      %1895 = vmatmul.mubr.bf16.gmra.mrb[0].mxu0 %v469
      %v1896 = vpop.f32.mrb[0].mxu0
      %v1897 = vadd.f32 %v1276, %v1896
      %v1898 = vpop.f32.mrb[0].mxu0
      %v1899 = vpop.f32.mrb[0].mxu0
      %v1900 = vadd.f32 %v1276, %v1899
      %v1901 = vpop.f32.mrb[0].mxu0
      %1902 = vmatprep.mubr.bf16.mxu0 %v576
      %1903 = vmatmul.mubr.bf16.gmra.mrb[0].mxu0 %v470
      %v1904 = vpop.f32.mrb[0].mxu0
      %v1905 = vadd.f32 %v1276, %v1904
      %v1906 = vpop.f32.mrb[0].mxu0
      %v1907 = vpop.f32.mrb[0].mxu0
      %v1908 = vadd.f32 %v1276, %v1907
      %v1909 = vpop.f32.mrb[0].mxu0
      %1910 = vdwg.mxu0
      %1911 = vmatprep.subr.bf16.mxu0 0
      %1912 = vmatpush1.bf16.msra.mxu0 %v1582
      %1913 = vmatprep.subr.bf16.mxu0 0
      %1914 = vmatpush1.bf16.msra.mxu0 %v1583
      %1915 = vmatprep.subr.bf16.mxu0 0
      %1916 = vmatpush1.bf16.msra.mxu0 %v1584
      %1917 = vmatprep.subr.bf16.mxu0 0
      %1918 = vmatpush1.bf16.msra.mxu0 %v1585
      %1919 = vmatprep.subr.bf16.mxu0 0
      %1920 = vmatpush1.bf16.msra.mxu0 %v1586
      %1921 = vmatprep.subr.bf16.mxu0 0
      %1922 = vmatpush1.bf16.msra.mxu0 %v1587
      %1923 = vmatprep.subr.bf16.mxu0 0
      %1924 = vmatpush1.bf16.msra.mxu0 %v1588
      %1925 = vmatprep.subr.bf16.mxu0 0
      %1926 = vmatpush1.bf16.msra.mxu0 %v1589
      %1927 = vmatprep.subr.bf16.mxu0 0
      %1928 = vmatpush1.bf16.msra.mxu0 %v1590
      %1929 = vmatprep.subr.bf16.mxu0 0
      %1930 = vmatpush1.bf16.msra.mxu0 %v1591
      %1931 = vmatprep.subr.bf16.mxu0 0
      %1932 = vmatpush1.bf16.msra.mxu0 %v1592
      %1933 = vmatprep.subr.bf16.mxu0 0
      %1934 = vmatpush1.bf16.msra.mxu0 %v1593
      %1935 = vmatprep.subr.bf16.mxu0 0
      %1936 = vmatpush1.bf16.msra.mxu0 %v1594
      %1937 = vmatprep.subr.bf16.mxu0 0
      %1938 = vmatpush1.bf16.msra.mxu0 %v1595
      %1939 = vmatprep.subr.bf16.mxu0 0
      %1940 = vmatpush1.bf16.msra.mxu0 %v1596
      %1941 = vmatprep.subr.bf16.mxu0 0
      %1942 = vmatpush1.bf16.msra.mxu0 %v1597
      %1943 = vmatprep.mubr.bf16.mxu0 %v663
      %1944 = vmatmul.mubr.bf16.gmra.mrb[0].mxu0 %v662
      %v1945 = vpop.f32.mrb[0].mxu0
      %v1946 = vadd.f32 %v1745, %v1945
      %v1947 = vpop.f32.mrb[0].mxu0
      %v1948 = vpop.f32.mrb[0].mxu0
      %v1949 = vadd.f32 %v1748, %v1948
      %v1950 = vpop.f32.mrb[0].mxu0
      %1951 = vmatprep.mubr.bf16.mxu0 %v664
      %1952 = vmatmul.mubr.bf16.gmra.mrb[0].mxu0 %v663
      %v1953 = vpop.f32.mrb[0].mxu0
      %v1954 = vadd.f32 %v1753, %v1953
      %v1955 = vpop.f32.mrb[0].mxu0
      %v1956 = vpop.f32.mrb[0].mxu0
      %v1957 = vadd.f32 %v1756, %v1956
      %v1958 = vpop.f32.mrb[0].mxu0
      %1959 = vmatprep.mubr.bf16.mxu0 %v665
      %1960 = vmatmul.mubr.bf16.gmra.mrb[0].mxu0 %v664
      %v1961 = vpop.f32.mrb[0].mxu0
      %v1962 = vadd.f32 %v1761, %v1961
      %v1963 = vpop.f32.mrb[0].mxu0
      %v1964 = vpop.f32.mrb[0].mxu0
      %v1965 = vadd.f32 %v1764, %v1964
      %v1966 = vpop.f32.mrb[0].mxu0
      %1967 = vmatprep.mubr.bf16.mxu0 %v666
      %1968 = vmatmul.mubr.bf16.gmra.mrb[0].mxu0 %v665
      %v1969 = vpop.f32.mrb[0].mxu0
      %v1970 = vadd.f32 %v1769, %v1969
      %v1971 = vpop.f32.mrb[0].mxu0
      %v1972 = vpop.f32.mrb[0].mxu0
      %v1973 = vadd.f32 %v1772, %v1972
      %v1974 = vpop.f32.mrb[0].mxu0
      %1975 = vmatprep.mubr.bf16.mxu0 %v667
      %1976 = vmatmul.mubr.bf16.gmra.mrb[0].mxu0 %v666
      %v1977 = vpop.f32.mrb[0].mxu0
      %v1978 = vadd.f32 %v1777, %v1977
      %v1979 = vpop.f32.mrb[0].mxu0
      %v1980 = vpop.f32.mrb[0].mxu0
      %v1981 = vadd.f32 %v1780, %v1980
      %v1982 = vpop.f32.mrb[0].mxu0
      %1983 = vmatprep.mubr.bf16.mxu0 %v668
      %1984 = vmatmul.mubr.bf16.gmra.mrb[0].mxu0 %v667
      %v1985 = vpop.f32.mrb[0].mxu0
      %v1986 = vadd.f32 %v1785, %v1985
      %v1987 = vpop.f32.mrb[0].mxu0
      %v1988 = vpop.f32.mrb[0].mxu0
      %v1989 = vadd.f32 %v1788, %v1988
      %v1990 = vpop.f32.mrb[0].mxu0
      %1991 = vmatprep.mubr.bf16.mxu0 %v669
      %1992 = vmatmul.mubr.bf16.gmra.mrb[0].mxu0 %v668
      %v1993 = vpop.f32.mrb[0].mxu0
      %v1994 = vadd.f32 %v1793, %v1993
      %v1995 = vpop.f32.mrb[0].mxu0
      %v1996 = vpop.f32.mrb[0].mxu0
      %v1997 = vadd.f32 %v1796, %v1996
      %v1998 = vpop.f32.mrb[0].mxu0
      %1999 = vmatprep.mubr.bf16.mxu0 %v670
      %2000 = vmatmul.mubr.bf16.gmra.mrb[0].mxu0 %v669
      %v2001 = vpop.f32.mrb[0].mxu0
      %v2002 = vadd.f32 %v1801, %v2001
      %v2003 = vpop.f32.mrb[0].mxu0
      %v2004 = vpop.f32.mrb[0].mxu0
      %v2005 = vadd.f32 %v1804, %v2004
      %v2006 = vpop.f32.mrb[0].mxu0
      %2007 = vmatprep.mubr.bf16.mxu0 %v671
      %2008 = vmatmul.mubr.bf16.gmra.mrb[0].mxu0 %v670
      %v2009 = vpop.f32.mrb[0].mxu0
      %v2010 = vadd.f32 %v1809, %v2009
      %v2011 = vpop.f32.mrb[0].mxu0
      %v2012 = vpop.f32.mrb[0].mxu0
      %v2013 = vadd.f32 %v1812, %v2012
      %v2014 = vpop.f32.mrb[0].mxu0
      %2015 = vmatprep.mubr.bf16.mxu0 %v672
      %2016 = vmatmul.mubr.bf16.gmra.mrb[0].mxu0 %v671
      %v2017 = vpop.f32.mrb[0].mxu0
      %v2018 = vadd.f32 %v1817, %v2017
      %v2019 = vpop.f32.mrb[0].mxu0
      %v2020 = vpop.f32.mrb[0].mxu0
      %v2021 = vadd.f32 %v1820, %v2020
      %v2022 = vpop.f32.mrb[0].mxu0
      %2023 = vmatprep.mubr.bf16.mxu0 %v673
      %2024 = vmatmul.mubr.bf16.gmra.mrb[0].mxu0 %v672
      %v2025 = vpop.f32.mrb[0].mxu0
      %v2026 = vadd.f32 %v1825, %v2025
      %v2027 = vpop.f32.mrb[0].mxu0
      %v2028 = vpop.f32.mrb[0].mxu0
      %v2029 = vadd.f32 %v1828, %v2028
      %v2030 = vpop.f32.mrb[0].mxu0
      %2031 = vmatprep.mubr.bf16.mxu0 %v674
      %2032 = vmatmul.mubr.bf16.gmra.mrb[0].mxu0 %v673
      %v2033 = vpop.f32.mrb[0].mxu0
      %v2034 = vadd.f32 %v1833, %v2033
      %v2035 = vpop.f32.mrb[0].mxu0
      %v2036 = vpop.f32.mrb[0].mxu0
      %v2037 = vadd.f32 %v1836, %v2036
      %v2038 = vpop.f32.mrb[0].mxu0
      %2039 = vmatprep.mubr.bf16.mxu0 %v675
      %2040 = vmatmul.mubr.bf16.gmra.mrb[0].mxu0 %v674
      %v2041 = vpop.f32.mrb[0].mxu0
      %v2042 = vadd.f32 %v1841, %v2041
      %v2043 = vpop.f32.mrb[0].mxu0
      %v2044 = vpop.f32.mrb[0].mxu0
      %v2045 = vadd.f32 %v1844, %v2044
      %v2046 = vpop.f32.mrb[0].mxu0
      %2047 = vmatprep.mubr.bf16.mxu0 %v676
      %2048 = vmatmul.mubr.bf16.gmra.mrb[0].mxu0 %v675
      %v2049 = vpop.f32.mrb[0].mxu0
      %v2050 = vadd.f32 %v1849, %v2049
      %v2051 = vpop.f32.mrb[0].mxu0
      %v2052 = vpop.f32.mrb[0].mxu0
      %v2053 = vadd.f32 %v1852, %v2052
      %v2054 = vpop.f32.mrb[0].mxu0
      %2055 = vmatprep.mubr.bf16.mxu0 %v677
      %2056 = vmatmul.mubr.bf16.gmra.mrb[0].mxu0 %v676
      %v2057 = vpop.f32.mrb[0].mxu0
      %v2058 = vadd.f32 %v1857, %v2057
      %v2059 = vpop.f32.mrb[0].mxu0
      %v2060 = vpop.f32.mrb[0].mxu0
      %v2061 = vadd.f32 %v1860, %v2060
      %v2062 = vpop.f32.mrb[0].mxu0
      %2063 = vmatprep.mubr.bf16.mxu0 %v678
      %2064 = vmatmul.mubr.bf16.gmra.mrb[0].mxu0 %v677
      %v2065 = vpop.f32.mrb[0].mxu0
      %v2066 = vadd.f32 %v1865, %v2065
      %v2067 = vpop.f32.mrb[0].mxu0
      %v2068 = vpop.f32.mrb[0].mxu0
      %v2069 = vadd.f32 %v1868, %v2068
      %v2070 = vpop.f32.mrb[0].mxu0
      %2071 = vmatprep.mubr.bf16.mxu0 %v679
      %2072 = vmatmul.mubr.bf16.gmra.mrb[0].mxu0 %v678
      %v2073 = vpop.f32.mrb[0].mxu0
      %v2074 = vadd.f32 %v1873, %v2073
      %v2075 = vpop.f32.mrb[0].mxu0
      %v2076 = vpop.f32.mrb[0].mxu0
      %v2077 = vadd.f32 %v1876, %v2076
      %v2078 = vpop.f32.mrb[0].mxu0
      %2079 = vmatprep.mubr.bf16.mxu0 %v680
      %2080 = vmatmul.mubr.bf16.gmra.mrb[0].mxu0 %v679
      %v2081 = vpop.f32.mrb[0].mxu0
      %v2082 = vadd.f32 %v1881, %v2081
      %v2083 = vpop.f32.mrb[0].mxu0
      %v2084 = vpop.f32.mrb[0].mxu0
      %v2085 = vadd.f32 %v1884, %v2084
      %v2086 = vpop.f32.mrb[0].mxu0
      %2087 = vmatprep.mubr.bf16.mxu0 %v681
      %2088 = vmatmul.mubr.bf16.gmra.mrb[0].mxu0 %v680
      %v2089 = vpop.f32.mrb[0].mxu0
      %v2090 = vadd.f32 %v1889, %v2089
      %v2091 = vpop.f32.mrb[0].mxu0
      %v2092 = vpop.f32.mrb[0].mxu0
      %v2093 = vadd.f32 %v1892, %v2092
      %v2094 = vpop.f32.mrb[0].mxu0
      %2095 = vmatprep.mubr.bf16.mxu0 %v682
      %2096 = vmatmul.mubr.bf16.gmra.mrb[0].mxu0 %v681
      %v2097 = vpop.f32.mrb[0].mxu0
      %v2098 = vadd.f32 %v1897, %v2097
      %v2099 = vpop.f32.mrb[0].mxu0
      %v2100 = vpop.f32.mrb[0].mxu0
      %v2101 = vadd.f32 %v1900, %v2100
      %v2102 = vpop.f32.mrb[0].mxu0
      %2103 = vmatprep.mubr.bf16.mxu0 %v662
      %2104 = vmatmul.mubr.bf16.gmra.mrb[0].mxu0 %v682
      %v2105 = vpop.f32.mrb[0].mxu0
      %v2106 = vadd.f32 %v1905, %v2105
      %v2107 = vpop.f32.mrb[0].mxu0
      %v2108 = vpop.f32.mrb[0].mxu0
      %v2109 = vadd.f32 %v1908, %v2108
      %v2110 = vpop.f32.mrb[0].mxu0
      %2111 = vdwg.mxu0
      %2112 = vmatprep.subr.bf16.mxu0 0
      %2113 = vmatpush1.bf16.msra.mxu0 %v1598
      %2114 = vmatprep.subr.bf16.mxu0 0
      %2115 = vmatpush1.bf16.msra.mxu0 %v1599
      %2116 = vmatprep.subr.bf16.mxu0 0
      %2117 = vmatpush1.bf16.msra.mxu0 %v1600
      %2118 = vmatprep.subr.bf16.mxu0 0
      %2119 = vmatpush1.bf16.msra.mxu0 %v1601
      %2120 = vmatprep.subr.bf16.mxu0 0
      %2121 = vmatpush1.bf16.msra.mxu0 %v1602
      %2122 = vmatprep.subr.bf16.mxu0 0
      %2123 = vmatpush1.bf16.msra.mxu0 %v1603
      %2124 = vmatprep.subr.bf16.mxu0 0
      %2125 = vmatpush1.bf16.msra.mxu0 %v1604
      %2126 = vmatprep.subr.bf16.mxu0 0
      %2127 = vmatpush1.bf16.msra.mxu0 %v1605
      %2128 = vmatprep.subr.bf16.mxu0 0
      %2129 = vmatpush1.bf16.msra.mxu0 %v1606
      %2130 = vmatprep.subr.bf16.mxu0 0
      %2131 = vmatpush1.bf16.msra.mxu0 %v1607
      %2132 = vmatprep.subr.bf16.mxu0 0
      %2133 = vmatpush1.bf16.msra.mxu0 %v1608
      %2134 = vmatprep.subr.bf16.mxu0 0
      %2135 = vmatpush1.bf16.msra.mxu0 %v1609
      %2136 = vmatprep.subr.bf16.mxu0 0
      %2137 = vmatpush1.bf16.msra.mxu0 %v1610
      %2138 = vmatprep.subr.bf16.mxu0 0
      %2139 = vmatpush1.bf16.msra.mxu0 %v1611
      %2140 = vmatprep.subr.bf16.mxu0 0
      %2141 = vmatpush1.bf16.msra.mxu0 %v1612
      %2142 = vmatprep.subr.bf16.mxu0 0
      %2143 = vmatpush1.bf16.msra.mxu0 %v1613
      %2144 = vmatprep.mubr.bf16.mxu0 %v768
      %2145 = vmatmul.mubr.bf16.gmra.mrb[0].mxu0 %v1085
      %v2146 = vpop.f32.mrb[0].mxu0
      %v2147 = vadd.f32 %v1946, %v2146
      %v2148 = vpop.f32.mrb[0].mxu0
      %v2149 = vpop.f32.mrb[0].mxu0
      %v2150 = vadd.f32 %v1949, %v2149
      %v2151 = vpop.f32.mrb[0].mxu0
      %2152 = vmatprep.mubr.bf16.mxu0 %v769
      %2153 = vmatmul.mubr.bf16.gmra.mrb[0].mxu0 %v1086
      %v2154 = vpop.f32.mrb[0].mxu0
      %v2155 = vadd.f32 %v1954, %v2154
      %v2156 = vpop.f32.mrb[0].mxu0
      %v2157 = vpop.f32.mrb[0].mxu0
      %v2158 = vadd.f32 %v1957, %v2157
      %v2159 = vpop.f32.mrb[0].mxu0
      %2160 = vmatprep.mubr.bf16.mxu0 %v770
      %2161 = vmatmul.mubr.bf16.gmra.mrb[0].mxu0 %v1087
      %v2162 = vpop.f32.mrb[0].mxu0
      %v2163 = vadd.f32 %v1962, %v2162
      %v2164 = vpop.f32.mrb[0].mxu0
      %v2165 = vpop.f32.mrb[0].mxu0
      %v2166 = vadd.f32 %v1965, %v2165
      %v2167 = vpop.f32.mrb[0].mxu0
      %2168 = vmatprep.mubr.bf16.mxu0 %v771
      %2169 = vmatmul.mubr.bf16.gmra.mrb[0].mxu0 %v1088
      %v2170 = vpop.f32.mrb[0].mxu0
      %v2171 = vadd.f32 %v1970, %v2170
      %v2172 = vpop.f32.mrb[0].mxu0
      %v2173 = vpop.f32.mrb[0].mxu0
      %v2174 = vadd.f32 %v1973, %v2173
      %v2175 = vpop.f32.mrb[0].mxu0
      %2176 = vmatprep.mubr.bf16.mxu0 %v772
      %2177 = vmatmul.mubr.bf16.gmra.mrb[0].mxu0 %v1089
      %v2178 = vpop.f32.mrb[0].mxu0
      %v2179 = vadd.f32 %v1978, %v2178
      %v2180 = vpop.f32.mrb[0].mxu0
      %v2181 = vpop.f32.mrb[0].mxu0
      %v2182 = vadd.f32 %v1981, %v2181
      %v2183 = vpop.f32.mrb[0].mxu0
      %2184 = vmatprep.mubr.bf16.mxu0 %v773
      %2185 = vmatmul.mubr.bf16.gmra.mrb[0].mxu0 %v1090
      %v2186 = vpop.f32.mrb[0].mxu0
      %v2187 = vadd.f32 %v1986, %v2186
      %v2188 = vpop.f32.mrb[0].mxu0
      %v2189 = vpop.f32.mrb[0].mxu0
      %v2190 = vadd.f32 %v1989, %v2189
      %v2191 = vpop.f32.mrb[0].mxu0
      %2192 = vmatprep.mubr.bf16.mxu0 %v774
      %2193 = vmatmul.mubr.bf16.gmra.mrb[0].mxu0 %v1091
      %v2194 = vpop.f32.mrb[0].mxu0
      %v2195 = vadd.f32 %v1994, %v2194
      %v2196 = vpop.f32.mrb[0].mxu0
      %v2197 = vpop.f32.mrb[0].mxu0
      %v2198 = vadd.f32 %v1997, %v2197
      %v2199 = vpop.f32.mrb[0].mxu0
      %2200 = vmatprep.mubr.bf16.mxu0 %v775
      %2201 = vmatmul.mubr.bf16.gmra.mrb[0].mxu0 %v1092
      %v2202 = vpop.f32.mrb[0].mxu0
      %v2203 = vadd.f32 %v2002, %v2202
      %v2204 = vpop.f32.mrb[0].mxu0
      %v2205 = vpop.f32.mrb[0].mxu0
      %v2206 = vadd.f32 %v2005, %v2205
      %v2207 = vpop.f32.mrb[0].mxu0
      %2208 = vmatprep.mubr.bf16.mxu0 %v776
      %2209 = vmatmul.mubr.bf16.gmra.mrb[0].mxu0 %v1093
      %v2210 = vpop.f32.mrb[0].mxu0
      %v2211 = vadd.f32 %v2010, %v2210
      %v2212 = vpop.f32.mrb[0].mxu0
      %v2213 = vpop.f32.mrb[0].mxu0
      %v2214 = vadd.f32 %v2013, %v2213
      %v2215 = vpop.f32.mrb[0].mxu0
      %2216 = vmatprep.mubr.bf16.mxu0 %v777
      %2217 = vmatmul.mubr.bf16.gmra.mrb[0].mxu0 %v1094
      %v2218 = vpop.f32.mrb[0].mxu0
      %v2219 = vadd.f32 %v2018, %v2218
      %v2220 = vpop.f32.mrb[0].mxu0
      %v2221 = vpop.f32.mrb[0].mxu0
      %v2222 = vadd.f32 %v2021, %v2221
      %v2223 = vpop.f32.mrb[0].mxu0
      %2224 = vmatprep.mubr.bf16.mxu0 %v778
      %2225 = vmatmul.mubr.bf16.gmra.mrb[0].mxu0 %v1095
      %v2226 = vpop.f32.mrb[0].mxu0
      %v2227 = vadd.f32 %v2026, %v2226
      %v2228 = vpop.f32.mrb[0].mxu0
      %v2229 = vpop.f32.mrb[0].mxu0
      %v2230 = vadd.f32 %v2029, %v2229
      %v2231 = vpop.f32.mrb[0].mxu0
      %2232 = vmatprep.mubr.bf16.mxu0 %v779
      %2233 = vmatmul.mubr.bf16.gmra.mrb[0].mxu0 %v1096
      %v2234 = vpop.f32.mrb[0].mxu0
      %v2235 = vadd.f32 %v2034, %v2234
      %v2236 = vpop.f32.mrb[0].mxu0
      %v2237 = vpop.f32.mrb[0].mxu0
      %v2238 = vadd.f32 %v2037, %v2237
      %v2239 = vpop.f32.mrb[0].mxu0
      %2240 = vmatprep.mubr.bf16.mxu0 %v780
      %2241 = vmatmul.mubr.bf16.gmra.mrb[0].mxu0 %v1097
      %v2242 = vpop.f32.mrb[0].mxu0
      %v2243 = vadd.f32 %v2042, %v2242
      %v2244 = vpop.f32.mrb[0].mxu0
      %v2245 = vpop.f32.mrb[0].mxu0
      %v2246 = vadd.f32 %v2045, %v2245
      %v2247 = vpop.f32.mrb[0].mxu0
      %2248 = vmatprep.mubr.bf16.mxu0 %v781
      %2249 = vmatmul.mubr.bf16.gmra.mrb[0].mxu0 %v1098
      %v2250 = vpop.f32.mrb[0].mxu0
      %v2251 = vadd.f32 %v2050, %v2250
      %v2252 = vpop.f32.mrb[0].mxu0
      %v2253 = vpop.f32.mrb[0].mxu0
      %v2254 = vadd.f32 %v2053, %v2253
      %v2255 = vpop.f32.mrb[0].mxu0
      %2256 = vmatprep.mubr.bf16.mxu0 %v782
      %2257 = vmatmul.mubr.bf16.gmra.mrb[0].mxu0 %v1099
      %v2258 = vpop.f32.mrb[0].mxu0
      %v2259 = vadd.f32 %v2058, %v2258
      %v2260 = vpop.f32.mrb[0].mxu0
      %v2261 = vpop.f32.mrb[0].mxu0
      %v2262 = vadd.f32 %v2061, %v2261
      %v2263 = vpop.f32.mrb[0].mxu0
      %2264 = vmatprep.mubr.bf16.mxu0 %v783
      %2265 = vmatmul.mubr.bf16.gmra.mrb[0].mxu0 %v1100
      %v2266 = vpop.f32.mrb[0].mxu0
      %v2267 = vadd.f32 %v2066, %v2266
      %v2268 = vpop.f32.mrb[0].mxu0
      %v2269 = vpop.f32.mrb[0].mxu0
      %v2270 = vadd.f32 %v2069, %v2269
      %v2271 = vpop.f32.mrb[0].mxu0
      %2272 = vmatprep.mubr.bf16.mxu0 %v784
      %2273 = vmatmul.mubr.bf16.gmra.mrb[0].mxu0 %v1101
      %v2274 = vpop.f32.mrb[0].mxu0
      %v2275 = vadd.f32 %v2074, %v2274
      %v2276 = vpop.f32.mrb[0].mxu0
      %v2277 = vpop.f32.mrb[0].mxu0
      %v2278 = vadd.f32 %v2077, %v2277
      %v2279 = vpop.f32.mrb[0].mxu0
      %2280 = vmatprep.mubr.bf16.mxu0 %v785
      %2281 = vmatmul.mubr.bf16.gmra.mrb[0].mxu0 %v1102
      %v2282 = vpop.f32.mrb[0].mxu0
      %v2283 = vadd.f32 %v2082, %v2282
      %v2284 = vpop.f32.mrb[0].mxu0
      %v2285 = vpop.f32.mrb[0].mxu0
      %v2286 = vadd.f32 %v2085, %v2285
      %v2287 = vpop.f32.mrb[0].mxu0
      %2288 = vmatprep.mubr.bf16.mxu0 %v786
      %2289 = vmatmul.mubr.bf16.gmra.mrb[0].mxu0 %v1103
      %v2290 = vpop.f32.mrb[0].mxu0
      %v2291 = vadd.f32 %v2090, %v2290
      %v2292 = vpop.f32.mrb[0].mxu0
      %v2293 = vpop.f32.mrb[0].mxu0
      %v2294 = vadd.f32 %v2093, %v2293
      %v2295 = vpop.f32.mrb[0].mxu0
      %2296 = vmatprep.mubr.bf16.mxu0 %v787
      %2297 = vmatmul.mubr.bf16.gmra.mrb[0].mxu0 %v1104
      %v2298 = vpop.f32.mrb[0].mxu0
      %v2299 = vadd.f32 %v2098, %v2298
      %v2300 = vpop.f32.mrb[0].mxu0
      %v2301 = vpop.f32.mrb[0].mxu0
      %v2302 = vadd.f32 %v2101, %v2301
      %v2303 = vpop.f32.mrb[0].mxu0
      %2304 = vmatprep.mubr.bf16.mxu0 %v788
      %2305 = vmatmul.mubr.bf16.gmra.mrb[0].mxu0 %v1105
      %v2306 = vpop.f32.mrb[0].mxu0
      %v2307 = vadd.f32 %v2106, %v2306
      %v2308 = vpop.f32.mrb[0].mxu0
      %v2309 = vpop.f32.mrb[0].mxu0
      %v2310 = vadd.f32 %v2109, %v2309
      %v2311 = vpop.f32.mrb[0].mxu0
      %2312 = vdwg.mxu0
      %2313 = vmatprep.subr.bf16.mxu0 0
      %2314 = vmatpush1.bf16.msra.mxu0 %v1614
      %2315 = vmatprep.subr.bf16.mxu0 0
      %2316 = vmatpush1.bf16.msra.mxu0 %v1615
      %2317 = vmatprep.subr.bf16.mxu0 0
      %2318 = vmatpush1.bf16.msra.mxu0 %v1616
      %2319 = vmatprep.subr.bf16.mxu0 0
      %2320 = vmatpush1.bf16.msra.mxu0 %v1617
      %2321 = vmatprep.subr.bf16.mxu0 0
      %2322 = vmatpush1.bf16.msra.mxu0 %v1618
      %2323 = vmatprep.subr.bf16.mxu0 0
      %2324 = vmatpush1.bf16.msra.mxu0 %v1619
      %2325 = vmatprep.subr.bf16.mxu0 0
      %2326 = vmatpush1.bf16.msra.mxu0 %v1620
      %2327 = vmatprep.subr.bf16.mxu0 0
      %2328 = vmatpush1.bf16.msra.mxu0 %v1621
      %2329 = vmatprep.subr.bf16.mxu0 0
      %2330 = vmatpush1.bf16.msra.mxu0 %v1622
      %2331 = vmatprep.subr.bf16.mxu0 0
      %2332 = vmatpush1.bf16.msra.mxu0 %v1623
      %2333 = vmatprep.subr.bf16.mxu0 0
      %2334 = vmatpush1.bf16.msra.mxu0 %v1624
      %2335 = vmatprep.subr.bf16.mxu0 0
      %2336 = vmatpush1.bf16.msra.mxu0 %v1625
      %2337 = vmatprep.subr.bf16.mxu0 0
      %2338 = vmatpush1.bf16.msra.mxu0 %v1626
      %2339 = vmatprep.subr.bf16.mxu0 0
      %2340 = vmatpush1.bf16.msra.mxu0 %v1627
      %2341 = vmatprep.subr.bf16.mxu0 0
      %2342 = vmatpush1.bf16.msra.mxu0 %v1628
      %2343 = vmatprep.subr.bf16.mxu0 0
      %2344 = vmatpush1.bf16.msra.mxu0 %v1629
      %2345 = vmatprep.mubr.bf16.mxu0 %v874
      %2346 = vmatmul.mubr.bf16.gmra.mrb[0].mxu0 %v769
      %v2347 = vpop.f32.mrb[0].mxu0
      %v2348 = vadd.f32 %v2147, %v2347
      %v2349 = vpop.f32.mrb[0].mxu0
      %v2350 = vpop.f32.mrb[0].mxu0
      %v2351 = vadd.f32 %v2150, %v2350
      %v2352 = vpop.f32.mrb[0].mxu0
      %2353 = vmatprep.mubr.bf16.mxu0 %v875
      %2354 = vmatmul.mubr.bf16.gmra.mrb[0].mxu0 %v770
      %v2355 = vpop.f32.mrb[0].mxu0
      %v2356 = vadd.f32 %v2155, %v2355
      %v2357 = vpop.f32.mrb[0].mxu0
      %v2358 = vpop.f32.mrb[0].mxu0
      %v2359 = vadd.f32 %v2158, %v2358
      %v2360 = vpop.f32.mrb[0].mxu0
      %2361 = vmatprep.mubr.bf16.mxu0 %v876
      %2362 = vmatmul.mubr.bf16.gmra.mrb[0].mxu0 %v771
      %v2363 = vpop.f32.mrb[0].mxu0
      %v2364 = vadd.f32 %v2163, %v2363
      %v2365 = vpop.f32.mrb[0].mxu0
      %v2366 = vpop.f32.mrb[0].mxu0
      %v2367 = vadd.f32 %v2166, %v2366
      %v2368 = vpop.f32.mrb[0].mxu0
      %2369 = vmatprep.mubr.bf16.mxu0 %v877
      %2370 = vmatmul.mubr.bf16.gmra.mrb[0].mxu0 %v772
      %v2371 = vpop.f32.mrb[0].mxu0
      %v2372 = vadd.f32 %v2171, %v2371
      %v2373 = vpop.f32.mrb[0].mxu0
      %v2374 = vpop.f32.mrb[0].mxu0
      %v2375 = vadd.f32 %v2174, %v2374
      %v2376 = vpop.f32.mrb[0].mxu0
      %2377 = vmatprep.mubr.bf16.mxu0 %v878
      %2378 = vmatmul.mubr.bf16.gmra.mrb[0].mxu0 %v773
      %v2379 = vpop.f32.mrb[0].mxu0
      %v2380 = vadd.f32 %v2179, %v2379
      %v2381 = vpop.f32.mrb[0].mxu0
      %v2382 = vpop.f32.mrb[0].mxu0
      %v2383 = vadd.f32 %v2182, %v2382
      %v2384 = vpop.f32.mrb[0].mxu0
      %2385 = vmatprep.mubr.bf16.mxu0 %v879
      %2386 = vmatmul.mubr.bf16.gmra.mrb[0].mxu0 %v774
      %v2387 = vpop.f32.mrb[0].mxu0
      %v2388 = vadd.f32 %v2187, %v2387
      %v2389 = vpop.f32.mrb[0].mxu0
      %v2390 = vpop.f32.mrb[0].mxu0
      %v2391 = vadd.f32 %v2190, %v2390
      %v2392 = vpop.f32.mrb[0].mxu0
      %2393 = vmatprep.mubr.bf16.mxu0 %v880
      %2394 = vmatmul.mubr.bf16.gmra.mrb[0].mxu0 %v775
      %v2395 = vpop.f32.mrb[0].mxu0
      %v2396 = vadd.f32 %v2195, %v2395
      %v2397 = vpop.f32.mrb[0].mxu0
      %v2398 = vpop.f32.mrb[0].mxu0
      %v2399 = vadd.f32 %v2198, %v2398
      %v2400 = vpop.f32.mrb[0].mxu0
      %2401 = vmatprep.mubr.bf16.mxu0 %v881
      %2402 = vmatmul.mubr.bf16.gmra.mrb[0].mxu0 %v776
      %v2403 = vpop.f32.mrb[0].mxu0
      %v2404 = vadd.f32 %v2203, %v2403
      %v2405 = vpop.f32.mrb[0].mxu0
      %v2406 = vpop.f32.mrb[0].mxu0
      %v2407 = vadd.f32 %v2206, %v2406
      %v2408 = vpop.f32.mrb[0].mxu0
      %2409 = vmatprep.mubr.bf16.mxu0 %v882
      %2410 = vmatmul.mubr.bf16.gmra.mrb[0].mxu0 %v777
      %v2411 = vpop.f32.mrb[0].mxu0
      %v2412 = vadd.f32 %v2211, %v2411
      %v2413 = vpop.f32.mrb[0].mxu0
      %v2414 = vpop.f32.mrb[0].mxu0
      %v2415 = vadd.f32 %v2214, %v2414
      %v2416 = vpop.f32.mrb[0].mxu0
      %2417 = vmatprep.mubr.bf16.mxu0 %v883
      %2418 = vmatmul.mubr.bf16.gmra.mrb[0].mxu0 %v778
      %v2419 = vpop.f32.mrb[0].mxu0
      %v2420 = vadd.f32 %v2219, %v2419
      %v2421 = vpop.f32.mrb[0].mxu0
      %v2422 = vpop.f32.mrb[0].mxu0
      %v2423 = vadd.f32 %v2222, %v2422
      %v2424 = vpop.f32.mrb[0].mxu0
      %2425 = vmatprep.mubr.bf16.mxu0 %v884
      %2426 = vmatmul.mubr.bf16.gmra.mrb[0].mxu0 %v779
      %v2427 = vpop.f32.mrb[0].mxu0
      %v2428 = vadd.f32 %v2227, %v2427
      %v2429 = vpop.f32.mrb[0].mxu0
      %v2430 = vpop.f32.mrb[0].mxu0
      %v2431 = vadd.f32 %v2230, %v2430
      %v2432 = vpop.f32.mrb[0].mxu0
      %2433 = vmatprep.mubr.bf16.mxu0 %v885
      %2434 = vmatmul.mubr.bf16.gmra.mrb[0].mxu0 %v780
      %v2435 = vpop.f32.mrb[0].mxu0
      %v2436 = vadd.f32 %v2235, %v2435
      %v2437 = vpop.f32.mrb[0].mxu0
      %v2438 = vpop.f32.mrb[0].mxu0
      %v2439 = vadd.f32 %v2238, %v2438
      %v2440 = vpop.f32.mrb[0].mxu0
      %2441 = vmatprep.mubr.bf16.mxu0 %v886
      %2442 = vmatmul.mubr.bf16.gmra.mrb[0].mxu0 %v781
      %v2443 = vpop.f32.mrb[0].mxu0
      %v2444 = vadd.f32 %v2243, %v2443
      %v2445 = vpop.f32.mrb[0].mxu0
      %v2446 = vpop.f32.mrb[0].mxu0
      %v2447 = vadd.f32 %v2246, %v2446
      %v2448 = vpop.f32.mrb[0].mxu0
      %2449 = vmatprep.mubr.bf16.mxu0 %v887
      %2450 = vmatmul.mubr.bf16.gmra.mrb[0].mxu0 %v782
      %v2451 = vpop.f32.mrb[0].mxu0
      %v2452 = vadd.f32 %v2251, %v2451
      %v2453 = vpop.f32.mrb[0].mxu0
      %v2454 = vpop.f32.mrb[0].mxu0
      %v2455 = vadd.f32 %v2254, %v2454
      %v2456 = vpop.f32.mrb[0].mxu0
      %2457 = vmatprep.mubr.bf16.mxu0 %v888
      %2458 = vmatmul.mubr.bf16.gmra.mrb[0].mxu0 %v783
      %v2459 = vpop.f32.mrb[0].mxu0
      %v2460 = vadd.f32 %v2259, %v2459
      %v2461 = vpop.f32.mrb[0].mxu0
      %v2462 = vpop.f32.mrb[0].mxu0
      %v2463 = vadd.f32 %v2262, %v2462
      %v2464 = vpop.f32.mrb[0].mxu0
      %2465 = vmatprep.mubr.bf16.mxu0 %v889
      %2466 = vmatmul.mubr.bf16.gmra.mrb[0].mxu0 %v784
      %v2467 = vpop.f32.mrb[0].mxu0
      %v2468 = vadd.f32 %v2267, %v2467
      %v2469 = vpop.f32.mrb[0].mxu0
      %v2470 = vpop.f32.mrb[0].mxu0
      %v2471 = vadd.f32 %v2270, %v2470
      %v2472 = vpop.f32.mrb[0].mxu0
      %2473 = vmatprep.mubr.bf16.mxu0 %v890
      %2474 = vmatmul.mubr.bf16.gmra.mrb[0].mxu0 %v785
      %v2475 = vpop.f32.mrb[0].mxu0
      %v2476 = vadd.f32 %v2275, %v2475
      %v2477 = vpop.f32.mrb[0].mxu0
      %v2478 = vpop.f32.mrb[0].mxu0
      %v2479 = vadd.f32 %v2278, %v2478
      %v2480 = vpop.f32.mrb[0].mxu0
      %2481 = vmatprep.mubr.bf16.mxu0 %v891
      %2482 = vmatmul.mubr.bf16.gmra.mrb[0].mxu0 %v786
      %v2483 = vpop.f32.mrb[0].mxu0
      %v2484 = vadd.f32 %v2283, %v2483
      %v2485 = vpop.f32.mrb[0].mxu0
      %v2486 = vpop.f32.mrb[0].mxu0
      %v2487 = vadd.f32 %v2286, %v2486
      %v2488 = vpop.f32.mrb[0].mxu0
      %2489 = vmatprep.mubr.bf16.mxu0 %v892
      %2490 = vmatmul.mubr.bf16.gmra.mrb[0].mxu0 %v787
      %v2491 = vpop.f32.mrb[0].mxu0
      %v2492 = vadd.f32 %v2291, %v2491
      %v2493 = vpop.f32.mrb[0].mxu0
      %v2494 = vpop.f32.mrb[0].mxu0
      %v2495 = vadd.f32 %v2294, %v2494
      %v2496 = vpop.f32.mrb[0].mxu0
      %2497 = vmatprep.mubr.bf16.mxu0 %v893
      %2498 = vmatmul.mubr.bf16.gmra.mrb[0].mxu0 %v788
      %v2499 = vpop.f32.mrb[0].mxu0
      %v2500 = vadd.f32 %v2299, %v2499
      %v2501 = vpop.f32.mrb[0].mxu0
      %v2502 = vpop.f32.mrb[0].mxu0
      %v2503 = vadd.f32 %v2302, %v2502
      %v2504 = vpop.f32.mrb[0].mxu0
      %2505 = vmatprep.mubr.bf16.mxu0 %v894
      %2506 = vmatmul.mubr.bf16.gmra.mrb[0].mxu0 %v768
      %v2507 = vpop.f32.mrb[0].mxu0
      %v2508 = vadd.f32 %v2307, %v2507
      %v2509 = vpop.f32.mrb[0].mxu0
      %v2510 = vpop.f32.mrb[0].mxu0
      %v2511 = vadd.f32 %v2310, %v2510
      %v2512 = vpop.f32.mrb[0].mxu0
      %2513 = vdwg.mxu0
      %2514 = vmatprep.subr.bf16.mxu0 0
      %2515 = vmatpush1.bf16.msra.mxu0 %v1630
      %2516 = vmatprep.subr.bf16.mxu0 0
      %2517 = vmatpush1.bf16.msra.mxu0 %v1631
      %2518 = vmatprep.subr.bf16.mxu0 0
      %2519 = vmatpush1.bf16.msra.mxu0 %v1632
      %2520 = vmatprep.subr.bf16.mxu0 0
      %2521 = vmatpush1.bf16.msra.mxu0 %v1633
      %2522 = vmatprep.subr.bf16.mxu0 0
      %2523 = vmatpush1.bf16.msra.mxu0 %v1634
      %2524 = vmatprep.subr.bf16.mxu0 0
      %2525 = vmatpush1.bf16.msra.mxu0 %v1635
      %2526 = vmatprep.subr.bf16.mxu0 0
      %2527 = vmatpush1.bf16.msra.mxu0 %v1636
      %2528 = vmatprep.subr.bf16.mxu0 0
      %2529 = vmatpush1.bf16.msra.mxu0 %v1637
      %2530 = vmatprep.subr.bf16.mxu0 0
      %2531 = vmatpush1.bf16.msra.mxu0 0
      %2532 = vmatprep.subr.bf16.mxu0 0
      %2533 = vmatpush1.bf16.msra.mxu0 0
      %2534 = vmatprep.subr.bf16.mxu0 0
      %2535 = vmatpush1.bf16.msra.mxu0 0
      %2536 = vmatprep.subr.bf16.mxu0 0
      %2537 = vmatpush1.bf16.msra.mxu0 0
      %2538 = vmatprep.subr.bf16.mxu0 0
      %2539 = vmatpush1.bf16.msra.mxu0 0
      %2540 = vmatprep.subr.bf16.mxu0 0
      %2541 = vmatpush1.bf16.msra.mxu0 0
      %2542 = vmatprep.subr.bf16.mxu0 0
      %2543 = vmatpush1.bf16.msra.mxu0 0
      %2544 = vmatprep.subr.bf16.mxu0 0
      %2545 = vmatpush1.bf16.msra.mxu0 0
      %2546 = vmatprep.mubr.bf16.mxu0 0
      %2547 = vmatmul.mubr.bf16.gmra.mrb[0].mxu0 %v980
      %v2548 = vpop.f32.mrb[0].mxu0
      %v2549 = vadd.f32 %v2348, %v2548
      %v2550 = vpop.f32.mrb[0].mxu0
      %v2551 = vpop.f32.mrb[0].mxu0
      %v2552 = vadd.f32 %v2351, %v2551
      %v2553 = vpop.f32.mrb[0].mxu0
      %2554 = vmatprep.mubr.bf16.mxu0 0
      %2555 = vmatmul.mubr.bf16.gmra.mrb[0].mxu0 %v981
      %v2556 = vpop.f32.mrb[0].mxu0
      %v2557 = vadd.f32 %v2356, %v2556
      %v2558 = vpop.f32.mrb[0].mxu0
      %v2559 = vpop.f32.mrb[0].mxu0
      %v2560 = vadd.f32 %v2359, %v2559
      %v2561 = vpop.f32.mrb[0].mxu0
      %2562 = vmatprep.mubr.bf16.mxu0 0
      %2563 = vmatmul.mubr.bf16.gmra.mrb[0].mxu0 %v982
      %v2564 = vpop.f32.mrb[0].mxu0
      %v2565 = vadd.f32 %v2364, %v2564
      %v2566 = vpop.f32.mrb[0].mxu0
      %v2567 = vpop.f32.mrb[0].mxu0
      %v2568 = vadd.f32 %v2367, %v2567
      %v2569 = vpop.f32.mrb[0].mxu0
      %2570 = vmatprep.mubr.bf16.mxu0 0
      %2571 = vmatmul.mubr.bf16.gmra.mrb[0].mxu0 %v983
      %v2572 = vpop.f32.mrb[0].mxu0
      %v2573 = vadd.f32 %v2372, %v2572
      %v2574 = vpop.f32.mrb[0].mxu0
      %v2575 = vpop.f32.mrb[0].mxu0
      %v2576 = vadd.f32 %v2375, %v2575
      %v2577 = vpop.f32.mrb[0].mxu0
      %2578 = vmatprep.mubr.bf16.mxu0 0
      %2579 = vmatmul.mubr.bf16.gmra.mrb[0].mxu0 %v984
      %v2580 = vpop.f32.mrb[0].mxu0
      %v2581 = vadd.f32 %v2380, %v2580
      %v2582 = vpop.f32.mrb[0].mxu0
      %v2583 = vpop.f32.mrb[0].mxu0
      %v2584 = vadd.f32 %v2383, %v2583
      %v2585 = vpop.f32.mrb[0].mxu0
      %2586 = vmatprep.mubr.bf16.mxu0 0
      %2587 = vmatmul.mubr.bf16.gmra.mrb[0].mxu0 %v985
      %v2588 = vpop.f32.mrb[0].mxu0
      %v2589 = vadd.f32 %v2388, %v2588
      %v2590 = vpop.f32.mrb[0].mxu0
      %v2591 = vpop.f32.mrb[0].mxu0
      %v2592 = vadd.f32 %v2391, %v2591
      %v2593 = vpop.f32.mrb[0].mxu0
      %2594 = vmatprep.mubr.bf16.mxu0 0
      %2595 = vmatmul.mubr.bf16.gmra.mrb[0].mxu0 %v986
      %v2596 = vpop.f32.mrb[0].mxu0
      %v2597 = vadd.f32 %v2396, %v2596
      %v2598 = vpop.f32.mrb[0].mxu0
      %v2599 = vpop.f32.mrb[0].mxu0
      %v2600 = vadd.f32 %v2399, %v2599
      %v2601 = vpop.f32.mrb[0].mxu0
      %2602 = vmatprep.mubr.bf16.mxu0 0
      %2603 = vmatmul.mubr.bf16.gmra.mrb[0].mxu0 %v987
      %v2604 = vpop.f32.mrb[0].mxu0
      %v2605 = vadd.f32 %v2404, %v2604
      %v2606 = vpop.f32.mrb[0].mxu0
      %v2607 = vpop.f32.mrb[0].mxu0
      %v2608 = vadd.f32 %v2407, %v2607
      %v2609 = vpop.f32.mrb[0].mxu0
      %2610 = vmatprep.mubr.bf16.mxu0 0
      %2611 = vmatmul.mubr.bf16.gmra.mrb[0].mxu0 %v988
      %v2612 = vpop.f32.mrb[0].mxu0
      %v2613 = vadd.f32 %v2412, %v2612
      %v2614 = vpop.f32.mrb[0].mxu0
      %v2615 = vpop.f32.mrb[0].mxu0
      %v2616 = vadd.f32 %v2415, %v2615
      %v2617 = vpop.f32.mrb[0].mxu0
      %2618 = vmatprep.mubr.bf16.mxu0 0
      %2619 = vmatmul.mubr.bf16.gmra.mrb[0].mxu0 %v989
      %v2620 = vpop.f32.mrb[0].mxu0
      %v2621 = vadd.f32 %v2420, %v2620
      %v2622 = vpop.f32.mrb[0].mxu0
      %v2623 = vpop.f32.mrb[0].mxu0
      %v2624 = vadd.f32 %v2423, %v2623
      %v2625 = vpop.f32.mrb[0].mxu0
      %2626 = vmatprep.mubr.bf16.mxu0 0
      %2627 = vmatmul.mubr.bf16.gmra.mrb[0].mxu0 %v990
      %v2628 = vpop.f32.mrb[0].mxu0
      %v2629 = vadd.f32 %v2428, %v2628
      %v2630 = vpop.f32.mrb[0].mxu0
      %v2631 = vpop.f32.mrb[0].mxu0
      %v2632 = vadd.f32 %v2431, %v2631
      %v2633 = vpop.f32.mrb[0].mxu0
      %2634 = vmatprep.mubr.bf16.mxu0 0
      %2635 = vmatmul.mubr.bf16.gmra.mrb[0].mxu0 %v991
      %v2636 = vpop.f32.mrb[0].mxu0
      %v2637 = vadd.f32 %v2436, %v2636
      %v2638 = vpop.f32.mrb[0].mxu0
      %v2639 = vpop.f32.mrb[0].mxu0
      %v2640 = vadd.f32 %v2439, %v2639
      %v2641 = vpop.f32.mrb[0].mxu0
      %2642 = vmatprep.mubr.bf16.mxu0 0
      %2643 = vmatmul.mubr.bf16.gmra.mrb[0].mxu0 %v992
      %v2644 = vpop.f32.mrb[0].mxu0
      %v2645 = vadd.f32 %v2444, %v2644
      %v2646 = vpop.f32.mrb[0].mxu0
      %v2647 = vpop.f32.mrb[0].mxu0
      %v2648 = vadd.f32 %v2447, %v2647
      %v2649 = vpop.f32.mrb[0].mxu0
      %2650 = vmatprep.mubr.bf16.mxu0 0
      %2651 = vmatmul.mubr.bf16.gmra.mrb[0].mxu0 %v993
      %v2652 = vpop.f32.mrb[0].mxu0
      %v2653 = vadd.f32 %v2452, %v2652
      %v2654 = vpop.f32.mrb[0].mxu0
      %v2655 = vpop.f32.mrb[0].mxu0
      %v2656 = vadd.f32 %v2455, %v2655
      %v2657 = vpop.f32.mrb[0].mxu0
      %2658 = vmatprep.mubr.bf16.mxu0 0
      %2659 = vmatmul.mubr.bf16.gmra.mrb[0].mxu0 %v994
      %v2660 = vpop.f32.mrb[0].mxu0
      %v2661 = vadd.f32 %v2460, %v2660
      %v2662 = vpop.f32.mrb[0].mxu0
      %v2663 = vpop.f32.mrb[0].mxu0
      %v2664 = vadd.f32 %v2463, %v2663
      %v2665 = vpop.f32.mrb[0].mxu0
      %2666 = vmatprep.mubr.bf16.mxu0 0
      %2667 = vmatmul.mubr.bf16.gmra.mrb[0].mxu0 %v995
      %v2668 = vpop.f32.mrb[0].mxu0
      %v2669 = vadd.f32 %v2468, %v2668
      %v2670 = vpop.f32.mrb[0].mxu0
      %v2671 = vpop.f32.mrb[0].mxu0
      %v2672 = vadd.f32 %v2471, %v2671
      %v2673 = vpop.f32.mrb[0].mxu0
      %2674 = vmatprep.mubr.bf16.mxu0 0
      %2675 = vmatmul.mubr.bf16.gmra.mrb[0].mxu0 %v996
      %v2676 = vpop.f32.mrb[0].mxu0
      %v2677 = vadd.f32 %v2476, %v2676
      %v2678 = vpop.f32.mrb[0].mxu0
      %v2679 = vpop.f32.mrb[0].mxu0
      %v2680 = vadd.f32 %v2479, %v2679
      %v2681 = vpop.f32.mrb[0].mxu0
      %2682 = vmatprep.mubr.bf16.mxu0 0
      %2683 = vmatmul.mubr.bf16.gmra.mrb[0].mxu0 %v997
      %v2684 = vpop.f32.mrb[0].mxu0
      %v2685 = vadd.f32 %v2484, %v2684
      %v2686 = vpop.f32.mrb[0].mxu0
      %v2687 = vpop.f32.mrb[0].mxu0
      %v2688 = vadd.f32 %v2487, %v2687
      %v2689 = vpop.f32.mrb[0].mxu0
      %2690 = vmatprep.mubr.bf16.mxu0 0
      %2691 = vmatmul.mubr.bf16.gmra.mrb[0].mxu0 %v998
      %v2692 = vpop.f32.mrb[0].mxu0
      %v2693 = vadd.f32 %v2492, %v2692
      %v2694 = vpop.f32.mrb[0].mxu0
      %v2695 = vpop.f32.mrb[0].mxu0
      %v2696 = vadd.f32 %v2495, %v2695
      %v2697 = vpop.f32.mrb[0].mxu0
      %2698 = vmatprep.mubr.bf16.mxu0 0
      %2699 = vmatmul.mubr.bf16.gmra.mrb[0].mxu0 %v999
      %v2700 = vpop.f32.mrb[0].mxu0
      %v2701 = vadd.f32 %v2500, %v2700
      %v2702 = vpop.f32.mrb[0].mxu0
      %v2703 = vpop.f32.mrb[0].mxu0
      %v2704 = vadd.f32 %v2503, %v2703
      %v2705 = vpop.f32.mrb[0].mxu0
      %2706 = vmatprep.mubr.bf16.mxu0 0
      %2707 = vmatmul.mubr.bf16.gmra.mrb[0].mxu0 %v1000
      %v2708 = vpop.f32.mrb[0].mxu0
      %v2709 = vadd.f32 %v2508, %v2708
      %v2710 = vpop.f32.mrb[0].mxu0
      %v2711 = vpop.f32.mrb[0].mxu0
      %v2712 = vadd.f32 %v2511, %v2711
      %v2713 = vpop.f32.mrb[0].mxu0
      %2714 = vdwg.mxu0
      %vm2715 = vcmp.gt.f32.partialorder %v2549, 0.0
      %vm2716 = vcmp.gt.f32.partialorder %v2552, 0.0
      %vm2717 = vcmp.gt.f32.partialorder %v2557, 0.0
      %vm2718 = vcmp.gt.f32.partialorder %v2560, 0.0
      %vm2719 = vcmp.gt.f32.partialorder %v2565, 0.0
      %vm2720 = vcmp.gt.f32.partialorder %v2568, 0.0
      %vm2721 = vcmp.gt.f32.partialorder %v2573, 0.0
      %vm2722 = vcmp.gt.f32.partialorder %v2576, 0.0
      %vm2723 = vcmp.gt.f32.partialorder %v2581, 0.0
      %vm2724 = vcmp.gt.f32.partialorder %v2584, 0.0
      %vm2725 = vcmp.gt.f32.partialorder %v2589, 0.0
      %vm2726 = vcmp.gt.f32.partialorder %v2592, 0.0
      %vm2727 = vcmp.gt.f32.partialorder %v2597, 0.0
      %vm2728 = vcmp.gt.f32.partialorder %v2600, 0.0
      %vm2729 = vcmp.gt.f32.partialorder %v2605, 0.0
      %vm2730 = vcmp.gt.f32.partialorder %v2608, 0.0
      %vm2731 = vcmp.gt.f32.partialorder %v2613, 0.0
      %vm2732 = vcmp.gt.f32.partialorder %v2616, 0.0
      %vm2733 = vcmp.gt.f32.partialorder %v2621, 0.0
      %vm2734 = vcmp.gt.f32.partialorder %v2624, 0.0
      %vm2735 = vcmp.gt.f32.partialorder %v2629, 0.0
      %vm2736 = vcmp.gt.f32.partialorder %v2632, 0.0
      %vm2737 = vcmp.gt.f32.partialorder %v2637, 0.0
      %vm2738 = vcmp.gt.f32.partialorder %v2640, 0.0
      %vm2739 = vcmp.gt.f32.partialorder %v2645, 0.0
      %vm2740 = vcmp.gt.f32.partialorder %v2648, 0.0
      %vm2741 = vcmp.gt.f32.partialorder %v2653, 0.0
      %vm2742 = vcmp.gt.f32.partialorder %v2656, 0.0
      %vm2743 = vcmp.gt.f32.partialorder %v2661, 0.0
      %vm2744 = vcmp.gt.f32.partialorder %v2664, 0.0
      %vm2745 = vcmp.gt.f32.partialorder %v2669, 0.0
      %vm2746 = vcmp.gt.f32.partialorder %v2672, 0.0
      %vm2747 = vcmp.gt.f32.partialorder %v2677, 0.0
      %vm2748 = vcmp.gt.f32.partialorder %v2680, 0.0
      %vm2749 = vcmp.gt.f32.partialorder %v2685, 0.0
      %vm2750 = vcmp.gt.f32.partialorder %v2688, 0.0
      %vm2751 = vcmp.gt.f32.partialorder %v2693, 0.0
      %vm2752 = vcmp.gt.f32.partialorder %v2696, 0.0
      %vm2753 = vcmp.gt.f32.partialorder %v2701, 0.0
      %vm2754 = vcmp.gt.f32.partialorder %v2704, 0.0
      %vm2755 = vcmp.gt.f32.partialorder %v2709, 0.0
      %vm2756 = vcmp.gt.f32.partialorder %v2712, 0.0
      %v2757 = vmin.f32 %v2549, 0.0
      %v2758 = vmin.f32 %v2552, 0.0
      %v2759 = vmin.f32 %v2557, 0.0
      %v2760 = vmin.f32 %v2560, 0.0
      %v2761 = vmin.f32 %v2565, 0.0
      %v2762 = vmin.f32 %v2568, 0.0
      %v2763 = vmin.f32 %v2573, 0.0
      %v2764 = vmin.f32 %v2576, 0.0
      %v2765 = vmin.f32 %v2581, 0.0
      %v2766 = vmin.f32 %v2584, 0.0
      %v2767 = vmin.f32 %v2589, 0.0
      %v2768 = vmin.f32 %v2592, 0.0
      %v2769 = vmin.f32 %v2597, 0.0
      %v2770 = vmin.f32 %v2600, 0.0
      %v2771 = vmin.f32 %v2605, 0.0
      %v2772 = vmin.f32 %v2608, 0.0
      %v2773 = vmin.f32 %v2613, 0.0
      %v2774 = vmin.f32 %v2616, 0.0
      %v2775 = vmin.f32 %v2621, 0.0
      %v2776 = vmin.f32 %v2624, 0.0
      %v2777 = vmin.f32 %v2629, 0.0
      %v2778 = vmin.f32 %v2632, 0.0
      %v2779 = vmin.f32 %v2637, 0.0
      %v2780 = vmin.f32 %v2640, 0.0
      %v2781 = vmin.f32 %v2645, 0.0
      %v2782 = vmin.f32 %v2648, 0.0
      %v2783 = vmin.f32 %v2653, 0.0
      %v2784 = vmin.f32 %v2656, 0.0
      %v2785 = vmin.f32 %v2661, 0.0
      %v2786 = vmin.f32 %v2664, 0.0
      %v2787 = vmin.f32 %v2669, 0.0
      %v2788 = vmin.f32 %v2672, 0.0
      %v2789 = vmin.f32 %v2677, 0.0
      %v2790 = vmin.f32 %v2680, 0.0
      %v2791 = vmin.f32 %v2685, 0.0
      %v2792 = vmin.f32 %v2688, 0.0
      %v2793 = vmin.f32 %v2693, 0.0
      %v2794 = vmin.f32 %v2696, 0.0
      %v2795 = vmin.f32 %v2701, 0.0
      %v2796 = vmin.f32 %v2704, 0.0
      %v2797 = vmin.f32 %v2709, 0.0
      %v2798 = vmin.f32 %v2712, 0.0
      %v2799 = vmul.f32 %v2757, 1.442695
      %v2800 = vpow.pop %v2799
      %v2801 = vmul.f32 %v2758, 1.442695
      %v2802 = vpow.pop %v2801
      %v2803 = vmul.f32 %v2759, 1.442695
      %v2804 = vpow.pop %v2803
      %v2805 = vmul.f32 %v2760, 1.442695
      %v2806 = vpow.pop %v2805
      %v2807 = vmul.f32 %v2761, 1.442695
      %v2808 = vpow.pop %v2807
      %v2809 = vmul.f32 %v2762, 1.442695
      %v2810 = vpow.pop %v2809
      %v2811 = vmul.f32 %v2763, 1.442695
      %v2812 = vpow.pop %v2811
      %v2813 = vmul.f32 %v2764, 1.442695
      %v2814 = vpow.pop %v2813
      %v2815 = vmul.f32 %v2765, 1.442695
      %v2816 = vpow.pop %v2815
      %v2817 = vmul.f32 %v2766, 1.442695
      %v2818 = vpow.pop %v2817
      %v2819 = vmul.f32 %v2767, 1.442695
      %v2820 = vpow.pop %v2819
      %v2821 = vmul.f32 %v2768, 1.442695
      %v2822 = vpow.pop %v2821
      %v2823 = vmul.f32 %v2769, 1.442695
      %v2824 = vpow.pop %v2823
      %v2825 = vmul.f32 %v2770, 1.442695
      %v2826 = vpow.pop %v2825
      %v2827 = vmul.f32 %v2771, 1.442695
      %v2828 = vpow.pop %v2827
      %v2829 = vmul.f32 %v2772, 1.442695
      %v2830 = vpow.pop %v2829
      %v2831 = vmul.f32 %v2773, 1.442695
      %v2832 = vpow.pop %v2831
      %v2833 = vmul.f32 %v2774, 1.442695
      %v2834 = vpow.pop %v2833
      %v2835 = vmul.f32 %v2775, 1.442695
      %v2836 = vpow.pop %v2835
      %v2837 = vmul.f32 %v2776, 1.442695
      %v2838 = vpow.pop %v2837
      %v2839 = vmul.f32 %v2777, 1.442695
      %v2840 = vpow.pop %v2839
      %v2841 = vmul.f32 %v2778, 1.442695
      %v2842 = vpow.pop %v2841
      %v2843 = vmul.f32 %v2779, 1.442695
      %v2844 = vpow.pop %v2843
      %v2845 = vmul.f32 %v2780, 1.442695
      %v2846 = vpow.pop %v2845
      %v2847 = vmul.f32 %v2781, 1.442695
      %v2848 = vpow.pop %v2847
      %v2849 = vmul.f32 %v2782, 1.442695
      %v2850 = vpow.pop %v2849
      %v2851 = vmul.f32 %v2783, 1.442695
      %v2852 = vpow.pop %v2851
      %v2853 = vmul.f32 %v2784, 1.442695
      %v2854 = vpow.pop %v2853
      %v2855 = vmul.f32 %v2785, 1.442695
      %v2856 = vpow.pop %v2855
      %v2857 = vmul.f32 %v2786, 1.442695
      %v2858 = vpow.pop %v2857
      %v2859 = vmul.f32 %v2787, 1.442695
      %v2860 = vpow.pop %v2859
      %v2861 = vmul.f32 %v2788, 1.442695
      %v2862 = vpow.pop %v2861
      %v2863 = vmul.f32 %v2789, 1.442695
      %v2864 = vpow.pop %v2863
      %v2865 = vmul.f32 %v2790, 1.442695
      %v2866 = vpow.pop %v2865
      %v2867 = vmul.f32 %v2791, 1.442695
      %v2868 = vpow.pop %v2867
      %v2869 = vmul.f32 %v2792, 1.442695
      %v2870 = vpow.pop %v2869
      %v2871 = vmul.f32 %v2793, 1.442695
      %v2872 = vpow.pop %v2871
      %v2873 = vmul.f32 %v2794, 1.442695
      %v2874 = vpow.pop %v2873
      %v2875 = vmul.f32 %v2795, 1.442695
      %v2876 = vpow.pop %v2875
      %v2877 = vmul.f32 %v2796, 1.442695
      %v2878 = vpow.pop %v2877
      %v2879 = vmul.f32 %v2797, 1.442695
      %v2880 = vpow.pop %v2879
      %v2881 = vmul.f32 %v2798, 1.442695
      %v2882 = vpow.pop %v2881
      %v2883 = vsub.f32 %v2800, 1.0
      %v2884 = vsub.f32 %v2802, 1.0
      %v2885 = vsub.f32 %v2804, 1.0
      %v2886 = vsub.f32 %v2806, 1.0
      %v2887 = vsub.f32 %v2808, 1.0
      %v2888 = vsub.f32 %v2810, 1.0
      %v2889 = vsub.f32 %v2812, 1.0
      %v2890 = vsub.f32 %v2814, 1.0
      %v2891 = vsub.f32 %v2816, 1.0
      %v2892 = vsub.f32 %v2818, 1.0
      %v2893 = vsub.f32 %v2820, 1.0
      %v2894 = vsub.f32 %v2822, 1.0
      %v2895 = vsub.f32 %v2824, 1.0
      %v2896 = vsub.f32 %v2826, 1.0
      %v2897 = vsub.f32 %v2828, 1.0
      %v2898 = vsub.f32 %v2830, 1.0
      %v2899 = vsub.f32 %v2832, 1.0
      %v2900 = vsub.f32 %v2834, 1.0
      %v2901 = vsub.f32 %v2836, 1.0
      %v2902 = vsub.f32 %v2838, 1.0
      %v2903 = vsub.f32 %v2840, 1.0
      %v2904 = vsub.f32 %v2842, 1.0
      %v2905 = vsub.f32 %v2844, 1.0
      %v2906 = vsub.f32 %v2846, 1.0
      %v2907 = vsub.f32 %v2848, 1.0
      %v2908 = vsub.f32 %v2850, 1.0
      %v2909 = vsub.f32 %v2852, 1.0
      %v2910 = vsub.f32 %v2854, 1.0
      %v2911 = vsub.f32 %v2856, 1.0
      %v2912 = vsub.f32 %v2858, 1.0
      %v2913 = vsub.f32 %v2860, 1.0
      %v2914 = vsub.f32 %v2862, 1.0
      %v2915 = vsub.f32 %v2864, 1.0
      %v2916 = vsub.f32 %v2866, 1.0
      %v2917 = vsub.f32 %v2868, 1.0
      %v2918 = vsub.f32 %v2870, 1.0
      %v2919 = vsub.f32 %v2872, 1.0
      %v2920 = vsub.f32 %v2874, 1.0
      %v2921 = vsub.f32 %v2876, 1.0
      %v2922 = vsub.f32 %v2878, 1.0
      %v2923 = vsub.f32 %v2880, 1.0
      %v2924 = vsub.f32 %v2882, 1.0
      %v2925 = vsel %vm2715, %v2549, %v2883
      %v2926 = vsel %vm2716, %v2552, %v2884
      %v2927 = vsel %vm2717, %v2557, %v2885
      %v2928 = vsel %vm2718, %v2560, %v2886
      %v2929 = vsel %vm2719, %v2565, %v2887
      %v2930 = vsel %vm2720, %v2568, %v2888
      %v2931 = vsel %vm2721, %v2573, %v2889
      %v2932 = vsel %vm2722, %v2576, %v2890
      %v2933 = vsel %vm2723, %v2581, %v2891
      %v2934 = vsel %vm2724, %v2584, %v2892
      %v2935 = vsel %vm2725, %v2589, %v2893
      %v2936 = vsel %vm2726, %v2592, %v2894
      %v2937 = vsel %vm2727, %v2597, %v2895
      %v2938 = vsel %vm2728, %v2600, %v2896
      %v2939 = vsel %vm2729, %v2605, %v2897
      %v2940 = vsel %vm2730, %v2608, %v2898
      %v2941 = vsel %vm2731, %v2613, %v2899
      %v2942 = vsel %vm2732, %v2616, %v2900
      %v2943 = vsel %vm2733, %v2621, %v2901
      %v2944 = vsel %vm2734, %v2624, %v2902
      %v2945 = vsel %vm2735, %v2629, %v2903
      %v2946 = vsel %vm2736, %v2632, %v2904
      %v2947 = vsel %vm2737, %v2637, %v2905
      %v2948 = vsel %vm2738, %v2640, %v2906
      %v2949 = vsel %vm2739, %v2645, %v2907
      %v2950 = vsel %vm2740, %v2648, %v2908
      %v2951 = vsel %vm2741, %v2653, %v2909
      %v2952 = vsel %vm2742, %v2656, %v2910
      %v2953 = vsel %vm2743, %v2661, %v2911
      %v2954 = vsel %vm2744, %v2664, %v2912
      %v2955 = vsel %vm2745, %v2669, %v2913
      %v2956 = vsel %vm2746, %v2672, %v2914
      %v2957 = vsel %vm2747, %v2677, %v2915
      %v2958 = vsel %vm2748, %v2680, %v2916
      %v2959 = vsel %vm2749, %v2685, %v2917
      %v2960 = vsel %vm2750, %v2688, %v2918
      %v2961 = vsel %vm2751, %v2693, %v2919
      %v2962 = vsel %vm2752, %v2696, %v2920
      %v2963 = vsel %vm2753, %v2701, %v2921
      %v2964 = vsel %vm2754, %v2704, %v2922
      %v2965 = vsel %vm2755, %v2709, %v2923
      %v2966 = vsel %vm2756, %v2712, %v2924
      %2968 = vset.pattern.permute.xlu0 0
      %2969 = vperm.xlu0 %2968, %v321
      %v2970 = vpop.permute.xlu0 %2969
      %2973 = vset.pattern.permute.xlu0 0
      %2974 = vperm.xlu0 %2973, %v322
      %v2975 = vpop.permute.xlu0 %2974
      %2978 = vset.pattern.permute.xlu0 0
      %2979 = vperm.xlu0 %2978, %v323
      %v2980 = vpop.permute.xlu0 %2979
      %2983 = vset.pattern.permute.xlu0 0
      %2984 = vperm.xlu0 %2983, %v324
      %v2985 = vpop.permute.xlu0 %2984
      %2988 = vset.pattern.permute.xlu0 0
      %2989 = vperm.xlu0 %2988, %v325
      %v2990 = vpop.permute.xlu0 %2989
      %2993 = vset.pattern.permute.xlu0 0
      %2994 = vperm.xlu0 %2993, %v326
      %v2995 = vpop.permute.xlu0 %2994
      %2998 = vset.pattern.permute.xlu0 0
      %2999 = vperm.xlu0 %2998, %v327
      %v3000 = vpop.permute.xlu0 %2999
      %3003 = vset.pattern.permute.xlu0 0
      %3004 = vperm.xlu0 %3003, %v328
      %v3005 = vpop.permute.xlu0 %3004
      %3008 = vset.pattern.permute.xlu0 0
      %3009 = vperm.xlu0 %3008, %v329
      %v3010 = vpop.permute.xlu0 %3009
      %3013 = vset.pattern.permute.xlu0 0
      %3014 = vperm.xlu0 %3013, %v330
      %v3015 = vpop.permute.xlu0 %3014
      %3018 = vset.pattern.permute.xlu0 0
      %3019 = vperm.xlu0 %3018, %v331
      %v3020 = vpop.permute.xlu0 %3019
      %3023 = vset.pattern.permute.xlu0 0
      %3024 = vperm.xlu0 %3023, %v332
      %v3025 = vpop.permute.xlu0 %3024
      %3028 = vset.pattern.permute.xlu0 0
      %3029 = vperm.xlu0 %3028, %v333
      %v3030 = vpop.permute.xlu0 %3029
      %3033 = vset.pattern.permute.xlu0 0
      %3034 = vperm.xlu0 %3033, %v334
      %v3035 = vpop.permute.xlu0 %3034
      %3038 = vset.pattern.permute.xlu0 0
      %3039 = vperm.xlu0 %3038, %v335
      %v3040 = vpop.permute.xlu0 %3039
      %3043 = vset.pattern.permute.xlu0 0
      %3044 = vperm.xlu0 %3043, %v336
      %v3045 = vpop.permute.xlu0 %3044
      %3048 = vset.pattern.permute.xlu0 0
      %3049 = vperm.xlu0 %3048, %v337
      %v3050 = vpop.permute.xlu0 %3049
      %3053 = vset.pattern.permute.xlu0 0
      %3054 = vperm.xlu0 %3053, %v338
      %v3055 = vpop.permute.xlu0 %3054
      %3058 = vset.pattern.permute.xlu0 0
      %3059 = vperm.xlu0 %3058, %v339
      %v3060 = vpop.permute.xlu0 %3059
      %3063 = vset.pattern.permute.xlu0 0
      %3064 = vperm.xlu0 %3063, %v340
      %v3065 = vpop.permute.xlu0 %3064
      %3068 = vset.pattern.permute.xlu0 0
      %3069 = vperm.xlu0 %3068, %v341
      %v3070 = vpop.permute.xlu0 %3069
      %3073 = vset.pattern.permute.xlu0 0
      %3074 = vperm.xlu0 %3073, %v342
      %v3075 = vpop.permute.xlu0 %3074
      %3078 = vset.pattern.permute.xlu0 0
      %3079 = vperm.xlu0 %3078, %v343
      %v3080 = vpop.permute.xlu0 %3079
      %3083 = vset.pattern.permute.xlu0 0
      %3084 = vperm.xlu0 %3083, %v344
      %v3085 = vpop.permute.xlu0 %3084
      %3088 = vset.pattern.permute.xlu0 0
      %3089 = vperm.xlu0 %3088, %v345
      %v3090 = vpop.permute.xlu0 %3089
      %3093 = vset.pattern.permute.xlu0 0
      %3094 = vperm.xlu0 %3093, %v346
      %v3095 = vpop.permute.xlu0 %3094
      %3098 = vset.pattern.permute.xlu0 0
      %3099 = vperm.xlu0 %3098, %v347
      %v3100 = vpop.permute.xlu0 %3099
      %3103 = vset.pattern.permute.xlu0 0
      %3104 = vperm.xlu0 %3103, %v348
      %v3105 = vpop.permute.xlu0 %3104
      %3108 = vset.pattern.permute.xlu0 0
      %3109 = vperm.xlu0 %3108, %v349
      %v3110 = vpop.permute.xlu0 %3109
      %3113 = vset.pattern.permute.xlu0 0
      %3114 = vperm.xlu0 %3113, %v350
      %v3115 = vpop.permute.xlu0 %3114
      %3118 = vset.pattern.permute.xlu0 0
      %3119 = vperm.xlu0 %3118, %v351
      %v3120 = vpop.permute.xlu0 %3119
      %3123 = vset.pattern.permute.xlu0 0
      %3124 = vperm.xlu0 %3123, %v352
      %v3125 = vpop.permute.xlu0 %3124
      %3128 = vset.pattern.permute.xlu0 0
      %3129 = vperm.xlu0 %3128, %v353
      %v3130 = vpop.permute.xlu0 %3129
      %3133 = vset.pattern.permute.xlu0 0
      %3134 = vperm.xlu0 %3133, %v354
      %v3135 = vpop.permute.xlu0 %3134
      %3138 = vset.pattern.permute.xlu0 0
      %3139 = vperm.xlu0 %3138, %v355
      %v3140 = vpop.permute.xlu0 %3139
      %3143 = vset.pattern.permute.xlu0 0
      %3144 = vperm.xlu0 %3143, %v356
      %v3145 = vpop.permute.xlu0 %3144
      %3148 = vset.pattern.permute.xlu0 0
      %3149 = vperm.xlu0 %3148, %v357
      %v3150 = vpop.permute.xlu0 %3149
      %3153 = vset.pattern.permute.xlu0 0
      %3154 = vperm.xlu0 %3153, %v358
      %v3155 = vpop.permute.xlu0 %3154
      %3158 = vset.pattern.permute.xlu0 0
      %3159 = vperm.xlu0 %3158, %v359
      %v3160 = vpop.permute.xlu0 %3159
      %3163 = vset.pattern.permute.xlu0 0
      %3164 = vperm.xlu0 %3163, %v360
      %v3165 = vpop.permute.xlu0 %3164
      %3168 = vset.pattern.permute.xlu0 0
      %3169 = vperm.xlu0 %3168, %v361
      %v3170 = vpop.permute.xlu0 %3169
      %3173 = vset.pattern.permute.xlu0 0
      %3174 = vperm.xlu0 %3173, %v362
      %v3175 = vpop.permute.xlu0 %3174
      %v3177 = vmul.f32 %v2925, %v2970
      %v3178 = vmul.f32 %v2926, %v2975
      %v3179 = vmul.f32 %v2927, %v2980
      %v3180 = vmul.f32 %v2928, %v2985
      %v3181 = vmul.f32 %v2929, %v2990
      %v3182 = vmul.f32 %v2930, %v2995
      %v3183 = vmul.f32 %v2931, %v3000
      %v3184 = vmul.f32 %v2932, %v3005
      %v3185 = vmul.f32 %v2933, %v3010
      %v3186 = vmul.f32 %v2934, %v3015
      %v3187 = vmul.f32 %v2935, %v3020
      %v3188 = vmul.f32 %v2936, %v3025
      %v3189 = vmul.f32 %v2937, %v3030
      %v3190 = vmul.f32 %v2938, %v3035
      %v3191 = vmul.f32 %v2939, %v3040
      %v3192 = vmul.f32 %v2940, %v3045
      %v3193 = vmul.f32 %v2941, %v3050
      %v3194 = vmul.f32 %v2942, %v3055
      %v3195 = vmul.f32 %v2943, %v3060
      %v3196 = vmul.f32 %v2944, %v3065
      %v3197 = vmul.f32 %v2945, %v3070
      %v3198 = vmul.f32 %v2946, %v3075
      %v3199 = vmul.f32 %v2947, %v3080
      %v3200 = vmul.f32 %v2948, %v3085
      %v3201 = vmul.f32 %v2949, %v3090
      %v3202 = vmul.f32 %v2950, %v3095
      %v3203 = vmul.f32 %v2951, %v3100
      %v3204 = vmul.f32 %v2952, %v3105
      %v3205 = vmul.f32 %v2953, %v3110
      %v3206 = vmul.f32 %v2954, %v3115
      %v3207 = vmul.f32 %v2955, %v3120
      %v3208 = vmul.f32 %v2956, %v3125
      %v3209 = vmul.f32 %v2957, %v3130
      %v3210 = vmul.f32 %v2958, %v3135
      %v3211 = vmul.f32 %v2959, %v3140
      %v3212 = vmul.f32 %v2960, %v3145
      %v3213 = vmul.f32 %v2961, %v3150
      %v3214 = vmul.f32 %v2962, %v3155
      %v3215 = vmul.f32 %v2963, %v3160
      %v3216 = vmul.f32 %v2964, %v3165
      %v3217 = vmul.f32 %v2965, %v3170
      %v3218 = vmul.f32 %v2966, %v3175
      %v3219 = vpack.c.bf16 %v3178, %v3177
      %v3220 = vpack.c.bf16 %v3180, %v3179
      %v3221 = vpack.c.bf16 %v3182, %v3181
      %v3222 = vpack.c.bf16 %v3184, %v3183
      %v3223 = vpack.c.bf16 %v3186, %v3185
      %v3224 = vpack.c.bf16 %v3188, %v3187
      %v3225 = vpack.c.bf16 %v3190, %v3189
      %v3226 = vpack.c.bf16 %v3192, %v3191
      %v3227 = vpack.c.bf16 %v3194, %v3193
      %v3228 = vpack.c.bf16 %v3196, %v3195
      %v3229 = vpack.c.bf16 %v3198, %v3197
      %v3230 = vpack.c.bf16 %v3200, %v3199
      %v3231 = vpack.c.bf16 %v3202, %v3201
      %v3232 = vpack.c.bf16 %v3204, %v3203
      %v3233 = vpack.c.bf16 %v3206, %v3205
      %v3234 = vpack.c.bf16 %v3208, %v3207
      %v3235 = vpack.c.bf16 %v3210, %v3209
      %v3236 = vpack.c.bf16 %v3212, %v3211
      %v3237 = vpack.c.bf16 %v3214, %v3213
      %v3238 = vpack.c.bf16 %v3216, %v3215
      %v3239 = vpack.c.bf16 %v3218, %v3217
      %v3261 = vunpack.c.l.b16 %v3219
      %v3262 = vunpack.c.h.b16 %v3219
      %v3263 = vunpack.c.l.b16 %v3220
      %v3264 = vunpack.c.h.b16 %v3220
      %v3265 = vunpack.c.l.b16 %v3221
      %v3266 = vunpack.c.h.b16 %v3221
      %v3267 = vunpack.c.l.b16 %v3222
      %v3268 = vunpack.c.h.b16 %v3222
      %v3269 = vunpack.c.l.b16 %v3223
      %v3270 = vunpack.c.h.b16 %v3223
      %v3271 = vunpack.c.l.b16 %v3224
      %v3272 = vunpack.c.h.b16 %v3224
      %v3273 = vunpack.c.l.b16 %v3225
      %v3274 = vunpack.c.h.b16 %v3225
      %v3275 = vunpack.c.l.b16 %v3226
      %v3276 = vunpack.c.h.b16 %v3226
      %v3277 = vunpack.c.l.b16 %v3227
      %v3278 = vunpack.c.h.b16 %v3227
      %v3279 = vunpack.c.l.b16 %v3228
      %v3280 = vunpack.c.h.b16 %v3228
      %v3281 = vunpack.c.l.b16 %v3229
      %v3282 = vunpack.c.h.b16 %v3229
      %v3283 = vunpack.c.l.b16 %v3230
      %v3284 = vunpack.c.h.b16 %v3230
      %v3285 = vunpack.c.l.b16 %v3231
      %v3286 = vunpack.c.h.b16 %v3231
      %v3287 = vunpack.c.l.b16 %v3232
      %v3288 = vunpack.c.h.b16 %v3232
      %v3289 = vunpack.c.l.b16 %v3233
      %v3290 = vunpack.c.h.b16 %v3233
      %v3291 = vunpack.c.l.b16 %v3234
      %v3292 = vunpack.c.h.b16 %v3234
      %v3293 = vunpack.c.l.b16 %v3235
      %v3294 = vunpack.c.h.b16 %v3235
      %v3295 = vunpack.c.l.b16 %v3236
      %v3296 = vunpack.c.h.b16 %v3236
      %v3297 = vunpack.c.l.b16 %v3237
      %v3298 = vunpack.c.h.b16 %v3237
      %v3299 = vunpack.c.l.b16 %v3238
      %v3300 = vunpack.c.h.b16 %v3238
      %v3301 = vunpack.c.l.b16 %v3239
      %v3302 = vunpack.c.h.b16 %v3239
      %v3303 = vpack.c.b16 %v3261, %v3261
      %v3304 = vpack.c.b16 %v3262, %v3262
      %v3305 = vpack.c.b16 %v3263, %v3263
      %v3306 = vpack.c.b16 %v3264, %v3264
      %v3307 = vpack.c.b16 %v3265, %v3265
      %v3308 = vpack.c.b16 %v3266, %v3266
      %v3309 = vpack.c.b16 %v3267, %v3267
      %v3310 = vpack.c.b16 %v3268, %v3268
      %v3311 = vpack.c.b16 %v3269, %v3269
      %v3312 = vpack.c.b16 %v3270, %v3270
      %v3313 = vpack.c.b16 %v3271, %v3271
      %v3314 = vpack.c.b16 %v3272, %v3272
      %v3315 = vpack.c.b16 %v3273, %v3273
      %v3316 = vpack.c.b16 %v3274, %v3274
      %v3317 = vpack.c.b16 %v3275, %v3275
      %v3318 = vpack.c.b16 %v3276, %v3276
      %v3319 = vpack.c.b16 %v3277, %v3277
      %v3320 = vpack.c.b16 %v3278, %v3278
      %v3321 = vpack.c.b16 %v3279, %v3279
      %v3322 = vpack.c.b16 %v3280, %v3280
      %v3323 = vpack.c.b16 %v3281, %v3281
      %v3324 = vpack.c.b16 %v3282, %v3282
      %v3325 = vpack.c.b16 %v3283, %v3283
      %v3326 = vpack.c.b16 %v3284, %v3284
      %v3327 = vpack.c.b16 %v3285, %v3285
      %v3328 = vpack.c.b16 %v3286, %v3286
      %v3329 = vpack.c.b16 %v3287, %v3287
      %v3330 = vpack.c.b16 %v3288, %v3288
      %v3331 = vpack.c.b16 %v3289, %v3289
      %v3332 = vpack.c.b16 %v3290, %v3290
      %v3333 = vpack.c.b16 %v3291, %v3291
      %v3334 = vpack.c.b16 %v3292, %v3292
      %v3335 = vpack.c.b16 %v3293, %v3293
      %v3336 = vpack.c.b16 %v3294, %v3294
      %v3337 = vpack.c.b16 %v3295, %v3295
      %v3338 = vpack.c.b16 %v3296, %v3296
      %v3339 = vpack.c.b16 %v3297, %v3297
      %v3340 = vpack.c.b16 %v3298, %v3298
      %v3341 = vpack.c.b16 %v3299, %v3299
      %v3342 = vpack.c.b16 %v3300, %v3300
      %v3343 = vpack.c.b16 %v3301, %v3301
      %v3344 = vpack.c.b16 %v3302, %v3302
      %3387 = vst [vmem:[%s231] sm:$0xf] %v3303
      %3388 = vst [vmem:[%s231 + $0x4] sm:$0xf] %v3304
      %3389 = vst [vmem:[%s231 + $0x8] sm:$0xf] %v3305
      %3390 = vst [vmem:[%s231 + $0xc] sm:$0xf] %v3306
      %3391 = vst [vmem:[%s231 + $0x10] sm:$0xf] %v3307
      %3392 = vst [vmem:[%s231 + $0x14] sm:$0xf] %v3308
      %3393 = vst [vmem:[%s231 + $0x18] sm:$0xf] %v3309
      %3394 = vst [vmem:[%s231 + $0x1c] sm:$0xf] %v3310
      %3395 = vst [vmem:[%s231 + $0x20] sm:$0xf] %v3311
      %3396 = vst [vmem:[%s231 + $0x24] sm:$0xf] %v3312
      %3397 = vst [vmem:[%s231 + $0x28] sm:$0xf] %v3313
      %3398 = vst [vmem:[%s231 + $0x2c] sm:$0xf] %v3314
      %3399 = vst [vmem:[%s231 + $0x30] sm:$0xf] %v3315
      %3400 = vst [vmem:[%s231 + $0x34] sm:$0xf] %v3316
      %3401 = vst [vmem:[%s231 + $0x38] sm:$0xf] %v3317
      %3402 = vst [vmem:[%s231 + $0x3c] sm:$0xf] %v3318
      %3403 = vst [vmem:[%s231 + $0x40] sm:$0xf] %v3319
      %3404 = vst [vmem:[%s231 + $0x44] sm:$0xf] %v3320
      %3405 = vst [vmem:[%s231 + $0x48] sm:$0xf] %v3321
      %3406 = vst [vmem:[%s231 + $0x4c] sm:$0xf] %v3322
      %3407 = vst [vmem:[%s231 + $0x50] sm:$0xf] %v3323
      %3408 = vst [vmem:[%s231 + $0x54] sm:$0xf] %v3324
      %3409 = vst [vmem:[%s231 + $0x58] sm:$0xf] %v3325
      %3410 = vst [vmem:[%s231 + $0x5c] sm:$0xf] %v3326
      %3411 = vst [vmem:[%s231 + $0x60] sm:$0xf] %v3327
      %3412 = vst [vmem:[%s231 + $0x64] sm:$0xf] %v3328
      %3413 = vst [vmem:[%s231 + $0x68] sm:$0xf] %v3329
      %3414 = vst [vmem:[%s231 + $0x6c] sm:$0xf] %v3330
      %3415 = vst [vmem:[%s231 + $0x70] sm:$0xf] %v3331
      %3416 = vst [vmem:[%s231 + $0x74] sm:$0xf] %v3332
      %3417 = vst [vmem:[%s231 + $0x78] sm:$0xf] %v3333
      %3418 = vst [vmem:[%s231 + $0x7c] sm:$0xf] %v3334
      %3419 = vst [vmem:[%s231 + $0x80] sm:$0xf] %v3335
      %3420 = vst [vmem:[%s231 + $0x84] sm:$0xf] %v3336
      %3421 = vst [vmem:[%s231 + $0x88] sm:$0xf] %v3337
      %3422 = vst [vmem:[%s231 + $0x8c] sm:$0xf] %v3338
      %3423 = vst [vmem:[%s231 + $0x90] sm:$0xf] %v3339
      %3424 = vst [vmem:[%s231 + $0x94] sm:$0xf] %v3340
      %3425 = vst [vmem:[%s231 + $0x98] sm:$0xf] %v3341
      %3426 = vst [vmem:[%s231 + $0x9c] sm:$0xf] %v3342
      %3427 = vst [vmem:[%s231 + $0xa0] sm:$0xf] %v3343
      %3428 = vst [vmem:[%s231 + $0xa4] sm:$0xf] %v3344
      %v3429 = vunpack.c.l.bf16 %v3219
      %v3430 = vunpack.c.h.bf16 %v3219
      %v3431 = vunpack.c.l.bf16 %v3220
      %v3432 = vunpack.c.h.bf16 %v3220
      %v3433 = vunpack.c.l.bf16 %v3221
      %v3434 = vunpack.c.h.bf16 %v3221
      %v3435 = vunpack.c.l.bf16 %v3222
      %v3436 = vunpack.c.h.bf16 %v3222
      %v3437 = vunpack.c.l.bf16 %v3223
      %v3438 = vunpack.c.h.bf16 %v3223
      %v3439 = vunpack.c.l.bf16 %v3224
      %v3440 = vunpack.c.h.bf16 %v3224
      %v3441 = vunpack.c.l.bf16 %v3225
      %v3442 = vunpack.c.h.bf16 %v3225
      %v3443 = vunpack.c.l.bf16 %v3226
      %v3444 = vunpack.c.h.bf16 %v3226
      %v3445 = vunpack.c.l.bf16 %v3227
      %v3446 = vunpack.c.h.bf16 %v3227
      %v3447 = vunpack.c.l.bf16 %v3228
      %v3448 = vunpack.c.h.bf16 %v3228
      %v3449 = vunpack.c.l.bf16 %v3229
      %v3450 = vunpack.c.h.bf16 %v3229
      %v3451 = vunpack.c.l.bf16 %v3230
      %v3452 = vunpack.c.h.bf16 %v3230
      %v3453 = vunpack.c.l.bf16 %v3231
      %v3454 = vunpack.c.h.bf16 %v3231
      %v3455 = vunpack.c.l.bf16 %v3232
      %v3456 = vunpack.c.h.bf16 %v3232
      %v3457 = vunpack.c.l.bf16 %v3233
      %v3458 = vunpack.c.h.bf16 %v3233
      %v3459 = vunpack.c.l.bf16 %v3234
      %v3460 = vunpack.c.h.bf16 %v3234
      %v3461 = vunpack.c.l.bf16 %v3235
      %v3462 = vunpack.c.h.bf16 %v3235
      %v3463 = vunpack.c.l.bf16 %v3236
      %v3464 = vunpack.c.h.bf16 %v3236
      %v3465 = vunpack.c.l.bf16 %v3237
      %v3466 = vunpack.c.h.bf16 %v3237
      %v3467 = vunpack.c.l.bf16 %v3238
      %v3468 = vunpack.c.h.bf16 %v3238
      %v3469 = vunpack.c.l.bf16 %v3239
      %v3470 = vunpack.c.h.bf16 %v3239
      %v3471 = vadd.f32 %v3429, %v3430
      %v3472 = vadd.f32 %v3471, %v3431
      %v3473 = vadd.f32 %v3472, %v3432
      %v3474 = vadd.f32 %v3473, %v3433
      %v3475 = vadd.f32 %v3474, %v3434
      %v3476 = vadd.f32 %v3475, %v3435
      %v3477 = vadd.f32 %v3476, %v3436
      %v3478 = vadd.f32 %v3477, %v3437
      %v3479 = vadd.f32 %v3478, %v3438
      %v3480 = vadd.f32 %v3479, %v3439
      %v3481 = vadd.f32 %v3480, %v3440
      %v3482 = vadd.f32 %v3481, %v3441
      %v3483 = vadd.f32 %v3482, %v3442
      %v3484 = vadd.f32 %v3483, %v3443
      %v3485 = vadd.f32 %v3484, %v3444
      %v3486 = vadd.f32 %v3485, %v3445
      %v3487 = vadd.f32 %v3486, %v3446
      %v3488 = vadd.f32 %v3487, %v3447
      %v3489 = vadd.f32 %v3488, %v3448
      %v3490 = vadd.f32 %v3489, %v3449
      %v3491 = vadd.f32 %v3490, %v3450
      %v3492 = vadd.f32 %v3491, %v3451
      %v3493 = vadd.f32 %v3492, %v3452
      %v3494 = vadd.f32 %v3493, %v3453
      %v3495 = vadd.f32 %v3494, %v3454
      %v3496 = vadd.f32 %v3495, %v3455
      %v3497 = vadd.f32 %v3496, %v3456
      %v3498 = vadd.f32 %v3497, %v3457
      %v3499 = vadd.f32 %v3498, %v3458
      %v3500 = vadd.f32 %v3499, %v3459
      %v3501 = vadd.f32 %v3500, %v3460
      %v3502 = vadd.f32 %v3501, %v3461
      %v3503 = vadd.f32 %v3502, %v3462
      %v3504 = vadd.f32 %v3503, %v3463
      %v3505 = vadd.f32 %v3504, %v3464
      %v3506 = vadd.f32 %v3505, %v3465
      %v3507 = vadd.f32 %v3506, %v3466
      %v3508 = vadd.f32 %v3507, %v3467
      %v3509 = vadd.f32 %v3508, %v3468
      %v3510 = vadd.f32 %v3509, %v3469
      %v3511 = vadd.f32 %v3510, %v3470
      %v3512 = vrot.slane %v3511, 4
      %v3513 = vadd.f32 %v3511, %v3512
      %v3514 = vrot.slane %v3513, 2
      %v3515 = vadd.f32 %v3513, %v3514
      %v3516 = vrot.slane %v3515, 1
      %v3517 = vadd.f32 %v3515, %v3516
      %v3518 = vmul.f32 %v3429, %v3429
      %v3519 = vmul.f32 %v3430, %v3430
      %v3520 = vmul.f32 %v3431, %v3431
      %v3521 = vmul.f32 %v3432, %v3432
      %v3522 = vmul.f32 %v3433, %v3433
      %v3523 = vmul.f32 %v3434, %v3434
      %v3524 = vmul.f32 %v3435, %v3435
      %v3525 = vmul.f32 %v3436, %v3436
      %v3526 = vmul.f32 %v3437, %v3437
      %v3527 = vmul.f32 %v3438, %v3438
      %v3528 = vmul.f32 %v3439, %v3439
      %v3529 = vmul.f32 %v3440, %v3440
      %v3530 = vmul.f32 %v3441, %v3441
      %v3531 = vmul.f32 %v3442, %v3442
      %v3532 = vmul.f32 %v3443, %v3443
      %v3533 = vmul.f32 %v3444, %v3444
      %v3534 = vmul.f32 %v3445, %v3445
      %v3535 = vmul.f32 %v3446, %v3446
      %v3536 = vmul.f32 %v3447, %v3447
      %v3537 = vmul.f32 %v3448, %v3448
      %v3538 = vmul.f32 %v3449, %v3449
      %v3539 = vmul.f32 %v3450, %v3450
      %v3540 = vmul.f32 %v3451, %v3451
      %v3541 = vmul.f32 %v3452, %v3452
      %v3542 = vmul.f32 %v3453, %v3453
      %v3543 = vmul.f32 %v3454, %v3454
      %v3544 = vmul.f32 %v3455, %v3455
      %v3545 = vmul.f32 %v3456, %v3456
      %v3546 = vmul.f32 %v3457, %v3457
      %v3547 = vmul.f32 %v3458, %v3458
      %v3548 = vmul.f32 %v3459, %v3459
      %v3549 = vmul.f32 %v3460, %v3460
      %v3550 = vmul.f32 %v3461, %v3461
      %v3551 = vmul.f32 %v3462, %v3462
      %v3552 = vmul.f32 %v3463, %v3463
      %v3553 = vmul.f32 %v3464, %v3464
      %v3554 = vmul.f32 %v3465, %v3465
      %v3555 = vmul.f32 %v3466, %v3466
      %v3556 = vmul.f32 %v3467, %v3467
      %v3557 = vmul.f32 %v3468, %v3468
      %v3558 = vmul.f32 %v3469, %v3469
      %v3559 = vmul.f32 %v3470, %v3470
      %v3560 = vadd.f32 %v3518, %v3519
      %v3561 = vadd.f32 %v3560, %v3520
      %v3562 = vadd.f32 %v3561, %v3521
      %v3563 = vadd.f32 %v3562, %v3522
      %v3564 = vadd.f32 %v3563, %v3523
      %v3565 = vadd.f32 %v3564, %v3524
      %v3566 = vadd.f32 %v3565, %v3525
      %v3567 = vadd.f32 %v3566, %v3526
      %v3568 = vadd.f32 %v3567, %v3527
      %v3569 = vadd.f32 %v3568, %v3528
      %v3570 = vadd.f32 %v3569, %v3529
      %v3571 = vadd.f32 %v3570, %v3530
      %v3572 = vadd.f32 %v3571, %v3531
      %v3573 = vadd.f32 %v3572, %v3532
      %v3574 = vadd.f32 %v3573, %v3533
      %v3575 = vadd.f32 %v3574, %v3534
      %v3576 = vadd.f32 %v3575, %v3535
      %v3577 = vadd.f32 %v3576, %v3536
      %v3578 = vadd.f32 %v3577, %v3537
      %v3579 = vadd.f32 %v3578, %v3538
      %v3580 = vadd.f32 %v3579, %v3539
      %v3581 = vadd.f32 %v3580, %v3540
      %v3582 = vadd.f32 %v3581, %v3541
      %v3583 = vadd.f32 %v3582, %v3542
      %v3584 = vadd.f32 %v3583, %v3543
      %v3585 = vadd.f32 %v3584, %v3544
      %v3586 = vadd.f32 %v3585, %v3545
      %v3587 = vadd.f32 %v3586, %v3546
      %v3588 = vadd.f32 %v3587, %v3547
      %v3589 = vadd.f32 %v3588, %v3548
      %v3590 = vadd.f32 %v3589, %v3549
      %v3591 = vadd.f32 %v3590, %v3550
      %v3592 = vadd.f32 %v3591, %v3551
      %v3593 = vadd.f32 %v3592, %v3552
      %v3594 = vadd.f32 %v3593, %v3553
      %v3595 = vadd.f32 %v3594, %v3554
      %v3596 = vadd.f32 %v3595, %v3555
      %v3597 = vadd.f32 %v3596, %v3556
      %v3598 = vadd.f32 %v3597, %v3557
      %v3599 = vadd.f32 %v3598, %v3558
      %v3600 = vadd.f32 %v3599, %v3559
      %v3601 = vrot.slane %v3600, 4
      %v3602 = vadd.f32 %v3600, %v3601
      %v3603 = vrot.slane %v3602, 2
      %v3604 = vadd.f32 %v3602, %v3603
      %v3605 = vrot.slane %v3604, 1
      %v3606 = vadd.f32 %v3604, %v3605
      %vm3607 = vcmask 1040384
      %v3608 = vsel %vm3607, %v3517, %v3606
      %3609 = vst [vmem:[%s235] sm:$0x3] %v3608
      %p3610 = scmp.lt.s32.totalorder %s17, 1
      %s3611 = scalar_select %p3610, %s17, 1
      %s3612 = smul.addr %s3611, 42
      %s3613 = smul.addr %s3612, 4
      %s3614 = scalar_lea.vmem %s4, %s3613
      %p3615 = scmp.lt.s32.totalorder %s17, 1
      %s3616 = scalar_select %p3615, %s17, 1
      %s3617 = smul.addr %s3616, 2
      %s3618 = scalar_lea.vmem %s5, %s3617
      // Predicated region
      $region37: #{conv_block_forward.2} parent=35 // pred_check
        %p3619 = pneg %p124
      $region38: #{conv_block_forward.2} parent=35 // pred_check_branch
        %3621 = sbr.rel (%p3619) target = $region40
      $region39: #{conv_block_forward.2} parent=35 // pred_region
        _
      $region40: #{conv_block_forward.2} parent=35 // pred_fallthru
        _
      // Predicated region
      $region41: #{conv_block_forward.2} parent=35 // pred_check
        %p3622 = pneg %p150
      $region42: #{conv_block_forward.2} parent=35 // pred_check_branch
        %3624 = sbr.rel (%p3622) target = $region44
      $region43: #{conv_block_forward.2} parent=35 // pred_region
        _
      $region44: #{conv_block_forward.2} parent=35 // pred_fallthru
        _
    $region36: #{conv_block_forward.2} parent=5 // pred_fallthru
      _
    %p3625 = scmp.le.s32.totalorder 2, %s12
    // Predicated region
    $region45: #{conv_block_forward.2} parent=5 // pred_check
      %p3626 = pneg %p3625
    $region46: #{conv_block_forward.2} parent=5 // pred_check_branch
      %3628 = sbr.rel (%p3626) target = $region48
    $region47: #{conv_block_forward.2} parent=5 // pred_region
      %s3629 = ssub.s32 %s12, 2
      // Predicated region
      $region49: #{conv_block_forward.2} parent=47 // pred_check
        %p3630 = pneg %p130
      $region50: #{conv_block_forward.2} parent=47 // pred_check_branch
        %3632 = sbr.rel (%p3630) target = $region52
      $region51: #{conv_block_forward.2} parent=47 // pred_region
        %p3633 = scmp.lt.s32.totalorder %s18, 1
        %s3634 = scalar_select %p3633, %s18, 1
        %s3635 = smul.addr %s3634, 42
        %s3636 = smul.addr %s3635, 4
        %s3637 = scalar_lea.vmem %s4, %s3636
      $region52: #{conv_block_forward.2} parent=47 // pred_fallthru
        _
      // Predicated region
      $region53: #{conv_block_forward.2} parent=47 // pred_check
        %p3638 = pneg %p156
      $region54: #{conv_block_forward.2} parent=47 // pred_check_branch
        %3640 = sbr.rel (%p3638) target = $region56
      $region55: #{conv_block_forward.2} parent=47 // pred_region
        %p3641 = scmp.lt.s32.totalorder %s18, 1
        %s3642 = scalar_select %p3641, %s18, 1
        %s3643 = smul.addr %s3642, 2
        %s3644 = scalar_lea.vmem %s5, %s3643
      $region56: #{conv_block_forward.2} parent=47 // pred_fallthru
        _
    $region48: #{conv_block_forward.2} parent=5 // pred_fallthru
      _
  $region6: #{conv_block_forward.2} parent=0 // loop_footer
    %s16 = sadd.s32 1, %s12
  $region7: #{conv_block_forward.2} parent=0 // loop_footer_branch
    %11 = sbr.rel target = $region3
  $region8: #{conv_block_forward.2} parent=0 // loop_exit
    _

// kernel: conv_block_forward.3
$region0: #{conv_block_forward.3}
  #allocation0 [shape = 'u32[]', space=smem, size = 0x4, offset = 0x4, fixed_abs, tag = 'smem constant byte address 0x4 - core index']
  #allocation1 [shape = 'u32[144,128]{1,0:T(1,128)}', space=vmem, size = 0x12000, scoped, tag = 'internal scratch']
  %s0 = inlined_call_operand.vmem [shape: bf16[2,336,128], index: 0, kind: input, shape index: {}]
  %s1 = inlined_call_operand.vmem [shape: f32[1,128], index: 1, kind: input, shape index: {}]
  %s2 = inlined_call_operand.vmem [shape: f32[1,128], index: 2, kind: input, shape index: {}]
  %s3 = inlined_call_operand.vmem [shape: bf16[1152,128], index: 3, kind: input, shape index: {}]
  %s4 = inlined_call_operand.vmem [shape: f32[1,128], index: 4, kind: input, shape index: {}]
  %s5 = inlined_call_operand.vmem [shape: f32[336,1], index: 5, kind: input, shape index: {}]
  %s6 = inlined_call_operand.vmem [shape: bf16[2,336,128], index: 6, kind: output, shape index: {0}]
  %s7 = inlined_call_operand.vmem [shape: f32[2,2,128], index: 7, kind: output, shape index: {1}]
  %8 = xla_tuple %s6, %s7
  %s9 = sld [smem:[#allocation0]]
  $region65: #{conv_block_forward.3} parent=0
    _
  %s11 = ssub.s32 1, %s9
  %s12 = scalar_select 0, %s11, %s9
  loop: start=0, step=1, limit=4
  $region2: #{conv_block_forward.3} parent=0 // loop_pre_header
    _
  $region3: #{conv_block_forward.3} parent=0 // loop_header
    %s14 = sphi 0, %s18
    %p15 = scmp.ge.s32.totalorder %s14, 4
    %s24 = sphi 0, %s26
    %s27 = sphi 0, %s24
    %s28 = sphi 0, %s27
    %s44 = sphi 0, %s28
    %s48 = sphi 0, %s48
    %s50 = sphi 0, %s48
    %s51 = sphi 0, %s50
    %s65 = sphi 0, %s51
    %s69 = sphi 0, %s69
    %s71 = sphi 0, %s69
    %s72 = sphi 0, %s71
    %s86 = sphi 0, %s72
    %s90 = sphi 0, %s90
    %s92 = sphi 0, %s90
    %s93 = sphi 0, %s92
    %s107 = sphi 0, %s93
    %s111 = sphi 0, %s111
    %s113 = sphi 0, %s111
    %s114 = sphi 0, %s113
    %s128 = sphi 0, %s114
    %s132 = sphi 0, %s132
    %s134 = sphi 0, %s132
    %s135 = sphi 0, %s134
    %s149 = sphi 0, %s135
    %s155 = sphi 0, %s157
    %s158 = sphi 0, %s155
    %s159 = sphi 0, %s158
    %s175 = sphi 0, %s159
    %s181 = sphi 0, %s183
    %s184 = sphi 0, %s181
    %s185 = sphi 0, %s184
    %s201 = sphi 0, %s185
  $region4: #{conv_block_forward.3} parent=0 // loop_header_branch
    %17 = sbr.rel (%p15) target = $region8
  $region5: #{conv_block_forward.3} parent=0 // loop_body
    %s19 = ssub.s32 %s14, 1
    %s20 = ssub.s32 %s14, 2
    %s21 = sadd.s32 %s14, 1
    %s22 = ssub.s32 %s14, %s21
    %p23 = scmp.eq.s32.totalorder %s22, 0
    %s25 = sadd.s32 %s24, 1
    %s26 = scalar_select %p23, %s24, %s25
    %p29 = pneg %p23
    %p30 = scmp.eq.s32.totalorder %s14, 1
    %p31 = por %p29, %p30
    %p32 = scmp.ne.s32.totalorder %s24, %s27
    %p33 = scmp.eq.s32.totalorder %s14, 0
    %p34 = por %p32, %p33
    %p35 = scmp.ne.s32.totalorder %s24, %s27
    %p36 = scmp.eq.s32.totalorder %s19, 1
    %p37 = por %p35, %p36
    %p38 = scmp.ne.s32.totalorder %s27, %s28
    %p39 = scmp.eq.s32.totalorder %s19, 0
    %p40 = por %p38, %p39
    %p41 = scmp.ne.s32.totalorder %s27, %s28
    %p42 = scmp.eq.s32.totalorder %s20, 1
    %p43 = por %p41, %p42
    %p45 = scmp.ne.s32.totalorder %s28, %s44
    %p46 = scmp.eq.s32.totalorder %s20, 0
    %p47 = por %p45, %p46
    %s49 = sadd.s32 %s48, 1
    %p52 = scmp.eq.s32.totalorder %s14, 1
    %p53 = scmp.ne.s32.totalorder %s48, %s50
    %p54 = scmp.eq.s32.totalorder %s14, 0
    %p55 = por %p53, %p54
    %p56 = scmp.ne.s32.totalorder %s48, %s50
    %p57 = scmp.eq.s32.totalorder %s19, 1
    %p58 = por %p56, %p57
    %p59 = scmp.ne.s32.totalorder %s50, %s51
    %p60 = scmp.eq.s32.totalorder %s19, 0
    %p61 = por %p59, %p60
    %p62 = scmp.ne.s32.totalorder %s50, %s51
    %p63 = scmp.eq.s32.totalorder %s20, 1
    %p64 = por %p62, %p63
    %p66 = scmp.ne.s32.totalorder %s51, %s65
    %p67 = scmp.eq.s32.totalorder %s20, 0
    %p68 = por %p66, %p67
    %s70 = sadd.s32 %s69, 1
    %p73 = scmp.eq.s32.totalorder %s14, 1
    %p74 = scmp.ne.s32.totalorder %s69, %s71
    %p75 = scmp.eq.s32.totalorder %s14, 0
    %p76 = por %p74, %p75
    %p77 = scmp.ne.s32.totalorder %s69, %s71
    %p78 = scmp.eq.s32.totalorder %s19, 1
    %p79 = por %p77, %p78
    %p80 = scmp.ne.s32.totalorder %s71, %s72
    %p81 = scmp.eq.s32.totalorder %s19, 0
    %p82 = por %p80, %p81
    %p83 = scmp.ne.s32.totalorder %s71, %s72
    %p84 = scmp.eq.s32.totalorder %s20, 1
    %p85 = por %p83, %p84
    %p87 = scmp.ne.s32.totalorder %s72, %s86
    %p88 = scmp.eq.s32.totalorder %s20, 0
    %p89 = por %p87, %p88
    %s91 = sadd.s32 %s90, 1
    %p94 = scmp.eq.s32.totalorder %s14, 1
    %p95 = scmp.ne.s32.totalorder %s90, %s92
    %p96 = scmp.eq.s32.totalorder %s14, 0
    %p97 = por %p95, %p96
    %p98 = scmp.ne.s32.totalorder %s90, %s92
    %p99 = scmp.eq.s32.totalorder %s19, 1
    %p100 = por %p98, %p99
    %p101 = scmp.ne.s32.totalorder %s92, %s93
    %p102 = scmp.eq.s32.totalorder %s19, 0
    %p103 = por %p101, %p102
    %p104 = scmp.ne.s32.totalorder %s92, %s93
    %p105 = scmp.eq.s32.totalorder %s20, 1
    %p106 = por %p104, %p105
    %p108 = scmp.ne.s32.totalorder %s93, %s107
    %p109 = scmp.eq.s32.totalorder %s20, 0
    %p110 = por %p108, %p109
    %s112 = sadd.s32 %s111, 1
    %p115 = scmp.eq.s32.totalorder %s14, 1
    %p116 = scmp.ne.s32.totalorder %s111, %s113
    %p117 = scmp.eq.s32.totalorder %s14, 0
    %p118 = por %p116, %p117
    %p119 = scmp.ne.s32.totalorder %s111, %s113
    %p120 = scmp.eq.s32.totalorder %s19, 1
    %p121 = por %p119, %p120
    %p122 = scmp.ne.s32.totalorder %s113, %s114
    %p123 = scmp.eq.s32.totalorder %s19, 0
    %p124 = por %p122, %p123
    %p125 = scmp.ne.s32.totalorder %s113, %s114
    %p126 = scmp.eq.s32.totalorder %s20, 1
    %p127 = por %p125, %p126
    %p129 = scmp.ne.s32.totalorder %s114, %s128
    %p130 = scmp.eq.s32.totalorder %s20, 0
    %p131 = por %p129, %p130
    %s133 = sadd.s32 %s132, 1
    %p136 = scmp.eq.s32.totalorder %s14, 1
    %p137 = scmp.ne.s32.totalorder %s132, %s134
    %p138 = scmp.eq.s32.totalorder %s14, 0
    %p139 = por %p137, %p138
    %p140 = scmp.ne.s32.totalorder %s132, %s134
    %p141 = scmp.eq.s32.totalorder %s19, 1
    %p142 = por %p140, %p141
    %p143 = scmp.ne.s32.totalorder %s134, %s135
    %p144 = scmp.eq.s32.totalorder %s19, 0
    %p145 = por %p143, %p144
    %p146 = scmp.ne.s32.totalorder %s134, %s135
    %p147 = scmp.eq.s32.totalorder %s20, 1
    %p148 = por %p146, %p147
    %p150 = scmp.ne.s32.totalorder %s135, %s149
    %p151 = scmp.eq.s32.totalorder %s20, 0
    %p152 = por %p150, %p151
    %s153 = ssub.s32 %s14, %s21
    %p154 = scmp.eq.s32.totalorder %s153, 0
    %s156 = sadd.s32 %s155, 1
    %s157 = scalar_select %p154, %s155, %s156
    %p160 = pneg %p154
    %p161 = scmp.eq.s32.totalorder %s14, 1
    %p162 = por %p160, %p161
    %p163 = scmp.ne.s32.totalorder %s155, %s158
    %p164 = scmp.eq.s32.totalorder %s14, 0
    %p165 = por %p163, %p164
    %p166 = scmp.ne.s32.totalorder %s155, %s158
    %p167 = scmp.eq.s32.totalorder %s19, 1
    %p168 = por %p166, %p167
    %p169 = scmp.ne.s32.totalorder %s158, %s159
    %p170 = scmp.eq.s32.totalorder %s19, 0
    %p171 = por %p169, %p170
    %p172 = scmp.ne.s32.totalorder %s158, %s159
    %p173 = scmp.eq.s32.totalorder %s20, 1
    %p174 = por %p172, %p173
    %p176 = scmp.ne.s32.totalorder %s159, %s175
    %p177 = scmp.eq.s32.totalorder %s20, 0
    %p178 = por %p176, %p177
    %s179 = ssub.s32 %s14, %s21
    %p180 = scmp.eq.s32.totalorder %s179, 0
    %s182 = sadd.s32 %s181, 1
    %s183 = scalar_select %p180, %s181, %s182
    %p186 = pneg %p180
    %p187 = scmp.eq.s32.totalorder %s14, 1
    %p188 = por %p186, %p187
    %p189 = scmp.ne.s32.totalorder %s181, %s184
    %p190 = scmp.eq.s32.totalorder %s14, 0
    %p191 = por %p189, %p190
    %p192 = scmp.ne.s32.totalorder %s181, %s184
    %p193 = scmp.eq.s32.totalorder %s19, 1
    %p194 = por %p192, %p193
    %p195 = scmp.ne.s32.totalorder %s184, %s185
    %p196 = scmp.eq.s32.totalorder %s19, 0
    %p197 = por %p195, %p196
    %p198 = scmp.ne.s32.totalorder %s184, %s185
    %p199 = scmp.eq.s32.totalorder %s20, 1
    %p200 = por %p198, %p199
    %p202 = scmp.ne.s32.totalorder %s185, %s201
    %p203 = scmp.eq.s32.totalorder %s20, 0
    %p204 = por %p202, %p203
    %p205 = scmp.le.s32.totalorder 1, %s14
    %p206 = scmp.lt.s32.totalorder %s14, 3
    %p207 = pnand %p205, %p206
    %p208 = pneg %p207
    // Predicated region
    $region9: #{conv_block_forward.3} parent=5 // pred_check
      _
    $region10: #{conv_block_forward.3} parent=5 // pred_check_branch
      %210 = sbr.rel (%p207) target = $region12
    $region11: #{conv_block_forward.3} parent=5 // pred_region
      %s211 = ssub.s32 %s14, 1
      // Predicated region
      $region13: #{conv_block_forward.3} parent=11 // pred_check
        %p212 = pneg %p61
      $region14: #{conv_block_forward.3} parent=11 // pred_check_branch
        %214 = sbr.rel (%p212) target = $region16
      $region15: #{conv_block_forward.3} parent=11 // pred_region
        _
      $region16: #{conv_block_forward.3} parent=11 // pred_fallthru
        _
      // Predicated region
      $region17: #{conv_block_forward.3} parent=11 // pred_check
        %p215 = pneg %p82
      $region18: #{conv_block_forward.3} parent=11 // pred_check_branch
        %217 = sbr.rel (%p215) target = $region20
      $region19: #{conv_block_forward.3} parent=11 // pred_region
        _
      $region20: #{conv_block_forward.3} parent=11 // pred_fallthru
        _
      // Predicated region
      $region21: #{conv_block_forward.3} parent=11 // pred_check
        %p218 = pneg %p103
      $region22: #{conv_block_forward.3} parent=11 // pred_check_branch
        %220 = sbr.rel (%p218) target = $region24
      $region23: #{conv_block_forward.3} parent=11 // pred_region
        _
      $region24: #{conv_block_forward.3} parent=11 // pred_fallthru
        _
      // Predicated region
      $region25: #{conv_block_forward.3} parent=11 // pred_check
        %p221 = pneg %p124
      $region26: #{conv_block_forward.3} parent=11 // pred_check_branch
        %223 = sbr.rel (%p221) target = $region28
      $region27: #{conv_block_forward.3} parent=11 // pred_region
        _
      $region28: #{conv_block_forward.3} parent=11 // pred_fallthru
        _
      // Predicated region
      $region29: #{conv_block_forward.3} parent=11 // pred_check
        %p224 = pneg %p145
      $region30: #{conv_block_forward.3} parent=11 // pred_check_branch
        %226 = sbr.rel (%p224) target = $region32
      $region31: #{conv_block_forward.3} parent=11 // pred_region
        _
      $region32: #{conv_block_forward.3} parent=11 // pred_fallthru
        _
    $region12: #{conv_block_forward.3} parent=5 // pred_fallthru
      _
    %p227 = scmp.lt.s32.totalorder %s14, 2
    // Predicated region
    $region33: #{conv_block_forward.3} parent=5 // pred_check
      %p228 = pneg %p227
    $region34: #{conv_block_forward.3} parent=5 // pred_check_branch
      %230 = sbr.rel (%p228) target = $region36
    $region35: #{conv_block_forward.3} parent=5 // pred_region
      // Predicated region
      $region37: #{conv_block_forward.3} parent=35 // pred_check
        %p231 = pneg %p34
      $region38: #{conv_block_forward.3} parent=35 // pred_check_branch
        %233 = sbr.rel (%p231) target = $region40
      $region39: #{conv_block_forward.3} parent=35 // pred_region
        %p234 = scmp.lt.s32.totalorder %s14, 1
        %s235 = scalar_select %p234, %s14, 1
        %s236 = smul.addr %s235, 42
        %s237 = smul.addr %s236, 4
        %s238 = scalar_lea.vmem %s0, %s237
      $region40: #{conv_block_forward.3} parent=35 // pred_fallthru
        _
    $region36: #{conv_block_forward.3} parent=5 // pred_fallthru
      _
    %p239 = scmp.le.s32.totalorder 1, %s14
    %p240 = scmp.lt.s32.totalorder %s14, 3
    %p241 = pnand %p239, %p240
    %p242 = pneg %p241
    // Predicated region
    $region41: #{conv_block_forward.3} parent=5 // pred_check
      _
    $region42: #{conv_block_forward.3} parent=5 // pred_check_branch
      %244 = sbr.rel (%p241) target = $region44
    $region43: #{conv_block_forward.3} parent=5 // pred_region
      %s245 = ssub.s32 %s14, 1
      %p246 = scmp.lt.s32.totalorder %s19, 1
      %s247 = scalar_select %p246, %s19, 1
      %s248 = smul.addr %s247, 42
      %s249 = smul.addr %s248, 4
      %s250 = scalar_lea.vmem %s0, %s249
      %p251 = pneg %p40
      %p252 = pneg %p37
      %p253 = pneg %p61
      %p254 = pneg %p58
      %p255 = pneg %p82
      %p256 = pneg %p79
      %p257 = pneg %p103
      %p258 = pneg %p100
      %p259 = pneg %p124
      %p260 = pneg %p121
      %p261 = pneg %p145
      %p262 = pneg %p142
      %p263 = pneg %p171
      %p264 = pneg %p168
      %p265 = scmp.lt.s32.totalorder %s19, 1
      %s266 = scalar_select %p265, %s19, 1
      %s267 = smul.addr %s266, 42
      %s268 = smul.addr %s267, 4
      %s269 = scalar_lea.vmem %s6, %s268
      %p270 = pneg %p197
      %p271 = pneg %p194
      %p272 = scmp.lt.s32.totalorder %s19, 1
      %s273 = scalar_select %p272, %s19, 1
      %s274 = smul.addr %s273, 2
      %s275 = scalar_lea.vmem %s7, %s274
      %p276 = scmp.lt.s32.totalorder %s19, 1
      %s277 = scalar_select %p276, %s19, 1
      %s278 = smul.addr %s277, 42
      %s279 = smul.addr %s278, 4
      %s280 = scalar_lea.vmem %s0, %s279
      %p281 = scmp.lt.s32.totalorder %s19, 1
      %s282 = scalar_select %p281, %s19, 1
      %s283 = smul.addr %s282, 42
      %s284 = smul.addr %s283, 4
      %s285 = scalar_lea.vmem %s6, %s284
      %p286 = scmp.lt.s32.totalorder %s19, 1
      %s287 = scalar_select %p286, %s19, 1
      %s288 = smul.addr %s287, 2
      %s289 = scalar_lea.vmem %s7, %s288
      %v291 = vld [vmem:[%s5] sm:$0xff]
      %v292 = vld [vmem:[%s5 + $0x8] sm:$0xff]
      %v293 = vld [vmem:[%s5 + $0x10] sm:$0xff]
      %v294 = vld [vmem:[%s5 + $0x18] sm:$0xff]
      %v295 = vld [vmem:[%s5 + $0x20] sm:$0xff]
      %v296 = vld [vmem:[%s5 + $0x28] sm:$0xff]
      %v297 = vld [vmem:[%s5 + $0x30] sm:$0xff]
      %v298 = vld [vmem:[%s5 + $0x38] sm:$0xff]
      %v299 = vld [vmem:[%s5 + $0x40] sm:$0xff]
      %v300 = vld [vmem:[%s5 + $0x48] sm:$0xff]
      %v301 = vld [vmem:[%s5 + $0x50] sm:$0xff]
      %v302 = vld [vmem:[%s5 + $0x58] sm:$0xff]
      %v303 = vld [vmem:[%s5 + $0x60] sm:$0xff]
      %v304 = vld [vmem:[%s5 + $0x68] sm:$0xff]
      %v305 = vld [vmem:[%s5 + $0x70] sm:$0xff]
      %v306 = vld [vmem:[%s5 + $0x78] sm:$0xff]
      %v307 = vld [vmem:[%s5 + $0x80] sm:$0xff]
      %v308 = vld [vmem:[%s5 + $0x88] sm:$0xff]
      %v309 = vld [vmem:[%s5 + $0x90] sm:$0xff]
      %v310 = vld [vmem:[%s5 + $0x98] sm:$0xff]
      %v311 = vld [vmem:[%s5 + $0xa0] sm:$0xff]
      %v312 = vld [vmem:[%s5 + $0xa8] sm:$0xff]
      %v313 = vld [vmem:[%s5 + $0xb0] sm:$0xff]
      %v314 = vld [vmem:[%s5 + $0xb8] sm:$0xff]
      %v315 = vld [vmem:[%s5 + $0xc0] sm:$0xff]
      %v316 = vld [vmem:[%s5 + $0xc8] sm:$0xff]
      %v317 = vld [vmem:[%s5 + $0xd0] sm:$0xff]
      %v318 = vld [vmem:[%s5 + $0xd8] sm:$0xff]
      %v319 = vld [vmem:[%s5 + $0xe0] sm:$0xff]
      %v320 = vld [vmem:[%s5 + $0xe8] sm:$0xff]
      %v321 = vld [vmem:[%s5 + $0xf0] sm:$0xff]
      %v322 = vld [vmem:[%s5 + $0xf8] sm:$0xff]
      %v323 = vld [vmem:[%s5 + $0x100] sm:$0xff]
      %v324 = vld [vmem:[%s5 + $0x108] sm:$0xff]
      %v325 = vld [vmem:[%s5 + $0x110] sm:$0xff]
      %v326 = vld [vmem:[%s5 + $0x118] sm:$0xff]
      %v327 = vld [vmem:[%s5 + $0x120] sm:$0xff]
      %v328 = vld [vmem:[%s5 + $0x128] sm:$0xff]
      %v329 = vld [vmem:[%s5 + $0x130] sm:$0xff]
      %v330 = vld [vmem:[%s5 + $0x138] sm:$0xff]
      %v331 = vld [vmem:[%s5 + $0x140] sm:$0xff]
      %v332 = vld [vmem:[%s5 + $0x148] sm:$0xff]
      %v333 = vld [vmem:[%s280] sm:$0xf]
      %v334 = vld [vmem:[%s280 + $0x4] sm:$0xf]
      %v335 = vld [vmem:[%s280 + $0x8] sm:$0xf]
      %v336 = vld [vmem:[%s280 + $0xc] sm:$0xf]
      %v337 = vld [vmem:[%s280 + $0x10] sm:$0xf]
      %v338 = vld [vmem:[%s280 + $0x14] sm:$0xf]
      %v339 = vld [vmem:[%s280 + $0x18] sm:$0xf]
      %v340 = vld [vmem:[%s280 + $0x1c] sm:$0xf]
      %v341 = vld [vmem:[%s280 + $0x20] sm:$0xf]
      %v342 = vld [vmem:[%s280 + $0x24] sm:$0xf]
      %v343 = vld [vmem:[%s280 + $0x28] sm:$0xf]
      %v344 = vld [vmem:[%s280 + $0x2c] sm:$0xf]
      %v345 = vld [vmem:[%s280 + $0x30] sm:$0xf]
      %v346 = vld [vmem:[%s280 + $0x34] sm:$0xf]
      %v347 = vld [vmem:[%s280 + $0x38] sm:$0xf]
      %v348 = vld [vmem:[%s280 + $0x3c] sm:$0xf]
      %v349 = vld [vmem:[%s280 + $0x40] sm:$0xf]
      %v350 = vld [vmem:[%s280 + $0x44] sm:$0xf]
      %v351 = vld [vmem:[%s280 + $0x48] sm:$0xf]
      %v352 = vld [vmem:[%s280 + $0x4c] sm:$0xf]
      %v353 = vld [vmem:[%s280 + $0x50] sm:$0xf]
      %v354 = vld [vmem:[%s280 + $0x54] sm:$0xf]
      %v355 = vld [vmem:[%s280 + $0x58] sm:$0xf]
      %v356 = vld [vmem:[%s280 + $0x5c] sm:$0xf]
      %v357 = vld [vmem:[%s280 + $0x60] sm:$0xf]
      %v358 = vld [vmem:[%s280 + $0x64] sm:$0xf]
      %v359 = vld [vmem:[%s280 + $0x68] sm:$0xf]
      %v360 = vld [vmem:[%s280 + $0x6c] sm:$0xf]
      %v361 = vld [vmem:[%s280 + $0x70] sm:$0xf]
      %v362 = vld [vmem:[%s280 + $0x74] sm:$0xf]
      %v363 = vld [vmem:[%s280 + $0x78] sm:$0xf]
      %v364 = vld [vmem:[%s280 + $0x7c] sm:$0xf]
      %v365 = vld [vmem:[%s280 + $0x80] sm:$0xf]
      %v366 = vld [vmem:[%s280 + $0x84] sm:$0xf]
      %v367 = vld [vmem:[%s280 + $0x88] sm:$0xf]
      %v368 = vld [vmem:[%s280 + $0x8c] sm:$0xf]
      %v369 = vld [vmem:[%s280 + $0x90] sm:$0xf]
      %v370 = vld [vmem:[%s280 + $0x94] sm:$0xf]
      %v371 = vld [vmem:[%s280 + $0x98] sm:$0xf]
      %v372 = vld [vmem:[%s280 + $0x9c] sm:$0xf]
      %v373 = vld [vmem:[%s280 + $0xa0] sm:$0xf]
      %v374 = vld [vmem:[%s280 + $0xa4] sm:$0xf]
      %v375 = vunpack.c.l.bf16 %v333
      %v376 = vunpack.c.l.bf16 %v334
      %v377 = vunpack.c.l.bf16 %v335
      %v378 = vunpack.c.l.bf16 %v336
      %v379 = vunpack.c.l.bf16 %v337
      %v380 = vunpack.c.l.bf16 %v338
      %v381 = vunpack.c.l.bf16 %v339
      %v382 = vunpack.c.l.bf16 %v340
      %v383 = vunpack.c.l.bf16 %v341
      %v384 = vunpack.c.l.bf16 %v342
      %v385 = vunpack.c.l.bf16 %v343
      %v386 = vunpack.c.l.bf16 %v344
      %v387 = vunpack.c.l.bf16 %v345
      %v388 = vunpack.c.l.bf16 %v346
      %v389 = vunpack.c.l.bf16 %v347
      %v390 = vunpack.c.l.bf16 %v348
      %v391 = vunpack.c.l.bf16 %v349
      %v392 = vunpack.c.l.bf16 %v350
      %v393 = vunpack.c.l.bf16 %v351
      %v394 = vunpack.c.l.bf16 %v352
      %v395 = vunpack.c.l.bf16 %v353
      %v396 = vunpack.c.l.bf16 %v354
      %v397 = vunpack.c.l.bf16 %v355
      %v398 = vunpack.c.l.bf16 %v356
      %v399 = vunpack.c.l.bf16 %v357
      %v400 = vunpack.c.l.bf16 %v358
      %v401 = vunpack.c.l.bf16 %v359
      %v402 = vunpack.c.l.bf16 %v360
      %v403 = vunpack.c.l.bf16 %v361
      %v404 = vunpack.c.l.bf16 %v362
      %v405 = vunpack.c.l.bf16 %v363
      %v406 = vunpack.c.l.bf16 %v364
      %v407 = vunpack.c.l.bf16 %v365
      %v408 = vunpack.c.l.bf16 %v366
      %v409 = vunpack.c.l.bf16 %v367
      %v410 = vunpack.c.l.bf16 %v368
      %v411 = vunpack.c.l.bf16 %v369
      %v412 = vunpack.c.l.bf16 %v370
      %v413 = vunpack.c.l.bf16 %v371
      %v414 = vunpack.c.l.bf16 %v372
      %v415 = vunpack.c.l.bf16 %v373
      %v416 = vunpack.c.l.bf16 %v374
      %v417 = vld [vmem:[%s1] sm:$0x1]
      %v419 = vlaneseq
      %v420 = vshrl.u32 %v419, 7
      %v421 = vsub.s32 0, %v420
      %v422 = vrot.slane %v417, %v421
      %v424 = vmul.f32 %v375, %v422
      %v425 = vmul.f32 %v376, %v422
      %v426 = vmul.f32 %v377, %v422
      %v427 = vmul.f32 %v378, %v422
      %v428 = vmul.f32 %v379, %v422
      %v429 = vmul.f32 %v380, %v422
      %v430 = vmul.f32 %v381, %v422
      %v431 = vmul.f32 %v382, %v422
      %v432 = vmul.f32 %v383, %v422
      %v433 = vmul.f32 %v384, %v422
      %v434 = vmul.f32 %v385, %v422
      %v435 = vmul.f32 %v386, %v422
      %v436 = vmul.f32 %v387, %v422
      %v437 = vmul.f32 %v388, %v422
      %v438 = vmul.f32 %v389, %v422
      %v439 = vmul.f32 %v390, %v422
      %v440 = vmul.f32 %v391, %v422
      %v441 = vmul.f32 %v392, %v422
      %v442 = vmul.f32 %v393, %v422
      %v443 = vmul.f32 %v394, %v422
      %v444 = vmul.f32 %v395, %v422
      %v445 = vmul.f32 %v396, %v422
      %v446 = vmul.f32 %v397, %v422
      %v447 = vmul.f32 %v398, %v422
      %v448 = vmul.f32 %v399, %v422
      %v449 = vmul.f32 %v400, %v422
      %v450 = vmul.f32 %v401, %v422
      %v451 = vmul.f32 %v402, %v422
      %v452 = vmul.f32 %v403, %v422
      %v453 = vmul.f32 %v404, %v422
      %v454 = vmul.f32 %v405, %v422
      %v455 = vmul.f32 %v406, %v422
      %v456 = vmul.f32 %v407, %v422
      %v457 = vmul.f32 %v408, %v422
      %v458 = vmul.f32 %v409, %v422
      %v459 = vmul.f32 %v410, %v422
      %v460 = vmul.f32 %v411, %v422
      %v461 = vmul.f32 %v412, %v422
      %v462 = vmul.f32 %v413, %v422
      %v463 = vmul.f32 %v414, %v422
      %v464 = vmul.f32 %v415, %v422
      %v465 = vmul.f32 %v416, %v422
      %v466 = vld [vmem:[%s2] sm:$0x1]
      %v468 = vlaneseq
      %v469 = vshrl.u32 %v468, 7
      %v470 = vsub.s32 0, %v469
      %v471 = vrot.slane %v466, %v470
      %v473 = vadd.f32 %v424, %v471
      %v474 = vadd.f32 %v425, %v471
      %v475 = vadd.f32 %v426, %v471
      %v476 = vadd.f32 %v427, %v471
      %v477 = vadd.f32 %v428, %v471
      %v478 = vadd.f32 %v429, %v471
      %v479 = vadd.f32 %v430, %v471
      %v480 = vadd.f32 %v431, %v471
      %v481 = vadd.f32 %v432, %v471
      %v482 = vadd.f32 %v433, %v471
      %v483 = vadd.f32 %v434, %v471
      %v484 = vadd.f32 %v435, %v471
      %v485 = vadd.f32 %v436, %v471
      %v486 = vadd.f32 %v437, %v471
      %v487 = vadd.f32 %v438, %v471
      %v488 = vadd.f32 %v439, %v471
      %v489 = vadd.f32 %v440, %v471
      %v490 = vadd.f32 %v441, %v471
      %v491 = vadd.f32 %v442, %v471
      %v492 = vadd.f32 %v443, %v471
      %v493 = vadd.f32 %v444, %v471
      %v494 = vadd.f32 %v445, %v471
      %v495 = vadd.f32 %v446, %v471
      %v496 = vadd.f32 %v447, %v471
      %v497 = vadd.f32 %v448, %v471
      %v498 = vadd.f32 %v449, %v471
      %v499 = vadd.f32 %v450, %v471
      %v500 = vadd.f32 %v451, %v471
      %v501 = vadd.f32 %v452, %v471
      %v502 = vadd.f32 %v453, %v471
      %v503 = vadd.f32 %v454, %v471
      %v504 = vadd.f32 %v455, %v471
      %v505 = vadd.f32 %v456, %v471
      %v506 = vadd.f32 %v457, %v471
      %v507 = vadd.f32 %v458, %v471
      %v508 = vadd.f32 %v459, %v471
      %v509 = vadd.f32 %v460, %v471
      %v510 = vadd.f32 %v461, %v471
      %v511 = vadd.f32 %v462, %v471
      %v512 = vadd.f32 %v463, %v471
      %v513 = vadd.f32 %v464, %v471
      %v514 = vadd.f32 %v465, %v471
      %516 = vset.pattern.permute.xlu0 0
      %517 = vperm.xlu0 %516, %v291
      %v518 = vpop.permute.xlu0 %517
      %521 = vset.pattern.permute.xlu0 0
      %522 = vperm.xlu0 %521, %v292
      %v523 = vpop.permute.xlu0 %522
      %526 = vset.pattern.permute.xlu0 0
      %527 = vperm.xlu0 %526, %v293
      %v528 = vpop.permute.xlu0 %527
      %531 = vset.pattern.permute.xlu0 0
      %532 = vperm.xlu0 %531, %v294
      %v533 = vpop.permute.xlu0 %532
      %536 = vset.pattern.permute.xlu0 0
      %537 = vperm.xlu0 %536, %v295
      %v538 = vpop.permute.xlu0 %537
      %541 = vset.pattern.permute.xlu0 0
      %542 = vperm.xlu0 %541, %v296
      %v543 = vpop.permute.xlu0 %542
      %546 = vset.pattern.permute.xlu0 0
      %547 = vperm.xlu0 %546, %v297
      %v548 = vpop.permute.xlu0 %547
      %551 = vset.pattern.permute.xlu0 0
      %552 = vperm.xlu0 %551, %v298
      %v553 = vpop.permute.xlu0 %552
      %556 = vset.pattern.permute.xlu0 0
      %557 = vperm.xlu0 %556, %v299
      %v558 = vpop.permute.xlu0 %557
      %561 = vset.pattern.permute.xlu0 0
      %562 = vperm.xlu0 %561, %v300
      %v563 = vpop.permute.xlu0 %562
      %566 = vset.pattern.permute.xlu0 0
      %567 = vperm.xlu0 %566, %v301
      %v568 = vpop.permute.xlu0 %567
      %571 = vset.pattern.permute.xlu0 0
      %572 = vperm.xlu0 %571, %v302
      %v573 = vpop.permute.xlu0 %572
      %576 = vset.pattern.permute.xlu0 0
      %577 = vperm.xlu0 %576, %v303
      %v578 = vpop.permute.xlu0 %577
      %581 = vset.pattern.permute.xlu0 0
      %582 = vperm.xlu0 %581, %v304
      %v583 = vpop.permute.xlu0 %582
      %586 = vset.pattern.permute.xlu0 0
      %587 = vperm.xlu0 %586, %v305
      %v588 = vpop.permute.xlu0 %587
      %591 = vset.pattern.permute.xlu0 0
      %592 = vperm.xlu0 %591, %v306
      %v593 = vpop.permute.xlu0 %592
      %596 = vset.pattern.permute.xlu0 0
      %597 = vperm.xlu0 %596, %v307
      %v598 = vpop.permute.xlu0 %597
      %601 = vset.pattern.permute.xlu0 0
      %602 = vperm.xlu0 %601, %v308
      %v603 = vpop.permute.xlu0 %602
      %606 = vset.pattern.permute.xlu0 0
      %607 = vperm.xlu0 %606, %v309
      %v608 = vpop.permute.xlu0 %607
      %611 = vset.pattern.permute.xlu0 0
      %612 = vperm.xlu0 %611, %v310
      %v613 = vpop.permute.xlu0 %612
      %616 = vset.pattern.permute.xlu0 0
      %617 = vperm.xlu0 %616, %v311
      %v618 = vpop.permute.xlu0 %617
      %621 = vset.pattern.permute.xlu0 0
      %622 = vperm.xlu0 %621, %v312
      %v623 = vpop.permute.xlu0 %622
      %626 = vset.pattern.permute.xlu0 0
      %627 = vperm.xlu0 %626, %v313
      %v628 = vpop.permute.xlu0 %627
      %631 = vset.pattern.permute.xlu0 0
      %632 = vperm.xlu0 %631, %v314
      %v633 = vpop.permute.xlu0 %632
      %636 = vset.pattern.permute.xlu0 0
      %637 = vperm.xlu0 %636, %v315
      %v638 = vpop.permute.xlu0 %637
      %641 = vset.pattern.permute.xlu0 0
      %642 = vperm.xlu0 %641, %v316
      %v643 = vpop.permute.xlu0 %642
      %646 = vset.pattern.permute.xlu0 0
      %647 = vperm.xlu0 %646, %v317
      %v648 = vpop.permute.xlu0 %647
      %651 = vset.pattern.permute.xlu0 0
      %652 = vperm.xlu0 %651, %v318
      %v653 = vpop.permute.xlu0 %652
      %656 = vset.pattern.permute.xlu0 0
      %657 = vperm.xlu0 %656, %v319
      %v658 = vpop.permute.xlu0 %657
      %661 = vset.pattern.permute.xlu0 0
      %662 = vperm.xlu0 %661, %v320
      %v663 = vpop.permute.xlu0 %662
      %666 = vset.pattern.permute.xlu0 0
      %667 = vperm.xlu0 %666, %v321
      %v668 = vpop.permute.xlu0 %667
      %671 = vset.pattern.permute.xlu0 0
      %672 = vperm.xlu0 %671, %v322
      %v673 = vpop.permute.xlu0 %672
      %676 = vset.pattern.permute.xlu0 0
      %677 = vperm.xlu0 %676, %v323
      %v678 = vpop.permute.xlu0 %677
      %681 = vset.pattern.permute.xlu0 0
      %682 = vperm.xlu0 %681, %v324
      %v683 = vpop.permute.xlu0 %682
      %686 = vset.pattern.permute.xlu0 0
      %687 = vperm.xlu0 %686, %v325
      %v688 = vpop.permute.xlu0 %687
      %691 = vset.pattern.permute.xlu0 0
      %692 = vperm.xlu0 %691, %v326
      %v693 = vpop.permute.xlu0 %692
      %696 = vset.pattern.permute.xlu0 0
      %697 = vperm.xlu0 %696, %v327
      %v698 = vpop.permute.xlu0 %697
      %701 = vset.pattern.permute.xlu0 0
      %702 = vperm.xlu0 %701, %v328
      %v703 = vpop.permute.xlu0 %702
      %706 = vset.pattern.permute.xlu0 0
      %707 = vperm.xlu0 %706, %v329
      %v708 = vpop.permute.xlu0 %707
      %711 = vset.pattern.permute.xlu0 0
      %712 = vperm.xlu0 %711, %v330
      %v713 = vpop.permute.xlu0 %712
      %716 = vset.pattern.permute.xlu0 0
      %717 = vperm.xlu0 %716, %v331
      %v718 = vpop.permute.xlu0 %717
      %721 = vset.pattern.permute.xlu0 0
      %722 = vperm.xlu0 %721, %v332
      %v723 = vpop.permute.xlu0 %722
      %v725 = vmul.f32 %v473, %v518
      %v726 = vmul.f32 %v474, %v523
      %v727 = vmul.f32 %v475, %v528
      %v728 = vmul.f32 %v476, %v533
      %v729 = vmul.f32 %v477, %v538
      %v730 = vmul.f32 %v478, %v543
      %v731 = vmul.f32 %v479, %v548
      %v732 = vmul.f32 %v480, %v553
      %v733 = vmul.f32 %v481, %v558
      %v734 = vmul.f32 %v482, %v563
      %v735 = vmul.f32 %v483, %v568
      %v736 = vmul.f32 %v484, %v573
      %v737 = vmul.f32 %v485, %v578
      %v738 = vmul.f32 %v486, %v583
      %v739 = vmul.f32 %v487, %v588
      %v740 = vmul.f32 %v488, %v593
      %v741 = vmul.f32 %v489, %v598
      %v742 = vmul.f32 %v490, %v603
      %v743 = vmul.f32 %v491, %v608
      %v744 = vmul.f32 %v492, %v613
      %v745 = vmul.f32 %v493, %v618
      %v746 = vmul.f32 %v494, %v623
      %v747 = vmul.f32 %v495, %v628
      %v748 = vmul.f32 %v496, %v633
      %v749 = vmul.f32 %v497, %v638
      %v750 = vmul.f32 %v498, %v643
      %v751 = vmul.f32 %v499, %v648
      %v752 = vmul.f32 %v500, %v653
      %v753 = vmul.f32 %v501, %v658
      %v754 = vmul.f32 %v502, %v663
      %v755 = vmul.f32 %v503, %v668
      %v756 = vmul.f32 %v504, %v673
      %v757 = vmul.f32 %v505, %v678
      %v758 = vmul.f32 %v506, %v683
      %v759 = vmul.f32 %v507, %v688
      %v760 = vmul.f32 %v508, %v693
      %v761 = vmul.f32 %v509, %v698
      %v762 = vmul.f32 %v510, %v703
      %v763 = vmul.f32 %v511, %v708
      %v764 = vmul.f32 %v512, %v713
      %v765 = vmul.f32 %v513, %v718
      %v766 = vmul.f32 %v514, %v723
      %v767 = vrot.slane %v725, 5
      %v768 = vrot.slane %v726, 5
      %v769 = vrot.slane %v727, 5
      %v770 = vrot.slane %v728, 5
      %v771 = vrot.slane %v729, 5
      %v772 = vrot.slane %v730, 5
      %v773 = vrot.slane %v731, 5
      %v774 = vrot.slane %v732, 5
      %v775 = vrot.slane %v733, 5
      %v776 = vrot.slane %v734, 5
      %v777 = vrot.slane %v735, 5
      %v778 = vrot.slane %v736, 5
      %v779 = vrot.slane %v737, 5
      %v780 = vrot.slane %v738, 5
      %v781 = vrot.slane %v739, 5
      %v782 = vrot.slane %v740, 5
      %v783 = vrot.slane %v741, 5
      %v784 = vrot.slane %v742, 5
      %v785 = vrot.slane %v743, 5
      %v786 = vrot.slane %v744, 5
      %v787 = vrot.slane %v745, 5
      %v788 = vrot.slane %v746, 5
      %v789 = vrot.slane %v747, 5
      %v790 = vrot.slane %v748, 5
      %v791 = vrot.slane %v749, 5
      %v792 = vrot.slane %v750, 5
      %v793 = vrot.slane %v751, 5
      %v794 = vrot.slane %v752, 5
      %v795 = vrot.slane %v753, 5
      %v796 = vrot.slane %v754, 5
      %v797 = vrot.slane %v755, 5
      %v798 = vrot.slane %v756, 5
      %v799 = vrot.slane %v757, 5
      %v800 = vrot.slane %v758, 5
      %v801 = vrot.slane %v759, 5
      %v802 = vrot.slane %v760, 5
      %v803 = vrot.slane %v761, 5
      %v804 = vrot.slane %v762, 5
      %v805 = vrot.slane %v763, 5
      %v806 = vrot.slane %v764, 5
      %v807 = vrot.slane %v765, 5
      %v808 = vrot.slane %v766, 5
      %v809 = vlaneseq
      %v810 = vshrl.u32 %v809, 7
      %vm811 = vcmp.lt.s32.totalorder %v810, 3
      %v812 = vsel %vm811, %v807, %v808
      %v813 = vsel %vm811, %v806, %v807
      %v814 = vsel %vm811, %v805, %v806
      %v815 = vsel %vm811, %v804, %v805
      %v816 = vsel %vm811, %v803, %v804
      %v817 = vsel %vm811, %v802, %v803
      %v818 = vsel %vm811, %v801, %v802
      %v819 = vsel %vm811, %v800, %v801
      %v820 = vsel %vm811, %v799, %v800
      %v821 = vsel %vm811, %v798, %v799
      %v822 = vsel %vm811, %v797, %v798
      %v823 = vsel %vm811, %v796, %v797
      %v824 = vsel %vm811, %v795, %v796
      %v825 = vsel %vm811, %v794, %v795
      %v826 = vsel %vm811, %v793, %v794
      %v827 = vsel %vm811, %v792, %v793
      %v828 = vsel %vm811, %v791, %v792
      %v829 = vsel %vm811, %v790, %v791
      %v830 = vsel %vm811, %v789, %v790
      %v831 = vsel %vm811, %v788, %v789
      %v832 = vsel %vm811, %v787, %v788
      %v833 = vsel %vm811, %v786, %v787
      %v834 = vsel %vm811, %v785, %v786
      %v835 = vsel %vm811, %v784, %v785
      %v836 = vsel %vm811, %v783, %v784
      %v837 = vsel %vm811, %v782, %v783
      %v838 = vsel %vm811, %v781, %v782
      %v839 = vsel %vm811, %v780, %v781
      %v840 = vsel %vm811, %v779, %v780
      %v841 = vsel %vm811, %v778, %v779
      %v842 = vsel %vm811, %v777, %v778
      %v843 = vsel %vm811, %v776, %v777
      %v844 = vsel %vm811, %v775, %v776
      %v845 = vsel %vm811, %v774, %v775
      %v846 = vsel %vm811, %v773, %v774
      %v847 = vsel %vm811, %v772, %v773
      %v848 = vsel %vm811, %v771, %v772
      %v849 = vsel %vm811, %v770, %v771
      %v850 = vsel %vm811, %v769, %v770
      %v851 = vsel %vm811, %v768, %v769
      %v852 = vsel %vm811, %v767, %v768
      %v853 = vsel %vm811, %v808, %v767
      %v854 = vpack.c.bf16 %v812, %v813
      %v855 = vpack.c.bf16 %v852, %v853
      %v856 = vpack.c.bf16 %v850, %v851
      %v857 = vpack.c.bf16 %v848, %v849
      %v858 = vpack.c.bf16 %v846, %v847
      %v859 = vpack.c.bf16 %v844, %v845
      %v860 = vpack.c.bf16 %v842, %v843
      %v861 = vpack.c.bf16 %v840, %v841
      %v862 = vpack.c.bf16 %v838, %v839
      %v863 = vpack.c.bf16 %v836, %v837
      %v864 = vpack.c.bf16 %v834, %v835
      %v865 = vpack.c.bf16 %v832, %v833
      %v866 = vpack.c.bf16 %v830, %v831
      %v867 = vpack.c.bf16 %v828, %v829
      %v868 = vpack.c.bf16 %v826, %v827
      %v869 = vpack.c.bf16 %v824, %v825
      %v870 = vpack.c.bf16 %v822, %v823
      %v871 = vpack.c.bf16 %v820, %v821
      %v872 = vpack.c.bf16 %v818, %v819
      %v873 = vpack.c.bf16 %v816, %v817
      %v874 = vpack.c.bf16 %v814, %v815
      %v875 = vrot.slane %v725, 6
      %v876 = vrot.slane %v726, 6
      %v877 = vrot.slane %v727, 6
      %v878 = vrot.slane %v728, 6
      %v879 = vrot.slane %v729, 6
      %v880 = vrot.slane %v730, 6
      %v881 = vrot.slane %v731, 6
      %v882 = vrot.slane %v732, 6
      %v883 = vrot.slane %v733, 6
      %v884 = vrot.slane %v734, 6
      %v885 = vrot.slane %v735, 6
      %v886 = vrot.slane %v736, 6
      %v887 = vrot.slane %v737, 6
      %v888 = vrot.slane %v738, 6
      %v889 = vrot.slane %v739, 6
      %v890 = vrot.slane %v740, 6
      %v891 = vrot.slane %v741, 6
      %v892 = vrot.slane %v742, 6
      %v893 = vrot.slane %v743, 6
      %v894 = vrot.slane %v744, 6
      %v895 = vrot.slane %v745, 6
      %v896 = vrot.slane %v746, 6
      %v897 = vrot.slane %v747, 6
      %v898 = vrot.slane %v748, 6
      %v899 = vrot.slane %v749, 6
      %v900 = vrot.slane %v750, 6
      %v901 = vrot.slane %v751, 6
      %v902 = vrot.slane %v752, 6
      %v903 = vrot.slane %v753, 6
      %v904 = vrot.slane %v754, 6
      %v905 = vrot.slane %v755, 6
      %v906 = vrot.slane %v756, 6
      %v907 = vrot.slane %v757, 6
      %v908 = vrot.slane %v758, 6
      %v909 = vrot.slane %v759, 6
      %v910 = vrot.slane %v760, 6
      %v911 = vrot.slane %v761, 6
      %v912 = vrot.slane %v762, 6
      %v913 = vrot.slane %v763, 6
      %v914 = vrot.slane %v764, 6
      %v915 = vrot.slane %v765, 6
      %v916 = vrot.slane %v766, 6
      %vm917 = vcmp.lt.s32.totalorder %v810, 2
      %v918 = vsel %vm917, %v915, %v916
      %v919 = vsel %vm917, %v914, %v915
      %v920 = vsel %vm917, %v913, %v914
      %v921 = vsel %vm917, %v912, %v913
      %v922 = vsel %vm917, %v911, %v912
      %v923 = vsel %vm917, %v910, %v911
      %v924 = vsel %vm917, %v909, %v910
      %v925 = vsel %vm917, %v908, %v909
      %v926 = vsel %vm917, %v907, %v908
      %v927 = vsel %vm917, %v906, %v907
      %v928 = vsel %vm917, %v905, %v906
      %v929 = vsel %vm917, %v904, %v905
      %v930 = vsel %vm917, %v903, %v904
      %v931 = vsel %vm917, %v902, %v903
      %v932 = vsel %vm917, %v901, %v902
      %v933 = vsel %vm917, %v900, %v901
      %v934 = vsel %vm917, %v899, %v900
      %v935 = vsel %vm917, %v898, %v899
      %v936 = vsel %vm917, %v897, %v898
      %v937 = vsel %vm917, %v896, %v897
      %v938 = vsel %vm917, %v895, %v896
      %v939 = vsel %vm917, %v894, %v895
      %v940 = vsel %vm917, %v893, %v894
      %v941 = vsel %vm917, %v892, %v893
      %v942 = vsel %vm917, %v891, %v892
      %v943 = vsel %vm917, %v890, %v891
      %v944 = vsel %vm917, %v889, %v890
      %v945 = vsel %vm917, %v888, %v889
      %v946 = vsel %vm917, %v887, %v888
      %v947 = vsel %vm917, %v886, %v887
      %v948 = vsel %vm917, %v885, %v886
      %v949 = vsel %vm917, %v884, %v885
      %v950 = vsel %vm917, %v883, %v884
      %v951 = vsel %vm917, %v882, %v883
      %v952 = vsel %vm917, %v881, %v882
      %v953 = vsel %vm917, %v880, %v881
      %v954 = vsel %vm917, %v879, %v880
      %v955 = vsel %vm917, %v878, %v879
      %v956 = vsel %vm917, %v877, %v878
      %v957 = vsel %vm917, %v876, %v877
      %v958 = vsel %vm917, %v875, %v876
      %v959 = vsel %vm917, %v916, %v875
      %v960 = vpack.c.bf16 %v918, %v919
      %v961 = vpack.c.bf16 %v958, %v959
      %v962 = vpack.c.bf16 %v956, %v957
      %v963 = vpack.c.bf16 %v954, %v955
      %v964 = vpack.c.bf16 %v952, %v953
      %v965 = vpack.c.bf16 %v950, %v951
      %v966 = vpack.c.bf16 %v948, %v949
      %v967 = vpack.c.bf16 %v946, %v947
      %v968 = vpack.c.bf16 %v944, %v945
      %v969 = vpack.c.bf16 %v942, %v943
      %v970 = vpack.c.bf16 %v940, %v941
      %v971 = vpack.c.bf16 %v938, %v939
      %v972 = vpack.c.bf16 %v936, %v937
      %v973 = vpack.c.bf16 %v934, %v935
      %v974 = vpack.c.bf16 %v932, %v933
      %v975 = vpack.c.bf16 %v930, %v931
      %v976 = vpack.c.bf16 %v928, %v929
      %v977 = vpack.c.bf16 %v926, %v927
      %v978 = vpack.c.bf16 %v924, %v925
      %v979 = vpack.c.bf16 %v922, %v923
      %v980 = vpack.c.bf16 %v920, %v921
      %v981 = vrot.slane %v725, 7
      %v982 = vrot.slane %v726, 7
      %v983 = vrot.slane %v727, 7
      %v984 = vrot.slane %v728, 7
      %v985 = vrot.slane %v729, 7
      %v986 = vrot.slane %v730, 7
      %v987 = vrot.slane %v731, 7
      %v988 = vrot.slane %v732, 7
      %v989 = vrot.slane %v733, 7
      %v990 = vrot.slane %v734, 7
      %v991 = vrot.slane %v735, 7
      %v992 = vrot.slane %v736, 7
      %v993 = vrot.slane %v737, 7
      %v994 = vrot.slane %v738, 7
      %v995 = vrot.slane %v739, 7
      %v996 = vrot.slane %v740, 7
      %v997 = vrot.slane %v741, 7
      %v998 = vrot.slane %v742, 7
      %v999 = vrot.slane %v743, 7
      %v1000 = vrot.slane %v744, 7
      %v1001 = vrot.slane %v745, 7
      %v1002 = vrot.slane %v746, 7
      %v1003 = vrot.slane %v747, 7
      %v1004 = vrot.slane %v748, 7
      %v1005 = vrot.slane %v749, 7
      %v1006 = vrot.slane %v750, 7
      %v1007 = vrot.slane %v751, 7
      %v1008 = vrot.slane %v752, 7
      %v1009 = vrot.slane %v753, 7
      %v1010 = vrot.slane %v754, 7
      %v1011 = vrot.slane %v755, 7
      %v1012 = vrot.slane %v756, 7
      %v1013 = vrot.slane %v757, 7
      %v1014 = vrot.slane %v758, 7
      %v1015 = vrot.slane %v759, 7
      %v1016 = vrot.slane %v760, 7
      %v1017 = vrot.slane %v761, 7
      %v1018 = vrot.slane %v762, 7
      %v1019 = vrot.slane %v763, 7
      %v1020 = vrot.slane %v764, 7
      %v1021 = vrot.slane %v765, 7
      %v1022 = vrot.slane %v766, 7
      %vm1023 = vcmp.lt.s32.totalorder %v810, 1
      %v1024 = vsel %vm1023, %v1021, %v1022
      %v1025 = vsel %vm1023, %v1020, %v1021
      %v1026 = vsel %vm1023, %v1019, %v1020
      %v1027 = vsel %vm1023, %v1018, %v1019
      %v1028 = vsel %vm1023, %v1017, %v1018
      %v1029 = vsel %vm1023, %v1016, %v1017
      %v1030 = vsel %vm1023, %v1015, %v1016
      %v1031 = vsel %vm1023, %v1014, %v1015
      %v1032 = vsel %vm1023, %v1013, %v1014
      %v1033 = vsel %vm1023, %v1012, %v1013
      %v1034 = vsel %vm1023, %v1011, %v1012
      %v1035 = vsel %vm1023, %v1010, %v1011
      %v1036 = vsel %vm1023, %v1009, %v1010
      %v1037 = vsel %vm1023, %v1008, %v1009
      %v1038 = vsel %vm1023, %v1007, %v1008
      %v1039 = vsel %vm1023, %v1006, %v1007
      %v1040 = vsel %vm1023, %v1005, %v1006
      %v1041 = vsel %vm1023, %v1004, %v1005
      %v1042 = vsel %vm1023, %v1003, %v1004
      %v1043 = vsel %vm1023, %v1002, %v1003
      %v1044 = vsel %vm1023, %v1001, %v1002
      %v1045 = vsel %vm1023, %v1000, %v1001
      %v1046 = vsel %vm1023, %v999, %v1000
      %v1047 = vsel %vm1023, %v998, %v999
      %v1048 = vsel %vm1023, %v997, %v998
      %v1049 = vsel %vm1023, %v996, %v997
      %v1050 = vsel %vm1023, %v995, %v996
      %v1051 = vsel %vm1023, %v994, %v995
      %v1052 = vsel %vm1023, %v993, %v994
      %v1053 = vsel %vm1023, %v992, %v993
      %v1054 = vsel %vm1023, %v991, %v992
      %v1055 = vsel %vm1023, %v990, %v991
      %v1056 = vsel %vm1023, %v989, %v990
      %v1057 = vsel %vm1023, %v988, %v989
      %v1058 = vsel %vm1023, %v987, %v988
      %v1059 = vsel %vm1023, %v986, %v987
      %v1060 = vsel %vm1023, %v985, %v986
      %v1061 = vsel %vm1023, %v984, %v985
      %v1062 = vsel %vm1023, %v983, %v984
      %v1063 = vsel %vm1023, %v982, %v983
      %v1064 = vsel %vm1023, %v981, %v982
      %v1065 = vsel %vm1023, %v1022, %v981
      %v1066 = vpack.c.bf16 %v1024, %v1025
      %v1067 = vpack.c.bf16 %v1064, %v1065
      %v1068 = vpack.c.bf16 %v1062, %v1063
      %v1069 = vpack.c.bf16 %v1060, %v1061
      %v1070 = vpack.c.bf16 %v1058, %v1059
      %v1071 = vpack.c.bf16 %v1056, %v1057
      %v1072 = vpack.c.bf16 %v1054, %v1055
      %v1073 = vpack.c.bf16 %v1052, %v1053
      %v1074 = vpack.c.bf16 %v1050, %v1051
      %v1075 = vpack.c.bf16 %v1048, %v1049
      %v1076 = vpack.c.bf16 %v1046, %v1047
      %v1077 = vpack.c.bf16 %v1044, %v1045
      %v1078 = vpack.c.bf16 %v1042, %v1043
      %v1079 = vpack.c.bf16 %v1040, %v1041
      %v1080 = vpack.c.bf16 %v1038, %v1039
      %v1081 = vpack.c.bf16 %v1036, %v1037
      %v1082 = vpack.c.bf16 %v1034, %v1035
      %v1083 = vpack.c.bf16 %v1032, %v1033
      %v1084 = vpack.c.bf16 %v1030, %v1031
      %v1085 = vpack.c.bf16 %v1028, %v1029
      %v1086 = vpack.c.bf16 %v1026, %v1027
      %v1087 = vpack.c.bf16 %v726, %v725
      %v1088 = vpack.c.bf16 %v728, %v727
      %v1089 = vpack.c.bf16 %v730, %v729
      %v1090 = vpack.c.bf16 %v732, %v731
      %v1091 = vpack.c.bf16 %v734, %v733
      %v1092 = vpack.c.bf16 %v736, %v735
      %v1093 = vpack.c.bf16 %v738, %v737
      %v1094 = vpack.c.bf16 %v740, %v739
      %v1095 = vpack.c.bf16 %v742, %v741
      %v1096 = vpack.c.bf16 %v744, %v743
      %v1097 = vpack.c.bf16 %v746, %v745
      %v1098 = vpack.c.bf16 %v748, %v747
      %v1099 = vpack.c.bf16 %v750, %v749
      %v1100 = vpack.c.bf16 %v752, %v751
      %v1101 = vpack.c.bf16 %v754, %v753
      %v1102 = vpack.c.bf16 %v756, %v755
      %v1103 = vpack.c.bf16 %v758, %v757
      %v1104 = vpack.c.bf16 %v760, %v759
      %v1105 = vpack.c.bf16 %v762, %v761
      %v1106 = vpack.c.bf16 %v764, %v763
      %v1107 = vpack.c.bf16 %v766, %v765
      %v1108 = vrot.slane %v725, 1
      %v1109 = vrot.slane %v726, 1
      %v1110 = vrot.slane %v727, 1
      %v1111 = vrot.slane %v728, 1
      %v1112 = vrot.slane %v729, 1
      %v1113 = vrot.slane %v730, 1
      %v1114 = vrot.slane %v731, 1
      %v1115 = vrot.slane %v732, 1
      %v1116 = vrot.slane %v733, 1
      %v1117 = vrot.slane %v734, 1
      %v1118 = vrot.slane %v735, 1
      %v1119 = vrot.slane %v736, 1
      %v1120 = vrot.slane %v737, 1
      %v1121 = vrot.slane %v738, 1
      %v1122 = vrot.slane %v739, 1
      %v1123 = vrot.slane %v740, 1
      %v1124 = vrot.slane %v741, 1
      %v1125 = vrot.slane %v742, 1
      %v1126 = vrot.slane %v743, 1
      %v1127 = vrot.slane %v744, 1
      %v1128 = vrot.slane %v745, 1
      %v1129 = vrot.slane %v746, 1
      %v1130 = vrot.slane %v747, 1
      %v1131 = vrot.slane %v748, 1
      %v1132 = vrot.slane %v749, 1
      %v1133 = vrot.slane %v750, 1
      %v1134 = vrot.slane %v751, 1
      %v1135 = vrot.slane %v752, 1
      %v1136 = vrot.slane %v753, 1
      %v1137 = vrot.slane %v754, 1
      %v1138 = vrot.slane %v755, 1
      %v1139 = vrot.slane %v756, 1
      %v1140 = vrot.slane %v757, 1
      %v1141 = vrot.slane %v758, 1
      %v1142 = vrot.slane %v759, 1
      %v1143 = vrot.slane %v760, 1
      %v1144 = vrot.slane %v761, 1
      %v1145 = vrot.slane %v762, 1
      %v1146 = vrot.slane %v763, 1
      %v1147 = vrot.slane %v764, 1
      %v1148 = vrot.slane %v765, 1
      %v1149 = vrot.slane %v766, 1
      %vm1150 = vcmp.lt.s32.totalorder %v810, 7
      %v1151 = vsel %vm1150, %v1148, %v1149
      %v1152 = vsel %vm1150, %v1147, %v1148
      %v1153 = vsel %vm1150, %v1146, %v1147
      %v1154 = vsel %vm1150, %v1145, %v1146
      %v1155 = vsel %vm1150, %v1144, %v1145
      %v1156 = vsel %vm1150, %v1143, %v1144
      %v1157 = vsel %vm1150, %v1142, %v1143
      %v1158 = vsel %vm1150, %v1141, %v1142
      %v1159 = vsel %vm1150, %v1140, %v1141
      %v1160 = vsel %vm1150, %v1139, %v1140
      %v1161 = vsel %vm1150, %v1138, %v1139
      %v1162 = vsel %vm1150, %v1137, %v1138
      %v1163 = vsel %vm1150, %v1136, %v1137
      %v1164 = vsel %vm1150, %v1135, %v1136
      %v1165 = vsel %vm1150, %v1134, %v1135
      %v1166 = vsel %vm1150, %v1133, %v1134
      %v1167 = vsel %vm1150, %v1132, %v1133
      %v1168 = vsel %vm1150, %v1131, %v1132
      %v1169 = vsel %vm1150, %v1130, %v1131
      %v1170 = vsel %vm1150, %v1129, %v1130
      %v1171 = vsel %vm1150, %v1128, %v1129
      %v1172 = vsel %vm1150, %v1127, %v1128
      %v1173 = vsel %vm1150, %v1126, %v1127
      %v1174 = vsel %vm1150, %v1125, %v1126
      %v1175 = vsel %vm1150, %v1124, %v1125
      %v1176 = vsel %vm1150, %v1123, %v1124
      %v1177 = vsel %vm1150, %v1122, %v1123
      %v1178 = vsel %vm1150, %v1121, %v1122
      %v1179 = vsel %vm1150, %v1120, %v1121
      %v1180 = vsel %vm1150, %v1119, %v1120
      %v1181 = vsel %vm1150, %v1118, %v1119
      %v1182 = vsel %vm1150, %v1117, %v1118
      %v1183 = vsel %vm1150, %v1116, %v1117
      %v1184 = vsel %vm1150, %v1115, %v1116
      %v1185 = vsel %vm1150, %v1114, %v1115
      %v1186 = vsel %vm1150, %v1113, %v1114
      %v1187 = vsel %vm1150, %v1112, %v1113
      %v1188 = vsel %vm1150, %v1111, %v1112
      %v1189 = vsel %vm1150, %v1110, %v1111
      %v1190 = vsel %vm1150, %v1109, %v1110
      %v1191 = vsel %vm1150, %v1108, %v1109
      %v1192 = vsel %vm1150, %v1149, %v1108
      %v1193 = vpack.c.bf16 %v1190, %v1191
      %v1194 = vpack.c.bf16 %v1188, %v1189
      %v1195 = vpack.c.bf16 %v1186, %v1187
      %v1196 = vpack.c.bf16 %v1184, %v1185
      %v1197 = vpack.c.bf16 %v1182, %v1183
      %v1198 = vpack.c.bf16 %v1180, %v1181
      %v1199 = vpack.c.bf16 %v1178, %v1179
      %v1200 = vpack.c.bf16 %v1176, %v1177
      %v1201 = vpack.c.bf16 %v1174, %v1175
      %v1202 = vpack.c.bf16 %v1172, %v1173
      %v1203 = vpack.c.bf16 %v1170, %v1171
      %v1204 = vpack.c.bf16 %v1168, %v1169
      %v1205 = vpack.c.bf16 %v1166, %v1167
      %v1206 = vpack.c.bf16 %v1164, %v1165
      %v1207 = vpack.c.bf16 %v1162, %v1163
      %v1208 = vpack.c.bf16 %v1160, %v1161
      %v1209 = vpack.c.bf16 %v1158, %v1159
      %v1210 = vpack.c.bf16 %v1156, %v1157
      %v1211 = vpack.c.bf16 %v1154, %v1155
      %v1212 = vpack.c.bf16 %v1152, %v1153
      %v1213 = vpack.c.bf16 %v1192, %v1151
      %v1214 = vrot.slane %v725, 2
      %v1215 = vrot.slane %v726, 2
      %v1216 = vrot.slane %v727, 2
      %v1217 = vrot.slane %v728, 2
      %v1218 = vrot.slane %v729, 2
      %v1219 = vrot.slane %v730, 2
      %v1220 = vrot.slane %v731, 2
      %v1221 = vrot.slane %v732, 2
      %v1222 = vrot.slane %v733, 2
      %v1223 = vrot.slane %v734, 2
      %v1224 = vrot.slane %v735, 2
      %v1225 = vrot.slane %v736, 2
      %v1226 = vrot.slane %v737, 2
      %v1227 = vrot.slane %v738, 2
      %v1228 = vrot.slane %v739, 2
      %v1229 = vrot.slane %v740, 2
      %v1230 = vrot.slane %v741, 2
      %v1231 = vrot.slane %v742, 2
      %v1232 = vrot.slane %v743, 2
      %v1233 = vrot.slane %v744, 2
      %v1234 = vrot.slane %v745, 2
      %v1235 = vrot.slane %v746, 2
      %v1236 = vrot.slane %v747, 2
      %v1237 = vrot.slane %v748, 2
      %v1238 = vrot.slane %v749, 2
      %v1239 = vrot.slane %v750, 2
      %v1240 = vrot.slane %v751, 2
      %v1241 = vrot.slane %v752, 2
      %v1242 = vrot.slane %v753, 2
      %v1243 = vrot.slane %v754, 2
      %v1244 = vrot.slane %v755, 2
      %v1245 = vrot.slane %v756, 2
      %v1246 = vrot.slane %v757, 2
      %v1247 = vrot.slane %v758, 2
      %v1248 = vrot.slane %v759, 2
      %v1249 = vrot.slane %v760, 2
      %v1250 = vrot.slane %v761, 2
      %v1251 = vrot.slane %v762, 2
      %v1252 = vrot.slane %v763, 2
      %v1253 = vrot.slane %v764, 2
      %v1254 = vrot.slane %v765, 2
      %v1255 = vrot.slane %v766, 2
      %vm1256 = vcmp.lt.s32.totalorder %v810, 6
      %v1257 = vsel %vm1256, %v1254, %v1255
      %v1258 = vsel %vm1256, %v1253, %v1254
      %v1259 = vsel %vm1256, %v1252, %v1253
      %v1260 = vsel %vm1256, %v1251, %v1252
      %v1261 = vsel %vm1256, %v1250, %v1251
      %v1262 = vsel %vm1256, %v1249, %v1250
      %v1263 = vsel %vm1256, %v1248, %v1249
      %v1264 = vsel %vm1256, %v1247, %v1248
      %v1265 = vsel %vm1256, %v1246, %v1247
      %v1266 = vsel %vm1256, %v1245, %v1246
      %v1267 = vsel %vm1256, %v1244, %v1245
      %v1268 = vsel %vm1256, %v1243, %v1244
      %v1269 = vsel %vm1256, %v1242, %v1243
      %v1270 = vsel %vm1256, %v1241, %v1242
      %v1271 = vsel %vm1256, %v1240, %v1241
      %v1272 = vsel %vm1256, %v1239, %v1240
      %v1273 = vsel %vm1256, %v1238, %v1239
      %v1274 = vsel %vm1256, %v1237, %v1238
      %v1275 = vsel %vm1256, %v1236, %v1237
      %v1276 = vsel %vm1256, %v1235, %v1236
      %v1277 = vsel %vm1256, %v1234, %v1235
      %v1278 = vsel %vm1256, %v1233, %v1234
      %v1279 = vsel %vm1256, %v1232, %v1233
      %v1280 = vsel %vm1256, %v1231, %v1232
      %v1281 = vsel %vm1256, %v1230, %v1231
      %v1282 = vsel %vm1256, %v1229, %v1230
      %v1283 = vsel %vm1256, %v1228, %v1229
      %v1284 = vsel %vm1256, %v1227, %v1228
      %v1285 = vsel %vm1256, %v1226, %v1227
      %v1286 = vsel %vm1256, %v1225, %v1226
      %v1287 = vsel %vm1256, %v1224, %v1225
      %v1288 = vsel %vm1256, %v1223, %v1224
      %v1289 = vsel %vm1256, %v1222, %v1223
      %v1290 = vsel %vm1256, %v1221, %v1222
      %v1291 = vsel %vm1256, %v1220, %v1221
      %v1292 = vsel %vm1256, %v1219, %v1220
      %v1293 = vsel %vm1256, %v1218, %v1219
      %v1294 = vsel %vm1256, %v1217, %v1218
      %v1295 = vsel %vm1256, %v1216, %v1217
      %v1296 = vsel %vm1256, %v1215, %v1216
      %v1297 = vsel %vm1256, %v1214, %v1215
      %v1298 = vsel %vm1256, %v1255, %v1214
      %v1299 = vpack.c.bf16 %v1294, %v1295
      %v1300 = vpack.c.bf16 %v1292, %v1293
      %v1301 = vpack.c.bf16 %v1290, %v1291
      %v1302 = vpack.c.bf16 %v1288, %v1289
      %v1303 = vpack.c.bf16 %v1286, %v1287
      %v1304 = vpack.c.bf16 %v1284, %v1285
      %v1305 = vpack.c.bf16 %v1282, %v1283
      %v1306 = vpack.c.bf16 %v1280, %v1281
      %v1307 = vpack.c.bf16 %v1278, %v1279
      %v1308 = vpack.c.bf16 %v1276, %v1277
      %v1309 = vpack.c.bf16 %v1274, %v1275
      %v1310 = vpack.c.bf16 %v1272, %v1273
      %v1311 = vpack.c.bf16 %v1270, %v1271
      %v1312 = vpack.c.bf16 %v1268, %v1269
      %v1313 = vpack.c.bf16 %v1266, %v1267
      %v1314 = vpack.c.bf16 %v1264, %v1265
      %v1315 = vpack.c.bf16 %v1262, %v1263
      %v1316 = vpack.c.bf16 %v1260, %v1261
      %v1317 = vpack.c.bf16 %v1258, %v1259
      %v1318 = vpack.c.bf16 %v1298, %v1257
      %v1319 = vpack.c.bf16 %v1296, %v1297
      %v1320 = vrot.slane %v725, 3
      %v1321 = vrot.slane %v726, 3
      %v1322 = vrot.slane %v727, 3
      %v1323 = vrot.slane %v728, 3
      %v1324 = vrot.slane %v729, 3
      %v1325 = vrot.slane %v730, 3
      %v1326 = vrot.slane %v731, 3
      %v1327 = vrot.slane %v732, 3
      %v1328 = vrot.slane %v733, 3
      %v1329 = vrot.slane %v734, 3
      %v1330 = vrot.slane %v735, 3
      %v1331 = vrot.slane %v736, 3
      %v1332 = vrot.slane %v737, 3
      %v1333 = vrot.slane %v738, 3
      %v1334 = vrot.slane %v739, 3
      %v1335 = vrot.slane %v740, 3
      %v1336 = vrot.slane %v741, 3
      %v1337 = vrot.slane %v742, 3
      %v1338 = vrot.slane %v743, 3
      %v1339 = vrot.slane %v744, 3
      %v1340 = vrot.slane %v745, 3
      %v1341 = vrot.slane %v746, 3
      %v1342 = vrot.slane %v747, 3
      %v1343 = vrot.slane %v748, 3
      %v1344 = vrot.slane %v749, 3
      %v1345 = vrot.slane %v750, 3
      %v1346 = vrot.slane %v751, 3
      %v1347 = vrot.slane %v752, 3
      %v1348 = vrot.slane %v753, 3
      %v1349 = vrot.slane %v754, 3
      %v1350 = vrot.slane %v755, 3
      %v1351 = vrot.slane %v756, 3
      %v1352 = vrot.slane %v757, 3
      %v1353 = vrot.slane %v758, 3
      %v1354 = vrot.slane %v759, 3
      %v1355 = vrot.slane %v760, 3
      %v1356 = vrot.slane %v761, 3
      %v1357 = vrot.slane %v762, 3
      %v1358 = vrot.slane %v763, 3
      %v1359 = vrot.slane %v764, 3
      %v1360 = vrot.slane %v765, 3
      %v1361 = vrot.slane %v766, 3
      %vm1362 = vcmp.lt.s32.totalorder %v810, 5
      %v1363 = vsel %vm1362, %v1360, %v1361
      %v1364 = vsel %vm1362, %v1359, %v1360
      %v1365 = vsel %vm1362, %v1358, %v1359
      %v1366 = vsel %vm1362, %v1357, %v1358
      %v1367 = vsel %vm1362, %v1356, %v1357
      %v1368 = vsel %vm1362, %v1355, %v1356
      %v1369 = vsel %vm1362, %v1354, %v1355
      %v1370 = vsel %vm1362, %v1353, %v1354
      %v1371 = vsel %vm1362, %v1352, %v1353
      %v1372 = vsel %vm1362, %v1351, %v1352
      %v1373 = vsel %vm1362, %v1350, %v1351
      %v1374 = vsel %vm1362, %v1349, %v1350
      %v1375 = vsel %vm1362, %v1348, %v1349
      %v1376 = vsel %vm1362, %v1347, %v1348
      %v1377 = vsel %vm1362, %v1346, %v1347
      %v1378 = vsel %vm1362, %v1345, %v1346
      %v1379 = vsel %vm1362, %v1344, %v1345
      %v1380 = vsel %vm1362, %v1343, %v1344
      %v1381 = vsel %vm1362, %v1342, %v1343
      %v1382 = vsel %vm1362, %v1341, %v1342
      %v1383 = vsel %vm1362, %v1340, %v1341
      %v1384 = vsel %vm1362, %v1339, %v1340
      %v1385 = vsel %vm1362, %v1338, %v1339
      %v1386 = vsel %vm1362, %v1337, %v1338
      %v1387 = vsel %vm1362, %v1336, %v1337
      %v1388 = vsel %vm1362, %v1335, %v1336
      %v1389 = vsel %vm1362, %v1334, %v1335
      %v1390 = vsel %vm1362, %v1333, %v1334
      %v1391 = vsel %vm1362, %v1332, %v1333
      %v1392 = vsel %vm1362, %v1331, %v1332
      %v1393 = vsel %vm1362, %v1330, %v1331
      %v1394 = vsel %vm1362, %v1329, %v1330
      %v1395 = vsel %vm1362, %v1328, %v1329
      %v1396 = vsel %vm1362, %v1327, %v1328
      %v1397 = vsel %vm1362, %v1326, %v1327
      %v1398 = vsel %vm1362, %v1325, %v1326
      %v1399 = vsel %vm1362, %v1324, %v1325
      %v1400 = vsel %vm1362, %v1323, %v1324
      %v1401 = vsel %vm1362, %v1322, %v1323
      %v1402 = vsel %vm1362, %v1321, %v1322
      %v1403 = vsel %vm1362, %v1320, %v1321
      %v1404 = vsel %vm1362, %v1361, %v1320
      %v1405 = vpack.c.bf16 %v1400, %v1401
      %v1406 = vpack.c.bf16 %v1398, %v1399
      %v1407 = vpack.c.bf16 %v1396, %v1397
      %v1408 = vpack.c.bf16 %v1394, %v1395
      %v1409 = vpack.c.bf16 %v1392, %v1393
      %v1410 = vpack.c.bf16 %v1390, %v1391
      %v1411 = vpack.c.bf16 %v1388, %v1389
      %v1412 = vpack.c.bf16 %v1386, %v1387
      %v1413 = vpack.c.bf16 %v1384, %v1385
      %v1414 = vpack.c.bf16 %v1382, %v1383
      %v1415 = vpack.c.bf16 %v1380, %v1381
      %v1416 = vpack.c.bf16 %v1378, %v1379
      %v1417 = vpack.c.bf16 %v1376, %v1377
      %v1418 = vpack.c.bf16 %v1374, %v1375
      %v1419 = vpack.c.bf16 %v1372, %v1373
      %v1420 = vpack.c.bf16 %v1370, %v1371
      %v1421 = vpack.c.bf16 %v1368, %v1369
      %v1422 = vpack.c.bf16 %v1366, %v1367
      %v1423 = vpack.c.bf16 %v1364, %v1365
      %v1424 = vpack.c.bf16 %v1404, %v1363
      %v1425 = vpack.c.bf16 %v1402, %v1403
      %v1426 = vld [vmem:[%s3] sm:$0xf]
      %v1427 = vld [vmem:[%s3 + $0x4] sm:$0xf]
      %v1428 = vld [vmem:[%s3 + $0x8] sm:$0xf]
      %v1429 = vld [vmem:[%s3 + $0xc] sm:$0xf]
      %v1430 = vld [vmem:[%s3 + $0x10] sm:$0xf]
      %v1431 = vld [vmem:[%s3 + $0x14] sm:$0xf]
      %v1432 = vld [vmem:[%s3 + $0x18] sm:$0xf]
      %v1433 = vld [vmem:[%s3 + $0x1c] sm:$0xf]
      %v1434 = vld [vmem:[%s3 + $0x20] sm:$0xf]
      %v1435 = vld [vmem:[%s3 + $0x24] sm:$0xf]
      %v1436 = vld [vmem:[%s3 + $0x28] sm:$0xf]
      %v1437 = vld [vmem:[%s3 + $0x2c] sm:$0xf]
      %v1438 = vld [vmem:[%s3 + $0x30] sm:$0xf]
      %v1439 = vld [vmem:[%s3 + $0x34] sm:$0xf]
      %v1440 = vld [vmem:[%s3 + $0x38] sm:$0xf]
      %v1441 = vld [vmem:[%s3 + $0x3c] sm:$0xf]
      %v1442 = vld [vmem:[%s3 + $0x40] sm:$0xf]
      %v1443 = vld [vmem:[%s3 + $0x44] sm:$0xf]
      %v1444 = vld [vmem:[%s3 + $0x48] sm:$0xf]
      %v1445 = vld [vmem:[%s3 + $0x4c] sm:$0xf]
      %v1446 = vld [vmem:[%s3 + $0x50] sm:$0xf]
      %v1447 = vld [vmem:[%s3 + $0x54] sm:$0xf]
      %v1448 = vld [vmem:[%s3 + $0x58] sm:$0xf]
      %v1449 = vld [vmem:[%s3 + $0x5c] sm:$0xf]
      %v1450 = vld [vmem:[%s3 + $0x60] sm:$0xf]
      %v1451 = vld [vmem:[%s3 + $0x64] sm:$0xf]
      %v1452 = vld [vmem:[%s3 + $0x68] sm:$0xf]
      %v1453 = vld [vmem:[%s3 + $0x6c] sm:$0xf]
      %v1454 = vld [vmem:[%s3 + $0x70] sm:$0xf]
      %v1455 = vld [vmem:[%s3 + $0x74] sm:$0xf]
      %v1456 = vld [vmem:[%s3 + $0x78] sm:$0xf]
      %v1457 = vld [vmem:[%s3 + $0x7c] sm:$0xf]
      %v1458 = vld [vmem:[%s3 + $0x80] sm:$0xf]
      %v1459 = vld [vmem:[%s3 + $0x84] sm:$0xf]
      %v1460 = vld [vmem:[%s3 + $0x88] sm:$0xf]
      %v1461 = vld [vmem:[%s3 + $0x8c] sm:$0xf]
      %v1462 = vld [vmem:[%s3 + $0x90] sm:$0xf]
      %v1463 = vld [vmem:[%s3 + $0x94] sm:$0xf]
      %v1464 = vld [vmem:[%s3 + $0x98] sm:$0xf]
      %v1465 = vld [vmem:[%s3 + $0x9c] sm:$0xf]
      %v1466 = vld [vmem:[%s3 + $0xa0] sm:$0xf]
      %v1467 = vld [vmem:[%s3 + $0xa4] sm:$0xf]
      %v1468 = vld [vmem:[%s3 + $0xa8] sm:$0xf]
      %v1469 = vld [vmem:[%s3 + $0xac] sm:$0xf]
      %v1470 = vld [vmem:[%s3 + $0xb0] sm:$0xf]
      %v1471 = vld [vmem:[%s3 + $0xb4] sm:$0xf]
      %v1472 = vld [vmem:[%s3 + $0xb8] sm:$0xf]
      %v1473 = vld [vmem:[%s3 + $0xbc] sm:$0xf]
      %v1474 = vld [vmem:[%s3 + $0xc0] sm:$0xf]
      %v1475 = vld [vmem:[%s3 + $0xc4] sm:$0xf]
      %v1476 = vld [vmem:[%s3 + $0xc8] sm:$0xf]
      %v1477 = vld [vmem:[%s3 + $0xcc] sm:$0xf]
      %v1478 = vld [vmem:[%s3 + $0xd0] sm:$0xf]
      %v1479 = vld [vmem:[%s3 + $0xd4] sm:$0xf]
      %v1480 = vld [vmem:[%s3 + $0xd8] sm:$0xf]
      %v1481 = vld [vmem:[%s3 + $0xdc] sm:$0xf]
      %v1482 = vld [vmem:[%s3 + $0xe0] sm:$0xf]
      %v1483 = vld [vmem:[%s3 + $0xe4] sm:$0xf]
      %v1484 = vld [vmem:[%s3 + $0xe8] sm:$0xf]
      %v1485 = vld [vmem:[%s3 + $0xec] sm:$0xf]
      %v1486 = vld [vmem:[%s3 + $0xf0] sm:$0xf]
      %v1487 = vld [vmem:[%s3 + $0xf4] sm:$0xf]
      %v1488 = vld [vmem:[%s3 + $0xf8] sm:$0xf]
      %v1489 = vld [vmem:[%s3 + $0xfc] sm:$0xf]
      %v1490 = vld [vmem:[%s3 + $0x100] sm:$0xf]
      %v1491 = vld [vmem:[%s3 + $0x104] sm:$0xf]
      %v1492 = vld [vmem:[%s3 + $0x108] sm:$0xf]
      %v1493 = vld [vmem:[%s3 + $0x10c] sm:$0xf]
      %v1494 = vld [vmem:[%s3 + $0x110] sm:$0xf]
      %v1495 = vld [vmem:[%s3 + $0x114] sm:$0xf]
      %v1496 = vld [vmem:[%s3 + $0x118] sm:$0xf]
      %v1497 = vld [vmem:[%s3 + $0x11c] sm:$0xf]
      %v1498 = vld [vmem:[%s3 + $0x120] sm:$0xf]
      %v1499 = vld [vmem:[%s3 + $0x124] sm:$0xf]
      %v1500 = vld [vmem:[%s3 + $0x128] sm:$0xf]
      %v1501 = vld [vmem:[%s3 + $0x12c] sm:$0xf]
      %v1502 = vld [vmem:[%s3 + $0x130] sm:$0xf]
      %v1503 = vld [vmem:[%s3 + $0x134] sm:$0xf]
      %v1504 = vld [vmem:[%s3 + $0x138] sm:$0xf]
      %v1505 = vld [vmem:[%s3 + $0x13c] sm:$0xf]
      %v1506 = vld [vmem:[%s3 + $0x140] sm:$0xf]
      %v1507 = vld [vmem:[%s3 + $0x144] sm:$0xf]
      %v1508 = vld [vmem:[%s3 + $0x148] sm:$0xf]
      %v1509 = vld [vmem:[%s3 + $0x14c] sm:$0xf]
      %v1510 = vld [vmem:[%s3 + $0x150] sm:$0xf]
      %v1511 = vld [vmem:[%s3 + $0x154] sm:$0xf]
      %v1512 = vld [vmem:[%s3 + $0x158] sm:$0xf]
      %v1513 = vld [vmem:[%s3 + $0x15c] sm:$0xf]
      %v1514 = vld [vmem:[%s3 + $0x160] sm:$0xf]
      %v1515 = vld [vmem:[%s3 + $0x164] sm:$0xf]
      %v1516 = vld [vmem:[%s3 + $0x168] sm:$0xf]
      %v1517 = vld [vmem:[%s3 + $0x16c] sm:$0xf]
      %v1518 = vld [vmem:[%s3 + $0x170] sm:$0xf]
      %v1519 = vld [vmem:[%s3 + $0x174] sm:$0xf]
      %v1520 = vld [vmem:[%s3 + $0x178] sm:$0xf]
      %v1521 = vld [vmem:[%s3 + $0x17c] sm:$0xf]
      %v1522 = vld [vmem:[%s3 + $0x180] sm:$0xf]
      %v1523 = vld [vmem:[%s3 + $0x184] sm:$0xf]
      %v1524 = vld [vmem:[%s3 + $0x188] sm:$0xf]
      %v1525 = vld [vmem:[%s3 + $0x18c] sm:$0xf]
      %v1526 = vld [vmem:[%s3 + $0x190] sm:$0xf]
      %v1527 = vld [vmem:[%s3 + $0x194] sm:$0xf]
      %v1528 = vld [vmem:[%s3 + $0x198] sm:$0xf]
      %v1529 = vld [vmem:[%s3 + $0x19c] sm:$0xf]
      %v1530 = vld [vmem:[%s3 + $0x1a0] sm:$0xf]
      %v1531 = vld [vmem:[%s3 + $0x1a4] sm:$0xf]
      %v1532 = vld [vmem:[%s3 + $0x1a8] sm:$0xf]
      %v1533 = vld [vmem:[%s3 + $0x1ac] sm:$0xf]
      %v1534 = vld [vmem:[%s3 + $0x1b0] sm:$0xf]
      %v1535 = vld [vmem:[%s3 + $0x1b4] sm:$0xf]
      %v1536 = vld [vmem:[%s3 + $0x1b8] sm:$0xf]
      %v1537 = vld [vmem:[%s3 + $0x1bc] sm:$0xf]
      %v1538 = vld [vmem:[%s3 + $0x1c0] sm:$0xf]
      %v1539 = vld [vmem:[%s3 + $0x1c4] sm:$0xf]
      %v1540 = vld [vmem:[%s3 + $0x1c8] sm:$0xf]
      %v1541 = vld [vmem:[%s3 + $0x1cc] sm:$0xf]
      %v1542 = vld [vmem:[%s3 + $0x1d0] sm:$0xf]
      %v1543 = vld [vmem:[%s3 + $0x1d4] sm:$0xf]
      %v1544 = vld [vmem:[%s3 + $0x1d8] sm:$0xf]
      %v1545 = vld [vmem:[%s3 + $0x1dc] sm:$0xf]
      %v1546 = vld [vmem:[%s3 + $0x1e0] sm:$0xf]
      %v1547 = vld [vmem:[%s3 + $0x1e4] sm:$0xf]
      %v1548 = vld [vmem:[%s3 + $0x1e8] sm:$0xf]
      %v1549 = vld [vmem:[%s3 + $0x1ec] sm:$0xf]
      %v1550 = vld [vmem:[%s3 + $0x1f0] sm:$0xf]
      %v1551 = vld [vmem:[%s3 + $0x1f4] sm:$0xf]
      %v1552 = vld [vmem:[%s3 + $0x1f8] sm:$0xf]
      %v1553 = vld [vmem:[%s3 + $0x1fc] sm:$0xf]
      %v1554 = vld [vmem:[%s3 + $0x200] sm:$0xf]
      %v1555 = vld [vmem:[%s3 + $0x204] sm:$0xf]
      %v1556 = vld [vmem:[%s3 + $0x208] sm:$0xf]
      %v1557 = vld [vmem:[%s3 + $0x20c] sm:$0xf]
      %v1558 = vld [vmem:[%s3 + $0x210] sm:$0xf]
      %v1559 = vld [vmem:[%s3 + $0x214] sm:$0xf]
      %v1560 = vld [vmem:[%s3 + $0x218] sm:$0xf]
      %v1561 = vld [vmem:[%s3 + $0x21c] sm:$0xf]
      %v1562 = vld [vmem:[%s3 + $0x220] sm:$0xf]
      %v1563 = vld [vmem:[%s3 + $0x224] sm:$0xf]
      %v1564 = vld [vmem:[%s3 + $0x228] sm:$0xf]
      %v1565 = vld [vmem:[%s3 + $0x22c] sm:$0xf]
      %v1566 = vld [vmem:[%s3 + $0x230] sm:$0xf]
      %v1567 = vld [vmem:[%s3 + $0x234] sm:$0xf]
      %v1568 = vld [vmem:[%s3 + $0x238] sm:$0xf]
      %v1569 = vld [vmem:[%s3 + $0x23c] sm:$0xf]
      %v1570 = vld [vmem:[%s4] sm:$0x1]
      %v1572 = vlaneseq
      %v1573 = vshrl.u32 %v1572, 7
      %v1574 = vsub.s32 0, %v1573
      %v1575 = vrot.slane %v1570, %v1574
      %v1721 = vunpack.c.l.b16 %v1426
      %v1722 = vunpack.c.l.b16 %v1427
      %v1723 = vunpack.c.l.b16 %v1428
      %v1724 = vunpack.c.l.b16 %v1429
      %v1725 = vunpack.c.l.b16 %v1430
      %v1726 = vunpack.c.l.b16 %v1431
      %v1727 = vunpack.c.l.b16 %v1432
      %v1728 = vunpack.c.l.b16 %v1433
      %v1729 = vunpack.c.l.b16 %v1434
      %v1730 = vunpack.c.l.b16 %v1435
      %v1731 = vunpack.c.l.b16 %v1436
      %v1732 = vunpack.c.l.b16 %v1437
      %v1733 = vunpack.c.l.b16 %v1438
      %v1734 = vunpack.c.l.b16 %v1439
      %v1735 = vunpack.c.l.b16 %v1440
      %v1736 = vunpack.c.l.b16 %v1441
      %v1737 = vunpack.c.l.b16 %v1442
      %v1738 = vunpack.c.l.b16 %v1443
      %v1739 = vunpack.c.l.b16 %v1444
      %v1740 = vunpack.c.l.b16 %v1445
      %v1741 = vunpack.c.l.b16 %v1446
      %v1742 = vunpack.c.l.b16 %v1447
      %v1743 = vunpack.c.l.b16 %v1448
      %v1744 = vunpack.c.l.b16 %v1449
      %v1745 = vunpack.c.l.b16 %v1450
      %v1746 = vunpack.c.l.b16 %v1451
      %v1747 = vunpack.c.l.b16 %v1452
      %v1748 = vunpack.c.l.b16 %v1453
      %v1749 = vunpack.c.l.b16 %v1454
      %v1750 = vunpack.c.l.b16 %v1455
      %v1751 = vunpack.c.l.b16 %v1456
      %v1752 = vunpack.c.l.b16 %v1457
      %v1753 = vunpack.c.l.b16 %v1458
      %v1754 = vunpack.c.l.b16 %v1459
      %v1755 = vunpack.c.l.b16 %v1460
      %v1756 = vunpack.c.l.b16 %v1461
      %v1757 = vunpack.c.l.b16 %v1462
      %v1758 = vunpack.c.l.b16 %v1463
      %v1759 = vunpack.c.l.b16 %v1464
      %v1760 = vunpack.c.l.b16 %v1465
      %v1761 = vunpack.c.l.b16 %v1466
      %v1762 = vunpack.c.l.b16 %v1467
      %v1763 = vunpack.c.l.b16 %v1468
      %v1764 = vunpack.c.l.b16 %v1469
      %v1765 = vunpack.c.l.b16 %v1470
      %v1766 = vunpack.c.l.b16 %v1471
      %v1767 = vunpack.c.l.b16 %v1472
      %v1768 = vunpack.c.l.b16 %v1473
      %v1769 = vunpack.c.l.b16 %v1474
      %v1770 = vunpack.c.l.b16 %v1475
      %v1771 = vunpack.c.l.b16 %v1476
      %v1772 = vunpack.c.l.b16 %v1477
      %v1773 = vunpack.c.l.b16 %v1478
      %v1774 = vunpack.c.l.b16 %v1479
      %v1775 = vunpack.c.l.b16 %v1480
      %v1776 = vunpack.c.l.b16 %v1481
      %v1777 = vunpack.c.l.b16 %v1482
      %v1778 = vunpack.c.l.b16 %v1483
      %v1779 = vunpack.c.l.b16 %v1484
      %v1780 = vunpack.c.l.b16 %v1485
      %v1781 = vunpack.c.l.b16 %v1486
      %v1782 = vunpack.c.l.b16 %v1487
      %v1783 = vunpack.c.l.b16 %v1488
      %v1784 = vunpack.c.l.b16 %v1489
      %v1785 = vunpack.c.l.b16 %v1490
      %v1786 = vunpack.c.l.b16 %v1491
      %v1787 = vunpack.c.l.b16 %v1492
      %v1788 = vunpack.c.l.b16 %v1493
      %v1789 = vunpack.c.l.b16 %v1494
      %v1790 = vunpack.c.l.b16 %v1495
      %v1791 = vunpack.c.l.b16 %v1496
      %v1792 = vunpack.c.l.b16 %v1497
      %v1793 = vunpack.c.l.b16 %v1498
      %v1794 = vunpack.c.l.b16 %v1499
      %v1795 = vunpack.c.l.b16 %v1500
      %v1796 = vunpack.c.l.b16 %v1501
      %v1797 = vunpack.c.l.b16 %v1502
      %v1798 = vunpack.c.l.b16 %v1503
      %v1799 = vunpack.c.l.b16 %v1504
      %v1800 = vunpack.c.l.b16 %v1505
      %v1801 = vunpack.c.l.b16 %v1506
      %v1802 = vunpack.c.l.b16 %v1507
      %v1803 = vunpack.c.l.b16 %v1508
      %v1804 = vunpack.c.l.b16 %v1509
      %v1805 = vunpack.c.l.b16 %v1510
      %v1806 = vunpack.c.l.b16 %v1511
      %v1807 = vunpack.c.l.b16 %v1512
      %v1808 = vunpack.c.l.b16 %v1513
      %v1809 = vunpack.c.l.b16 %v1514
      %v1810 = vunpack.c.l.b16 %v1515
      %v1811 = vunpack.c.l.b16 %v1516
      %v1812 = vunpack.c.l.b16 %v1517
      %v1813 = vunpack.c.l.b16 %v1518
      %v1814 = vunpack.c.l.b16 %v1519
      %v1815 = vunpack.c.l.b16 %v1520
      %v1816 = vunpack.c.l.b16 %v1521
      %v1817 = vunpack.c.l.b16 %v1522
      %v1818 = vunpack.c.l.b16 %v1523
      %v1819 = vunpack.c.l.b16 %v1524
      %v1820 = vunpack.c.l.b16 %v1525
      %v1821 = vunpack.c.l.b16 %v1526
      %v1822 = vunpack.c.l.b16 %v1527
      %v1823 = vunpack.c.l.b16 %v1528
      %v1824 = vunpack.c.l.b16 %v1529
      %v1825 = vunpack.c.l.b16 %v1530
      %v1826 = vunpack.c.l.b16 %v1531
      %v1827 = vunpack.c.l.b16 %v1532
      %v1828 = vunpack.c.l.b16 %v1533
      %v1829 = vunpack.c.l.b16 %v1534
      %v1830 = vunpack.c.l.b16 %v1535
      %v1831 = vunpack.c.l.b16 %v1536
      %v1832 = vunpack.c.l.b16 %v1537
      %v1833 = vunpack.c.l.b16 %v1538
      %v1834 = vunpack.c.l.b16 %v1539
      %v1835 = vunpack.c.l.b16 %v1540
      %v1836 = vunpack.c.l.b16 %v1541
      %v1837 = vunpack.c.l.b16 %v1542
      %v1838 = vunpack.c.l.b16 %v1543
      %v1839 = vunpack.c.l.b16 %v1544
      %v1840 = vunpack.c.l.b16 %v1545
      %v1841 = vunpack.c.l.b16 %v1546
      %v1842 = vunpack.c.l.b16 %v1547
      %v1843 = vunpack.c.l.b16 %v1548
      %v1844 = vunpack.c.l.b16 %v1549
      %v1845 = vunpack.c.l.b16 %v1550
      %v1846 = vunpack.c.l.b16 %v1551
      %v1847 = vunpack.c.l.b16 %v1552
      %v1848 = vunpack.c.l.b16 %v1553
      %v1849 = vunpack.c.l.b16 %v1554
      %v1850 = vunpack.c.l.b16 %v1555
      %v1851 = vunpack.c.l.b16 %v1556
      %v1852 = vunpack.c.l.b16 %v1557
      %v1853 = vunpack.c.l.b16 %v1558
      %v1854 = vunpack.c.l.b16 %v1559
      %v1855 = vunpack.c.l.b16 %v1560
      %v1856 = vunpack.c.l.b16 %v1561
      %v1857 = vunpack.c.l.b16 %v1562
      %v1858 = vunpack.c.l.b16 %v1563
      %v1859 = vunpack.c.l.b16 %v1564
      %v1860 = vunpack.c.l.b16 %v1565
      %v1861 = vunpack.c.l.b16 %v1566
      %v1862 = vunpack.c.l.b16 %v1567
      %v1863 = vunpack.c.l.b16 %v1568
      %v1864 = vunpack.c.l.b16 %v1569
      %v1865 = vpack.c.b16 %v1722, %v1721
      %v1866 = vpack.c.b16 %v1724, %v1723
      %v1867 = vpack.c.b16 %v1726, %v1725
      %v1868 = vpack.c.b16 %v1728, %v1727
      %v1869 = vpack.c.b16 %v1730, %v1729
      %v1870 = vpack.c.b16 %v1732, %v1731
      %v1871 = vpack.c.b16 %v1734, %v1733
      %v1872 = vpack.c.b16 %v1736, %v1735
      %v1873 = vpack.c.b16 %v1738, %v1737
      %v1874 = vpack.c.b16 %v1740, %v1739
      %v1875 = vpack.c.b16 %v1742, %v1741
      %v1876 = vpack.c.b16 %v1744, %v1743
      %v1877 = vpack.c.b16 %v1746, %v1745
      %v1878 = vpack.c.b16 %v1748, %v1747
      %v1879 = vpack.c.b16 %v1750, %v1749
      %v1880 = vpack.c.b16 %v1752, %v1751
      %v1881 = vpack.c.b16 %v1754, %v1753
      %v1882 = vpack.c.b16 %v1756, %v1755
      %v1883 = vpack.c.b16 %v1758, %v1757
      %v1884 = vpack.c.b16 %v1760, %v1759
      %v1885 = vpack.c.b16 %v1762, %v1761
      %v1886 = vpack.c.b16 %v1764, %v1763
      %v1887 = vpack.c.b16 %v1766, %v1765
      %v1888 = vpack.c.b16 %v1768, %v1767
      %v1889 = vpack.c.b16 %v1770, %v1769
      %v1890 = vpack.c.b16 %v1772, %v1771
      %v1891 = vpack.c.b16 %v1774, %v1773
      %v1892 = vpack.c.b16 %v1776, %v1775
      %v1893 = vpack.c.b16 %v1778, %v1777
      %v1894 = vpack.c.b16 %v1780, %v1779
      %v1895 = vpack.c.b16 %v1782, %v1781
      %v1896 = vpack.c.b16 %v1784, %v1783
      %v1897 = vpack.c.b16 %v1786, %v1785
      %v1898 = vpack.c.b16 %v1788, %v1787
      %v1899 = vpack.c.b16 %v1790, %v1789
      %v1900 = vpack.c.b16 %v1792, %v1791
      %v1901 = vpack.c.b16 %v1794, %v1793
      %v1902 = vpack.c.b16 %v1796, %v1795
      %v1903 = vpack.c.b16 %v1798, %v1797
      %v1904 = vpack.c.b16 %v1800, %v1799
      %v1905 = vpack.c.b16 %v1802, %v1801
      %v1906 = vpack.c.b16 %v1804, %v1803
      %v1907 = vpack.c.b16 %v1806, %v1805
      %v1908 = vpack.c.b16 %v1808, %v1807
      %v1909 = vpack.c.b16 %v1810, %v1809
      %v1910 = vpack.c.b16 %v1812, %v1811
      %v1911 = vpack.c.b16 %v1814, %v1813
      %v1912 = vpack.c.b16 %v1816, %v1815
      %v1913 = vpack.c.b16 %v1818, %v1817
      %v1914 = vpack.c.b16 %v1820, %v1819
      %v1915 = vpack.c.b16 %v1822, %v1821
      %v1916 = vpack.c.b16 %v1824, %v1823
      %v1917 = vpack.c.b16 %v1826, %v1825
      %v1918 = vpack.c.b16 %v1828, %v1827
      %v1919 = vpack.c.b16 %v1830, %v1829
      %v1920 = vpack.c.b16 %v1832, %v1831
      %v1921 = vpack.c.b16 %v1834, %v1833
      %v1922 = vpack.c.b16 %v1836, %v1835
      %v1923 = vpack.c.b16 %v1838, %v1837
      %v1924 = vpack.c.b16 %v1840, %v1839
      %v1925 = vpack.c.b16 %v1842, %v1841
      %v1926 = vpack.c.b16 %v1844, %v1843
      %v1927 = vpack.c.b16 %v1846, %v1845
      %v1928 = vpack.c.b16 %v1848, %v1847
      %v1929 = vpack.c.b16 %v1850, %v1849
      %v1930 = vpack.c.b16 %v1852, %v1851
      %v1931 = vpack.c.b16 %v1854, %v1853
      %v1932 = vpack.c.b16 %v1856, %v1855
      %v1933 = vpack.c.b16 %v1858, %v1857
      %v1934 = vpack.c.b16 %v1860, %v1859
      %v1935 = vpack.c.b16 %v1862, %v1861
      %v1936 = vpack.c.b16 %v1864, %v1863
      %2009 = vmatprep.subr.bf16.mxu0 0
      %2010 = vmatpush1.bf16.msra.mxu0 %v1865
      %2011 = vmatprep.subr.bf16.mxu0 0
      %2012 = vmatpush1.bf16.msra.mxu0 %v1866
      %2013 = vmatprep.subr.bf16.mxu0 0
      %2014 = vmatpush1.bf16.msra.mxu0 %v1867
      %2015 = vmatprep.subr.bf16.mxu0 0
      %2016 = vmatpush1.bf16.msra.mxu0 %v1868
      %2017 = vmatprep.subr.bf16.mxu0 0
      %2018 = vmatpush1.bf16.msra.mxu0 %v1869
      %2019 = vmatprep.subr.bf16.mxu0 0
      %2020 = vmatpush1.bf16.msra.mxu0 %v1870
      %2021 = vmatprep.subr.bf16.mxu0 0
      %2022 = vmatpush1.bf16.msra.mxu0 %v1871
      %2023 = vmatprep.subr.bf16.mxu0 0
      %2024 = vmatpush1.bf16.msra.mxu0 %v1872
      %2025 = vmatprep.subr.bf16.mxu0 0
      %2026 = vmatpush1.bf16.msra.mxu0 %v1873
      %2027 = vmatprep.subr.bf16.mxu0 0
      %2028 = vmatpush1.bf16.msra.mxu0 %v1874
      %2029 = vmatprep.subr.bf16.mxu0 0
      %2030 = vmatpush1.bf16.msra.mxu0 %v1875
      %2031 = vmatprep.subr.bf16.mxu0 0
      %2032 = vmatpush1.bf16.msra.mxu0 %v1876
      %2033 = vmatprep.subr.bf16.mxu0 0
      %2034 = vmatpush1.bf16.msra.mxu0 %v1877
      %2035 = vmatprep.subr.bf16.mxu0 0
      %2036 = vmatpush1.bf16.msra.mxu0 %v1878
      %2037 = vmatprep.subr.bf16.mxu0 0
      %2038 = vmatpush1.bf16.msra.mxu0 %v1879
      %2039 = vmatprep.subr.bf16.mxu0 0
      %2040 = vmatpush1.bf16.msra.mxu0 %v1880
      %2041 = vmatprep.mubr.bf16.mxu0 %v960
      %2042 = vmatmul.mubr.bf16.gmra.mrb[0].mxu0 %v854
      %v2043 = vpop.f32.mrb[0].mxu0
      %v2044 = vadd.f32 %v1575, %v2043
      %v2045 = vpop.f32.mrb[0].mxu0
      %v2046 = vpop.f32.mrb[0].mxu0
      %v2047 = vadd.f32 %v1575, %v2046
      %v2048 = vpop.f32.mrb[0].mxu0
      %2049 = vmatprep.mubr.bf16.mxu0 %v961
      %2050 = vmatmul.mubr.bf16.gmra.mrb[0].mxu0 %v855
      %v2051 = vpop.f32.mrb[0].mxu0
      %v2052 = vadd.f32 %v1575, %v2051
      %v2053 = vpop.f32.mrb[0].mxu0
      %v2054 = vpop.f32.mrb[0].mxu0
      %v2055 = vadd.f32 %v1575, %v2054
      %v2056 = vpop.f32.mrb[0].mxu0
      %2057 = vmatprep.mubr.bf16.mxu0 %v962
      %2058 = vmatmul.mubr.bf16.gmra.mrb[0].mxu0 %v856
      %v2059 = vpop.f32.mrb[0].mxu0
      %v2060 = vadd.f32 %v1575, %v2059
      %v2061 = vpop.f32.mrb[0].mxu0
      %v2062 = vpop.f32.mrb[0].mxu0
      %v2063 = vadd.f32 %v1575, %v2062
      %v2064 = vpop.f32.mrb[0].mxu0
      %2065 = vmatprep.mubr.bf16.mxu0 %v963
      %2066 = vmatmul.mubr.bf16.gmra.mrb[0].mxu0 %v857
      %v2067 = vpop.f32.mrb[0].mxu0
      %v2068 = vadd.f32 %v1575, %v2067
      %v2069 = vpop.f32.mrb[0].mxu0
      %v2070 = vpop.f32.mrb[0].mxu0
      %v2071 = vadd.f32 %v1575, %v2070
      %v2072 = vpop.f32.mrb[0].mxu0
      %2073 = vmatprep.mubr.bf16.mxu0 %v964
      %2074 = vmatmul.mubr.bf16.gmra.mrb[0].mxu0 %v858
      %v2075 = vpop.f32.mrb[0].mxu0
      %v2076 = vadd.f32 %v1575, %v2075
      %v2077 = vpop.f32.mrb[0].mxu0
      %v2078 = vpop.f32.mrb[0].mxu0
      %v2079 = vadd.f32 %v1575, %v2078
      %v2080 = vpop.f32.mrb[0].mxu0
      %2081 = vmatprep.mubr.bf16.mxu0 %v965
      %2082 = vmatmul.mubr.bf16.gmra.mrb[0].mxu0 %v859
      %v2083 = vpop.f32.mrb[0].mxu0
      %v2084 = vadd.f32 %v1575, %v2083
      %v2085 = vpop.f32.mrb[0].mxu0
      %v2086 = vpop.f32.mrb[0].mxu0
      %v2087 = vadd.f32 %v1575, %v2086
      %v2088 = vpop.f32.mrb[0].mxu0
      %2089 = vmatprep.mubr.bf16.mxu0 %v966
      %2090 = vmatmul.mubr.bf16.gmra.mrb[0].mxu0 %v860
      %v2091 = vpop.f32.mrb[0].mxu0
      %v2092 = vadd.f32 %v1575, %v2091
      %v2093 = vpop.f32.mrb[0].mxu0
      %v2094 = vpop.f32.mrb[0].mxu0
      %v2095 = vadd.f32 %v1575, %v2094
      %v2096 = vpop.f32.mrb[0].mxu0
      %2097 = vmatprep.mubr.bf16.mxu0 %v967
      %2098 = vmatmul.mubr.bf16.gmra.mrb[0].mxu0 %v861
      %v2099 = vpop.f32.mrb[0].mxu0
      %v2100 = vadd.f32 %v1575, %v2099
      %v2101 = vpop.f32.mrb[0].mxu0
      %v2102 = vpop.f32.mrb[0].mxu0
      %v2103 = vadd.f32 %v1575, %v2102
      %v2104 = vpop.f32.mrb[0].mxu0
      %2105 = vmatprep.mubr.bf16.mxu0 %v968
      %2106 = vmatmul.mubr.bf16.gmra.mrb[0].mxu0 %v862
      %v2107 = vpop.f32.mrb[0].mxu0
      %v2108 = vadd.f32 %v1575, %v2107
      %v2109 = vpop.f32.mrb[0].mxu0
      %v2110 = vpop.f32.mrb[0].mxu0
      %v2111 = vadd.f32 %v1575, %v2110
      %v2112 = vpop.f32.mrb[0].mxu0
      %2113 = vmatprep.mubr.bf16.mxu0 %v969
      %2114 = vmatmul.mubr.bf16.gmra.mrb[0].mxu0 %v863
      %v2115 = vpop.f32.mrb[0].mxu0
      %v2116 = vadd.f32 %v1575, %v2115
      %v2117 = vpop.f32.mrb[0].mxu0
      %v2118 = vpop.f32.mrb[0].mxu0
      %v2119 = vadd.f32 %v1575, %v2118
      %v2120 = vpop.f32.mrb[0].mxu0
      %2121 = vmatprep.mubr.bf16.mxu0 %v970
      %2122 = vmatmul.mubr.bf16.gmra.mrb[0].mxu0 %v864
      %v2123 = vpop.f32.mrb[0].mxu0
      %v2124 = vadd.f32 %v1575, %v2123
      %v2125 = vpop.f32.mrb[0].mxu0
      %v2126 = vpop.f32.mrb[0].mxu0
      %v2127 = vadd.f32 %v1575, %v2126
      %v2128 = vpop.f32.mrb[0].mxu0
      %2129 = vmatprep.mubr.bf16.mxu0 %v971
      %2130 = vmatmul.mubr.bf16.gmra.mrb[0].mxu0 %v865
      %v2131 = vpop.f32.mrb[0].mxu0
      %v2132 = vadd.f32 %v1575, %v2131
      %v2133 = vpop.f32.mrb[0].mxu0
      %v2134 = vpop.f32.mrb[0].mxu0
      %v2135 = vadd.f32 %v1575, %v2134
      %v2136 = vpop.f32.mrb[0].mxu0
      %2137 = vmatprep.mubr.bf16.mxu0 %v972
      %2138 = vmatmul.mubr.bf16.gmra.mrb[0].mxu0 %v866
      %v2139 = vpop.f32.mrb[0].mxu0
      %v2140 = vadd.f32 %v1575, %v2139
      %v2141 = vpop.f32.mrb[0].mxu0
      %v2142 = vpop.f32.mrb[0].mxu0
      %v2143 = vadd.f32 %v1575, %v2142
      %v2144 = vpop.f32.mrb[0].mxu0
      %2145 = vmatprep.mubr.bf16.mxu0 %v973
      %2146 = vmatmul.mubr.bf16.gmra.mrb[0].mxu0 %v867
      %v2147 = vpop.f32.mrb[0].mxu0
      %v2148 = vadd.f32 %v1575, %v2147
      %v2149 = vpop.f32.mrb[0].mxu0
      %v2150 = vpop.f32.mrb[0].mxu0
      %v2151 = vadd.f32 %v1575, %v2150
      %v2152 = vpop.f32.mrb[0].mxu0
      %2153 = vmatprep.mubr.bf16.mxu0 %v974
      %2154 = vmatmul.mubr.bf16.gmra.mrb[0].mxu0 %v868
      %v2155 = vpop.f32.mrb[0].mxu0
      %v2156 = vadd.f32 %v1575, %v2155
      %v2157 = vpop.f32.mrb[0].mxu0
      %v2158 = vpop.f32.mrb[0].mxu0
      %v2159 = vadd.f32 %v1575, %v2158
      %v2160 = vpop.f32.mrb[0].mxu0
      %2161 = vmatprep.mubr.bf16.mxu0 %v975
      %2162 = vmatmul.mubr.bf16.gmra.mrb[0].mxu0 %v869
      %v2163 = vpop.f32.mrb[0].mxu0
      %v2164 = vadd.f32 %v1575, %v2163
      %v2165 = vpop.f32.mrb[0].mxu0
      %v2166 = vpop.f32.mrb[0].mxu0
      %v2167 = vadd.f32 %v1575, %v2166
      %v2168 = vpop.f32.mrb[0].mxu0
      %2169 = vmatprep.mubr.bf16.mxu0 %v976
      %2170 = vmatmul.mubr.bf16.gmra.mrb[0].mxu0 %v870
      %v2171 = vpop.f32.mrb[0].mxu0
      %v2172 = vadd.f32 %v1575, %v2171
      %v2173 = vpop.f32.mrb[0].mxu0
      %v2174 = vpop.f32.mrb[0].mxu0
      %v2175 = vadd.f32 %v1575, %v2174
      %v2176 = vpop.f32.mrb[0].mxu0
      %2177 = vmatprep.mubr.bf16.mxu0 %v977
      %2178 = vmatmul.mubr.bf16.gmra.mrb[0].mxu0 %v871
      %v2179 = vpop.f32.mrb[0].mxu0
      %v2180 = vadd.f32 %v1575, %v2179
      %v2181 = vpop.f32.mrb[0].mxu0
      %v2182 = vpop.f32.mrb[0].mxu0
      %v2183 = vadd.f32 %v1575, %v2182
      %v2184 = vpop.f32.mrb[0].mxu0
      %2185 = vmatprep.mubr.bf16.mxu0 %v978
      %2186 = vmatmul.mubr.bf16.gmra.mrb[0].mxu0 %v872
      %v2187 = vpop.f32.mrb[0].mxu0
      %v2188 = vadd.f32 %v1575, %v2187
      %v2189 = vpop.f32.mrb[0].mxu0
      %v2190 = vpop.f32.mrb[0].mxu0
      %v2191 = vadd.f32 %v1575, %v2190
      %v2192 = vpop.f32.mrb[0].mxu0
      %2193 = vmatprep.mubr.bf16.mxu0 %v979
      %2194 = vmatmul.mubr.bf16.gmra.mrb[0].mxu0 %v873
      %v2195 = vpop.f32.mrb[0].mxu0
      %v2196 = vadd.f32 %v1575, %v2195
      %v2197 = vpop.f32.mrb[0].mxu0
      %v2198 = vpop.f32.mrb[0].mxu0
      %v2199 = vadd.f32 %v1575, %v2198
      %v2200 = vpop.f32.mrb[0].mxu0
      %2201 = vmatprep.mubr.bf16.mxu0 %v980
      %2202 = vmatmul.mubr.bf16.gmra.mrb[0].mxu0 %v874
      %v2203 = vpop.f32.mrb[0].mxu0
      %v2204 = vadd.f32 %v1575, %v2203
      %v2205 = vpop.f32.mrb[0].mxu0
      %v2206 = vpop.f32.mrb[0].mxu0
      %v2207 = vadd.f32 %v1575, %v2206
      %v2208 = vpop.f32.mrb[0].mxu0
      %2209 = vdwg.mxu0
      %2210 = vmatprep.subr.bf16.mxu0 0
      %2211 = vmatpush1.bf16.msra.mxu0 %v1881
      %2212 = vmatprep.subr.bf16.mxu0 0
      %2213 = vmatpush1.bf16.msra.mxu0 %v1882
      %2214 = vmatprep.subr.bf16.mxu0 0
      %2215 = vmatpush1.bf16.msra.mxu0 %v1883
      %2216 = vmatprep.subr.bf16.mxu0 0
      %2217 = vmatpush1.bf16.msra.mxu0 %v1884
      %2218 = vmatprep.subr.bf16.mxu0 0
      %2219 = vmatpush1.bf16.msra.mxu0 %v1885
      %2220 = vmatprep.subr.bf16.mxu0 0
      %2221 = vmatpush1.bf16.msra.mxu0 %v1886
      %2222 = vmatprep.subr.bf16.mxu0 0
      %2223 = vmatpush1.bf16.msra.mxu0 %v1887
      %2224 = vmatprep.subr.bf16.mxu0 0
      %2225 = vmatpush1.bf16.msra.mxu0 %v1888
      %2226 = vmatprep.subr.bf16.mxu0 0
      %2227 = vmatpush1.bf16.msra.mxu0 %v1889
      %2228 = vmatprep.subr.bf16.mxu0 0
      %2229 = vmatpush1.bf16.msra.mxu0 %v1890
      %2230 = vmatprep.subr.bf16.mxu0 0
      %2231 = vmatpush1.bf16.msra.mxu0 %v1891
      %2232 = vmatprep.subr.bf16.mxu0 0
      %2233 = vmatpush1.bf16.msra.mxu0 %v1892
      %2234 = vmatprep.subr.bf16.mxu0 0
      %2235 = vmatpush1.bf16.msra.mxu0 %v1893
      %2236 = vmatprep.subr.bf16.mxu0 0
      %2237 = vmatpush1.bf16.msra.mxu0 %v1894
      %2238 = vmatprep.subr.bf16.mxu0 0
      %2239 = vmatpush1.bf16.msra.mxu0 %v1895
      %2240 = vmatprep.subr.bf16.mxu0 0
      %2241 = vmatpush1.bf16.msra.mxu0 %v1896
      %2242 = vmatprep.mubr.bf16.mxu0 %v1067
      %2243 = vmatmul.mubr.bf16.gmra.mrb[0].mxu0 %v1066
      %v2244 = vpop.f32.mrb[0].mxu0
      %v2245 = vadd.f32 %v2044, %v2244
      %v2246 = vpop.f32.mrb[0].mxu0
      %v2247 = vpop.f32.mrb[0].mxu0
      %v2248 = vadd.f32 %v2047, %v2247
      %v2249 = vpop.f32.mrb[0].mxu0
      %2250 = vmatprep.mubr.bf16.mxu0 %v1068
      %2251 = vmatmul.mubr.bf16.gmra.mrb[0].mxu0 %v1067
      %v2252 = vpop.f32.mrb[0].mxu0
      %v2253 = vadd.f32 %v2052, %v2252
      %v2254 = vpop.f32.mrb[0].mxu0
      %v2255 = vpop.f32.mrb[0].mxu0
      %v2256 = vadd.f32 %v2055, %v2255
      %v2257 = vpop.f32.mrb[0].mxu0
      %2258 = vmatprep.mubr.bf16.mxu0 %v1069
      %2259 = vmatmul.mubr.bf16.gmra.mrb[0].mxu0 %v1068
      %v2260 = vpop.f32.mrb[0].mxu0
      %v2261 = vadd.f32 %v2060, %v2260
      %v2262 = vpop.f32.mrb[0].mxu0
      %v2263 = vpop.f32.mrb[0].mxu0
      %v2264 = vadd.f32 %v2063, %v2263
      %v2265 = vpop.f32.mrb[0].mxu0
      %2266 = vmatprep.mubr.bf16.mxu0 %v1070
      %2267 = vmatmul.mubr.bf16.gmra.mrb[0].mxu0 %v1069
      %v2268 = vpop.f32.mrb[0].mxu0
      %v2269 = vadd.f32 %v2068, %v2268
      %v2270 = vpop.f32.mrb[0].mxu0
      %v2271 = vpop.f32.mrb[0].mxu0
      %v2272 = vadd.f32 %v2071, %v2271
      %v2273 = vpop.f32.mrb[0].mxu0
      %2274 = vmatprep.mubr.bf16.mxu0 %v1071
      %2275 = vmatmul.mubr.bf16.gmra.mrb[0].mxu0 %v1070
      %v2276 = vpop.f32.mrb[0].mxu0
      %v2277 = vadd.f32 %v2076, %v2276
      %v2278 = vpop.f32.mrb[0].mxu0
      %v2279 = vpop.f32.mrb[0].mxu0
      %v2280 = vadd.f32 %v2079, %v2279
      %v2281 = vpop.f32.mrb[0].mxu0
      %2282 = vmatprep.mubr.bf16.mxu0 %v1072
      %2283 = vmatmul.mubr.bf16.gmra.mrb[0].mxu0 %v1071
      %v2284 = vpop.f32.mrb[0].mxu0
      %v2285 = vadd.f32 %v2084, %v2284
      %v2286 = vpop.f32.mrb[0].mxu0
      %v2287 = vpop.f32.mrb[0].mxu0
      %v2288 = vadd.f32 %v2087, %v2287
      %v2289 = vpop.f32.mrb[0].mxu0
      %2290 = vmatprep.mubr.bf16.mxu0 %v1073
      %2291 = vmatmul.mubr.bf16.gmra.mrb[0].mxu0 %v1072
      %v2292 = vpop.f32.mrb[0].mxu0
      %v2293 = vadd.f32 %v2092, %v2292
      %v2294 = vpop.f32.mrb[0].mxu0
      %v2295 = vpop.f32.mrb[0].mxu0
      %v2296 = vadd.f32 %v2095, %v2295
      %v2297 = vpop.f32.mrb[0].mxu0
      %2298 = vmatprep.mubr.bf16.mxu0 %v1074
      %2299 = vmatmul.mubr.bf16.gmra.mrb[0].mxu0 %v1073
      %v2300 = vpop.f32.mrb[0].mxu0
      %v2301 = vadd.f32 %v2100, %v2300
      %v2302 = vpop.f32.mrb[0].mxu0
      %v2303 = vpop.f32.mrb[0].mxu0
      %v2304 = vadd.f32 %v2103, %v2303
      %v2305 = vpop.f32.mrb[0].mxu0
      %2306 = vmatprep.mubr.bf16.mxu0 %v1075
      %2307 = vmatmul.mubr.bf16.gmra.mrb[0].mxu0 %v1074
      %v2308 = vpop.f32.mrb[0].mxu0
      %v2309 = vadd.f32 %v2108, %v2308
      %v2310 = vpop.f32.mrb[0].mxu0
      %v2311 = vpop.f32.mrb[0].mxu0
      %v2312 = vadd.f32 %v2111, %v2311
      %v2313 = vpop.f32.mrb[0].mxu0
      %2314 = vmatprep.mubr.bf16.mxu0 %v1076
      %2315 = vmatmul.mubr.bf16.gmra.mrb[0].mxu0 %v1075
      %v2316 = vpop.f32.mrb[0].mxu0
      %v2317 = vadd.f32 %v2116, %v2316
      %v2318 = vpop.f32.mrb[0].mxu0
      %v2319 = vpop.f32.mrb[0].mxu0
      %v2320 = vadd.f32 %v2119, %v2319
      %v2321 = vpop.f32.mrb[0].mxu0
      %2322 = vmatprep.mubr.bf16.mxu0 %v1077
      %2323 = vmatmul.mubr.bf16.gmra.mrb[0].mxu0 %v1076
      %v2324 = vpop.f32.mrb[0].mxu0
      %v2325 = vadd.f32 %v2124, %v2324
      %v2326 = vpop.f32.mrb[0].mxu0
      %v2327 = vpop.f32.mrb[0].mxu0
      %v2328 = vadd.f32 %v2127, %v2327
      %v2329 = vpop.f32.mrb[0].mxu0
      %2330 = vmatprep.mubr.bf16.mxu0 %v1078
      %2331 = vmatmul.mubr.bf16.gmra.mrb[0].mxu0 %v1077
      %v2332 = vpop.f32.mrb[0].mxu0
      %v2333 = vadd.f32 %v2132, %v2332
      %v2334 = vpop.f32.mrb[0].mxu0
      %v2335 = vpop.f32.mrb[0].mxu0
      %v2336 = vadd.f32 %v2135, %v2335
      %v2337 = vpop.f32.mrb[0].mxu0
      %2338 = vmatprep.mubr.bf16.mxu0 %v1079
      %2339 = vmatmul.mubr.bf16.gmra.mrb[0].mxu0 %v1078
      %v2340 = vpop.f32.mrb[0].mxu0
      %v2341 = vadd.f32 %v2140, %v2340
      %v2342 = vpop.f32.mrb[0].mxu0
      %v2343 = vpop.f32.mrb[0].mxu0
      %v2344 = vadd.f32 %v2143, %v2343
      %v2345 = vpop.f32.mrb[0].mxu0
      %2346 = vmatprep.mubr.bf16.mxu0 %v1080
      %2347 = vmatmul.mubr.bf16.gmra.mrb[0].mxu0 %v1079
      %v2348 = vpop.f32.mrb[0].mxu0
      %v2349 = vadd.f32 %v2148, %v2348
      %v2350 = vpop.f32.mrb[0].mxu0
      %v2351 = vpop.f32.mrb[0].mxu0
      %v2352 = vadd.f32 %v2151, %v2351
      %v2353 = vpop.f32.mrb[0].mxu0
      %2354 = vmatprep.mubr.bf16.mxu0 %v1081
      %2355 = vmatmul.mubr.bf16.gmra.mrb[0].mxu0 %v1080
      %v2356 = vpop.f32.mrb[0].mxu0
      %v2357 = vadd.f32 %v2156, %v2356
      %v2358 = vpop.f32.mrb[0].mxu0
      %v2359 = vpop.f32.mrb[0].mxu0
      %v2360 = vadd.f32 %v2159, %v2359
      %v2361 = vpop.f32.mrb[0].mxu0
      %2362 = vmatprep.mubr.bf16.mxu0 %v1082
      %2363 = vmatmul.mubr.bf16.gmra.mrb[0].mxu0 %v1081
      %v2364 = vpop.f32.mrb[0].mxu0
      %v2365 = vadd.f32 %v2164, %v2364
      %v2366 = vpop.f32.mrb[0].mxu0
      %v2367 = vpop.f32.mrb[0].mxu0
      %v2368 = vadd.f32 %v2167, %v2367
      %v2369 = vpop.f32.mrb[0].mxu0
      %2370 = vmatprep.mubr.bf16.mxu0 %v1083
      %2371 = vmatmul.mubr.bf16.gmra.mrb[0].mxu0 %v1082
      %v2372 = vpop.f32.mrb[0].mxu0
      %v2373 = vadd.f32 %v2172, %v2372
      %v2374 = vpop.f32.mrb[0].mxu0
      %v2375 = vpop.f32.mrb[0].mxu0
      %v2376 = vadd.f32 %v2175, %v2375
      %v2377 = vpop.f32.mrb[0].mxu0
      %2378 = vmatprep.mubr.bf16.mxu0 %v1084
      %2379 = vmatmul.mubr.bf16.gmra.mrb[0].mxu0 %v1083
      %v2380 = vpop.f32.mrb[0].mxu0
      %v2381 = vadd.f32 %v2180, %v2380
      %v2382 = vpop.f32.mrb[0].mxu0
      %v2383 = vpop.f32.mrb[0].mxu0
      %v2384 = vadd.f32 %v2183, %v2383
      %v2385 = vpop.f32.mrb[0].mxu0
      %2386 = vmatprep.mubr.bf16.mxu0 %v1085
      %2387 = vmatmul.mubr.bf16.gmra.mrb[0].mxu0 %v1084
      %v2388 = vpop.f32.mrb[0].mxu0
      %v2389 = vadd.f32 %v2188, %v2388
      %v2390 = vpop.f32.mrb[0].mxu0
      %v2391 = vpop.f32.mrb[0].mxu0
      %v2392 = vadd.f32 %v2191, %v2391
      %v2393 = vpop.f32.mrb[0].mxu0
      %2394 = vmatprep.mubr.bf16.mxu0 %v1086
      %2395 = vmatmul.mubr.bf16.gmra.mrb[0].mxu0 %v1085
      %v2396 = vpop.f32.mrb[0].mxu0
      %v2397 = vadd.f32 %v2196, %v2396
      %v2398 = vpop.f32.mrb[0].mxu0
      %v2399 = vpop.f32.mrb[0].mxu0
      %v2400 = vadd.f32 %v2199, %v2399
      %v2401 = vpop.f32.mrb[0].mxu0
      %2402 = vmatprep.mubr.bf16.mxu0 %v1066
      %2403 = vmatmul.mubr.bf16.gmra.mrb[0].mxu0 %v1086
      %v2404 = vpop.f32.mrb[0].mxu0
      %v2405 = vadd.f32 %v2204, %v2404
      %v2406 = vpop.f32.mrb[0].mxu0
      %v2407 = vpop.f32.mrb[0].mxu0
      %v2408 = vadd.f32 %v2207, %v2407
      %v2409 = vpop.f32.mrb[0].mxu0
      %2410 = vdwg.mxu0
      %2411 = vmatprep.subr.bf16.mxu0 0
      %2412 = vmatpush1.bf16.msra.mxu0 %v1897
      %2413 = vmatprep.subr.bf16.mxu0 0
      %2414 = vmatpush1.bf16.msra.mxu0 %v1898
      %2415 = vmatprep.subr.bf16.mxu0 0
      %2416 = vmatpush1.bf16.msra.mxu0 %v1899
      %2417 = vmatprep.subr.bf16.mxu0 0
      %2418 = vmatpush1.bf16.msra.mxu0 %v1900
      %2419 = vmatprep.subr.bf16.mxu0 0
      %2420 = vmatpush1.bf16.msra.mxu0 %v1901
      %2421 = vmatprep.subr.bf16.mxu0 0
      %2422 = vmatpush1.bf16.msra.mxu0 %v1902
      %2423 = vmatprep.subr.bf16.mxu0 0
      %2424 = vmatpush1.bf16.msra.mxu0 %v1903
      %2425 = vmatprep.subr.bf16.mxu0 0
      %2426 = vmatpush1.bf16.msra.mxu0 %v1904
      %2427 = vmatprep.subr.bf16.mxu0 0
      %2428 = vmatpush1.bf16.msra.mxu0 %v1905
      %2429 = vmatprep.subr.bf16.mxu0 0
      %2430 = vmatpush1.bf16.msra.mxu0 %v1906
      %2431 = vmatprep.subr.bf16.mxu0 0
      %2432 = vmatpush1.bf16.msra.mxu0 %v1907
      %2433 = vmatprep.subr.bf16.mxu0 0
      %2434 = vmatpush1.bf16.msra.mxu0 %v1908
      %2435 = vmatprep.subr.bf16.mxu0 0
      %2436 = vmatpush1.bf16.msra.mxu0 %v1909
      %2437 = vmatprep.subr.bf16.mxu0 0
      %2438 = vmatpush1.bf16.msra.mxu0 %v1910
      %2439 = vmatprep.subr.bf16.mxu0 0
      %2440 = vmatpush1.bf16.msra.mxu0 %v1911
      %2441 = vmatprep.subr.bf16.mxu0 0
      %2442 = vmatpush1.bf16.msra.mxu0 %v1912
      %2443 = vmatprep.mubr.bf16.mxu0 %v1193
      %2444 = vmatmul.mubr.bf16.gmra.mrb[0].mxu0 %v1087
      %v2445 = vpop.f32.mrb[0].mxu0
      %v2446 = vadd.f32 %v2245, %v2445
      %v2447 = vpop.f32.mrb[0].mxu0
      %v2448 = vpop.f32.mrb[0].mxu0
      %v2449 = vadd.f32 %v2248, %v2448
      %v2450 = vpop.f32.mrb[0].mxu0
      %2451 = vmatprep.mubr.bf16.mxu0 %v1194
      %2452 = vmatmul.mubr.bf16.gmra.mrb[0].mxu0 %v1088
      %v2453 = vpop.f32.mrb[0].mxu0
      %v2454 = vadd.f32 %v2253, %v2453
      %v2455 = vpop.f32.mrb[0].mxu0
      %v2456 = vpop.f32.mrb[0].mxu0
      %v2457 = vadd.f32 %v2256, %v2456
      %v2458 = vpop.f32.mrb[0].mxu0
      %2459 = vmatprep.mubr.bf16.mxu0 %v1195
      %2460 = vmatmul.mubr.bf16.gmra.mrb[0].mxu0 %v1089
      %v2461 = vpop.f32.mrb[0].mxu0
      %v2462 = vadd.f32 %v2261, %v2461
      %v2463 = vpop.f32.mrb[0].mxu0
      %v2464 = vpop.f32.mrb[0].mxu0
      %v2465 = vadd.f32 %v2264, %v2464
      %v2466 = vpop.f32.mrb[0].mxu0
      %2467 = vmatprep.mubr.bf16.mxu0 %v1196
      %2468 = vmatmul.mubr.bf16.gmra.mrb[0].mxu0 %v1090
      %v2469 = vpop.f32.mrb[0].mxu0
      %v2470 = vadd.f32 %v2269, %v2469
      %v2471 = vpop.f32.mrb[0].mxu0
      %v2472 = vpop.f32.mrb[0].mxu0
      %v2473 = vadd.f32 %v2272, %v2472
      %v2474 = vpop.f32.mrb[0].mxu0
      %2475 = vmatprep.mubr.bf16.mxu0 %v1197
      %2476 = vmatmul.mubr.bf16.gmra.mrb[0].mxu0 %v1091
      %v2477 = vpop.f32.mrb[0].mxu0
      %v2478 = vadd.f32 %v2277, %v2477
      %v2479 = vpop.f32.mrb[0].mxu0
      %v2480 = vpop.f32.mrb[0].mxu0
      %v2481 = vadd.f32 %v2280, %v2480
      %v2482 = vpop.f32.mrb[0].mxu0
      %2483 = vmatprep.mubr.bf16.mxu0 %v1198
      %2484 = vmatmul.mubr.bf16.gmra.mrb[0].mxu0 %v1092
      %v2485 = vpop.f32.mrb[0].mxu0
      %v2486 = vadd.f32 %v2285, %v2485
      %v2487 = vpop.f32.mrb[0].mxu0
      %v2488 = vpop.f32.mrb[0].mxu0
      %v2489 = vadd.f32 %v2288, %v2488
      %v2490 = vpop.f32.mrb[0].mxu0
      %2491 = vmatprep.mubr.bf16.mxu0 %v1199
      %2492 = vmatmul.mubr.bf16.gmra.mrb[0].mxu0 %v1093
      %v2493 = vpop.f32.mrb[0].mxu0
      %v2494 = vadd.f32 %v2293, %v2493
      %v2495 = vpop.f32.mrb[0].mxu0
      %v2496 = vpop.f32.mrb[0].mxu0
      %v2497 = vadd.f32 %v2296, %v2496
      %v2498 = vpop.f32.mrb[0].mxu0
      %2499 = vmatprep.mubr.bf16.mxu0 %v1200
      %2500 = vmatmul.mubr.bf16.gmra.mrb[0].mxu0 %v1094
      %v2501 = vpop.f32.mrb[0].mxu0
      %v2502 = vadd.f32 %v2301, %v2501
      %v2503 = vpop.f32.mrb[0].mxu0
      %v2504 = vpop.f32.mrb[0].mxu0
      %v2505 = vadd.f32 %v2304, %v2504
      %v2506 = vpop.f32.mrb[0].mxu0
      %2507 = vmatprep.mubr.bf16.mxu0 %v1201
      %2508 = vmatmul.mubr.bf16.gmra.mrb[0].mxu0 %v1095
      %v2509 = vpop.f32.mrb[0].mxu0
      %v2510 = vadd.f32 %v2309, %v2509
      %v2511 = vpop.f32.mrb[0].mxu0
      %v2512 = vpop.f32.mrb[0].mxu0
      %v2513 = vadd.f32 %v2312, %v2512
      %v2514 = vpop.f32.mrb[0].mxu0
      %2515 = vmatprep.mubr.bf16.mxu0 %v1202
      %2516 = vmatmul.mubr.bf16.gmra.mrb[0].mxu0 %v1096
      %v2517 = vpop.f32.mrb[0].mxu0
      %v2518 = vadd.f32 %v2317, %v2517
      %v2519 = vpop.f32.mrb[0].mxu0
      %v2520 = vpop.f32.mrb[0].mxu0
      %v2521 = vadd.f32 %v2320, %v2520
      %v2522 = vpop.f32.mrb[0].mxu0
      %2523 = vmatprep.mubr.bf16.mxu0 %v1203
      %2524 = vmatmul.mubr.bf16.gmra.mrb[0].mxu0 %v1097
      %v2525 = vpop.f32.mrb[0].mxu0
      %v2526 = vadd.f32 %v2325, %v2525
      %v2527 = vpop.f32.mrb[0].mxu0
      %v2528 = vpop.f32.mrb[0].mxu0
      %v2529 = vadd.f32 %v2328, %v2528
      %v2530 = vpop.f32.mrb[0].mxu0
      %2531 = vmatprep.mubr.bf16.mxu0 %v1204
      %2532 = vmatmul.mubr.bf16.gmra.mrb[0].mxu0 %v1098
      %v2533 = vpop.f32.mrb[0].mxu0
      %v2534 = vadd.f32 %v2333, %v2533
      %v2535 = vpop.f32.mrb[0].mxu0
      %v2536 = vpop.f32.mrb[0].mxu0
      %v2537 = vadd.f32 %v2336, %v2536
      %v2538 = vpop.f32.mrb[0].mxu0
      %2539 = vmatprep.mubr.bf16.mxu0 %v1205
      %2540 = vmatmul.mubr.bf16.gmra.mrb[0].mxu0 %v1099
      %v2541 = vpop.f32.mrb[0].mxu0
      %v2542 = vadd.f32 %v2341, %v2541
      %v2543 = vpop.f32.mrb[0].mxu0
      %v2544 = vpop.f32.mrb[0].mxu0
      %v2545 = vadd.f32 %v2344, %v2544
      %v2546 = vpop.f32.mrb[0].mxu0
      %2547 = vmatprep.mubr.bf16.mxu0 %v1206
      %2548 = vmatmul.mubr.bf16.gmra.mrb[0].mxu0 %v1100
      %v2549 = vpop.f32.mrb[0].mxu0
      %v2550 = vadd.f32 %v2349, %v2549
      %v2551 = vpop.f32.mrb[0].mxu0
      %v2552 = vpop.f32.mrb[0].mxu0
      %v2553 = vadd.f32 %v2352, %v2552
      %v2554 = vpop.f32.mrb[0].mxu0
      %2555 = vmatprep.mubr.bf16.mxu0 %v1207
      %2556 = vmatmul.mubr.bf16.gmra.mrb[0].mxu0 %v1101
      %v2557 = vpop.f32.mrb[0].mxu0
      %v2558 = vadd.f32 %v2357, %v2557
      %v2559 = vpop.f32.mrb[0].mxu0
      %v2560 = vpop.f32.mrb[0].mxu0
      %v2561 = vadd.f32 %v2360, %v2560
      %v2562 = vpop.f32.mrb[0].mxu0
      %2563 = vmatprep.mubr.bf16.mxu0 %v1208
      %2564 = vmatmul.mubr.bf16.gmra.mrb[0].mxu0 %v1102
      %v2565 = vpop.f32.mrb[0].mxu0
      %v2566 = vadd.f32 %v2365, %v2565
      %v2567 = vpop.f32.mrb[0].mxu0
      %v2568 = vpop.f32.mrb[0].mxu0
      %v2569 = vadd.f32 %v2368, %v2568
      %v2570 = vpop.f32.mrb[0].mxu0
      %2571 = vmatprep.mubr.bf16.mxu0 %v1209
      %2572 = vmatmul.mubr.bf16.gmra.mrb[0].mxu0 %v1103
      %v2573 = vpop.f32.mrb[0].mxu0
      %v2574 = vadd.f32 %v2373, %v2573
      %v2575 = vpop.f32.mrb[0].mxu0
      %v2576 = vpop.f32.mrb[0].mxu0
      %v2577 = vadd.f32 %v2376, %v2576
      %v2578 = vpop.f32.mrb[0].mxu0
      %2579 = vmatprep.mubr.bf16.mxu0 %v1210
      %2580 = vmatmul.mubr.bf16.gmra.mrb[0].mxu0 %v1104
      %v2581 = vpop.f32.mrb[0].mxu0
      %v2582 = vadd.f32 %v2381, %v2581
      %v2583 = vpop.f32.mrb[0].mxu0
      %v2584 = vpop.f32.mrb[0].mxu0
      %v2585 = vadd.f32 %v2384, %v2584
      %v2586 = vpop.f32.mrb[0].mxu0
      %2587 = vmatprep.mubr.bf16.mxu0 %v1211
      %2588 = vmatmul.mubr.bf16.gmra.mrb[0].mxu0 %v1105
      %v2589 = vpop.f32.mrb[0].mxu0
      %v2590 = vadd.f32 %v2389, %v2589
      %v2591 = vpop.f32.mrb[0].mxu0
      %v2592 = vpop.f32.mrb[0].mxu0
      %v2593 = vadd.f32 %v2392, %v2592
      %v2594 = vpop.f32.mrb[0].mxu0
      %2595 = vmatprep.mubr.bf16.mxu0 %v1212
      %2596 = vmatmul.mubr.bf16.gmra.mrb[0].mxu0 %v1106
      %v2597 = vpop.f32.mrb[0].mxu0
      %v2598 = vadd.f32 %v2397, %v2597
      %v2599 = vpop.f32.mrb[0].mxu0
      %v2600 = vpop.f32.mrb[0].mxu0
      %v2601 = vadd.f32 %v2400, %v2600
      %v2602 = vpop.f32.mrb[0].mxu0
      %2603 = vmatprep.mubr.bf16.mxu0 %v1213
      %2604 = vmatmul.mubr.bf16.gmra.mrb[0].mxu0 %v1107
      %v2605 = vpop.f32.mrb[0].mxu0
      %v2606 = vadd.f32 %v2405, %v2605
      %v2607 = vpop.f32.mrb[0].mxu0
      %v2608 = vpop.f32.mrb[0].mxu0
      %v2609 = vadd.f32 %v2408, %v2608
      %v2610 = vpop.f32.mrb[0].mxu0
      %2611 = vdwg.mxu0
      %2612 = vmatprep.subr.bf16.mxu0 0
      %2613 = vmatpush1.bf16.msra.mxu0 %v1913
      %2614 = vmatprep.subr.bf16.mxu0 0
      %2615 = vmatpush1.bf16.msra.mxu0 %v1914
      %2616 = vmatprep.subr.bf16.mxu0 0
      %2617 = vmatpush1.bf16.msra.mxu0 %v1915
      %2618 = vmatprep.subr.bf16.mxu0 0
      %2619 = vmatpush1.bf16.msra.mxu0 %v1916
      %2620 = vmatprep.subr.bf16.mxu0 0
      %2621 = vmatpush1.bf16.msra.mxu0 %v1917
      %2622 = vmatprep.subr.bf16.mxu0 0
      %2623 = vmatpush1.bf16.msra.mxu0 %v1918
      %2624 = vmatprep.subr.bf16.mxu0 0
      %2625 = vmatpush1.bf16.msra.mxu0 %v1919
      %2626 = vmatprep.subr.bf16.mxu0 0
      %2627 = vmatpush1.bf16.msra.mxu0 %v1920
      %2628 = vmatprep.subr.bf16.mxu0 0
      %2629 = vmatpush1.bf16.msra.mxu0 %v1921
      %2630 = vmatprep.subr.bf16.mxu0 0
      %2631 = vmatpush1.bf16.msra.mxu0 %v1922
      %2632 = vmatprep.subr.bf16.mxu0 0
      %2633 = vmatpush1.bf16.msra.mxu0 %v1923
      %2634 = vmatprep.subr.bf16.mxu0 0
      %2635 = vmatpush1.bf16.msra.mxu0 %v1924
      %2636 = vmatprep.subr.bf16.mxu0 0
      %2637 = vmatpush1.bf16.msra.mxu0 %v1925
      %2638 = vmatprep.subr.bf16.mxu0 0
      %2639 = vmatpush1.bf16.msra.mxu0 %v1926
      %2640 = vmatprep.subr.bf16.mxu0 0
      %2641 = vmatpush1.bf16.msra.mxu0 %v1927
      %2642 = vmatprep.subr.bf16.mxu0 0
      %2643 = vmatpush1.bf16.msra.mxu0 %v1928
      %2644 = vmatprep.mubr.bf16.mxu0 %v1299
      %2645 = vmatmul.mubr.bf16.gmra.mrb[0].mxu0 %v1194
      %v2646 = vpop.f32.mrb[0].mxu0
      %v2647 = vadd.f32 %v2446, %v2646
      %v2648 = vpop.f32.mrb[0].mxu0
      %v2649 = vpop.f32.mrb[0].mxu0
      %v2650 = vadd.f32 %v2449, %v2649
      %v2651 = vpop.f32.mrb[0].mxu0
      %2652 = vmatprep.mubr.bf16.mxu0 %v1300
      %2653 = vmatmul.mubr.bf16.gmra.mrb[0].mxu0 %v1195
      %v2654 = vpop.f32.mrb[0].mxu0
      %v2655 = vadd.f32 %v2454, %v2654
      %v2656 = vpop.f32.mrb[0].mxu0
      %v2657 = vpop.f32.mrb[0].mxu0
      %v2658 = vadd.f32 %v2457, %v2657
      %v2659 = vpop.f32.mrb[0].mxu0
      %2660 = vmatprep.mubr.bf16.mxu0 %v1301
      %2661 = vmatmul.mubr.bf16.gmra.mrb[0].mxu0 %v1196
      %v2662 = vpop.f32.mrb[0].mxu0
      %v2663 = vadd.f32 %v2462, %v2662
      %v2664 = vpop.f32.mrb[0].mxu0
      %v2665 = vpop.f32.mrb[0].mxu0
      %v2666 = vadd.f32 %v2465, %v2665
      %v2667 = vpop.f32.mrb[0].mxu0
      %2668 = vmatprep.mubr.bf16.mxu0 %v1302
      %2669 = vmatmul.mubr.bf16.gmra.mrb[0].mxu0 %v1197
      %v2670 = vpop.f32.mrb[0].mxu0
      %v2671 = vadd.f32 %v2470, %v2670
      %v2672 = vpop.f32.mrb[0].mxu0
      %v2673 = vpop.f32.mrb[0].mxu0
      %v2674 = vadd.f32 %v2473, %v2673
      %v2675 = vpop.f32.mrb[0].mxu0
      %2676 = vmatprep.mubr.bf16.mxu0 %v1303
      %2677 = vmatmul.mubr.bf16.gmra.mrb[0].mxu0 %v1198
      %v2678 = vpop.f32.mrb[0].mxu0
      %v2679 = vadd.f32 %v2478, %v2678
      %v2680 = vpop.f32.mrb[0].mxu0
      %v2681 = vpop.f32.mrb[0].mxu0
      %v2682 = vadd.f32 %v2481, %v2681
      %v2683 = vpop.f32.mrb[0].mxu0
      %2684 = vmatprep.mubr.bf16.mxu0 %v1304
      %2685 = vmatmul.mubr.bf16.gmra.mrb[0].mxu0 %v1199
      %v2686 = vpop.f32.mrb[0].mxu0
      %v2687 = vadd.f32 %v2486, %v2686
      %v2688 = vpop.f32.mrb[0].mxu0
      %v2689 = vpop.f32.mrb[0].mxu0
      %v2690 = vadd.f32 %v2489, %v2689
      %v2691 = vpop.f32.mrb[0].mxu0
      %2692 = vmatprep.mubr.bf16.mxu0 %v1305
      %2693 = vmatmul.mubr.bf16.gmra.mrb[0].mxu0 %v1200
      %v2694 = vpop.f32.mrb[0].mxu0
      %v2695 = vadd.f32 %v2494, %v2694
      %v2696 = vpop.f32.mrb[0].mxu0
      %v2697 = vpop.f32.mrb[0].mxu0
      %v2698 = vadd.f32 %v2497, %v2697
      %v2699 = vpop.f32.mrb[0].mxu0
      %2700 = vmatprep.mubr.bf16.mxu0 %v1306
      %2701 = vmatmul.mubr.bf16.gmra.mrb[0].mxu0 %v1201
      %v2702 = vpop.f32.mrb[0].mxu0
      %v2703 = vadd.f32 %v2502, %v2702
      %v2704 = vpop.f32.mrb[0].mxu0
      %v2705 = vpop.f32.mrb[0].mxu0
      %v2706 = vadd.f32 %v2505, %v2705
      %v2707 = vpop.f32.mrb[0].mxu0
      %2708 = vmatprep.mubr.bf16.mxu0 %v1307
      %2709 = vmatmul.mubr.bf16.gmra.mrb[0].mxu0 %v1202
      %v2710 = vpop.f32.mrb[0].mxu0
      %v2711 = vadd.f32 %v2510, %v2710
      %v2712 = vpop.f32.mrb[0].mxu0
      %v2713 = vpop.f32.mrb[0].mxu0
      %v2714 = vadd.f32 %v2513, %v2713
      %v2715 = vpop.f32.mrb[0].mxu0
      %2716 = vmatprep.mubr.bf16.mxu0 %v1308
      %2717 = vmatmul.mubr.bf16.gmra.mrb[0].mxu0 %v1203
      %v2718 = vpop.f32.mrb[0].mxu0
      %v2719 = vadd.f32 %v2518, %v2718
      %v2720 = vpop.f32.mrb[0].mxu0
      %v2721 = vpop.f32.mrb[0].mxu0
      %v2722 = vadd.f32 %v2521, %v2721
      %v2723 = vpop.f32.mrb[0].mxu0
      %2724 = vmatprep.mubr.bf16.mxu0 %v1309
      %2725 = vmatmul.mubr.bf16.gmra.mrb[0].mxu0 %v1204
      %v2726 = vpop.f32.mrb[0].mxu0
      %v2727 = vadd.f32 %v2526, %v2726
      %v2728 = vpop.f32.mrb[0].mxu0
      %v2729 = vpop.f32.mrb[0].mxu0
      %v2730 = vadd.f32 %v2529, %v2729
      %v2731 = vpop.f32.mrb[0].mxu0
      %2732 = vmatprep.mubr.bf16.mxu0 %v1310
      %2733 = vmatmul.mubr.bf16.gmra.mrb[0].mxu0 %v1205
      %v2734 = vpop.f32.mrb[0].mxu0
      %v2735 = vadd.f32 %v2534, %v2734
      %v2736 = vpop.f32.mrb[0].mxu0
      %v2737 = vpop.f32.mrb[0].mxu0
      %v2738 = vadd.f32 %v2537, %v2737
      %v2739 = vpop.f32.mrb[0].mxu0
      %2740 = vmatprep.mubr.bf16.mxu0 %v1311
      %2741 = vmatmul.mubr.bf16.gmra.mrb[0].mxu0 %v1206
      %v2742 = vpop.f32.mrb[0].mxu0
      %v2743 = vadd.f32 %v2542, %v2742
      %v2744 = vpop.f32.mrb[0].mxu0
      %v2745 = vpop.f32.mrb[0].mxu0
      %v2746 = vadd.f32 %v2545, %v2745
      %v2747 = vpop.f32.mrb[0].mxu0
      %2748 = vmatprep.mubr.bf16.mxu0 %v1312
      %2749 = vmatmul.mubr.bf16.gmra.mrb[0].mxu0 %v1207
      %v2750 = vpop.f32.mrb[0].mxu0
      %v2751 = vadd.f32 %v2550, %v2750
      %v2752 = vpop.f32.mrb[0].mxu0
      %v2753 = vpop.f32.mrb[0].mxu0
      %v2754 = vadd.f32 %v2553, %v2753
      %v2755 = vpop.f32.mrb[0].mxu0
      %2756 = vmatprep.mubr.bf16.mxu0 %v1313
      %2757 = vmatmul.mubr.bf16.gmra.mrb[0].mxu0 %v1208
      %v2758 = vpop.f32.mrb[0].mxu0
      %v2759 = vadd.f32 %v2558, %v2758
      %v2760 = vpop.f32.mrb[0].mxu0
      %v2761 = vpop.f32.mrb[0].mxu0
      %v2762 = vadd.f32 %v2561, %v2761
      %v2763 = vpop.f32.mrb[0].mxu0
      %2764 = vmatprep.mubr.bf16.mxu0 %v1314
      %2765 = vmatmul.mubr.bf16.gmra.mrb[0].mxu0 %v1209
      %v2766 = vpop.f32.mrb[0].mxu0
      %v2767 = vadd.f32 %v2566, %v2766
      %v2768 = vpop.f32.mrb[0].mxu0
      %v2769 = vpop.f32.mrb[0].mxu0
      %v2770 = vadd.f32 %v2569, %v2769
      %v2771 = vpop.f32.mrb[0].mxu0
      %2772 = vmatprep.mubr.bf16.mxu0 %v1315
      %2773 = vmatmul.mubr.bf16.gmra.mrb[0].mxu0 %v1210
      %v2774 = vpop.f32.mrb[0].mxu0
      %v2775 = vadd.f32 %v2574, %v2774
      %v2776 = vpop.f32.mrb[0].mxu0
      %v2777 = vpop.f32.mrb[0].mxu0
      %v2778 = vadd.f32 %v2577, %v2777
      %v2779 = vpop.f32.mrb[0].mxu0
      %2780 = vmatprep.mubr.bf16.mxu0 %v1316
      %2781 = vmatmul.mubr.bf16.gmra.mrb[0].mxu0 %v1211
      %v2782 = vpop.f32.mrb[0].mxu0
      %v2783 = vadd.f32 %v2582, %v2782
      %v2784 = vpop.f32.mrb[0].mxu0
      %v2785 = vpop.f32.mrb[0].mxu0
      %v2786 = vadd.f32 %v2585, %v2785
      %v2787 = vpop.f32.mrb[0].mxu0
      %2788 = vmatprep.mubr.bf16.mxu0 %v1317
      %2789 = vmatmul.mubr.bf16.gmra.mrb[0].mxu0 %v1212
      %v2790 = vpop.f32.mrb[0].mxu0
      %v2791 = vadd.f32 %v2590, %v2790
      %v2792 = vpop.f32.mrb[0].mxu0
      %v2793 = vpop.f32.mrb[0].mxu0
      %v2794 = vadd.f32 %v2593, %v2793
      %v2795 = vpop.f32.mrb[0].mxu0
      %2796 = vmatprep.mubr.bf16.mxu0 %v1318
      %2797 = vmatmul.mubr.bf16.gmra.mrb[0].mxu0 %v1213
      %v2798 = vpop.f32.mrb[0].mxu0
      %v2799 = vadd.f32 %v2598, %v2798
      %v2800 = vpop.f32.mrb[0].mxu0
      %v2801 = vpop.f32.mrb[0].mxu0
      %v2802 = vadd.f32 %v2601, %v2801
      %v2803 = vpop.f32.mrb[0].mxu0
      %2804 = vmatprep.mubr.bf16.mxu0 %v1319
      %2805 = vmatmul.mubr.bf16.gmra.mrb[0].mxu0 %v1193
      %v2806 = vpop.f32.mrb[0].mxu0
      %v2807 = vadd.f32 %v2606, %v2806
      %v2808 = vpop.f32.mrb[0].mxu0
      %v2809 = vpop.f32.mrb[0].mxu0
      %v2810 = vadd.f32 %v2609, %v2809
      %v2811 = vpop.f32.mrb[0].mxu0
      %2812 = vdwg.mxu0
      %2813 = vmatprep.subr.bf16.mxu0 0
      %2814 = vmatpush1.bf16.msra.mxu0 %v1929
      %2815 = vmatprep.subr.bf16.mxu0 0
      %2816 = vmatpush1.bf16.msra.mxu0 %v1930
      %2817 = vmatprep.subr.bf16.mxu0 0
      %2818 = vmatpush1.bf16.msra.mxu0 %v1931
      %2819 = vmatprep.subr.bf16.mxu0 0
      %2820 = vmatpush1.bf16.msra.mxu0 %v1932
      %2821 = vmatprep.subr.bf16.mxu0 0
      %2822 = vmatpush1.bf16.msra.mxu0 %v1933
      %2823 = vmatprep.subr.bf16.mxu0 0
      %2824 = vmatpush1.bf16.msra.mxu0 %v1934
      %2825 = vmatprep.subr.bf16.mxu0 0
      %2826 = vmatpush1.bf16.msra.mxu0 %v1935
      %2827 = vmatprep.subr.bf16.mxu0 0
      %2828 = vmatpush1.bf16.msra.mxu0 %v1936
      %2829 = vmatprep.subr.bf16.mxu0 0
      %2830 = vmatpush1.bf16.msra.mxu0 0
      %2831 = vmatprep.subr.bf16.mxu0 0
      %2832 = vmatpush1.bf16.msra.mxu0 0
      %2833 = vmatprep.subr.bf16.mxu0 0
      %2834 = vmatpush1.bf16.msra.mxu0 0
      %2835 = vmatprep.subr.bf16.mxu0 0
      %2836 = vmatpush1.bf16.msra.mxu0 0
      %2837 = vmatprep.subr.bf16.mxu0 0
      %2838 = vmatpush1.bf16.msra.mxu0 0
      %2839 = vmatprep.subr.bf16.mxu0 0
      %2840 = vmatpush1.bf16.msra.mxu0 0
      %2841 = vmatprep.subr.bf16.mxu0 0
      %2842 = vmatpush1.bf16.msra.mxu0 0
      %2843 = vmatprep.subr.bf16.mxu0 0
      %2844 = vmatpush1.bf16.msra.mxu0 0
      %2845 = vmatprep.mubr.bf16.mxu0 0
      %2846 = vmatmul.mubr.bf16.gmra.mrb[0].mxu0 %v1405
      %v2847 = vpop.f32.mrb[0].mxu0
      %v2848 = vadd.f32 %v2647, %v2847
      %v2849 = vpop.f32.mrb[0].mxu0
      %v2850 = vpop.f32.mrb[0].mxu0
      %v2851 = vadd.f32 %v2650, %v2850
      %v2852 = vpop.f32.mrb[0].mxu0
      %2853 = vmatprep.mubr.bf16.mxu0 0
      %2854 = vmatmul.mubr.bf16.gmra.mrb[0].mxu0 %v1406
      %v2855 = vpop.f32.mrb[0].mxu0
      %v2856 = vadd.f32 %v2655, %v2855
      %v2857 = vpop.f32.mrb[0].mxu0
      %v2858 = vpop.f32.mrb[0].mxu0
      %v2859 = vadd.f32 %v2658, %v2858
      %v2860 = vpop.f32.mrb[0].mxu0
      %2861 = vmatprep.mubr.bf16.mxu0 0
      %2862 = vmatmul.mubr.bf16.gmra.mrb[0].mxu0 %v1407
      %v2863 = vpop.f32.mrb[0].mxu0
      %v2864 = vadd.f32 %v2663, %v2863
      %v2865 = vpop.f32.mrb[0].mxu0
      %v2866 = vpop.f32.mrb[0].mxu0
      %v2867 = vadd.f32 %v2666, %v2866
      %v2868 = vpop.f32.mrb[0].mxu0
      %2869 = vmatprep.mubr.bf16.mxu0 0
      %2870 = vmatmul.mubr.bf16.gmra.mrb[0].mxu0 %v1408
      %v2871 = vpop.f32.mrb[0].mxu0
      %v2872 = vadd.f32 %v2671, %v2871
      %v2873 = vpop.f32.mrb[0].mxu0
      %v2874 = vpop.f32.mrb[0].mxu0
      %v2875 = vadd.f32 %v2674, %v2874
      %v2876 = vpop.f32.mrb[0].mxu0
      %2877 = vmatprep.mubr.bf16.mxu0 0
      %2878 = vmatmul.mubr.bf16.gmra.mrb[0].mxu0 %v1409
      %v2879 = vpop.f32.mrb[0].mxu0
      %v2880 = vadd.f32 %v2679, %v2879
      %v2881 = vpop.f32.mrb[0].mxu0
      %v2882 = vpop.f32.mrb[0].mxu0
      %v2883 = vadd.f32 %v2682, %v2882
      %v2884 = vpop.f32.mrb[0].mxu0
      %2885 = vmatprep.mubr.bf16.mxu0 0
      %2886 = vmatmul.mubr.bf16.gmra.mrb[0].mxu0 %v1410
      %v2887 = vpop.f32.mrb[0].mxu0
      %v2888 = vadd.f32 %v2687, %v2887
      %v2889 = vpop.f32.mrb[0].mxu0
      %v2890 = vpop.f32.mrb[0].mxu0
      %v2891 = vadd.f32 %v2690, %v2890
      %v2892 = vpop.f32.mrb[0].mxu0
      %2893 = vmatprep.mubr.bf16.mxu0 0
      %2894 = vmatmul.mubr.bf16.gmra.mrb[0].mxu0 %v1411
      %v2895 = vpop.f32.mrb[0].mxu0
      %v2896 = vadd.f32 %v2695, %v2895
      %v2897 = vpop.f32.mrb[0].mxu0
      %v2898 = vpop.f32.mrb[0].mxu0
      %v2899 = vadd.f32 %v2698, %v2898
      %v2900 = vpop.f32.mrb[0].mxu0
      %2901 = vmatprep.mubr.bf16.mxu0 0
      %2902 = vmatmul.mubr.bf16.gmra.mrb[0].mxu0 %v1412
      %v2903 = vpop.f32.mrb[0].mxu0
      %v2904 = vadd.f32 %v2703, %v2903
      %v2905 = vpop.f32.mrb[0].mxu0
      %v2906 = vpop.f32.mrb[0].mxu0
      %v2907 = vadd.f32 %v2706, %v2906
      %v2908 = vpop.f32.mrb[0].mxu0
      %2909 = vmatprep.mubr.bf16.mxu0 0
      %2910 = vmatmul.mubr.bf16.gmra.mrb[0].mxu0 %v1413
      %v2911 = vpop.f32.mrb[0].mxu0
      %v2912 = vadd.f32 %v2711, %v2911
      %v2913 = vpop.f32.mrb[0].mxu0
      %v2914 = vpop.f32.mrb[0].mxu0
      %v2915 = vadd.f32 %v2714, %v2914
      %v2916 = vpop.f32.mrb[0].mxu0
      %2917 = vmatprep.mubr.bf16.mxu0 0
      %2918 = vmatmul.mubr.bf16.gmra.mrb[0].mxu0 %v1414
      %v2919 = vpop.f32.mrb[0].mxu0
      %v2920 = vadd.f32 %v2719, %v2919
      %v2921 = vpop.f32.mrb[0].mxu0
      %v2922 = vpop.f32.mrb[0].mxu0
      %v2923 = vadd.f32 %v2722, %v2922
      %v2924 = vpop.f32.mrb[0].mxu0
      %2925 = vmatprep.mubr.bf16.mxu0 0
      %2926 = vmatmul.mubr.bf16.gmra.mrb[0].mxu0 %v1415
      %v2927 = vpop.f32.mrb[0].mxu0
      %v2928 = vadd.f32 %v2727, %v2927
      %v2929 = vpop.f32.mrb[0].mxu0
      %v2930 = vpop.f32.mrb[0].mxu0
      %v2931 = vadd.f32 %v2730, %v2930
      %v2932 = vpop.f32.mrb[0].mxu0
      %2933 = vmatprep.mubr.bf16.mxu0 0
      %2934 = vmatmul.mubr.bf16.gmra.mrb[0].mxu0 %v1416
      %v2935 = vpop.f32.mrb[0].mxu0
      %v2936 = vadd.f32 %v2735, %v2935
      %v2937 = vpop.f32.mrb[0].mxu0
      %v2938 = vpop.f32.mrb[0].mxu0
      %v2939 = vadd.f32 %v2738, %v2938
      %v2940 = vpop.f32.mrb[0].mxu0
      %2941 = vmatprep.mubr.bf16.mxu0 0
      %2942 = vmatmul.mubr.bf16.gmra.mrb[0].mxu0 %v1417
      %v2943 = vpop.f32.mrb[0].mxu0
      %v2944 = vadd.f32 %v2743, %v2943
      %v2945 = vpop.f32.mrb[0].mxu0
      %v2946 = vpop.f32.mrb[0].mxu0
      %v2947 = vadd.f32 %v2746, %v2946
      %v2948 = vpop.f32.mrb[0].mxu0
      %2949 = vmatprep.mubr.bf16.mxu0 0
      %2950 = vmatmul.mubr.bf16.gmra.mrb[0].mxu0 %v1418
      %v2951 = vpop.f32.mrb[0].mxu0
      %v2952 = vadd.f32 %v2751, %v2951
      %v2953 = vpop.f32.mrb[0].mxu0
      %v2954 = vpop.f32.mrb[0].mxu0
      %v2955 = vadd.f32 %v2754, %v2954
      %v2956 = vpop.f32.mrb[0].mxu0
      %2957 = vmatprep.mubr.bf16.mxu0 0
      %2958 = vmatmul.mubr.bf16.gmra.mrb[0].mxu0 %v1419
      %v2959 = vpop.f32.mrb[0].mxu0
      %v2960 = vadd.f32 %v2759, %v2959
      %v2961 = vpop.f32.mrb[0].mxu0
      %v2962 = vpop.f32.mrb[0].mxu0
      %v2963 = vadd.f32 %v2762, %v2962
      %v2964 = vpop.f32.mrb[0].mxu0
      %2965 = vmatprep.mubr.bf16.mxu0 0
      %2966 = vmatmul.mubr.bf16.gmra.mrb[0].mxu0 %v1420
      %v2967 = vpop.f32.mrb[0].mxu0
      %v2968 = vadd.f32 %v2767, %v2967
      %v2969 = vpop.f32.mrb[0].mxu0
      %v2970 = vpop.f32.mrb[0].mxu0
      %v2971 = vadd.f32 %v2770, %v2970
      %v2972 = vpop.f32.mrb[0].mxu0
      %2973 = vmatprep.mubr.bf16.mxu0 0
      %2974 = vmatmul.mubr.bf16.gmra.mrb[0].mxu0 %v1421
      %v2975 = vpop.f32.mrb[0].mxu0
      %v2976 = vadd.f32 %v2775, %v2975
      %v2977 = vpop.f32.mrb[0].mxu0
      %v2978 = vpop.f32.mrb[0].mxu0
      %v2979 = vadd.f32 %v2778, %v2978
      %v2980 = vpop.f32.mrb[0].mxu0
      %2981 = vmatprep.mubr.bf16.mxu0 0
      %2982 = vmatmul.mubr.bf16.gmra.mrb[0].mxu0 %v1422
      %v2983 = vpop.f32.mrb[0].mxu0
      %v2984 = vadd.f32 %v2783, %v2983
      %v2985 = vpop.f32.mrb[0].mxu0
      %v2986 = vpop.f32.mrb[0].mxu0
      %v2987 = vadd.f32 %v2786, %v2986
      %v2988 = vpop.f32.mrb[0].mxu0
      %2989 = vmatprep.mubr.bf16.mxu0 0
      %2990 = vmatmul.mubr.bf16.gmra.mrb[0].mxu0 %v1423
      %v2991 = vpop.f32.mrb[0].mxu0
      %v2992 = vadd.f32 %v2791, %v2991
      %v2993 = vpop.f32.mrb[0].mxu0
      %v2994 = vpop.f32.mrb[0].mxu0
      %v2995 = vadd.f32 %v2794, %v2994
      %v2996 = vpop.f32.mrb[0].mxu0
      %2997 = vmatprep.mubr.bf16.mxu0 0
      %2998 = vmatmul.mubr.bf16.gmra.mrb[0].mxu0 %v1424
      %v2999 = vpop.f32.mrb[0].mxu0
      %v3000 = vadd.f32 %v2799, %v2999
      %v3001 = vpop.f32.mrb[0].mxu0
      %v3002 = vpop.f32.mrb[0].mxu0
      %v3003 = vadd.f32 %v2802, %v3002
      %v3004 = vpop.f32.mrb[0].mxu0
      %3005 = vmatprep.mubr.bf16.mxu0 0
      %3006 = vmatmul.mubr.bf16.gmra.mrb[0].mxu0 %v1425
      %v3007 = vpop.f32.mrb[0].mxu0
      %v3008 = vadd.f32 %v2807, %v3007
      %v3009 = vpop.f32.mrb[0].mxu0
      %v3010 = vpop.f32.mrb[0].mxu0
      %v3011 = vadd.f32 %v2810, %v3010
      %v3012 = vpop.f32.mrb[0].mxu0
      %3013 = vdwg.mxu0
      %vm3014 = vcmp.gt.f32.partialorder %v2848, 0.0
      %vm3015 = vcmp.gt.f32.partialorder %v2851, 0.0
      %vm3016 = vcmp.gt.f32.partialorder %v2856, 0.0
      %vm3017 = vcmp.gt.f32.partialorder %v2859, 0.0
      %vm3018 = vcmp.gt.f32.partialorder %v2864, 0.0
      %vm3019 = vcmp.gt.f32.partialorder %v2867, 0.0
      %vm3020 = vcmp.gt.f32.partialorder %v2872, 0.0
      %vm3021 = vcmp.gt.f32.partialorder %v2875, 0.0
      %vm3022 = vcmp.gt.f32.partialorder %v2880, 0.0
      %vm3023 = vcmp.gt.f32.partialorder %v2883, 0.0
      %vm3024 = vcmp.gt.f32.partialorder %v2888, 0.0
      %vm3025 = vcmp.gt.f32.partialorder %v2891, 0.0
      %vm3026 = vcmp.gt.f32.partialorder %v2896, 0.0
      %vm3027 = vcmp.gt.f32.partialorder %v2899, 0.0
      %vm3028 = vcmp.gt.f32.partialorder %v2904, 0.0
      %vm3029 = vcmp.gt.f32.partialorder %v2907, 0.0
      %vm3030 = vcmp.gt.f32.partialorder %v2912, 0.0
      %vm3031 = vcmp.gt.f32.partialorder %v2915, 0.0
      %vm3032 = vcmp.gt.f32.partialorder %v2920, 0.0
      %vm3033 = vcmp.gt.f32.partialorder %v2923, 0.0
      %vm3034 = vcmp.gt.f32.partialorder %v2928, 0.0
      %vm3035 = vcmp.gt.f32.partialorder %v2931, 0.0
      %vm3036 = vcmp.gt.f32.partialorder %v2936, 0.0
      %vm3037 = vcmp.gt.f32.partialorder %v2939, 0.0
      %vm3038 = vcmp.gt.f32.partialorder %v2944, 0.0
      %vm3039 = vcmp.gt.f32.partialorder %v2947, 0.0
      %vm3040 = vcmp.gt.f32.partialorder %v2952, 0.0
      %vm3041 = vcmp.gt.f32.partialorder %v2955, 0.0
      %vm3042 = vcmp.gt.f32.partialorder %v2960, 0.0
      %vm3043 = vcmp.gt.f32.partialorder %v2963, 0.0
      %vm3044 = vcmp.gt.f32.partialorder %v2968, 0.0
      %vm3045 = vcmp.gt.f32.partialorder %v2971, 0.0
      %vm3046 = vcmp.gt.f32.partialorder %v2976, 0.0
      %vm3047 = vcmp.gt.f32.partialorder %v2979, 0.0
      %vm3048 = vcmp.gt.f32.partialorder %v2984, 0.0
      %vm3049 = vcmp.gt.f32.partialorder %v2987, 0.0
      %vm3050 = vcmp.gt.f32.partialorder %v2992, 0.0
      %vm3051 = vcmp.gt.f32.partialorder %v2995, 0.0
      %vm3052 = vcmp.gt.f32.partialorder %v3000, 0.0
      %vm3053 = vcmp.gt.f32.partialorder %v3003, 0.0
      %vm3054 = vcmp.gt.f32.partialorder %v3008, 0.0
      %vm3055 = vcmp.gt.f32.partialorder %v3011, 0.0
      %v3056 = vmin.f32 %v2848, 0.0
      %v3057 = vmin.f32 %v2851, 0.0
      %v3058 = vmin.f32 %v2856, 0.0
      %v3059 = vmin.f32 %v2859, 0.0
      %v3060 = vmin.f32 %v2864, 0.0
      %v3061 = vmin.f32 %v2867, 0.0
      %v3062 = vmin.f32 %v2872, 0.0
      %v3063 = vmin.f32 %v2875, 0.0
      %v3064 = vmin.f32 %v2880, 0.0
      %v3065 = vmin.f32 %v2883, 0.0
      %v3066 = vmin.f32 %v2888, 0.0
      %v3067 = vmin.f32 %v2891, 0.0
      %v3068 = vmin.f32 %v2896, 0.0
      %v3069 = vmin.f32 %v2899, 0.0
      %v3070 = vmin.f32 %v2904, 0.0
      %v3071 = vmin.f32 %v2907, 0.0
      %v3072 = vmin.f32 %v2912, 0.0
      %v3073 = vmin.f32 %v2915, 0.0
      %v3074 = vmin.f32 %v2920, 0.0
      %v3075 = vmin.f32 %v2923, 0.0
      %v3076 = vmin.f32 %v2928, 0.0
      %v3077 = vmin.f32 %v2931, 0.0
      %v3078 = vmin.f32 %v2936, 0.0
      %v3079 = vmin.f32 %v2939, 0.0
      %v3080 = vmin.f32 %v2944, 0.0
      %v3081 = vmin.f32 %v2947, 0.0
      %v3082 = vmin.f32 %v2952, 0.0
      %v3083 = vmin.f32 %v2955, 0.0
      %v3084 = vmin.f32 %v2960, 0.0
      %v3085 = vmin.f32 %v2963, 0.0
      %v3086 = vmin.f32 %v2968, 0.0
      %v3087 = vmin.f32 %v2971, 0.0
      %v3088 = vmin.f32 %v2976, 0.0
      %v3089 = vmin.f32 %v2979, 0.0
      %v3090 = vmin.f32 %v2984, 0.0
      %v3091 = vmin.f32 %v2987, 0.0
      %v3092 = vmin.f32 %v2992, 0.0
      %v3093 = vmin.f32 %v2995, 0.0
      %v3094 = vmin.f32 %v3000, 0.0
      %v3095 = vmin.f32 %v3003, 0.0
      %v3096 = vmin.f32 %v3008, 0.0
      %v3097 = vmin.f32 %v3011, 0.0
      %v3098 = vmul.f32 %v3056, 1.442695
      %v3099 = vpow.pop %v3098
      %v3100 = vmul.f32 %v3057, 1.442695
      %v3101 = vpow.pop %v3100
      %v3102 = vmul.f32 %v3058, 1.442695
      %v3103 = vpow.pop %v3102
      %v3104 = vmul.f32 %v3059, 1.442695
      %v3105 = vpow.pop %v3104
      %v3106 = vmul.f32 %v3060, 1.442695
      %v3107 = vpow.pop %v3106
      %v3108 = vmul.f32 %v3061, 1.442695
      %v3109 = vpow.pop %v3108
      %v3110 = vmul.f32 %v3062, 1.442695
      %v3111 = vpow.pop %v3110
      %v3112 = vmul.f32 %v3063, 1.442695
      %v3113 = vpow.pop %v3112
      %v3114 = vmul.f32 %v3064, 1.442695
      %v3115 = vpow.pop %v3114
      %v3116 = vmul.f32 %v3065, 1.442695
      %v3117 = vpow.pop %v3116
      %v3118 = vmul.f32 %v3066, 1.442695
      %v3119 = vpow.pop %v3118
      %v3120 = vmul.f32 %v3067, 1.442695
      %v3121 = vpow.pop %v3120
      %v3122 = vmul.f32 %v3068, 1.442695
      %v3123 = vpow.pop %v3122
      %v3124 = vmul.f32 %v3069, 1.442695
      %v3125 = vpow.pop %v3124
      %v3126 = vmul.f32 %v3070, 1.442695
      %v3127 = vpow.pop %v3126
      %v3128 = vmul.f32 %v3071, 1.442695
      %v3129 = vpow.pop %v3128
      %v3130 = vmul.f32 %v3072, 1.442695
      %v3131 = vpow.pop %v3130
      %v3132 = vmul.f32 %v3073, 1.442695
      %v3133 = vpow.pop %v3132
      %v3134 = vmul.f32 %v3074, 1.442695
      %v3135 = vpow.pop %v3134
      %v3136 = vmul.f32 %v3075, 1.442695
      %v3137 = vpow.pop %v3136
      %v3138 = vmul.f32 %v3076, 1.442695
      %v3139 = vpow.pop %v3138
      %v3140 = vmul.f32 %v3077, 1.442695
      %v3141 = vpow.pop %v3140
      %v3142 = vmul.f32 %v3078, 1.442695
      %v3143 = vpow.pop %v3142
      %v3144 = vmul.f32 %v3079, 1.442695
      %v3145 = vpow.pop %v3144
      %v3146 = vmul.f32 %v3080, 1.442695
      %v3147 = vpow.pop %v3146
      %v3148 = vmul.f32 %v3081, 1.442695
      %v3149 = vpow.pop %v3148
      %v3150 = vmul.f32 %v3082, 1.442695
      %v3151 = vpow.pop %v3150
      %v3152 = vmul.f32 %v3083, 1.442695
      %v3153 = vpow.pop %v3152
      %v3154 = vmul.f32 %v3084, 1.442695
      %v3155 = vpow.pop %v3154
      %v3156 = vmul.f32 %v3085, 1.442695
      %v3157 = vpow.pop %v3156
      %v3158 = vmul.f32 %v3086, 1.442695
      %v3159 = vpow.pop %v3158
      %v3160 = vmul.f32 %v3087, 1.442695
      %v3161 = vpow.pop %v3160
      %v3162 = vmul.f32 %v3088, 1.442695
      %v3163 = vpow.pop %v3162
      %v3164 = vmul.f32 %v3089, 1.442695
      %v3165 = vpow.pop %v3164
      %v3166 = vmul.f32 %v3090, 1.442695
      %v3167 = vpow.pop %v3166
      %v3168 = vmul.f32 %v3091, 1.442695
      %v3169 = vpow.pop %v3168
      %v3170 = vmul.f32 %v3092, 1.442695
      %v3171 = vpow.pop %v3170
      %v3172 = vmul.f32 %v3093, 1.442695
      %v3173 = vpow.pop %v3172
      %v3174 = vmul.f32 %v3094, 1.442695
      %v3175 = vpow.pop %v3174
      %v3176 = vmul.f32 %v3095, 1.442695
      %v3177 = vpow.pop %v3176
      %v3178 = vmul.f32 %v3096, 1.442695
      %v3179 = vpow.pop %v3178
      %v3180 = vmul.f32 %v3097, 1.442695
      %v3181 = vpow.pop %v3180
      %v3182 = vsub.f32 %v3099, 1.0
      %v3183 = vsub.f32 %v3101, 1.0
      %v3184 = vsub.f32 %v3103, 1.0
      %v3185 = vsub.f32 %v3105, 1.0
      %v3186 = vsub.f32 %v3107, 1.0
      %v3187 = vsub.f32 %v3109, 1.0
      %v3188 = vsub.f32 %v3111, 1.0
      %v3189 = vsub.f32 %v3113, 1.0
      %v3190 = vsub.f32 %v3115, 1.0
      %v3191 = vsub.f32 %v3117, 1.0
      %v3192 = vsub.f32 %v3119, 1.0
      %v3193 = vsub.f32 %v3121, 1.0
      %v3194 = vsub.f32 %v3123, 1.0
      %v3195 = vsub.f32 %v3125, 1.0
      %v3196 = vsub.f32 %v3127, 1.0
      %v3197 = vsub.f32 %v3129, 1.0
      %v3198 = vsub.f32 %v3131, 1.0
      %v3199 = vsub.f32 %v3133, 1.0
      %v3200 = vsub.f32 %v3135, 1.0
      %v3201 = vsub.f32 %v3137, 1.0
      %v3202 = vsub.f32 %v3139, 1.0
      %v3203 = vsub.f32 %v3141, 1.0
      %v3204 = vsub.f32 %v3143, 1.0
      %v3205 = vsub.f32 %v3145, 1.0
      %v3206 = vsub.f32 %v3147, 1.0
      %v3207 = vsub.f32 %v3149, 1.0
      %v3208 = vsub.f32 %v3151, 1.0
      %v3209 = vsub.f32 %v3153, 1.0
      %v3210 = vsub.f32 %v3155, 1.0
      %v3211 = vsub.f32 %v3157, 1.0
      %v3212 = vsub.f32 %v3159, 1.0
      %v3213 = vsub.f32 %v3161, 1.0
      %v3214 = vsub.f32 %v3163, 1.0
      %v3215 = vsub.f32 %v3165, 1.0
      %v3216 = vsub.f32 %v3167, 1.0
      %v3217 = vsub.f32 %v3169, 1.0
      %v3218 = vsub.f32 %v3171, 1.0
      %v3219 = vsub.f32 %v3173, 1.0
      %v3220 = vsub.f32 %v3175, 1.0
      %v3221 = vsub.f32 %v3177, 1.0
      %v3222 = vsub.f32 %v3179, 1.0
      %v3223 = vsub.f32 %v3181, 1.0
      %v3224 = vsel %vm3014, %v2848, %v3182
      %v3225 = vsel %vm3015, %v2851, %v3183
      %v3226 = vsel %vm3016, %v2856, %v3184
      %v3227 = vsel %vm3017, %v2859, %v3185
      %v3228 = vsel %vm3018, %v2864, %v3186
      %v3229 = vsel %vm3019, %v2867, %v3187
      %v3230 = vsel %vm3020, %v2872, %v3188
      %v3231 = vsel %vm3021, %v2875, %v3189
      %v3232 = vsel %vm3022, %v2880, %v3190
      %v3233 = vsel %vm3023, %v2883, %v3191
      %v3234 = vsel %vm3024, %v2888, %v3192
      %v3235 = vsel %vm3025, %v2891, %v3193
      %v3236 = vsel %vm3026, %v2896, %v3194
      %v3237 = vsel %vm3027, %v2899, %v3195
      %v3238 = vsel %vm3028, %v2904, %v3196
      %v3239 = vsel %vm3029, %v2907, %v3197
      %v3240 = vsel %vm3030, %v2912, %v3198
      %v3241 = vsel %vm3031, %v2915, %v3199
      %v3242 = vsel %vm3032, %v2920, %v3200
      %v3243 = vsel %vm3033, %v2923, %v3201
      %v3244 = vsel %vm3034, %v2928, %v3202
      %v3245 = vsel %vm3035, %v2931, %v3203
      %v3246 = vsel %vm3036, %v2936, %v3204
      %v3247 = vsel %vm3037, %v2939, %v3205
      %v3248 = vsel %vm3038, %v2944, %v3206
      %v3249 = vsel %vm3039, %v2947, %v3207
      %v3250 = vsel %vm3040, %v2952, %v3208
      %v3251 = vsel %vm3041, %v2955, %v3209
      %v3252 = vsel %vm3042, %v2960, %v3210
      %v3253 = vsel %vm3043, %v2963, %v3211
      %v3254 = vsel %vm3044, %v2968, %v3212
      %v3255 = vsel %vm3045, %v2971, %v3213
      %v3256 = vsel %vm3046, %v2976, %v3214
      %v3257 = vsel %vm3047, %v2979, %v3215
      %v3258 = vsel %vm3048, %v2984, %v3216
      %v3259 = vsel %vm3049, %v2987, %v3217
      %v3260 = vsel %vm3050, %v2992, %v3218
      %v3261 = vsel %vm3051, %v2995, %v3219
      %v3262 = vsel %vm3052, %v3000, %v3220
      %v3263 = vsel %vm3053, %v3003, %v3221
      %v3264 = vsel %vm3054, %v3008, %v3222
      %v3265 = vsel %vm3055, %v3011, %v3223
      %v3266 = vmul.f32 %v3224, %v518
      %v3267 = vmul.f32 %v3225, %v523
      %v3268 = vmul.f32 %v3226, %v528
      %v3269 = vmul.f32 %v3227, %v533
      %v3270 = vmul.f32 %v3228, %v538
      %v3271 = vmul.f32 %v3229, %v543
      %v3272 = vmul.f32 %v3230, %v548
      %v3273 = vmul.f32 %v3231, %v553
      %v3274 = vmul.f32 %v3232, %v558
      %v3275 = vmul.f32 %v3233, %v563
      %v3276 = vmul.f32 %v3234, %v568
      %v3277 = vmul.f32 %v3235, %v573
      %v3278 = vmul.f32 %v3236, %v578
      %v3279 = vmul.f32 %v3237, %v583
      %v3280 = vmul.f32 %v3238, %v588
      %v3281 = vmul.f32 %v3239, %v593
      %v3282 = vmul.f32 %v3240, %v598
      %v3283 = vmul.f32 %v3241, %v603
      %v3284 = vmul.f32 %v3242, %v608
      %v3285 = vmul.f32 %v3243, %v613
      %v3286 = vmul.f32 %v3244, %v618
      %v3287 = vmul.f32 %v3245, %v623
      %v3288 = vmul.f32 %v3246, %v628
      %v3289 = vmul.f32 %v3247, %v633
      %v3290 = vmul.f32 %v3248, %v638
      %v3291 = vmul.f32 %v3249, %v643
      %v3292 = vmul.f32 %v3250, %v648
      %v3293 = vmul.f32 %v3251, %v653
      %v3294 = vmul.f32 %v3252, %v658
      %v3295 = vmul.f32 %v3253, %v663
      %v3296 = vmul.f32 %v3254, %v668
      %v3297 = vmul.f32 %v3255, %v673
      %v3298 = vmul.f32 %v3256, %v678
      %v3299 = vmul.f32 %v3257, %v683
      %v3300 = vmul.f32 %v3258, %v688
      %v3301 = vmul.f32 %v3259, %v693
      %v3302 = vmul.f32 %v3260, %v698
      %v3303 = vmul.f32 %v3261, %v703
      %v3304 = vmul.f32 %v3262, %v708
      %v3305 = vmul.f32 %v3263, %v713
      %v3306 = vmul.f32 %v3264, %v718
      %v3307 = vmul.f32 %v3265, %v723
      %v3308 = vpack.c.bf16 %v3267, %v3266
      %v3309 = vpack.c.bf16 %v3269, %v3268
      %v3310 = vpack.c.bf16 %v3271, %v3270
      %v3311 = vpack.c.bf16 %v3273, %v3272
      %v3312 = vpack.c.bf16 %v3275, %v3274
      %v3313 = vpack.c.bf16 %v3277, %v3276
      %v3314 = vpack.c.bf16 %v3279, %v3278
      %v3315 = vpack.c.bf16 %v3281, %v3280
      %v3316 = vpack.c.bf16 %v3283, %v3282
      %v3317 = vpack.c.bf16 %v3285, %v3284
      %v3318 = vpack.c.bf16 %v3287, %v3286
      %v3319 = vpack.c.bf16 %v3289, %v3288
      %v3320 = vpack.c.bf16 %v3291, %v3290
      %v3321 = vpack.c.bf16 %v3293, %v3292
      %v3322 = vpack.c.bf16 %v3295, %v3294
      %v3323 = vpack.c.bf16 %v3297, %v3296
      %v3324 = vpack.c.bf16 %v3299, %v3298
      %v3325 = vpack.c.bf16 %v3301, %v3300
      %v3326 = vpack.c.bf16 %v3303, %v3302
      %v3327 = vpack.c.bf16 %v3305, %v3304
      %v3328 = vpack.c.bf16 %v3307, %v3306
      %v3350 = vunpack.c.l.b16 %v3308
      %v3351 = vunpack.c.h.b16 %v3308
      %v3352 = vunpack.c.l.b16 %v3309
      %v3353 = vunpack.c.h.b16 %v3309
      %v3354 = vunpack.c.l.b16 %v3310
      %v3355 = vunpack.c.h.b16 %v3310
      %v3356 = vunpack.c.l.b16 %v3311
      %v3357 = vunpack.c.h.b16 %v3311
      %v3358 = vunpack.c.l.b16 %v3312
      %v3359 = vunpack.c.h.b16 %v3312
      %v3360 = vunpack.c.l.b16 %v3313
      %v3361 = vunpack.c.h.b16 %v3313
      %v3362 = vunpack.c.l.b16 %v3314
      %v3363 = vunpack.c.h.b16 %v3314
      %v3364 = vunpack.c.l.b16 %v3315
      %v3365 = vunpack.c.h.b16 %v3315
      %v3366 = vunpack.c.l.b16 %v3316
      %v3367 = vunpack.c.h.b16 %v3316
      %v3368 = vunpack.c.l.b16 %v3317
      %v3369 = vunpack.c.h.b16 %v3317
      %v3370 = vunpack.c.l.b16 %v3318
      %v3371 = vunpack.c.h.b16 %v3318
      %v3372 = vunpack.c.l.b16 %v3319
      %v3373 = vunpack.c.h.b16 %v3319
      %v3374 = vunpack.c.l.b16 %v3320
      %v3375 = vunpack.c.h.b16 %v3320
      %v3376 = vunpack.c.l.b16 %v3321
      %v3377 = vunpack.c.h.b16 %v3321
      %v3378 = vunpack.c.l.b16 %v3322
      %v3379 = vunpack.c.h.b16 %v3322
      %v3380 = vunpack.c.l.b16 %v3323
      %v3381 = vunpack.c.h.b16 %v3323
      %v3382 = vunpack.c.l.b16 %v3324
      %v3383 = vunpack.c.h.b16 %v3324
      %v3384 = vunpack.c.l.b16 %v3325
      %v3385 = vunpack.c.h.b16 %v3325
      %v3386 = vunpack.c.l.b16 %v3326
      %v3387 = vunpack.c.h.b16 %v3326
      %v3388 = vunpack.c.l.b16 %v3327
      %v3389 = vunpack.c.h.b16 %v3327
      %v3390 = vunpack.c.l.b16 %v3328
      %v3391 = vunpack.c.h.b16 %v3328
      %v3392 = vpack.c.b16 %v3350, %v3350
      %v3393 = vpack.c.b16 %v3351, %v3351
      %v3394 = vpack.c.b16 %v3352, %v3352
      %v3395 = vpack.c.b16 %v3353, %v3353
      %v3396 = vpack.c.b16 %v3354, %v3354
      %v3397 = vpack.c.b16 %v3355, %v3355
      %v3398 = vpack.c.b16 %v3356, %v3356
      %v3399 = vpack.c.b16 %v3357, %v3357
      %v3400 = vpack.c.b16 %v3358, %v3358
      %v3401 = vpack.c.b16 %v3359, %v3359
      %v3402 = vpack.c.b16 %v3360, %v3360
      %v3403 = vpack.c.b16 %v3361, %v3361
      %v3404 = vpack.c.b16 %v3362, %v3362
      %v3405 = vpack.c.b16 %v3363, %v3363
      %v3406 = vpack.c.b16 %v3364, %v3364
      %v3407 = vpack.c.b16 %v3365, %v3365
      %v3408 = vpack.c.b16 %v3366, %v3366
      %v3409 = vpack.c.b16 %v3367, %v3367
      %v3410 = vpack.c.b16 %v3368, %v3368
      %v3411 = vpack.c.b16 %v3369, %v3369
      %v3412 = vpack.c.b16 %v3370, %v3370
      %v3413 = vpack.c.b16 %v3371, %v3371
      %v3414 = vpack.c.b16 %v3372, %v3372
      %v3415 = vpack.c.b16 %v3373, %v3373
      %v3416 = vpack.c.b16 %v3374, %v3374
      %v3417 = vpack.c.b16 %v3375, %v3375
      %v3418 = vpack.c.b16 %v3376, %v3376
      %v3419 = vpack.c.b16 %v3377, %v3377
      %v3420 = vpack.c.b16 %v3378, %v3378
      %v3421 = vpack.c.b16 %v3379, %v3379
      %v3422 = vpack.c.b16 %v3380, %v3380
      %v3423 = vpack.c.b16 %v3381, %v3381
      %v3424 = vpack.c.b16 %v3382, %v3382
      %v3425 = vpack.c.b16 %v3383, %v3383
      %v3426 = vpack.c.b16 %v3384, %v3384
      %v3427 = vpack.c.b16 %v3385, %v3385
      %v3428 = vpack.c.b16 %v3386, %v3386
      %v3429 = vpack.c.b16 %v3387, %v3387
      %v3430 = vpack.c.b16 %v3388, %v3388
      %v3431 = vpack.c.b16 %v3389, %v3389
      %v3432 = vpack.c.b16 %v3390, %v3390
      %v3433 = vpack.c.b16 %v3391, %v3391
      %3476 = vst [vmem:[%s285] sm:$0xf] %v3392
      %3477 = vst [vmem:[%s285 + $0x4] sm:$0xf] %v3393
      %3478 = vst [vmem:[%s285 + $0x8] sm:$0xf] %v3394
      %3479 = vst [vmem:[%s285 + $0xc] sm:$0xf] %v3395
      %3480 = vst [vmem:[%s285 + $0x10] sm:$0xf] %v3396
      %3481 = vst [vmem:[%s285 + $0x14] sm:$0xf] %v3397
      %3482 = vst [vmem:[%s285 + $0x18] sm:$0xf] %v3398
      %3483 = vst [vmem:[%s285 + $0x1c] sm:$0xf] %v3399
      %3484 = vst [vmem:[%s285 + $0x20] sm:$0xf] %v3400
      %3485 = vst [vmem:[%s285 + $0x24] sm:$0xf] %v3401
      %3486 = vst [vmem:[%s285 + $0x28] sm:$0xf] %v3402
      %3487 = vst [vmem:[%s285 + $0x2c] sm:$0xf] %v3403
      %3488 = vst [vmem:[%s285 + $0x30] sm:$0xf] %v3404
      %3489 = vst [vmem:[%s285 + $0x34] sm:$0xf] %v3405
      %3490 = vst [vmem:[%s285 + $0x38] sm:$0xf] %v3406
      %3491 = vst [vmem:[%s285 + $0x3c] sm:$0xf] %v3407
      %3492 = vst [vmem:[%s285 + $0x40] sm:$0xf] %v3408
      %3493 = vst [vmem:[%s285 + $0x44] sm:$0xf] %v3409
      %3494 = vst [vmem:[%s285 + $0x48] sm:$0xf] %v3410
      %3495 = vst [vmem:[%s285 + $0x4c] sm:$0xf] %v3411
      %3496 = vst [vmem:[%s285 + $0x50] sm:$0xf] %v3412
      %3497 = vst [vmem:[%s285 + $0x54] sm:$0xf] %v3413
      %3498 = vst [vmem:[%s285 + $0x58] sm:$0xf] %v3414
      %3499 = vst [vmem:[%s285 + $0x5c] sm:$0xf] %v3415
      %3500 = vst [vmem:[%s285 + $0x60] sm:$0xf] %v3416
      %3501 = vst [vmem:[%s285 + $0x64] sm:$0xf] %v3417
      %3502 = vst [vmem:[%s285 + $0x68] sm:$0xf] %v3418
      %3503 = vst [vmem:[%s285 + $0x6c] sm:$0xf] %v3419
      %3504 = vst [vmem:[%s285 + $0x70] sm:$0xf] %v3420
      %3505 = vst [vmem:[%s285 + $0x74] sm:$0xf] %v3421
      %3506 = vst [vmem:[%s285 + $0x78] sm:$0xf] %v3422
      %3507 = vst [vmem:[%s285 + $0x7c] sm:$0xf] %v3423
      %3508 = vst [vmem:[%s285 + $0x80] sm:$0xf] %v3424
      %3509 = vst [vmem:[%s285 + $0x84] sm:$0xf] %v3425
      %3510 = vst [vmem:[%s285 + $0x88] sm:$0xf] %v3426
      %3511 = vst [vmem:[%s285 + $0x8c] sm:$0xf] %v3427
      %3512 = vst [vmem:[%s285 + $0x90] sm:$0xf] %v3428
      %3513 = vst [vmem:[%s285 + $0x94] sm:$0xf] %v3429
      %3514 = vst [vmem:[%s285 + $0x98] sm:$0xf] %v3430
      %3515 = vst [vmem:[%s285 + $0x9c] sm:$0xf] %v3431
      %3516 = vst [vmem:[%s285 + $0xa0] sm:$0xf] %v3432
      %3517 = vst [vmem:[%s285 + $0xa4] sm:$0xf] %v3433
      %v3518 = vunpack.c.l.bf16 %v3308
      %v3519 = vunpack.c.h.bf16 %v3308
      %v3520 = vunpack.c.l.bf16 %v3309
      %v3521 = vunpack.c.h.bf16 %v3309
      %v3522 = vunpack.c.l.bf16 %v3310
      %v3523 = vunpack.c.h.bf16 %v3310
      %v3524 = vunpack.c.l.bf16 %v3311
      %v3525 = vunpack.c.h.bf16 %v3311
      %v3526 = vunpack.c.l.bf16 %v3312
      %v3527 = vunpack.c.h.bf16 %v3312
      %v3528 = vunpack.c.l.bf16 %v3313
      %v3529 = vunpack.c.h.bf16 %v3313
      %v3530 = vunpack.c.l.bf16 %v3314
      %v3531 = vunpack.c.h.bf16 %v3314
      %v3532 = vunpack.c.l.bf16 %v3315
      %v3533 = vunpack.c.h.bf16 %v3315
      %v3534 = vunpack.c.l.bf16 %v3316
      %v3535 = vunpack.c.h.bf16 %v3316
      %v3536 = vunpack.c.l.bf16 %v3317
      %v3537 = vunpack.c.h.bf16 %v3317
      %v3538 = vunpack.c.l.bf16 %v3318
      %v3539 = vunpack.c.h.bf16 %v3318
      %v3540 = vunpack.c.l.bf16 %v3319
      %v3541 = vunpack.c.h.bf16 %v3319
      %v3542 = vunpack.c.l.bf16 %v3320
      %v3543 = vunpack.c.h.bf16 %v3320
      %v3544 = vunpack.c.l.bf16 %v3321
      %v3545 = vunpack.c.h.bf16 %v3321
      %v3546 = vunpack.c.l.bf16 %v3322
      %v3547 = vunpack.c.h.bf16 %v3322
      %v3548 = vunpack.c.l.bf16 %v3323
      %v3549 = vunpack.c.h.bf16 %v3323
      %v3550 = vunpack.c.l.bf16 %v3324
      %v3551 = vunpack.c.h.bf16 %v3324
      %v3552 = vunpack.c.l.bf16 %v3325
      %v3553 = vunpack.c.h.bf16 %v3325
      %v3554 = vunpack.c.l.bf16 %v3326
      %v3555 = vunpack.c.h.bf16 %v3326
      %v3556 = vunpack.c.l.bf16 %v3327
      %v3557 = vunpack.c.h.bf16 %v3327
      %v3558 = vunpack.c.l.bf16 %v3328
      %v3559 = vunpack.c.h.bf16 %v3328
      %v3560 = vadd.f32 %v3518, %v3519
      %v3561 = vadd.f32 %v3560, %v3520
      %v3562 = vadd.f32 %v3561, %v3521
      %v3563 = vadd.f32 %v3562, %v3522
      %v3564 = vadd.f32 %v3563, %v3523
      %v3565 = vadd.f32 %v3564, %v3524
      %v3566 = vadd.f32 %v3565, %v3525
      %v3567 = vadd.f32 %v3566, %v3526
      %v3568 = vadd.f32 %v3567, %v3527
      %v3569 = vadd.f32 %v3568, %v3528
      %v3570 = vadd.f32 %v3569, %v3529
      %v3571 = vadd.f32 %v3570, %v3530
      %v3572 = vadd.f32 %v3571, %v3531
      %v3573 = vadd.f32 %v3572, %v3532
      %v3574 = vadd.f32 %v3573, %v3533
      %v3575 = vadd.f32 %v3574, %v3534
      %v3576 = vadd.f32 %v3575, %v3535
      %v3577 = vadd.f32 %v3576, %v3536
      %v3578 = vadd.f32 %v3577, %v3537
      %v3579 = vadd.f32 %v3578, %v3538
      %v3580 = vadd.f32 %v3579, %v3539
      %v3581 = vadd.f32 %v3580, %v3540
      %v3582 = vadd.f32 %v3581, %v3541
      %v3583 = vadd.f32 %v3582, %v3542
      %v3584 = vadd.f32 %v3583, %v3543
      %v3585 = vadd.f32 %v3584, %v3544
      %v3586 = vadd.f32 %v3585, %v3545
      %v3587 = vadd.f32 %v3586, %v3546
      %v3588 = vadd.f32 %v3587, %v3547
      %v3589 = vadd.f32 %v3588, %v3548
      %v3590 = vadd.f32 %v3589, %v3549
      %v3591 = vadd.f32 %v3590, %v3550
      %v3592 = vadd.f32 %v3591, %v3551
      %v3593 = vadd.f32 %v3592, %v3552
      %v3594 = vadd.f32 %v3593, %v3553
      %v3595 = vadd.f32 %v3594, %v3554
      %v3596 = vadd.f32 %v3595, %v3555
      %v3597 = vadd.f32 %v3596, %v3556
      %v3598 = vadd.f32 %v3597, %v3557
      %v3599 = vadd.f32 %v3598, %v3558
      %v3600 = vadd.f32 %v3599, %v3559
      %v3601 = vrot.slane %v3600, 4
      %v3602 = vadd.f32 %v3600, %v3601
      %v3603 = vrot.slane %v3602, 2
      %v3604 = vadd.f32 %v3602, %v3603
      %v3605 = vrot.slane %v3604, 1
      %v3606 = vadd.f32 %v3604, %v3605
      %v3607 = vmul.f32 %v3518, %v3518
      %v3608 = vmul.f32 %v3519, %v3519
      %v3609 = vmul.f32 %v3520, %v3520
      %v3610 = vmul.f32 %v3521, %v3521
      %v3611 = vmul.f32 %v3522, %v3522
      %v3612 = vmul.f32 %v3523, %v3523
      %v3613 = vmul.f32 %v3524, %v3524
      %v3614 = vmul.f32 %v3525, %v3525
      %v3615 = vmul.f32 %v3526, %v3526
      %v3616 = vmul.f32 %v3527, %v3527
      %v3617 = vmul.f32 %v3528, %v3528
      %v3618 = vmul.f32 %v3529, %v3529
      %v3619 = vmul.f32 %v3530, %v3530
      %v3620 = vmul.f32 %v3531, %v3531
      %v3621 = vmul.f32 %v3532, %v3532
      %v3622 = vmul.f32 %v3533, %v3533
      %v3623 = vmul.f32 %v3534, %v3534
      %v3624 = vmul.f32 %v3535, %v3535
      %v3625 = vmul.f32 %v3536, %v3536
      %v3626 = vmul.f32 %v3537, %v3537
      %v3627 = vmul.f32 %v3538, %v3538
      %v3628 = vmul.f32 %v3539, %v3539
      %v3629 = vmul.f32 %v3540, %v3540
      %v3630 = vmul.f32 %v3541, %v3541
      %v3631 = vmul.f32 %v3542, %v3542
      %v3632 = vmul.f32 %v3543, %v3543
      %v3633 = vmul.f32 %v3544, %v3544
      %v3634 = vmul.f32 %v3545, %v3545
      %v3635 = vmul.f32 %v3546, %v3546
      %v3636 = vmul.f32 %v3547, %v3547
      %v3637 = vmul.f32 %v3548, %v3548
      %v3638 = vmul.f32 %v3549, %v3549
      %v3639 = vmul.f32 %v3550, %v3550
      %v3640 = vmul.f32 %v3551, %v3551
      %v3641 = vmul.f32 %v3552, %v3552
      %v3642 = vmul.f32 %v3553, %v3553
      %v3643 = vmul.f32 %v3554, %v3554
      %v3644 = vmul.f32 %v3555, %v3555
      %v3645 = vmul.f32 %v3556, %v3556
      %v3646 = vmul.f32 %v3557, %v3557
      %v3647 = vmul.f32 %v3558, %v3558
      %v3648 = vmul.f32 %v3559, %v3559
      %v3649 = vadd.f32 %v3607, %v3608
      %v3650 = vadd.f32 %v3649, %v3609
      %v3651 = vadd.f32 %v3650, %v3610
      %v3652 = vadd.f32 %v3651, %v3611
      %v3653 = vadd.f32 %v3652, %v3612
      %v3654 = vadd.f32 %v3653, %v3613
      %v3655 = vadd.f32 %v3654, %v3614
      %v3656 = vadd.f32 %v3655, %v3615
      %v3657 = vadd.f32 %v3656, %v3616
      %v3658 = vadd.f32 %v3657, %v3617
      %v3659 = vadd.f32 %v3658, %v3618
      %v3660 = vadd.f32 %v3659, %v3619
      %v3661 = vadd.f32 %v3660, %v3620
      %v3662 = vadd.f32 %v3661, %v3621
      %v3663 = vadd.f32 %v3662, %v3622
      %v3664 = vadd.f32 %v3663, %v3623
      %v3665 = vadd.f32 %v3664, %v3624
      %v3666 = vadd.f32 %v3665, %v3625
      %v3667 = vadd.f32 %v3666, %v3626
      %v3668 = vadd.f32 %v3667, %v3627
      %v3669 = vadd.f32 %v3668, %v3628
      %v3670 = vadd.f32 %v3669, %v3629
      %v3671 = vadd.f32 %v3670, %v3630
      %v3672 = vadd.f32 %v3671, %v3631
      %v3673 = vadd.f32 %v3672, %v3632
      %v3674 = vadd.f32 %v3673, %v3633
      %v3675 = vadd.f32 %v3674, %v3634
      %v3676 = vadd.f32 %v3675, %v3635
      %v3677 = vadd.f32 %v3676, %v3636
      %v3678 = vadd.f32 %v3677, %v3637
      %v3679 = vadd.f32 %v3678, %v3638
      %v3680 = vadd.f32 %v3679, %v3639
      %v3681 = vadd.f32 %v3680, %v3640
      %v3682 = vadd.f32 %v3681, %v3641
      %v3683 = vadd.f32 %v3682, %v3642
      %v3684 = vadd.f32 %v3683, %v3643
      %v3685 = vadd.f32 %v3684, %v3644
      %v3686 = vadd.f32 %v3685, %v3645
      %v3687 = vadd.f32 %v3686, %v3646
      %v3688 = vadd.f32 %v3687, %v3647
      %v3689 = vadd.f32 %v3688, %v3648
      %v3690 = vrot.slane %v3689, 4
      %v3691 = vadd.f32 %v3689, %v3690
      %v3692 = vrot.slane %v3691, 2
      %v3693 = vadd.f32 %v3691, %v3692
      %v3694 = vrot.slane %v3693, 1
      %v3695 = vadd.f32 %v3693, %v3694
      %vm3696 = vcmask 1040384
      %v3697 = vsel %vm3696, %v3606, %v3695
      %3698 = vst [vmem:[%s289] sm:$0x3] %v3697
      %p3699 = scmp.lt.s32.totalorder %s19, 1
      %s3700 = scalar_select %p3699, %s19, 1
      %s3701 = smul.addr %s3700, 42
      %s3702 = smul.addr %s3701, 4
      %s3703 = scalar_lea.vmem %s6, %s3702
      %p3704 = scmp.lt.s32.totalorder %s19, 1
      %s3705 = scalar_select %p3704, %s19, 1
      %s3706 = smul.addr %s3705, 2
      %s3707 = scalar_lea.vmem %s7, %s3706
      // Predicated region
      $region45: #{conv_block_forward.3} parent=43 // pred_check
        %p3708 = pneg %p168
      $region46: #{conv_block_forward.3} parent=43 // pred_check_branch
        %3710 = sbr.rel (%p3708) target = $region48
      $region47: #{conv_block_forward.3} parent=43 // pred_region
        _
      $region48: #{conv_block_forward.3} parent=43 // pred_fallthru
        _
      // Predicated region
      $region49: #{conv_block_forward.3} parent=43 // pred_check
        %p3711 = pneg %p194
      $region50: #{conv_block_forward.3} parent=43 // pred_check_branch
        %3713 = sbr.rel (%p3711) target = $region52
      $region51: #{conv_block_forward.3} parent=43 // pred_region
        _
      $region52: #{conv_block_forward.3} parent=43 // pred_fallthru
        _
    $region44: #{conv_block_forward.3} parent=5 // pred_fallthru
      _
    %p3714 = scmp.le.s32.totalorder 2, %s14
    // Predicated region
    $region53: #{conv_block_forward.3} parent=5 // pred_check
      %p3715 = pneg %p3714
    $region54: #{conv_block_forward.3} parent=5 // pred_check_branch
      %3717 = sbr.rel (%p3715) target = $region56
    $region55: #{conv_block_forward.3} parent=5 // pred_region
      %s3718 = ssub.s32 %s14, 2
      // Predicated region
      $region57: #{conv_block_forward.3} parent=55 // pred_check
        %p3719 = pneg %p174
      $region58: #{conv_block_forward.3} parent=55 // pred_check_branch
        %3721 = sbr.rel (%p3719) target = $region60
      $region59: #{conv_block_forward.3} parent=55 // pred_region
        %p3722 = scmp.lt.s32.totalorder %s20, 1
        %s3723 = scalar_select %p3722, %s20, 1
        %s3724 = smul.addr %s3723, 42
        %s3725 = smul.addr %s3724, 4
        %s3726 = scalar_lea.vmem %s6, %s3725
      $region60: #{conv_block_forward.3} parent=55 // pred_fallthru
        _
      // Predicated region
      $region61: #{conv_block_forward.3} parent=55 // pred_check
        %p3727 = pneg %p200
      $region62: #{conv_block_forward.3} parent=55 // pred_check_branch
        %3729 = sbr.rel (%p3727) target = $region64
      $region63: #{conv_block_forward.3} parent=55 // pred_region
        %p3730 = scmp.lt.s32.totalorder %s20, 1
        %s3731 = scalar_select %p3730, %s20, 1
        %s3732 = smul.addr %s3731, 2
        %s3733 = scalar_lea.vmem %s7, %s3732
      $region64: #{conv_block_forward.3} parent=55 // pred_fallthru
        _
    $region56: #{conv_block_forward.3} parent=5 // pred_fallthru
      _
  $region6: #{conv_block_forward.3} parent=0 // loop_footer
    %s18 = sadd.s32 1, %s14
  $region7: #{conv_block_forward.3} parent=0 // loop_footer_branch
    %13 = sbr.rel target = $region3
  $region8: #{conv_block_forward.3} parent=0 // loop_exit
    _

</llo_original>
